<compile_context>
chip_gen: v5e
topology: v5e:2x2
jax: 0.10.0
libtpu: 0.0.40
codegen_flags: <defaults>
</compile_context>

<pallas_src>
import functools

import jax
import jax.numpy as jnp
from jax.experimental import pallas as pl
from jax.experimental.pallas import tpu as pltpu

NEG = -1e9
LN_EPS = 1e-5


def _layernorm(h, g, b):
    mean = jnp.mean(h, axis=-1, keepdims=True)
    var = jnp.mean(jnp.square(h - mean), axis=-1, keepdims=True)
    return (h - mean) * jax.lax.rsqrt(var + LN_EPS) * g + b


# ----------------- fused multi-head attention + add&LayerNorm ----------------

def _mha_kernel(x_ref, mem_ref, wq_ref, bq_ref, wkv_ref, bkv_ref,
                wo_ref, bo_ref, g_ref, beta_ref, *rest,
                H, scale, causal, use_mask):
    if use_mask:
        mask_ref, o_ref = rest
    else:
        (o_ref,) = rest

    x = x_ref[0]        # (Lq, E) f32 : query input == residual
    mem = mem_ref[0]    # (Lk, E) f32 : key/value input
    Lq, E = x.shape
    Lk = mem.shape[0]
    Dh = E // H

    xb = x.astype(jnp.bfloat16)
    mb = mem.astype(jnp.bfloat16)

    # fused projections (weights stored bf16, f32 accumulation on the MXU)
    q = jnp.dot(xb, wq_ref[...], preferred_element_type=jnp.float32) + bq_ref[...]
    kv = jnp.dot(mb, wkv_ref[...], preferred_element_type=jnp.float32) + bkv_ref[...]
    k = kv[:, :E]
    v = kv[:, E:]

    if use_mask:
        kpm_bias = mask_ref[0]          # (1, Lk) additive (0 / -1e9)
    if causal:
        row = jax.lax.broadcasted_iota(jnp.int32, (Lq, Lk), 0)
        col = jax.lax.broadcasted_iota(jnp.int32, (Lq, Lk), 1)
        causal_bias = jnp.where(col <= row, 0.0, NEG)

    # per-head attention; out-projection folded in per head so no concat needed
    acc = None
    for h in range(H):
        qh = q[:, h * Dh:(h + 1) * Dh].astype(jnp.bfloat16)
        kh = k[:, h * Dh:(h + 1) * Dh].astype(jnp.bfloat16)
        vh = v[:, h * Dh:(h + 1) * Dh].astype(jnp.bfloat16)
        s = jax.lax.dot_general(qh, kh, (((1,), (1,)), ((), ())),
                                preferred_element_type=jnp.float32) * scale
        if use_mask:
            s = s + kpm_bias
        if causal:
            s = s + causal_bias
        m = jnp.max(s, axis=-1, keepdims=True)
        p = jnp.exp(s - m)
        p = p * pl.reciprocal(jnp.sum(p, axis=-1, keepdims=True), approx=True)
        oh = jnp.dot(p.astype(jnp.bfloat16), vh,
                     preferred_element_type=jnp.float32)          # (Lq, Dh)
        part = jnp.dot(oh.astype(jnp.bfloat16),
                       wo_ref[h * Dh:(h + 1) * Dh, :],
                       preferred_element_type=jnp.float32)        # (Lq, E)
        acc = part if acc is None else acc + part

    o = acc + bo_ref[...]
    o_ref[0] = _layernorm(o + x, g_ref[...], beta_ref[...])


def mha_block(x, mem, p, H, *, kpm_bias=None, causal=False):
    """Fused attention sublayer. x: (N, Lq, E), mem: (N, Lk, E)."""
    N, Lq, E = x.shape
    Lk = mem.shape[1]
    Dh = E // H
    use_mask = kpm_bias is not None
    kernel = functools.partial(_mha_kernel, H=H, scale=1.0 / float(Dh) ** 0.5,
                               causal=causal, use_mask=use_mask)
    full = lambda n: (0, 0)
    in_specs = [
        pl.BlockSpec((1, Lq, E), lambda n: (n, 0, 0)),
        pl.BlockSpec((1, Lk, E), lambda n: (n, 0, 0)),
        pl.BlockSpec((E, E), full),
        pl.BlockSpec((1, E), full),
        pl.BlockSpec((E, 2 * E), full),
        pl.BlockSpec((1, 2 * E), full),
        pl.BlockSpec((E, E), full),
        pl.BlockSpec((1, E), full),
        pl.BlockSpec((1, E), full),
        pl.BlockSpec((1, E), full),
    ]
    inputs = [x, mem, p["wq"], p["bq"], p["wkv"], p["bkv"],
              p["wo"], p["bo"], p["ng"], p["nb"]]
    if use_mask:
        in_specs.append(pl.BlockSpec((1, 1, Lk), lambda n: (n, 0, 0)))
        inputs.append(kpm_bias)
    return pl.pallas_call(
        kernel,
        grid=(N,),
        in_specs=in_specs,
        out_specs=pl.BlockSpec((1, Lq, E), lambda n: (n, 0, 0)),
        out_shape=jax.ShapeDtypeStruct((N, Lq, E), jnp.float32),
        compiler_params=pltpu.CompilerParams(dimension_semantics=("parallel",)),
    )(*inputs)


# --------------------- fused FFN (+ residual + LayerNorm) --------------------

def _ffn_kernel(x_ref, w1_ref, b1_ref, w2_ref, b2_ref, g_ref, beta_ref, o_ref):
    x = x_ref[0]                                   # (L, E) f32
    h = jnp.dot(x.astype(jnp.bfloat16), w1_ref[...],
                preferred_element_type=jnp.float32) + b1_ref[...]
    h = jnp.maximum(h, 0.0)
    y = jnp.dot(h.astype(jnp.bfloat16), w2_ref[...],
                preferred_element_type=jnp.float32) + b2_ref[...]
    o_ref[0] = _layernorm(x + y, g_ref[...], beta_ref[...])


def ffn_block(x, p):
    N, L, E = x.shape
    FF = p["w1"].shape[1]
    full = lambda n: (0, 0)
    return pl.pallas_call(
        _ffn_kernel,
        grid=(N,),
        in_specs=[pl.BlockSpec((1, L, E), lambda n: (n, 0, 0)),
                  pl.BlockSpec((E, FF), full),
                  pl.BlockSpec((1, FF), full),
                  pl.BlockSpec((FF, E), full),
                  pl.BlockSpec((1, E), full),
                  pl.BlockSpec((1, E), full),
                  pl.BlockSpec((1, E), full)],
        out_specs=pl.BlockSpec((1, L, E), lambda n: (n, 0, 0)),
        out_shape=jax.ShapeDtypeStruct((N, L, E), jnp.float32),
        compiler_params=pltpu.CompilerParams(dimension_semantics=("parallel",)),
    )(x, p["w1"], p["b1"], p["w2"], p["b2"], p["ng"], p["nb"])


# --------------------------- pure LayerNorm (2-D) ----------------------------

def _ln_kernel(x_ref, g_ref, b_ref, o_ref):
    o_ref[...] = _layernorm(x_ref[...], g_ref[...], b_ref[...])


def layernorm(x2d, g, b):
    M, E = x2d.shape
    return pl.pallas_call(
        _ln_kernel,
        out_shape=jax.ShapeDtypeStruct((M, E), jnp.float32),
    )(x2d, g, b)


# --------------------- fused final LayerNorm + LM head -----------------------

def _ln_head_kernel(x_ref, g_ref, b_ref, w_ref, wb_ref, o_ref):
    xn = _layernorm(x_ref[...], g_ref[...], b_ref[...])
    o_ref[...] = jnp.dot(xn.astype(jnp.bfloat16), w_ref[...],
                         preferred_element_type=jnp.float32) + wb_ref[...]


def ln_head(x2d, g, b, w, wb):
    # TODO(synk): for production vocab sizes, tile the vocab dim in 128-wide
    # blocks (grid over V, reduction axis last) and set vmem_limit_bytes.
    M, E = x2d.shape
    V = w.shape[1]
    return pl.pallas_call(
        _ln_head_kernel,
        out_shape=jax.ShapeDtypeStruct((M, V), jnp.float32),
    )(x2d, g, b, w, wb)


# ------------------------------ full forward ---------------------------------

def transformer_forward(params, src, tgt, src_pad_idx, num_heads):
    Ls, N = src.shape
    Lt = tgt.shape[0]
    E = params["src_word_emb"].shape[1]
    H = num_heads

    # Embedding gathers (XLA glue) + learned positions; batch-first layout.
    src_b = src.T                     # (N, Ls)
    tgt_b = tgt.T                     # (N, Lt)
    x = (params["src_word_emb"][src_b] +
         params["src_pos_emb"][:Ls][None, :, :]).astype(jnp.float32)
    y = (params["tgt_word_emb"][tgt_b] +
         params["tgt_pos_emb"][:Lt][None, :, :]).astype(jnp.float32)

    # src key-padding additive bias: (N, 1, Ls), 0 valid / -1e9 at <pad>
    kpm_bias = jnp.where(src_b == src_pad_idx, NEG, 0.0).astype(jnp.float32)[:, None, :]

    # Encoder stack + final encoder LayerNorm (nn.Transformer default)
    for p in params["enc_layers"]:
        x = mha_block(x, x, p["self"], H, kpm_bias=kpm_bias)
        x = ffn_block(x, p["ffn"])
    mem = layernorm(x.reshape(N * Ls, E),
                    params["enc_norm_g"], params["enc_norm_b"]).reshape(N, Ls, E)

    # Decoder stack (causal self-attn, unmasked cross-attn)
    for p in params["dec_layers"]:
        y = mha_block(y, y, p["self"], H, causal=True)
        y = mha_block(y, mem, p["cross"], H)
        y = ffn_block(y, p["ffn"])

    # Final decoder LayerNorm fused with the LM head projection.
    logits = ln_head(y.reshape(N * Lt, E),
                     params["dec_norm_g"], params["dec_norm_b"],
                     params["fc_w"], params["fc_b"])
    # Back to PyTorch's (Lt, N, vocab) seq-major layout.
    return logits.reshape(N, Lt, -1).transpose(1, 0, 2)


# ----------------------------- parameter init --------------------------------

def init_params(key, E, H, FF, src_vocab, tgt_vocab, max_len, n_enc, n_dec):
    state = [key]

    def nxt():
        state[0], sub = jax.random.split(state[0])
        return sub

    def rnd(shape, scale=0.05, dtype=jnp.float32):
        return (jax.random.normal(nxt(), shape, dtype=jnp.float32) * scale).astype(dtype)

    wdt = jnp.bfloat16    # matmul weights in bf16 (MXU-native on v6e/v7x)

    def attn():
        return dict(
            wq=rnd((E, E), dtype=wdt), bq=jnp.zeros((1, E), jnp.float32),
            wkv=rnd((E, 2 * E), dtype=wdt), bkv=jnp.zeros((1, 2 * E), jnp.float32),
            wo=rnd((E, E), dtype=wdt), bo=jnp.zeros((1, E), jnp.float32),
            ng=jnp.ones((1, E), jnp.float32), nb=jnp.zeros((1, E), jnp.float32))

    def ffn():
        return dict(
            w1=rnd((E, FF), dtype=wdt), b1=jnp.zeros((1, FF), jnp.float32),
            w2=rnd((FF, E), dtype=wdt), b2=jnp.zeros((1, E), jnp.float32),
            ng=jnp.ones((1, E), jnp.float32), nb=jnp.zeros((1, E), jnp.float32))

    params = dict(
        src_word_emb=rnd((src_vocab, E)),
        src_pos_emb=rnd((max_len, E)),
        tgt_word_emb=rnd((tgt_vocab, E)),
        tgt_pos_emb=rnd((max_len, E)),
        enc_layers=[dict(self=attn(), ffn=ffn()) for _ in range(n_enc)],
        dec_layers=[dict(self=attn(), cross=attn(), ffn=ffn()) for _ in range(n_dec)],
        enc_norm_g=jnp.ones((1, E), jnp.float32),
        enc_norm_b=jnp.zeros((1, E), jnp.float32),
        dec_norm_g=jnp.ones((1, E), jnp.float32),
        dec_norm_b=jnp.zeros((1, E), jnp.float32),
        fc_w=rnd((E, tgt_vocab), dtype=wdt),
        fc_b=jnp.zeros((1, tgt_vocab), jnp.float32),
    )
    return params


# --------------------------------- main ---------------------------------------

if __name__ == "__main__":
    # Small, forward-consistent shapes (PyTorch module used 512/8/2048/3/3).
    E, H, FF = 32, 4, 64
    n_enc = n_dec = 3
    src_vocab, tgt_vocab = 50, 48
    max_len = 100
    src_pad_idx = 1
    Ls, Lt, N = 10, 8, 2

    key = jax.random.PRNGKey(0)
    pkey, skey, tkey = jax.random.split(key, 3)
    params = init_params(pkey, E, H, FF, src_vocab, tgt_vocab, max_len, n_enc, n_dec)

    src = jax.random.randint(skey, (Ls, N), 2, src_vocab, dtype=jnp.int32)
    src = src.at[-2:, 1].set(src_pad_idx)   # some <pad> tokens -> nontrivial mask
    tgt = jax.random.randint(tkey, (Lt, N), 2, tgt_vocab, dtype=jnp.int32)

    fwd = jax.jit(functools.partial(transformer_forward,
                                    src_pad_idx=src_pad_idx, num_heads=H))
    out = fwd(params, src, tgt)
    out = jax.block_until_ready(out)
    assert out.shape == (Lt, N, tgt_vocab), out.shape
    assert bool(jnp.all(jnp.isfinite(out)))
    print("KERNEL_OK")
</pallas_src>

<mosaic_0001>
module attributes {stable_mosaic.version = 11 : i64} {
  func.func @_ln_kernel(%arg0: memref<20x32xf32, #tpu.memory_space<vmem>>, %arg1: memref<1x32xf32, #tpu.memory_space<vmem>>, %arg2: memref<1x32xf32, #tpu.memory_space<vmem>>, %arg3: memref<20x32xf32, #tpu.memory_space<vmem>>) attributes {dimension_semantics = [], scalar_prefetch = 0 : i64, scratch_operands = 0 : i64, tpu.core_type = #tpu.core_type<tc>} {
    %c0 = arith.constant 0 : index
    %c0_0 = arith.constant 0 : index
    %0 = vector.load %arg0[%c0, %c0_0] : memref<20x32xf32, #tpu.memory_space<vmem>>, vector<20x32xf32>
    %c0_1 = arith.constant 0 : index
    %c0_2 = arith.constant 0 : index
    %1 = vector.load %arg1[%c0_1, %c0_2] : memref<1x32xf32, #tpu.memory_space<vmem>>, vector<1x32xf32>
    %c0_3 = arith.constant 0 : index
    %c0_4 = arith.constant 0 : index
    %2 = vector.load %arg2[%c0_3, %c0_4] : memref<1x32xf32, #tpu.memory_space<vmem>>, vector<1x32xf32>
    %cst = arith.constant dense<0.000000e+00> : vector<20xf32>
    %3 = vector.multi_reduction <add>, %0, %cst [1] : vector<20x32xf32> to vector<20xf32>
    %4 = vector.shape_cast %3 : vector<20xf32> to vector<20x1xf32>
    %cst_5 = arith.constant 3.200000e+01 : f32
    %5 = vector.broadcast %cst_5 : f32 to vector<20x1xf32>
    %6 = arith.divf %4, %5 : vector<20x1xf32>
    %7 = vector.broadcast %6 : vector<20x1xf32> to vector<20x32xf32>
    %8 = arith.subf %0, %7 : vector<20x32xf32>
    %9 = arith.mulf %8, %8 : vector<20x32xf32>
    %cst_6 = arith.constant dense<0.000000e+00> : vector<20xf32>
    %10 = vector.multi_reduction <add>, %9, %cst_6 [1] : vector<20x32xf32> to vector<20xf32>
    %11 = vector.shape_cast %10 : vector<20xf32> to vector<20x1xf32>
    %cst_7 = arith.constant 3.200000e+01 : f32
    %12 = vector.broadcast %cst_7 : f32 to vector<20x1xf32>
    %13 = arith.divf %11, %12 : vector<20x1xf32>
    %14 = vector.broadcast %6 : vector<20x1xf32> to vector<20x32xf32>
    %15 = arith.subf %0, %14 : vector<20x32xf32>
    %cst_8 = arith.constant 9.99999974E-6 : f32
    %16 = vector.broadcast %cst_8 : f32 to vector<20x1xf32>
    %17 = arith.addf %13, %16 : vector<20x1xf32>
    %18 = math.rsqrt %17 : vector<20x1xf32>
    %19 = vector.broadcast %18 : vector<20x1xf32> to vector<20x32xf32>
    %20 = arith.mulf %15, %19 : vector<20x32xf32>
    %21 = vector.broadcast %1 : vector<1x32xf32> to vector<20x32xf32>
    %22 = arith.mulf %20, %21 : vector<20x32xf32>
    %23 = vector.broadcast %2 : vector<1x32xf32> to vector<20x32xf32>
    %24 = arith.addf %22, %23 : vector<20x32xf32>
    %c0_9 = arith.constant 0 : index
    %c0_10 = arith.constant 0 : index
    %25 = vector.load %arg3[%c0_9, %c0_10] : memref<20x32xf32, #tpu.memory_space<vmem>>, vector<20x32xf32>
    tpu.vector_store %arg3[%c0_9, %c0_10], %24 {strides = array<i32>} : memref<20x32xf32, #tpu.memory_space<vmem>>, vector<20x32xf32>,
    return
  }
}

module attributes {stable_mosaic.version = 11 : i64} {
  func.func @_ffn_kernel(%arg0: i32, %arg1: memref<1x10x32xf32, #tpu.memory_space<vmem>>, %arg2: memref<32x64xbf16, #tpu.memory_space<vmem>>, %arg3: memref<1x64xf32, #tpu.memory_space<vmem>>, %arg4: memref<64x32xbf16, #tpu.memory_space<vmem>>, %arg5: memref<1x32xf32, #tpu.memory_space<vmem>>, %arg6: memref<1x32xf32, #tpu.memory_space<vmem>>, %arg7: memref<1x32xf32, #tpu.memory_space<vmem>>, %arg8: memref<1x10x32xf32, #tpu.memory_space<vmem>>) attributes {dimension_semantics = [#tpu.dimension_semantics<parallel>], iteration_bounds = array<i64: 2>, scalar_prefetch = 0 : i64, scratch_operands = 0 : i64, tpu.core_type = #tpu.core_type<tc>, window_params = [{transform_indices = @transform_0, window_bounds = array<i64: 1, 10, 32>}, {pipeline_mode = #tpu.pipeline_mode<synchronous>, transform_indices = @transform_1, window_bounds = array<i64: 32, 64>}, {pipeline_mode = #tpu.pipeline_mode<synchronous>, transform_indices = @transform_2, window_bounds = array<i64: 1, 64>}, {pipeline_mode = #tpu.pipeline_mode<synchronous>, transform_indices = @transform_3, window_bounds = array<i64: 64, 32>}, {pipeline_mode = #tpu.pipeline_mode<synchronous>, transform_indices = @transform_4, window_bounds = array<i64: 1, 32>}, {pipeline_mode = #tpu.pipeline_mode<synchronous>, transform_indices = @transform_5, window_bounds = array<i64: 1, 32>}, {pipeline_mode = #tpu.pipeline_mode<synchronous>, transform_indices = @transform_6, window_bounds = array<i64: 1, 32>}, {transform_indices = @transform_7, window_bounds = array<i64: 1, 10, 32>}]} {
    %c0 = arith.constant 0 : index
    %c0_0 = arith.constant 0 : index
    %c0_1 = arith.constant 0 : index
    %0 = vector.load %arg1[%c0, %c0_0, %c0_1] : memref<1x10x32xf32, #tpu.memory_space<vmem>>, vector<1x10x32xf32>
    %1 = vector.shape_cast %0 : vector<1x10x32xf32> to vector<10x32xf32>
    %2 = arith.truncf %1 : vector<10x32xf32> to vector<10x32xbf16>
    %c0_2 = arith.constant 0 : index
    %c0_3 = arith.constant 0 : index
    %3 = vector.load %arg2[%c0_2, %c0_3] : memref<32x64xbf16, #tpu.memory_space<vmem>>, vector<32x64xbf16>
    %cst = arith.constant dense<0.000000e+00> : vector<10x64xf32>
    %4 = tpu.matmul %2, %3, %cst {dimension_numbers = #tpu.dot_dimension_numbers<[1], [0], [0], [1], [0, 0, 1, 1], [], []>} : vector<10x32xbf16>, vector<32x64xbf16>, vector<10x64xf32> -> vector<10x64xf32>
    %c0_4 = arith.constant 0 : index
    %c0_5 = arith.constant 0 : index
    %5 = vector.load %arg3[%c0_4, %c0_5] : memref<1x64xf32, #tpu.memory_space<vmem>>, vector<1x64xf32>
    %6 = vector.broadcast %5 : vector<1x64xf32> to vector<10x64xf32>
    %7 = arith.addf %4, %6 : vector<10x64xf32>
    %cst_6 = arith.constant 0.000000e+00 : f32
    %8 = vector.broadcast %cst_6 : f32 to vector<10x64xf32>
    %9 = arith.maximumf %7, %8 : vector<10x64xf32>
    %10 = arith.truncf %9 : vector<10x64xf32> to vector<10x64xbf16>
    %c0_7 = arith.constant 0 : index
    %c0_8 = arith.constant 0 : index
    %11 = vector.load %arg4[%c0_7, %c0_8] : memref<64x32xbf16, #tpu.memory_space<vmem>>, vector<64x32xbf16>
    %cst_9 = arith.constant dense<0.000000e+00> : vector<10x32xf32>
    %12 = tpu.matmul %10, %11, %cst_9 {dimension_numbers = #tpu.dot_dimension_numbers<[1], [0], [0], [1], [0, 0, 1, 1], [], []>} : vector<10x64xbf16>, vector<64x32xbf16>, vector<10x32xf32> -> vector<10x32xf32>
    %c0_10 = arith.constant 0 : index
    %c0_11 = arith.constant 0 : index
    %13 = vector.load %arg5[%c0_10, %c0_11] : memref<1x32xf32, #tpu.memory_space<vmem>>, vector<1x32xf32>
    %14 = vector.broadcast %13 : vector<1x32xf32> to vector<10x32xf32>
    %15 = arith.addf %12, %14 : vector<10x32xf32>
    %16 = arith.addf %1, %15 : vector<10x32xf32>
    %c0_12 = arith.constant 0 : index
    %c0_13 = arith.constant 0 : index
    %17 = vector.load %arg6[%c0_12, %c0_13] : memref<1x32xf32, #tpu.memory_space<vmem>>, vector<1x32xf32>
    %c0_14 = arith.constant 0 : index
    %c0_15 = arith.constant 0 : index
    %18 = vector.load %arg7[%c0_14, %c0_15] : memref<1x32xf32, #tpu.memory_space<vmem>>, vector<1x32xf32>
    %cst_16 = arith.constant dense<0.000000e+00> : vector<10xf32>
    %19 = vector.multi_reduction <add>, %16, %cst_16 [1] : vector<10x32xf32> to vector<10xf32>
    %20 = vector.shape_cast %19 : vector<10xf32> to vector<10x1xf32>
    %cst_17 = arith.constant 3.200000e+01 : f32
    %21 = vector.broadcast %cst_17 : f32 to vector<10x1xf32>
    %22 = arith.divf %20, %21 : vector<10x1xf32>
    %23 = vector.broadcast %22 : vector<10x1xf32> to vector<10x32xf32>
    %24 = arith.subf %16, %23 : vector<10x32xf32>
    %25 = arith.mulf %24, %24 : vector<10x32xf32>
    %cst_18 = arith.constant dense<0.000000e+00> : vector<10xf32>
    %26 = vector.multi_reduction <add>, %25, %cst_18 [1] : vector<10x32xf32> to vector<10xf32>
    %27 = vector.shape_cast %26 : vector<10xf32> to vector<10x1xf32>
    %cst_19 = arith.constant 3.200000e+01 : f32
    %28 = vector.broadcast %cst_19 : f32 to vector<10x1xf32>
    %29 = arith.divf %27, %28 : vector<10x1xf32>
    %30 = vector.broadcast %22 : vector<10x1xf32> to vector<10x32xf32>
    %31 = arith.subf %16, %30 : vector<10x32xf32>
    %cst_20 = arith.constant 9.99999974E-6 : f32
    %32 = vector.broadcast %cst_20 : f32 to vector<10x1xf32>
    %33 = arith.addf %29, %32 : vector<10x1xf32>
    %34 = math.rsqrt %33 : vector<10x1xf32>
    %35 = vector.broadcast %34 : vector<10x1xf32> to vector<10x32xf32>
    %36 = arith.mulf %31, %35 : vector<10x32xf32>
    %37 = vector.broadcast %17 : vector<1x32xf32> to vector<10x32xf32>
    %38 = arith.mulf %36, %37 : vector<10x32xf32>
    %39 = vector.broadcast %18 : vector<1x32xf32> to vector<10x32xf32>
    %40 = arith.addf %38, %39 : vector<10x32xf32>
    %c0_21 = arith.constant 0 : index
    %c0_22 = arith.constant 0 : index
    %c0_23 = arith.constant 0 : index
    %41 = vector.load %arg8[%c0_21, %c0_22, %c0_23] : memref<1x10x32xf32, #tpu.memory_space<vmem>>, vector<1x10x32xf32>
    %42 = vector.shape_cast %41 : vector<1x10x32xf32> to vector<10x32xf32>
    %43 = vector.shape_cast %40 : vector<10x32xf32> to vector<1x10x32xf32>
    tpu.vector_store %arg8[%c0_21, %c0_22, %c0_23], %43 {strides = array<i32>} : memref<1x10x32xf32, #tpu.memory_space<vmem>>, vector<1x10x32xf32>,
    return
  }
  func.func @transform_0(%arg0: i32) -> (i32, i32, i32) {
    %c0_i32 = arith.constant 0 : i32
    %c0_i32_0 = arith.constant 0 : i32
    %c0_i32_1 = arith.constant 0 : i32
    return %arg0, %c0_i32, %c0_i32_0 : i32, i32, i32
  }
  func.func @transform_1(%arg0: i32) -> (i32, i32) {
    %c0_i32 = arith.constant 0 : i32
    %c0_i32_0 = arith.constant 0 : i32
    %c0_i32_1 = arith.constant 0 : i32
    return %c0_i32, %c0_i32_0 : i32, i32
  }
  func.func @transform_2(%arg0: i32) -> (i32, i32) {
    %c0_i32 = arith.constant 0 : i32
    %c0_i32_0 = arith.constant 0 : i32
    %c0_i32_1 = arith.constant 0 : i32
    return %c0_i32, %c0_i32_0 : i32, i32
  }
  func.func @transform_3(%arg0: i32) -> (i32, i32) {
    %c0_i32 = arith.constant 0 : i32
    %c0_i32_0 = arith.constant 0 : i32
    %c0_i32_1 = arith.constant 0 : i32
    return %c0_i32, %c0_i32_0 : i32, i32
  }
  func.func @transform_4(%arg0: i32) -> (i32, i32) {
    %c0_i32 = arith.constant 0 : i32
    %c0_i32_0 = arith.constant 0 : i32
    %c0_i32_1 = arith.constant 0 : i32
    return %c0_i32, %c0_i32_0 : i32, i32
  }
  func.func @transform_5(%arg0: i32) -> (i32, i32) {
    %c0_i32 = arith.constant 0 : i32
    %c0_i32_0 = arith.constant 0 : i32
    %c0_i32_1 = arith.constant 0 : i32
    return %c0_i32, %c0_i32_0 : i32, i32
  }
  func.func @transform_6(%arg0: i32) -> (i32, i32) {
    %c0_i32 = arith.constant 0 : i32
    %c0_i32_0 = arith.constant 0 : i32
    %c0_i32_1 = arith.constant 0 : i32
    return %c0_i32, %c0_i32_0 : i32, i32
  }
  func.func @transform_7(%arg0: i32) -> (i32, i32, i32) {
    %c0_i32 = arith.constant 0 : i32
    %c0_i32_0 = arith.constant 0 : i32
    %c0_i32_1 = arith.constant 0 : i32
    return %arg0, %c0_i32, %c0_i32_0 : i32, i32, i32
  }
}

module attributes {stable_mosaic.version = 11 : i64} {
  func.func @_mha_kernel(%arg0: i32, %arg1: memref<1x10x32xf32, #tpu.memory_space<vmem>>, %arg2: memref<1x10x32xf32, #tpu.memory_space<vmem>>, %arg3: memref<32x32xbf16, #tpu.memory_space<vmem>>, %arg4: memref<1x32xf32, #tpu.memory_space<vmem>>, %arg5: memref<32x64xbf16, #tpu.memory_space<vmem>>, %arg6: memref<1x64xf32, #tpu.memory_space<vmem>>, %arg7: memref<32x32xbf16, #tpu.memory_space<vmem>>, %arg8: memref<1x32xf32, #tpu.memory_space<vmem>>, %arg9: memref<1x32xf32, #tpu.memory_space<vmem>>, %arg10: memref<1x32xf32, #tpu.memory_space<vmem>>, %arg11: memref<1x1x10xf32, #tpu.memory_space<vmem>>, %arg12: memref<1x10x32xf32, #tpu.memory_space<vmem>>) attributes {dimension_semantics = [#tpu.dimension_semantics<parallel>], iteration_bounds = array<i64: 2>, scalar_prefetch = 0 : i64, scratch_operands = 0 : i64, tpu.core_type = #tpu.core_type<tc>, window_params = [{transform_indices = @transform_0, window_bounds = array<i64: 1, 10, 32>}, {transform_indices = @transform_1, window_bounds = array<i64: 1, 10, 32>}, {pipeline_mode = #tpu.pipeline_mode<synchronous>, transform_indices = @transform_2, window_bounds = array<i64: 32, 32>}, {pipeline_mode = #tpu.pipeline_mode<synchronous>, transform_indices = @transform_3, window_bounds = array<i64: 1, 32>}, {pipeline_mode = #tpu.pipeline_mode<synchronous>, transform_indices = @transform_4, window_bounds = array<i64: 32, 64>}, {pipeline_mode = #tpu.pipeline_mode<synchronous>, transform_indices = @transform_5, window_bounds = array<i64: 1, 64>}, {pipeline_mode = #tpu.pipeline_mode<synchronous>, transform_indices = @transform_6, window_bounds = array<i64: 32, 32>}, {pipeline_mode = #tpu.pipeline_mode<synchronous>, transform_indices = @transform_7, window_bounds = array<i64: 1, 32>}, {pipeline_mode = #tpu.pipeline_mode<synchronous>, transform_indices = @transform_8, window_bounds = array<i64: 1, 32>}, {pipeline_mode = #tpu.pipeline_mode<synchronous>, transform_indices = @transform_9, window_bounds = array<i64: 1, 32>}, {transform_indices = @transform_10, window_bounds = array<i64: 1, 1, 10>}, {transform_indices = @transform_11, window_bounds = array<i64: 1, 10, 32>}]} {
    %c0 = arith.constant 0 : index
    %c0_0 = arith.constant 0 : index
    %c0_1 = arith.constant 0 : index
    %0 = vector.load %arg1[%c0, %c0_0, %c0_1] : memref<1x10x32xf32, #tpu.memory_space<vmem>>, vector<1x10x32xf32>
    %1 = vector.shape_cast %0 : vector<1x10x32xf32> to vector<10x32xf32>
    %c0_2 = arith.constant 0 : index
    %c0_3 = arith.constant 0 : index
    %c0_4 = arith.constant 0 : index
    %2 = vector.load %arg2[%c0_2, %c0_3, %c0_4] : memref<1x10x32xf32, #tpu.memory_space<vmem>>, vector<1x10x32xf32>
    %3 = vector.shape_cast %2 : vector<1x10x32xf32> to vector<10x32xf32>
    %4 = arith.truncf %1 : vector<10x32xf32> to vector<10x32xbf16>
    %5 = arith.truncf %3 : vector<10x32xf32> to vector<10x32xbf16>
    %c0_5 = arith.constant 0 : index
    %c0_6 = arith.constant 0 : index
    %6 = vector.load %arg3[%c0_5, %c0_6] : memref<32x32xbf16, #tpu.memory_space<vmem>>, vector<32x32xbf16>
    %cst = arith.constant dense<0.000000e+00> : vector<10x32xf32>
    %7 = tpu.matmul %4, %6, %cst {dimension_numbers = #tpu.dot_dimension_numbers<[1], [0], [0], [1], [0, 0, 1, 1], [], []>} : vector<10x32xbf16>, vector<32x32xbf16>, vector<10x32xf32> -> vector<10x32xf32>
    %c0_7 = arith.constant 0 : index
    %c0_8 = arith.constant 0 : index
    %8 = vector.load %arg4[%c0_7, %c0_8] : memref<1x32xf32, #tpu.memory_space<vmem>>, vector<1x32xf32>
    %9 = vector.broadcast %8 : vector<1x32xf32> to vector<10x32xf32>
    %10 = arith.addf %7, %9 : vector<10x32xf32>
    %c0_9 = arith.constant 0 : index
    %c0_10 = arith.constant 0 : index
    %11 = vector.load %arg5[%c0_9, %c0_10] : memref<32x64xbf16, #tpu.memory_space<vmem>>, vector<32x64xbf16>
    %cst_11 = arith.constant dense<0.000000e+00> : vector<10x64xf32>
    %12 = tpu.matmul %5, %11, %cst_11 {dimension_numbers = #tpu.dot_dimension_numbers<[1], [0], [0], [1], [0, 0, 1, 1], [], []>} : vector<10x32xbf16>, vector<32x64xbf16>, vector<10x64xf32> -> vector<10x64xf32>
    %c0_12 = arith.constant 0 : index
    %c0_13 = arith.constant 0 : index
    %13 = vector.load %arg6[%c0_12, %c0_13] : memref<1x64xf32, #tpu.memory_space<vmem>>, vector<1x64xf32>
    %14 = vector.broadcast %13 : vector<1x64xf32> to vector<10x64xf32>
    %15 = arith.addf %12, %14 : vector<10x64xf32>
    %16 = vector.extract_strided_slice %15 {offsets = [0, 0], sizes = [10, 32], strides = [1, 1]} : vector<10x64xf32> to vector<10x32xf32>
    %17 = vector.extract_strided_slice %15 {offsets = [0, 32], sizes = [10, 32], strides = [1, 1]} : vector<10x64xf32> to vector<10x32xf32>
    %c0_14 = arith.constant 0 : index
    %c0_15 = arith.constant 0 : index
    %c0_16 = arith.constant 0 : index
    %18 = vector.load %arg11[%c0_14, %c0_15, %c0_16] : memref<1x1x10xf32, #tpu.memory_space<vmem>>, vector<1x1x10xf32>
    %19 = vector.shape_cast %18 : vector<1x1x10xf32> to vector<1x10xf32>
    %20 = vector.extract_strided_slice %10 {offsets = [0, 0], sizes = [10, 8], strides = [1, 1]} : vector<10x32xf32> to vector<10x8xf32>
    %21 = arith.truncf %20 : vector<10x8xf32> to vector<10x8xbf16>
    %22 = vector.extract_strided_slice %16 {offsets = [0, 0], sizes = [10, 8], strides = [1, 1]} : vector<10x32xf32> to vector<10x8xf32>
    %23 = arith.truncf %22 : vector<10x8xf32> to vector<10x8xbf16>
    %24 = vector.extract_strided_slice %17 {offsets = [0, 0], sizes = [10, 8], strides = [1, 1]} : vector<10x32xf32> to vector<10x8xf32>
    %25 = arith.truncf %24 : vector<10x8xf32> to vector<10x8xbf16>
    %cst_17 = arith.constant dense<0.000000e+00> : vector<10x10xf32>
    %26 = tpu.matmul %21, %23, %cst_17 {dimension_numbers = #tpu.dot_dimension_numbers<[1], [1], [0], [0], [0, 0, 1, 0], [], []>} : vector<10x8xbf16>, vector<10x8xbf16>, vector<10x10xf32> -> vector<10x10xf32>
    %cst_18 = arith.constant 0.353553385 : f32
    %27 = vector.broadcast %cst_18 : f32 to vector<10x10xf32>
    %28 = arith.mulf %26, %27 : vector<10x10xf32>
    %29 = vector.broadcast %19 : vector<1x10xf32> to vector<10x10xf32>
    %30 = arith.addf %28, %29 : vector<10x10xf32>
    %cst_19 = arith.constant dense<0xFF800000> : vector<10xf32>
    %31 = vector.multi_reduction <maximumf>, %30, %cst_19 [1] : vector<10x10xf32> to vector<10xf32>
    %32 = vector.shape_cast %31 : vector<10xf32> to vector<10x1xf32>
    %33 = vector.broadcast %32 : vector<10x1xf32> to vector<10x10xf32>
    %34 = arith.subf %30, %33 : vector<10x10xf32>
    %35 = math.exp %34 : vector<10x10xf32>
    %cst_20 = arith.constant dense<0.000000e+00> : vector<10xf32>
    %36 = vector.multi_reduction <add>, %35, %cst_20 [1] : vector<10x10xf32> to vector<10xf32>
    %37 = vector.shape_cast %36 : vector<10xf32> to vector<10x1xf32>
    %38 = tpu.reciprocal %37 {approx = true} : vector<10x1xf32> -> vector<10x1xf32>
    %39 = vector.broadcast %38 : vector<10x1xf32> to vector<10x10xf32>
    %40 = arith.mulf %35, %39 : vector<10x10xf32>
    %41 = arith.truncf %40 : vector<10x10xf32> to vector<10x10xbf16>
    %cst_21 = arith.constant dense<0.000000e+00> : vector<10x8xf32>
    %42 = tpu.matmul %41, %25, %cst_21 {dimension_numbers = #tpu.dot_dimension_numbers<[1], [0], [0], [1], [0, 0, 1, 1], [], []>} : vector<10x10xbf16>, vector<10x8xbf16>, vector<10x8xf32> -> vector<10x8xf32>
    %43 = arith.truncf %42 : vector<10x8xf32> to vector<10x8xbf16>
    %c0_22 = arith.constant 0 : index
    %c0_23 = arith.constant 0 : index
    %44 = vector.load %arg7[%c0_22, %c0_23] : memref<32x32xbf16, #tpu.memory_space<vmem>>, vector<8x32xbf16>
    %cst_24 = arith.constant dense<0.000000e+00> : vector<10x32xf32>
    %45 = tpu.matmul %43, %44, %cst_24 {dimension_numbers = #tpu.dot_dimension_numbers<[1], [0], [0], [1], [0, 0, 1, 1], [], []>} : vector<10x8xbf16>, vector<8x32xbf16>, vector<10x32xf32> -> vector<10x32xf32>
    %46 = vector.extract_strided_slice %10 {offsets = [0, 8], sizes = [10, 8], strides = [1, 1]} : vector<10x32xf32> to vector<10x8xf32>
    %47 = arith.truncf %46 : vector<10x8xf32> to vector<10x8xbf16>
    %48 = vector.extract_strided_slice %16 {offsets = [0, 8], sizes = [10, 8], strides = [1, 1]} : vector<10x32xf32> to vector<10x8xf32>
    %49 = arith.truncf %48 : vector<10x8xf32> to vector<10x8xbf16>
    %50 = vector.extract_strided_slice %17 {offsets = [0, 8], sizes = [10, 8], strides = [1, 1]} : vector<10x32xf32> to vector<10x8xf32>
    %51 = arith.truncf %50 : vector<10x8xf32> to vector<10x8xbf16>
    %cst_25 = arith.constant dense<0.000000e+00> : vector<10x10xf32>
    %52 = tpu.matmul %47, %49, %cst_25 {dimension_numbers = #tpu.dot_dimension_numbers<[1], [1], [0], [0], [0, 0, 1, 0], [], []>} : vector<10x8xbf16>, vector<10x8xbf16>, vector<10x10xf32> -> vector<10x10xf32>
    %cst_26 = arith.constant 0.353553385 : f32
    %53 = vector.broadcast %cst_26 : f32 to vector<10x10xf32>
    %54 = arith.mulf %52, %53 : vector<10x10xf32>
    %55 = vector.broadcast %19 : vector<1x10xf32> to vector<10x10xf32>
    %56 = arith.addf %54, %55 : vector<10x10xf32>
    %cst_27 = arith.constant dense<0xFF800000> : vector<10xf32>
    %57 = vector.multi_reduction <maximumf>, %56, %cst_27 [1] : vector<10x10xf32> to vector<10xf32>
    %58 = vector.shape_cast %57 : vector<10xf32> to vector<10x1xf32>
    %59 = vector.broadcast %58 : vector<10x1xf32> to vector<10x10xf32>
    %60 = arith.subf %56, %59 : vector<10x10xf32>
    %61 = math.exp %60 : vector<10x10xf32>
    %cst_28 = arith.constant dense<0.000000e+00> : vector<10xf32>
    %62 = vector.multi_reduction <add>, %61, %cst_28 [1] : vector<10x10xf32> to vector<10xf32>
    %63 = vector.shape_cast %62 : vector<10xf32> to vector<10x1xf32>
    %64 = tpu.reciprocal %63 {approx = true} : vector<10x1xf32> -> vector<10x1xf32>
    %65 = vector.broadcast %64 : vector<10x1xf32> to vector<10x10xf32>
    %66 = arith.mulf %61, %65 : vector<10x10xf32>
    %67 = arith.truncf %66 : vector<10x10xf32> to vector<10x10xbf16>
    %cst_29 = arith.constant dense<0.000000e+00> : vector<10x8xf32>
    %68 = tpu.matmul %67, %51, %cst_29 {dimension_numbers = #tpu.dot_dimension_numbers<[1], [0], [0], [1], [0, 0, 1, 1], [], []>} : vector<10x10xbf16>, vector<10x8xbf16>, vector<10x8xf32> -> vector<10x8xf32>
    %69 = arith.truncf %68 : vector<10x8xf32> to vector<10x8xbf16>
    %c8 = arith.constant 8 : index
    %c0_30 = arith.constant 0 : index
    %70 = vector.load %arg7[%c8, %c0_30] : memref<32x32xbf16, #tpu.memory_space<vmem>>, vector<8x32xbf16>
    %cst_31 = arith.constant dense<0.000000e+00> : vector<10x32xf32>
    %71 = tpu.matmul %69, %70, %cst_31 {dimension_numbers = #tpu.dot_dimension_numbers<[1], [0], [0], [1], [0, 0, 1, 1], [], []>} : vector<10x8xbf16>, vector<8x32xbf16>, vector<10x32xf32> -> vector<10x32xf32>
    %72 = arith.addf %45, %71 : vector<10x32xf32>
    %73 = vector.extract_strided_slice %10 {offsets = [0, 16], sizes = [10, 8], strides = [1, 1]} : vector<10x32xf32> to vector<10x8xf32>
    %74 = arith.truncf %73 : vector<10x8xf32> to vector<10x8xbf16>
    %75 = vector.extract_strided_slice %16 {offsets = [0, 16], sizes = [10, 8], strides = [1, 1]} : vector<10x32xf32> to vector<10x8xf32>
    %76 = arith.truncf %75 : vector<10x8xf32> to vector<10x8xbf16>
    %77 = vector.extract_strided_slice %17 {offsets = [0, 16], sizes = [10, 8], strides = [1, 1]} : vector<10x32xf32> to vector<10x8xf32>
    %78 = arith.truncf %77 : vector<10x8xf32> to vector<10x8xbf16>
    %cst_32 = arith.constant dense<0.000000e+00> : vector<10x10xf32>
    %79 = tpu.matmul %74, %76, %cst_32 {dimension_numbers = #tpu.dot_dimension_numbers<[1], [1], [0], [0], [0, 0, 1, 0], [], []>} : vector<10x8xbf16>, vector<10x8xbf16>, vector<10x10xf32> -> vector<10x10xf32>
    %cst_33 = arith.constant 0.353553385 : f32
    %80 = vector.broadcast %cst_33 : f32 to vector<10x10xf32>
    %81 = arith.mulf %79, %80 : vector<10x10xf32>
    %82 = vector.broadcast %19 : vector<1x10xf32> to vector<10x10xf32>
    %83 = arith.addf %81, %82 : vector<10x10xf32>
    %cst_34 = arith.constant dense<0xFF800000> : vector<10xf32>
    %84 = vector.multi_reduction <maximumf>, %83, %cst_34 [1] : vector<10x10xf32> to vector<10xf32>
    %85 = vector.shape_cast %84 : vector<10xf32> to vector<10x1xf32>
    %86 = vector.broadcast %85 : vector<10x1xf32> to vector<10x10xf32>
    %87 = arith.subf %83, %86 : vector<10x10xf32>
    %88 = math.exp %87 : vector<10x10xf32>
    %cst_35 = arith.constant dense<0.000000e+00> : vector<10xf32>
    %89 = vector.multi_reduction <add>, %88, %cst_35 [1] : vector<10x10xf32> to vector<10xf32>
    %90 = vector.shape_cast %89 : vector<10xf32> to vector<10x1xf32>
    %91 = tpu.reciprocal %90 {approx = true} : vector<10x1xf32> -> vector<10x1xf32>
    %92 = vector.broadcast %91 : vector<10x1xf32> to vector<10x10xf32>
    %93 = arith.mulf %88, %92 : vector<10x10xf32>
    %94 = arith.truncf %93 : vector<10x10xf32> to vector<10x10xbf16>
    %cst_36 = arith.constant dense<0.000000e+00> : vector<10x8xf32>
    %95 = tpu.matmul %94, %78, %cst_36 {dimension_numbers = #tpu.dot_dimension_numbers<[1], [0], [0], [1], [0, 0, 1, 1], [], []>} : vector<10x10xbf16>, vector<10x8xbf16>, vector<10x8xf32> -> vector<10x8xf32>
    %96 = arith.truncf %95 : vector<10x8xf32> to vector<10x8xbf16>
    %c16 = arith.constant 16 : index
    %c0_37 = arith.constant 0 : index
    %97 = vector.load %arg7[%c16, %c0_37] : memref<32x32xbf16, #tpu.memory_space<vmem>>, vector<8x32xbf16>
    %cst_38 = arith.constant dense<0.000000e+00> : vector<10x32xf32>
    %98 = tpu.matmul %96, %97, %cst_38 {dimension_numbers = #tpu.dot_dimension_numbers<[1], [0], [0], [1], [0, 0, 1, 1], [], []>} : vector<10x8xbf16>, vector<8x32xbf16>, vector<10x32xf32> -> vector<10x32xf32>
    %99 = arith.addf %72, %98 : vector<10x32xf32>
    %100 = vector.extract_strided_slice %10 {offsets = [0, 24], sizes = [10, 8], strides = [1, 1]} : vector<10x32xf32> to vector<10x8xf32>
    %101 = arith.truncf %100 : vector<10x8xf32> to vector<10x8xbf16>
    %102 = vector.extract_strided_slice %16 {offsets = [0, 24], sizes = [10, 8], strides = [1, 1]} : vector<10x32xf32> to vector<10x8xf32>
    %103 = arith.truncf %102 : vector<10x8xf32> to vector<10x8xbf16>
    %104 = vector.extract_strided_slice %17 {offsets = [0, 24], sizes = [10, 8], strides = [1, 1]} : vector<10x32xf32> to vector<10x8xf32>
    %105 = arith.truncf %104 : vector<10x8xf32> to vector<10x8xbf16>
    %cst_39 = arith.constant dense<0.000000e+00> : vector<10x10xf32>
    %106 = tpu.matmul %101, %103, %cst_39 {dimension_numbers = #tpu.dot_dimension_numbers<[1], [1], [0], [0], [0, 0, 1, 0], [], []>} : vector<10x8xbf16>, vector<10x8xbf16>, vector<10x10xf32> -> vector<10x10xf32>
    %cst_40 = arith.constant 0.353553385 : f32
    %107 = vector.broadcast %cst_40 : f32 to vector<10x10xf32>
    %108 = arith.mulf %106, %107 : vector<10x10xf32>
    %109 = vector.broadcast %19 : vector<1x10xf32> to vector<10x10xf32>
    %110 = arith.addf %108, %109 : vector<10x10xf32>
    %cst_41 = arith.constant dense<0xFF800000> : vector<10xf32>
    %111 = vector.multi_reduction <maximumf>, %110, %cst_41 [1] : vector<10x10xf32> to vector<10xf32>
    %112 = vector.shape_cast %111 : vector<10xf32> to vector<10x1xf32>
    %113 = vector.broadcast %112 : vector<10x1xf32> to vector<10x10xf32>
    %114 = arith.subf %110, %113 : vector<10x10xf32>
    %115 = math.exp %114 : vector<10x10xf32>
    %cst_42 = arith.constant dense<0.000000e+00> : vector<10xf32>
    %116 = vector.multi_reduction <add>, %115, %cst_42 [1] : vector<10x10xf32> to vector<10xf32>
    %117 = vector.shape_cast %116 : vector<10xf32> to vector<10x1xf32>
    %118 = tpu.reciprocal %117 {approx = true} : vector<10x1xf32> -> vector<10x1xf32>
    %119 = vector.broadcast %118 : vector<10x1xf32> to vector<10x10xf32>
    %120 = arith.mulf %115, %119 : vector<10x10xf32>
    %121 = arith.truncf %120 : vector<10x10xf32> to vector<10x10xbf16>
    %cst_43 = arith.constant dense<0.000000e+00> : vector<10x8xf32>
    %122 = tpu.matmul %121, %105, %cst_43 {dimension_numbers = #tpu.dot_dimension_numbers<[1], [0], [0], [1], [0, 0, 1, 1], [], []>} : vector<10x10xbf16>, vector<10x8xbf16>, vector<10x8xf32> -> vector<10x8xf32>
    %123 = arith.truncf %122 : vector<10x8xf32> to vector<10x8xbf16>
    %c24 = arith.constant 24 : index
    %c0_44 = arith.constant 0 : index
    %124 = vector.load %arg7[%c24, %c0_44] : memref<32x32xbf16, #tpu.memory_space<vmem>>, vector<8x32xbf16>
    %cst_45 = arith.constant dense<0.000000e+00> : vector<10x32xf32>
    %125 = tpu.matmul %123, %124, %cst_45 {dimension_numbers = #tpu.dot_dimension_numbers<[1], [0], [0], [1], [0, 0, 1, 1], [], []>} : vector<10x8xbf16>, vector<8x32xbf16>, vector<10x32xf32> -> vector<10x32xf32>
    %126 = arith.addf %99, %125 : vector<10x32xf32>
    %c0_46 = arith.constant 0 : index
    %c0_47 = arith.constant 0 : index
    %127 = vector.load %arg8[%c0_46, %c0_47] : memref<1x32xf32, #tpu.memory_space<vmem>>, vector<1x32xf32>
    %128 = vector.broadcast %127 : vector<1x32xf32> to vector<10x32xf32>
    %129 = arith.addf %126, %128 : vector<10x32xf32>
    %130 = arith.addf %129, %1 : vector<10x32xf32>
    %c0_48 = arith.constant 0 : index
    %c0_49 = arith.constant 0 : index
    %131 = vector.load %arg9[%c0_48, %c0_49] : memref<1x32xf32, #tpu.memory_space<vmem>>, vector<1x32xf32>
    %c0_50 = arith.constant 0 : index
    %c0_51 = arith.constant 0 : index
    %132 = vector.load %arg10[%c0_50, %c0_51] : memref<1x32xf32, #tpu.memory_space<vmem>>, vector<1x32xf32>
    %cst_52 = arith.constant dense<0.000000e+00> : vector<10xf32>
    %133 = vector.multi_reduction <add>, %130, %cst_52 [1] : vector<10x32xf32> to vector<10xf32>
    %134 = vector.shape_cast %133 : vector<10xf32> to vector<10x1xf32>
    %cst_53 = arith.constant 3.200000e+01 : f32
    %135 = vector.broadcast %cst_53 : f32 to vector<10x1xf32>
    %136 = arith.divf %134, %135 : vector<10x1xf32>
    %137 = vector.broadcast %136 : vector<10x1xf32> to vector<10x32xf32>
    %138 = arith.subf %130, %137 : vector<10x32xf32>
    %139 = arith.mulf %138, %138 : vector<10x32xf32>
    %cst_54 = arith.constant dense<0.000000e+00> : vector<10xf32>
    %140 = vector.multi_reduction <add>, %139, %cst_54 [1] : vector<10x32xf32> to vector<10xf32>
    %141 = vector.shape_cast %140 : vector<10xf32> to vector<10x1xf32>
    %cst_55 = arith.constant 3.200000e+01 : f32
    %142 = vector.broadcast %cst_55 : f32 to vector<10x1xf32>
    %143 = arith.divf %141, %142 : vector<10x1xf32>
    %144 = vector.broadcast %136 : vector<10x1xf32> to vector<10x32xf32>
    %145 = arith.subf %130, %144 : vector<10x32xf32>
    %cst_56 = arith.constant 9.99999974E-6 : f32
    %146 = vector.broadcast %cst_56 : f32 to vector<10x1xf32>
    %147 = arith.addf %143, %146 : vector<10x1xf32>
    %148 = math.rsqrt %147 : vector<10x1xf32>
    %149 = vector.broadcast %148 : vector<10x1xf32> to vector<10x32xf32>
    %150 = arith.mulf %145, %149 : vector<10x32xf32>
    %151 = vector.broadcast %131 : vector<1x32xf32> to vector<10x32xf32>
    %152 = arith.mulf %150, %151 : vector<10x32xf32>
    %153 = vector.broadcast %132 : vector<1x32xf32> to vector<10x32xf32>
    %154 = arith.addf %152, %153 : vector<10x32xf32>
    %c0_57 = arith.constant 0 : index
    %c0_58 = arith.constant 0 : index
    %c0_59 = arith.constant 0 : index
    %155 = vector.load %arg12[%c0_57, %c0_58, %c0_59] : memref<1x10x32xf32, #tpu.memory_space<vmem>>, vector<1x10x32xf32>
    %156 = vector.shape_cast %155 : vector<1x10x32xf32> to vector<10x32xf32>
    %157 = vector.shape_cast %154 : vector<10x32xf32> to vector<1x10x32xf32>
    tpu.vector_store %arg12[%c0_57, %c0_58, %c0_59], %157 {strides = array<i32>} : memref<1x10x32xf32, #tpu.memory_space<vmem>>, vector<1x10x32xf32>,
    return
  }
  func.func @transform_0(%arg0: i32) -> (i32, i32, i32) {
    %c0_i32 = arith.constant 0 : i32
    %c0_i32_0 = arith.constant 0 : i32
    %c0_i32_1 = arith.constant 0 : i32
    return %arg0, %c0_i32, %c0_i32_0 : i32, i32, i32
  }
  func.func @transform_1(%arg0: i32) -> (i32, i32, i32) {
    %c0_i32 = arith.constant 0 : i32
    %c0_i32_0 = arith.constant 0 : i32
    %c0_i32_1 = arith.constant 0 : i32
    return %arg0, %c0_i32, %c0_i32_0 : i32, i32, i32
  }
  func.func @transform_2(%arg0: i32) -> (i32, i32) {
    %c0_i32 = arith.constant 0 : i32
    %c0_i32_0 = arith.constant 0 : i32
    %c0_i32_1 = arith.constant 0 : i32
    return %c0_i32, %c0_i32_0 : i32, i32
  }
  func.func @transform_3(%arg0: i32) -> (i32, i32) {
    %c0_i32 = arith.constant 0 : i32
    %c0_i32_0 = arith.constant 0 : i32
    %c0_i32_1 = arith.constant 0 : i32
    return %c0_i32, %c0_i32_0 : i32, i32
  }
  func.func @transform_4(%arg0: i32) -> (i32, i32) {
    %c0_i32 = arith.constant 0 : i32
    %c0_i32_0 = arith.constant 0 : i32
    %c0_i32_1 = arith.constant 0 : i32
    return %c0_i32, %c0_i32_0 : i32, i32
  }
  func.func @transform_5(%arg0: i32) -> (i32, i32) {
    %c0_i32 = arith.constant 0 : i32
    %c0_i32_0 = arith.constant 0 : i32
    %c0_i32_1 = arith.constant 0 : i32
    return %c0_i32, %c0_i32_0 : i32, i32
  }
  func.func @transform_6(%arg0: i32) -> (i32, i32) {
    %c0_i32 = arith.constant 0 : i32
    %c0_i32_0 = arith.constant 0 : i32
    %c0_i32_1 = arith.constant 0 : i32
    return %c0_i32, %c0_i32_0 : i32, i32
  }
  func.func @transform_7(%arg0: i32) -> (i32, i32) {
    %c0_i32 = arith.constant 0 : i32
    %c0_i32_0 = arith.constant 0 : i32
    %c0_i32_1 = arith.constant 0 : i32
    return %c0_i32, %c0_i32_0 : i32, i32
  }
  func.func @transform_8(%arg0: i32) -> (i32, i32) {
    %c0_i32 = arith.constant 0 : i32
    %c0_i32_0 = arith.constant 0 : i32
    %c0_i32_1 = arith.constant 0 : i32
    return %c0_i32, %c0_i32_0 : i32, i32
  }
  func.func @transform_9(%arg0: i32) -> (i32, i32) {
    %c0_i32 = arith.constant 0 : i32
    %c0_i32_0 = arith.constant 0 : i32
    %c0_i32_1 = arith.constant 0 : i32
    return %c0_i32, %c0_i32_0 : i32, i32
  }
  func.func @transform_10(%arg0: i32) -> (i32, i32, i32) {
    %c0_i32 = arith.constant 0 : i32
    %c0_i32_0 = arith.constant 0 : i32
    %c0_i32_1 = arith.constant 0 : i32
    return %arg0, %c0_i32, %c0_i32_0 : i32, i32, i32
  }
  func.func @transform_11(%arg0: i32) -> (i32, i32, i32) {
    %c0_i32 = arith.constant 0 : i32
    %c0_i32_0 = arith.constant 0 : i32
    %c0_i32_1 = arith.constant 0 : i32
    return %arg0, %c0_i32, %c0_i32_0 : i32, i32, i32
  }
}

module attributes {stable_mosaic.version = 11 : i64} {
  func.func @_mha_kernel(%arg0: i32, %arg1: memref<1x8x32xf32, #tpu.memory_space<vmem>>, %arg2: memref<1x8x32xf32, #tpu.memory_space<vmem>>, %arg3: memref<32x32xbf16, #tpu.memory_space<vmem>>, %arg4: memref<1x32xf32, #tpu.memory_space<vmem>>, %arg5: memref<32x64xbf16, #tpu.memory_space<vmem>>, %arg6: memref<1x64xf32, #tpu.memory_space<vmem>>, %arg7: memref<32x32xbf16, #tpu.memory_space<vmem>>, %arg8: memref<1x32xf32, #tpu.memory_space<vmem>>, %arg9: memref<1x32xf32, #tpu.memory_space<vmem>>, %arg10: memref<1x32xf32, #tpu.memory_space<vmem>>, %arg11: memref<1x8x32xf32, #tpu.memory_space<vmem>>) attributes {dimension_semantics = [#tpu.dimension_semantics<parallel>], iteration_bounds = array<i64: 2>, scalar_prefetch = 0 : i64, scratch_operands = 0 : i64, tpu.core_type = #tpu.core_type<tc>, window_params = [{transform_indices = @transform_0, window_bounds = array<i64: 1, 8, 32>}, {transform_indices = @transform_1, window_bounds = array<i64: 1, 8, 32>}, {pipeline_mode = #tpu.pipeline_mode<synchronous>, transform_indices = @transform_2, window_bounds = array<i64: 32, 32>}, {pipeline_mode = #tpu.pipeline_mode<synchronous>, transform_indices = @transform_3, window_bounds = array<i64: 1, 32>}, {pipeline_mode = #tpu.pipeline_mode<synchronous>, transform_indices = @transform_4, window_bounds = array<i64: 32, 64>}, {pipeline_mode = #tpu.pipeline_mode<synchronous>, transform_indices = @transform_5, window_bounds = array<i64: 1, 64>}, {pipeline_mode = #tpu.pipeline_mode<synchronous>, transform_indices = @transform_6, window_bounds = array<i64: 32, 32>}, {pipeline_mode = #tpu.pipeline_mode<synchronous>, transform_indices = @transform_7, window_bounds = array<i64: 1, 32>}, {pipeline_mode = #tpu.pipeline_mode<synchronous>, transform_indices = @transform_8, window_bounds = array<i64: 1, 32>}, {pipeline_mode = #tpu.pipeline_mode<synchronous>, transform_indices = @transform_9, window_bounds = array<i64: 1, 32>}, {transform_indices = @transform_10, window_bounds = array<i64: 1, 8, 32>}]} {
    %c0 = arith.constant 0 : index
    %c0_0 = arith.constant 0 : index
    %c0_1 = arith.constant 0 : index
    %0 = vector.load %arg1[%c0, %c0_0, %c0_1] : memref<1x8x32xf32, #tpu.memory_space<vmem>>, vector<1x8x32xf32>
    %1 = vector.shape_cast %0 : vector<1x8x32xf32> to vector<8x32xf32>
    %c0_2 = arith.constant 0 : index
    %c0_3 = arith.constant 0 : index
    %c0_4 = arith.constant 0 : index
    %2 = vector.load %arg2[%c0_2, %c0_3, %c0_4] : memref<1x8x32xf32, #tpu.memory_space<vmem>>, vector<1x8x32xf32>
    %3 = vector.shape_cast %2 : vector<1x8x32xf32> to vector<8x32xf32>
    %4 = arith.truncf %1 : vector<8x32xf32> to vector<8x32xbf16>
    %5 = arith.truncf %3 : vector<8x32xf32> to vector<8x32xbf16>
    %c0_5 = arith.constant 0 : index
    %c0_6 = arith.constant 0 : index
    %6 = vector.load %arg3[%c0_5, %c0_6] : memref<32x32xbf16, #tpu.memory_space<vmem>>, vector<32x32xbf16>
    %cst = arith.constant dense<0.000000e+00> : vector<8x32xf32>
    %7 = tpu.matmul %4, %6, %cst {dimension_numbers = #tpu.dot_dimension_numbers<[1], [0], [0], [1], [0, 0, 1, 1], [], []>} : vector<8x32xbf16>, vector<32x32xbf16>, vector<8x32xf32> -> vector<8x32xf32>
    %c0_7 = arith.constant 0 : index
    %c0_8 = arith.constant 0 : index
    %8 = vector.load %arg4[%c0_7, %c0_8] : memref<1x32xf32, #tpu.memory_space<vmem>>, vector<1x32xf32>
    %9 = vector.broadcast %8 : vector<1x32xf32> to vector<8x32xf32>
    %10 = arith.addf %7, %9 : vector<8x32xf32>
    %c0_9 = arith.constant 0 : index
    %c0_10 = arith.constant 0 : index
    %11 = vector.load %arg5[%c0_9, %c0_10] : memref<32x64xbf16, #tpu.memory_space<vmem>>, vector<32x64xbf16>
    %cst_11 = arith.constant dense<0.000000e+00> : vector<8x64xf32>
    %12 = tpu.matmul %5, %11, %cst_11 {dimension_numbers = #tpu.dot_dimension_numbers<[1], [0], [0], [1], [0, 0, 1, 1], [], []>} : vector<8x32xbf16>, vector<32x64xbf16>, vector<8x64xf32> -> vector<8x64xf32>
    %c0_12 = arith.constant 0 : index
    %c0_13 = arith.constant 0 : index
    %13 = vector.load %arg6[%c0_12, %c0_13] : memref<1x64xf32, #tpu.memory_space<vmem>>, vector<1x64xf32>
    %14 = vector.broadcast %13 : vector<1x64xf32> to vector<8x64xf32>
    %15 = arith.addf %12, %14 : vector<8x64xf32>
    %16 = vector.extract_strided_slice %15 {offsets = [0, 0], sizes = [8, 32], strides = [1, 1]} : vector<8x64xf32> to vector<8x32xf32>
    %17 = vector.extract_strided_slice %15 {offsets = [0, 32], sizes = [8, 32], strides = [1, 1]} : vector<8x64xf32> to vector<8x32xf32>
    %18 = tpu.iota {dimensions = array<i32: 0>} : vector<8x8xi32>
    %19 = tpu.iota {dimensions = array<i32: 1>} : vector<8x8xi32>
    %20 = arith.cmpi sle, %19, %18 : vector<8x8xi32>
    %cst_14 = arith.constant 0.000000e+00 : f32
    %cst_15 = arith.constant -1.000000e+09 : f32
    %21 = vector.broadcast %cst_14 : f32 to vector<8x8xf32>
    %22 = vector.broadcast %cst_15 : f32 to vector<8x8xf32>
    %23 = arith.select %20, %21, %22 : vector<8x8xi1>, vector<8x8xf32>
    %24 = vector.extract_strided_slice %10 {offsets = [0, 0], sizes = [8, 8], strides = [1, 1]} : vector<8x32xf32> to vector<8x8xf32>
    %25 = arith.truncf %24 : vector<8x8xf32> to vector<8x8xbf16>
    %26 = vector.extract_strided_slice %16 {offsets = [0, 0], sizes = [8, 8], strides = [1, 1]} : vector<8x32xf32> to vector<8x8xf32>
    %27 = arith.truncf %26 : vector<8x8xf32> to vector<8x8xbf16>
    %28 = vector.extract_strided_slice %17 {offsets = [0, 0], sizes = [8, 8], strides = [1, 1]} : vector<8x32xf32> to vector<8x8xf32>
    %29 = arith.truncf %28 : vector<8x8xf32> to vector<8x8xbf16>
    %cst_16 = arith.constant dense<0.000000e+00> : vector<8x8xf32>
    %30 = tpu.matmul %25, %27, %cst_16 {dimension_numbers = #tpu.dot_dimension_numbers<[1], [1], [0], [0], [0, 0, 1, 0], [], []>} : vector<8x8xbf16>, vector<8x8xbf16>, vector<8x8xf32> -> vector<8x8xf32>
    %cst_17 = arith.constant 0.353553385 : f32
    %31 = vector.broadcast %cst_17 : f32 to vector<8x8xf32>
    %32 = arith.mulf %30, %31 : vector<8x8xf32>
    %33 = arith.addf %32, %23 : vector<8x8xf32>
    %cst_18 = arith.constant dense<0xFF800000> : vector<8xf32>
    %34 = vector.multi_reduction <maximumf>, %33, %cst_18 [1] : vector<8x8xf32> to vector<8xf32>
    %35 = vector.shape_cast %34 : vector<8xf32> to vector<8x1xf32>
    %36 = vector.broadcast %35 : vector<8x1xf32> to vector<8x8xf32>
    %37 = arith.subf %33, %36 : vector<8x8xf32>
    %38 = math.exp %37 : vector<8x8xf32>
    %cst_19 = arith.constant dense<0.000000e+00> : vector<8xf32>
    %39 = vector.multi_reduction <add>, %38, %cst_19 [1] : vector<8x8xf32> to vector<8xf32>
    %40 = vector.shape_cast %39 : vector<8xf32> to vector<8x1xf32>
    %41 = tpu.reciprocal %40 {approx = true} : vector<8x1xf32> -> vector<8x1xf32>
    %42 = vector.broadcast %41 : vector<8x1xf32> to vector<8x8xf32>
    %43 = arith.mulf %38, %42 : vector<8x8xf32>
    %44 = arith.truncf %43 : vector<8x8xf32> to vector<8x8xbf16>
    %cst_20 = arith.constant dense<0.000000e+00> : vector<8x8xf32>
    %45 = tpu.matmul %44, %29, %cst_20 {dimension_numbers = #tpu.dot_dimension_numbers<[1], [0], [0], [1], [0, 0, 1, 1], [], []>} : vector<8x8xbf16>, vector<8x8xbf16>, vector<8x8xf32> -> vector<8x8xf32>
    %46 = arith.truncf %45 : vector<8x8xf32> to vector<8x8xbf16>
    %c0_21 = arith.constant 0 : index
    %c0_22 = arith.constant 0 : index
    %47 = vector.load %arg7[%c0_21, %c0_22] : memref<32x32xbf16, #tpu.memory_space<vmem>>, vector<8x32xbf16>
    %cst_23 = arith.constant dense<0.000000e+00> : vector<8x32xf32>
    %48 = tpu.matmul %46, %47, %cst_23 {dimension_numbers = #tpu.dot_dimension_numbers<[1], [0], [0], [1], [0, 0, 1, 1], [], []>} : vector<8x8xbf16>, vector<8x32xbf16>, vector<8x32xf32> -> vector<8x32xf32>
    %49 = vector.extract_strided_slice %10 {offsets = [0, 8], sizes = [8, 8], strides = [1, 1]} : vector<8x32xf32> to vector<8x8xf32>
    %50 = arith.truncf %49 : vector<8x8xf32> to vector<8x8xbf16>
    %51 = vector.extract_strided_slice %16 {offsets = [0, 8], sizes = [8, 8], strides = [1, 1]} : vector<8x32xf32> to vector<8x8xf32>
    %52 = arith.truncf %51 : vector<8x8xf32> to vector<8x8xbf16>
    %53 = vector.extract_strided_slice %17 {offsets = [0, 8], sizes = [8, 8], strides = [1, 1]} : vector<8x32xf32> to vector<8x8xf32>
    %54 = arith.truncf %53 : vector<8x8xf32> to vector<8x8xbf16>
    %cst_24 = arith.constant dense<0.000000e+00> : vector<8x8xf32>
    %55 = tpu.matmul %50, %52, %cst_24 {dimension_numbers = #tpu.dot_dimension_numbers<[1], [1], [0], [0], [0, 0, 1, 0], [], []>} : vector<8x8xbf16>, vector<8x8xbf16>, vector<8x8xf32> -> vector<8x8xf32>
    %cst_25 = arith.constant 0.353553385 : f32
    %56 = vector.broadcast %cst_25 : f32 to vector<8x8xf32>
    %57 = arith.mulf %55, %56 : vector<8x8xf32>
    %58 = arith.addf %57, %23 : vector<8x8xf32>
    %cst_26 = arith.constant dense<0xFF800000> : vector<8xf32>
    %59 = vector.multi_reduction <maximumf>, %58, %cst_26 [1] : vector<8x8xf32> to vector<8xf32>
    %60 = vector.shape_cast %59 : vector<8xf32> to vector<8x1xf32>
    %61 = vector.broadcast %60 : vector<8x1xf32> to vector<8x8xf32>
    %62 = arith.subf %58, %61 : vector<8x8xf32>
    %63 = math.exp %62 : vector<8x8xf32>
    %cst_27 = arith.constant dense<0.000000e+00> : vector<8xf32>
    %64 = vector.multi_reduction <add>, %63, %cst_27 [1] : vector<8x8xf32> to vector<8xf32>
    %65 = vector.shape_cast %64 : vector<8xf32> to vector<8x1xf32>
    %66 = tpu.reciprocal %65 {approx = true} : vector<8x1xf32> -> vector<8x1xf32>
    %67 = vector.broadcast %66 : vector<8x1xf32> to vector<8x8xf32>
    %68 = arith.mulf %63, %67 : vector<8x8xf32>
    %69 = arith.truncf %68 : vector<8x8xf32> to vector<8x8xbf16>
    %cst_28 = arith.constant dense<0.000000e+00> : vector<8x8xf32>
    %70 = tpu.matmul %69, %54, %cst_28 {dimension_numbers = #tpu.dot_dimension_numbers<[1], [0], [0], [1], [0, 0, 1, 1], [], []>} : vector<8x8xbf16>, vector<8x8xbf16>, vector<8x8xf32> -> vector<8x8xf32>
    %71 = arith.truncf %70 : vector<8x8xf32> to vector<8x8xbf16>
    %c8 = arith.constant 8 : index
    %c0_29 = arith.constant 0 : index
    %72 = vector.load %arg7[%c8, %c0_29] : memref<32x32xbf16, #tpu.memory_space<vmem>>, vector<8x32xbf16>
    %cst_30 = arith.constant dense<0.000000e+00> : vector<8x32xf32>
    %73 = tpu.matmul %71, %72, %cst_30 {dimension_numbers = #tpu.dot_dimension_numbers<[1], [0], [0], [1], [0, 0, 1, 1], [], []>} : vector<8x8xbf16>, vector<8x32xbf16>, vector<8x32xf32> -> vector<8x32xf32>
    %74 = arith.addf %48, %73 : vector<8x32xf32>
    %75 = vector.extract_strided_slice %10 {offsets = [0, 16], sizes = [8, 8], strides = [1, 1]} : vector<8x32xf32> to vector<8x8xf32>
    %76 = arith.truncf %75 : vector<8x8xf32> to vector<8x8xbf16>
    %77 = vector.extract_strided_slice %16 {offsets = [0, 16], sizes = [8, 8], strides = [1, 1]} : vector<8x32xf32> to vector<8x8xf32>
    %78 = arith.truncf %77 : vector<8x8xf32> to vector<8x8xbf16>
    %79 = vector.extract_strided_slice %17 {offsets = [0, 16], sizes = [8, 8], strides = [1, 1]} : vector<8x32xf32> to vector<8x8xf32>
    %80 = arith.truncf %79 : vector<8x8xf32> to vector<8x8xbf16>
    %cst_31 = arith.constant dense<0.000000e+00> : vector<8x8xf32>
    %81 = tpu.matmul %76, %78, %cst_31 {dimension_numbers = #tpu.dot_dimension_numbers<[1], [1], [0], [0], [0, 0, 1, 0], [], []>} : vector<8x8xbf16>, vector<8x8xbf16>, vector<8x8xf32> -> vector<8x8xf32>
    %cst_32 = arith.constant 0.353553385 : f32
    %82 = vector.broadcast %cst_32 : f32 to vector<8x8xf32>
    %83 = arith.mulf %81, %82 : vector<8x8xf32>
    %84 = arith.addf %83, %23 : vector<8x8xf32>
    %cst_33 = arith.constant dense<0xFF800000> : vector<8xf32>
    %85 = vector.multi_reduction <maximumf>, %84, %cst_33 [1] : vector<8x8xf32> to vector<8xf32>
    %86 = vector.shape_cast %85 : vector<8xf32> to vector<8x1xf32>
    %87 = vector.broadcast %86 : vector<8x1xf32> to vector<8x8xf32>
    %88 = arith.subf %84, %87 : vector<8x8xf32>
    %89 = math.exp %88 : vector<8x8xf32>
    %cst_34 = arith.constant dense<0.000000e+00> : vector<8xf32>
    %90 = vector.multi_reduction <add>, %89, %cst_34 [1] : vector<8x8xf32> to vector<8xf32>
    %91 = vector.shape_cast %90 : vector<8xf32> to vector<8x1xf32>
    %92 = tpu.reciprocal %91 {approx = true} : vector<8x1xf32> -> vector<8x1xf32>
    %93 = vector.broadcast %92 : vector<8x1xf32> to vector<8x8xf32>
    %94 = arith.mulf %89, %93 : vector<8x8xf32>
    %95 = arith.truncf %94 : vector<8x8xf32> to vector<8x8xbf16>
    %cst_35 = arith.constant dense<0.000000e+00> : vector<8x8xf32>
    %96 = tpu.matmul %95, %80, %cst_35 {dimension_numbers = #tpu.dot_dimension_numbers<[1], [0], [0], [1], [0, 0, 1, 1], [], []>} : vector<8x8xbf16>, vector<8x8xbf16>, vector<8x8xf32> -> vector<8x8xf32>
    %97 = arith.truncf %96 : vector<8x8xf32> to vector<8x8xbf16>
    %c16 = arith.constant 16 : index
    %c0_36 = arith.constant 0 : index
    %98 = vector.load %arg7[%c16, %c0_36] : memref<32x32xbf16, #tpu.memory_space<vmem>>, vector<8x32xbf16>
    %cst_37 = arith.constant dense<0.000000e+00> : vector<8x32xf32>
    %99 = tpu.matmul %97, %98, %cst_37 {dimension_numbers = #tpu.dot_dimension_numbers<[1], [0], [0], [1], [0, 0, 1, 1], [], []>} : vector<8x8xbf16>, vector<8x32xbf16>, vector<8x32xf32> -> vector<8x32xf32>
    %100 = arith.addf %74, %99 : vector<8x32xf32>
    %101 = vector.extract_strided_slice %10 {offsets = [0, 24], sizes = [8, 8], strides = [1, 1]} : vector<8x32xf32> to vector<8x8xf32>
    %102 = arith.truncf %101 : vector<8x8xf32> to vector<8x8xbf16>
    %103 = vector.extract_strided_slice %16 {offsets = [0, 24], sizes = [8, 8], strides = [1, 1]} : vector<8x32xf32> to vector<8x8xf32>
    %104 = arith.truncf %103 : vector<8x8xf32> to vector<8x8xbf16>
    %105 = vector.extract_strided_slice %17 {offsets = [0, 24], sizes = [8, 8], strides = [1, 1]} : vector<8x32xf32> to vector<8x8xf32>
    %106 = arith.truncf %105 : vector<8x8xf32> to vector<8x8xbf16>
    %cst_38 = arith.constant dense<0.000000e+00> : vector<8x8xf32>
    %107 = tpu.matmul %102, %104, %cst_38 {dimension_numbers = #tpu.dot_dimension_numbers<[1], [1], [0], [0], [0, 0, 1, 0], [], []>} : vector<8x8xbf16>, vector<8x8xbf16>, vector<8x8xf32> -> vector<8x8xf32>
    %cst_39 = arith.constant 0.353553385 : f32
    %108 = vector.broadcast %cst_39 : f32 to vector<8x8xf32>
    %109 = arith.mulf %107, %108 : vector<8x8xf32>
    %110 = arith.addf %109, %23 : vector<8x8xf32>
    %cst_40 = arith.constant dense<0xFF800000> : vector<8xf32>
    %111 = vector.multi_reduction <maximumf>, %110, %cst_40 [1] : vector<8x8xf32> to vector<8xf32>
    %112 = vector.shape_cast %111 : vector<8xf32> to vector<8x1xf32>
    %113 = vector.broadcast %112 : vector<8x1xf32> to vector<8x8xf32>
    %114 = arith.subf %110, %113 : vector<8x8xf32>
    %115 = math.exp %114 : vector<8x8xf32>
    %cst_41 = arith.constant dense<0.000000e+00> : vector<8xf32>
    %116 = vector.multi_reduction <add>, %115, %cst_41 [1] : vector<8x8xf32> to vector<8xf32>
    %117 = vector.shape_cast %116 : vector<8xf32> to vector<8x1xf32>
    %118 = tpu.reciprocal %117 {approx = true} : vector<8x1xf32> -> vector<8x1xf32>
    %119 = vector.broadcast %118 : vector<8x1xf32> to vector<8x8xf32>
    %120 = arith.mulf %115, %119 : vector<8x8xf32>
    %121 = arith.truncf %120 : vector<8x8xf32> to vector<8x8xbf16>
    %cst_42 = arith.constant dense<0.000000e+00> : vector<8x8xf32>
    %122 = tpu.matmul %121, %106, %cst_42 {dimension_numbers = #tpu.dot_dimension_numbers<[1], [0], [0], [1], [0, 0, 1, 1], [], []>} : vector<8x8xbf16>, vector<8x8xbf16>, vector<8x8xf32> -> vector<8x8xf32>
    %123 = arith.truncf %122 : vector<8x8xf32> to vector<8x8xbf16>
    %c24 = arith.constant 24 : index
    %c0_43 = arith.constant 0 : index
    %124 = vector.load %arg7[%c24, %c0_43] : memref<32x32xbf16, #tpu.memory_space<vmem>>, vector<8x32xbf16>
    %cst_44 = arith.constant dense<0.000000e+00> : vector<8x32xf32>
    %125 = tpu.matmul %123, %124, %cst_44 {dimension_numbers = #tpu.dot_dimension_numbers<[1], [0], [0], [1], [0, 0, 1, 1], [], []>} : vector<8x8xbf16>, vector<8x32xbf16>, vector<8x32xf32> -> vector<8x32xf32>
    %126 = arith.addf %100, %125 : vector<8x32xf32>
    %c0_45 = arith.constant 0 : index
    %c0_46 = arith.constant 0 : index
    %127 = vector.load %arg8[%c0_45, %c0_46] : memref<1x32xf32, #tpu.memory_space<vmem>>, vector<1x32xf32>
    %128 = vector.broadcast %127 : vector<1x32xf32> to vector<8x32xf32>
    %129 = arith.addf %126, %128 : vector<8x32xf32>
    %130 = arith.addf %129, %1 : vector<8x32xf32>
    %c0_47 = arith.constant 0 : index
    %c0_48 = arith.constant 0 : index
    %131 = vector.load %arg9[%c0_47, %c0_48] : memref<1x32xf32, #tpu.memory_space<vmem>>, vector<1x32xf32>
    %c0_49 = arith.constant 0 : index
    %c0_50 = arith.constant 0 : index
    %132 = vector.load %arg10[%c0_49, %c0_50] : memref<1x32xf32, #tpu.memory_space<vmem>>, vector<1x32xf32>
    %cst_51 = arith.constant dense<0.000000e+00> : vector<8xf32>
    %133 = vector.multi_reduction <add>, %130, %cst_51 [1] : vector<8x32xf32> to vector<8xf32>
    %134 = vector.shape_cast %133 : vector<8xf32> to vector<8x1xf32>
    %cst_52 = arith.constant 3.200000e+01 : f32
    %135 = vector.broadcast %cst_52 : f32 to vector<8x1xf32>
    %136 = arith.divf %134, %135 : vector<8x1xf32>
    %137 = vector.broadcast %136 : vector<8x1xf32> to vector<8x32xf32>
    %138 = arith.subf %130, %137 : vector<8x32xf32>
    %139 = arith.mulf %138, %138 : vector<8x32xf32>
    %cst_53 = arith.constant dense<0.000000e+00> : vector<8xf32>
    %140 = vector.multi_reduction <add>, %139, %cst_53 [1] : vector<8x32xf32> to vector<8xf32>
    %141 = vector.shape_cast %140 : vector<8xf32> to vector<8x1xf32>
    %cst_54 = arith.constant 3.200000e+01 : f32
    %142 = vector.broadcast %cst_54 : f32 to vector<8x1xf32>
    %143 = arith.divf %141, %142 : vector<8x1xf32>
    %144 = vector.broadcast %136 : vector<8x1xf32> to vector<8x32xf32>
    %145 = arith.subf %130, %144 : vector<8x32xf32>
    %cst_55 = arith.constant 9.99999974E-6 : f32
    %146 = vector.broadcast %cst_55 : f32 to vector<8x1xf32>
    %147 = arith.addf %143, %146 : vector<8x1xf32>
    %148 = math.rsqrt %147 : vector<8x1xf32>
    %149 = vector.broadcast %148 : vector<8x1xf32> to vector<8x32xf32>
    %150 = arith.mulf %145, %149 : vector<8x32xf32>
    %151 = vector.broadcast %131 : vector<1x32xf32> to vector<8x32xf32>
    %152 = arith.mulf %150, %151 : vector<8x32xf32>
    %153 = vector.broadcast %132 : vector<1x32xf32> to vector<8x32xf32>
    %154 = arith.addf %152, %153 : vector<8x32xf32>
    %c0_56 = arith.constant 0 : index
    %c0_57 = arith.constant 0 : index
    %c0_58 = arith.constant 0 : index
    %155 = vector.load %arg11[%c0_56, %c0_57, %c0_58] : memref<1x8x32xf32, #tpu.memory_space<vmem>>, vector<1x8x32xf32>
    %156 = vector.shape_cast %155 : vector<1x8x32xf32> to vector<8x32xf32>
    %157 = vector.shape_cast %154 : vector<8x32xf32> to vector<1x8x32xf32>
    tpu.vector_store %arg11[%c0_56, %c0_57, %c0_58], %157 {strides = array<i32>} : memref<1x8x32xf32, #tpu.memory_space<vmem>>, vector<1x8x32xf32>,
    return
  }
  func.func @transform_0(%arg0: i32) -> (i32, i32, i32) {
    %c0_i32 = arith.constant 0 : i32
    %c0_i32_0 = arith.constant 0 : i32
    %c0_i32_1 = arith.constant 0 : i32
    return %arg0, %c0_i32, %c0_i32_0 : i32, i32, i32
  }
  func.func @transform_1(%arg0: i32) -> (i32, i32, i32) {
    %c0_i32 = arith.constant 0 : i32
    %c0_i32_0 = arith.constant 0 : i32
    %c0_i32_1 = arith.constant 0 : i32
    return %arg0, %c0_i32, %c0_i32_0 : i32, i32, i32
  }
  func.func @transform_2(%arg0: i32) -> (i32, i32) {
    %c0_i32 = arith.constant 0 : i32
    %c0_i32_0 = arith.constant 0 : i32
    %c0_i32_1 = arith.constant 0 : i32
    return %c0_i32, %c0_i32_0 : i32, i32
  }
  func.func @transform_3(%arg0: i32) -> (i32, i32) {
    %c0_i32 = arith.constant 0 : i32
    %c0_i32_0 = arith.constant 0 : i32
    %c0_i32_1 = arith.constant 0 : i32
    return %c0_i32, %c0_i32_0 : i32, i32
  }
  func.func @transform_4(%arg0: i32) -> (i32, i32) {
    %c0_i32 = arith.constant 0 : i32
    %c0_i32_0 = arith.constant 0 : i32
    %c0_i32_1 = arith.constant 0 : i32
    return %c0_i32, %c0_i32_0 : i32, i32
  }
  func.func @transform_5(%arg0: i32) -> (i32, i32) {
    %c0_i32 = arith.constant 0 : i32
    %c0_i32_0 = arith.constant 0 : i32
    %c0_i32_1 = arith.constant 0 : i32
    return %c0_i32, %c0_i32_0 : i32, i32
  }
  func.func @transform_6(%arg0: i32) -> (i32, i32) {
    %c0_i32 = arith.constant 0 : i32
    %c0_i32_0 = arith.constant 0 : i32
    %c0_i32_1 = arith.constant 0 : i32
    return %c0_i32, %c0_i32_0 : i32, i32
  }
  func.func @transform_7(%arg0: i32) -> (i32, i32) {
    %c0_i32 = arith.constant 0 : i32
    %c0_i32_0 = arith.constant 0 : i32
    %c0_i32_1 = arith.constant 0 : i32
    return %c0_i32, %c0_i32_0 : i32, i32
  }
  func.func @transform_8(%arg0: i32) -> (i32, i32) {
    %c0_i32 = arith.constant 0 : i32
    %c0_i32_0 = arith.constant 0 : i32
    %c0_i32_1 = arith.constant 0 : i32
    return %c0_i32, %c0_i32_0 : i32, i32
  }
  func.func @transform_9(%arg0: i32) -> (i32, i32) {
    %c0_i32 = arith.constant 0 : i32
    %c0_i32_0 = arith.constant 0 : i32
    %c0_i32_1 = arith.constant 0 : i32
    return %c0_i32, %c0_i32_0 : i32, i32
  }
  func.func @transform_10(%arg0: i32) -> (i32, i32, i32) {
    %c0_i32 = arith.constant 0 : i32
    %c0_i32_0 = arith.constant 0 : i32
    %c0_i32_1 = arith.constant 0 : i32
    return %arg0, %c0_i32, %c0_i32_0 : i32, i32, i32
  }
}

module attributes {stable_mosaic.version = 11 : i64} {
  func.func @_mha_kernel(%arg0: i32, %arg1: memref<1x8x32xf32, #tpu.memory_space<vmem>>, %arg2: memref<1x10x32xf32, #tpu.memory_space<vmem>>, %arg3: memref<32x32xbf16, #tpu.memory_space<vmem>>, %arg4: memref<1x32xf32, #tpu.memory_space<vmem>>, %arg5: memref<32x64xbf16, #tpu.memory_space<vmem>>, %arg6: memref<1x64xf32, #tpu.memory_space<vmem>>, %arg7: memref<32x32xbf16, #tpu.memory_space<vmem>>, %arg8: memref<1x32xf32, #tpu.memory_space<vmem>>, %arg9: memref<1x32xf32, #tpu.memory_space<vmem>>, %arg10: memref<1x32xf32, #tpu.memory_space<vmem>>, %arg11: memref<1x8x32xf32, #tpu.memory_space<vmem>>) attributes {dimension_semantics = [#tpu.dimension_semantics<parallel>], iteration_bounds = array<i64: 2>, scalar_prefetch = 0 : i64, scratch_operands = 0 : i64, tpu.core_type = #tpu.core_type<tc>, window_params = [{transform_indices = @transform_0, window_bounds = array<i64: 1, 8, 32>}, {transform_indices = @transform_1, window_bounds = array<i64: 1, 10, 32>}, {pipeline_mode = #tpu.pipeline_mode<synchronous>, transform_indices = @transform_2, window_bounds = array<i64: 32, 32>}, {pipeline_mode = #tpu.pipeline_mode<synchronous>, transform_indices = @transform_3, window_bounds = array<i64: 1, 32>}, {pipeline_mode = #tpu.pipeline_mode<synchronous>, transform_indices = @transform_4, window_bounds = array<i64: 32, 64>}, {pipeline_mode = #tpu.pipeline_mode<synchronous>, transform_indices = @transform_5, window_bounds = array<i64: 1, 64>}, {pipeline_mode = #tpu.pipeline_mode<synchronous>, transform_indices = @transform_6, window_bounds = array<i64: 32, 32>}, {pipeline_mode = #tpu.pipeline_mode<synchronous>, transform_indices = @transform_7, window_bounds = array<i64: 1, 32>}, {pipeline_mode = #tpu.pipeline_mode<synchronous>, transform_indices = @transform_8, window_bounds = array<i64: 1, 32>}, {pipeline_mode = #tpu.pipeline_mode<synchronous>, transform_indices = @transform_9, window_bounds = array<i64: 1, 32>}, {transform_indices = @transform_10, window_bounds = array<i64: 1, 8, 32>}]} {
    %c0 = arith.constant 0 : index
    %c0_0 = arith.constant 0 : index
    %c0_1 = arith.constant 0 : index
    %0 = vector.load %arg1[%c0, %c0_0, %c0_1] : memref<1x8x32xf32, #tpu.memory_space<vmem>>, vector<1x8x32xf32>
    %1 = vector.shape_cast %0 : vector<1x8x32xf32> to vector<8x32xf32>
    %c0_2 = arith.constant 0 : index
    %c0_3 = arith.constant 0 : index
    %c0_4 = arith.constant 0 : index
    %2 = vector.load %arg2[%c0_2, %c0_3, %c0_4] : memref<1x10x32xf32, #tpu.memory_space<vmem>>, vector<1x10x32xf32>
    %3 = vector.shape_cast %2 : vector<1x10x32xf32> to vector<10x32xf32>
    %4 = arith.truncf %1 : vector<8x32xf32> to vector<8x32xbf16>
    %5 = arith.truncf %3 : vector<10x32xf32> to vector<10x32xbf16>
    %c0_5 = arith.constant 0 : index
    %c0_6 = arith.constant 0 : index
    %6 = vector.load %arg3[%c0_5, %c0_6] : memref<32x32xbf16, #tpu.memory_space<vmem>>, vector<32x32xbf16>
    %cst = arith.constant dense<0.000000e+00> : vector<8x32xf32>
    %7 = tpu.matmul %4, %6, %cst {dimension_numbers = #tpu.dot_dimension_numbers<[1], [0], [0], [1], [0, 0, 1, 1], [], []>} : vector<8x32xbf16>, vector<32x32xbf16>, vector<8x32xf32> -> vector<8x32xf32>
    %c0_7 = arith.constant 0 : index
    %c0_8 = arith.constant 0 : index
    %8 = vector.load %arg4[%c0_7, %c0_8] : memref<1x32xf32, #tpu.memory_space<vmem>>, vector<1x32xf32>
    %9 = vector.broadcast %8 : vector<1x32xf32> to vector<8x32xf32>
    %10 = arith.addf %7, %9 : vector<8x32xf32>
    %c0_9 = arith.constant 0 : index
    %c0_10 = arith.constant 0 : index
    %11 = vector.load %arg5[%c0_9, %c0_10] : memref<32x64xbf16, #tpu.memory_space<vmem>>, vector<32x64xbf16>
    %cst_11 = arith.constant dense<0.000000e+00> : vector<10x64xf32>
    %12 = tpu.matmul %5, %11, %cst_11 {dimension_numbers = #tpu.dot_dimension_numbers<[1], [0], [0], [1], [0, 0, 1, 1], [], []>} : vector<10x32xbf16>, vector<32x64xbf16>, vector<10x64xf32> -> vector<10x64xf32>
    %c0_12 = arith.constant 0 : index
    %c0_13 = arith.constant 0 : index
    %13 = vector.load %arg6[%c0_12, %c0_13] : memref<1x64xf32, #tpu.memory_space<vmem>>, vector<1x64xf32>
    %14 = vector.broadcast %13 : vector<1x64xf32> to vector<10x64xf32>
    %15 = arith.addf %12, %14 : vector<10x64xf32>
    %16 = vector.extract_strided_slice %15 {offsets = [0, 0], sizes = [10, 32], strides = [1, 1]} : vector<10x64xf32> to vector<10x32xf32>
    %17 = vector.extract_strided_slice %15 {offsets = [0, 32], sizes = [10, 32], strides = [1, 1]} : vector<10x64xf32> to vector<10x32xf32>
    %18 = vector.extract_strided_slice %10 {offsets = [0, 0], sizes = [8, 8], strides = [1, 1]} : vector<8x32xf32> to vector<8x8xf32>
    %19 = arith.truncf %18 : vector<8x8xf32> to vector<8x8xbf16>
    %20 = vector.extract_strided_slice %16 {offsets = [0, 0], sizes = [10, 8], strides = [1, 1]} : vector<10x32xf32> to vector<10x8xf32>
    %21 = arith.truncf %20 : vector<10x8xf32> to vector<10x8xbf16>
    %22 = vector.extract_strided_slice %17 {offsets = [0, 0], sizes = [10, 8], strides = [1, 1]} : vector<10x32xf32> to vector<10x8xf32>
    %23 = arith.truncf %22 : vector<10x8xf32> to vector<10x8xbf16>
    %cst_14 = arith.constant dense<0.000000e+00> : vector<8x10xf32>
    %24 = tpu.matmul %19, %21, %cst_14 {dimension_numbers = #tpu.dot_dimension_numbers<[1], [1], [0], [0], [0, 0, 1, 0], [], []>} : vector<8x8xbf16>, vector<10x8xbf16>, vector<8x10xf32> -> vector<8x10xf32>
    %cst_15 = arith.constant 0.353553385 : f32
    %25 = vector.broadcast %cst_15 : f32 to vector<8x10xf32>
    %26 = arith.mulf %24, %25 : vector<8x10xf32>
    %cst_16 = arith.constant dense<0xFF800000> : vector<8xf32>
    %27 = vector.multi_reduction <maximumf>, %26, %cst_16 [1] : vector<8x10xf32> to vector<8xf32>
    %28 = vector.shape_cast %27 : vector<8xf32> to vector<8x1xf32>
    %29 = vector.broadcast %28 : vector<8x1xf32> to vector<8x10xf32>
    %30 = arith.subf %26, %29 : vector<8x10xf32>
    %31 = math.exp %30 : vector<8x10xf32>
    %cst_17 = arith.constant dense<0.000000e+00> : vector<8xf32>
    %32 = vector.multi_reduction <add>, %31, %cst_17 [1] : vector<8x10xf32> to vector<8xf32>
    %33 = vector.shape_cast %32 : vector<8xf32> to vector<8x1xf32>
    %34 = tpu.reciprocal %33 {approx = true} : vector<8x1xf32> -> vector<8x1xf32>
    %35 = vector.broadcast %34 : vector<8x1xf32> to vector<8x10xf32>
    %36 = arith.mulf %31, %35 : vector<8x10xf32>
    %37 = arith.truncf %36 : vector<8x10xf32> to vector<8x10xbf16>
    %cst_18 = arith.constant dense<0.000000e+00> : vector<8x8xf32>
    %38 = tpu.matmul %37, %23, %cst_18 {dimension_numbers = #tpu.dot_dimension_numbers<[1], [0], [0], [1], [0, 0, 1, 1], [], []>} : vector<8x10xbf16>, vector<10x8xbf16>, vector<8x8xf32> -> vector<8x8xf32>
    %39 = arith.truncf %38 : vector<8x8xf32> to vector<8x8xbf16>
    %c0_19 = arith.constant 0 : index
    %c0_20 = arith.constant 0 : index
    %40 = vector.load %arg7[%c0_19, %c0_20] : memref<32x32xbf16, #tpu.memory_space<vmem>>, vector<8x32xbf16>
    %cst_21 = arith.constant dense<0.000000e+00> : vector<8x32xf32>
    %41 = tpu.matmul %39, %40, %cst_21 {dimension_numbers = #tpu.dot_dimension_numbers<[1], [0], [0], [1], [0, 0, 1, 1], [], []>} : vector<8x8xbf16>, vector<8x32xbf16>, vector<8x32xf32> -> vector<8x32xf32>
    %42 = vector.extract_strided_slice %10 {offsets = [0, 8], sizes = [8, 8], strides = [1, 1]} : vector<8x32xf32> to vector<8x8xf32>
    %43 = arith.truncf %42 : vector<8x8xf32> to vector<8x8xbf16>
    %44 = vector.extract_strided_slice %16 {offsets = [0, 8], sizes = [10, 8], strides = [1, 1]} : vector<10x32xf32> to vector<10x8xf32>
    %45 = arith.truncf %44 : vector<10x8xf32> to vector<10x8xbf16>
    %46 = vector.extract_strided_slice %17 {offsets = [0, 8], sizes = [10, 8], strides = [1, 1]} : vector<10x32xf32> to vector<10x8xf32>
    %47 = arith.truncf %46 : vector<10x8xf32> to vector<10x8xbf16>
    %cst_22 = arith.constant dense<0.000000e+00> : vector<8x10xf32>
    %48 = tpu.matmul %43, %45, %cst_22 {dimension_numbers = #tpu.dot_dimension_numbers<[1], [1], [0], [0], [0, 0, 1, 0], [], []>} : vector<8x8xbf16>, vector<10x8xbf16>, vector<8x10xf32> -> vector<8x10xf32>
    %cst_23 = arith.constant 0.353553385 : f32
    %49 = vector.broadcast %cst_23 : f32 to vector<8x10xf32>
    %50 = arith.mulf %48, %49 : vector<8x10xf32>
    %cst_24 = arith.constant dense<0xFF800000> : vector<8xf32>
    %51 = vector.multi_reduction <maximumf>, %50, %cst_24 [1] : vector<8x10xf32> to vector<8xf32>
    %52 = vector.shape_cast %51 : vector<8xf32> to vector<8x1xf32>
    %53 = vector.broadcast %52 : vector<8x1xf32> to vector<8x10xf32>
    %54 = arith.subf %50, %53 : vector<8x10xf32>
    %55 = math.exp %54 : vector<8x10xf32>
    %cst_25 = arith.constant dense<0.000000e+00> : vector<8xf32>
    %56 = vector.multi_reduction <add>, %55, %cst_25 [1] : vector<8x10xf32> to vector<8xf32>
    %57 = vector.shape_cast %56 : vector<8xf32> to vector<8x1xf32>
    %58 = tpu.reciprocal %57 {approx = true} : vector<8x1xf32> -> vector<8x1xf32>
    %59 = vector.broadcast %58 : vector<8x1xf32> to vector<8x10xf32>
    %60 = arith.mulf %55, %59 : vector<8x10xf32>
    %61 = arith.truncf %60 : vector<8x10xf32> to vector<8x10xbf16>
    %cst_26 = arith.constant dense<0.000000e+00> : vector<8x8xf32>
    %62 = tpu.matmul %61, %47, %cst_26 {dimension_numbers = #tpu.dot_dimension_numbers<[1], [0], [0], [1], [0, 0, 1, 1], [], []>} : vector<8x10xbf16>, vector<10x8xbf16>, vector<8x8xf32> -> vector<8x8xf32>
    %63 = arith.truncf %62 : vector<8x8xf32> to vector<8x8xbf16>
    %c8 = arith.constant 8 : index
    %c0_27 = arith.constant 0 : index
    %64 = vector.load %arg7[%c8, %c0_27] : memref<32x32xbf16, #tpu.memory_space<vmem>>, vector<8x32xbf16>
    %cst_28 = arith.constant dense<0.000000e+00> : vector<8x32xf32>
    %65 = tpu.matmul %63, %64, %cst_28 {dimension_numbers = #tpu.dot_dimension_numbers<[1], [0], [0], [1], [0, 0, 1, 1], [], []>} : vector<8x8xbf16>, vector<8x32xbf16>, vector<8x32xf32> -> vector<8x32xf32>
    %66 = arith.addf %41, %65 : vector<8x32xf32>
    %67 = vector.extract_strided_slice %10 {offsets = [0, 16], sizes = [8, 8], strides = [1, 1]} : vector<8x32xf32> to vector<8x8xf32>
    %68 = arith.truncf %67 : vector<8x8xf32> to vector<8x8xbf16>
    %69 = vector.extract_strided_slice %16 {offsets = [0, 16], sizes = [10, 8], strides = [1, 1]} : vector<10x32xf32> to vector<10x8xf32>
    %70 = arith.truncf %69 : vector<10x8xf32> to vector<10x8xbf16>
    %71 = vector.extract_strided_slice %17 {offsets = [0, 16], sizes = [10, 8], strides = [1, 1]} : vector<10x32xf32> to vector<10x8xf32>
    %72 = arith.truncf %71 : vector<10x8xf32> to vector<10x8xbf16>
    %cst_29 = arith.constant dense<0.000000e+00> : vector<8x10xf32>
    %73 = tpu.matmul %68, %70, %cst_29 {dimension_numbers = #tpu.dot_dimension_numbers<[1], [1], [0], [0], [0, 0, 1, 0], [], []>} : vector<8x8xbf16>, vector<10x8xbf16>, vector<8x10xf32> -> vector<8x10xf32>
    %cst_30 = arith.constant 0.353553385 : f32
    %74 = vector.broadcast %cst_30 : f32 to vector<8x10xf32>
    %75 = arith.mulf %73, %74 : vector<8x10xf32>
    %cst_31 = arith.constant dense<0xFF800000> : vector<8xf32>
    %76 = vector.multi_reduction <maximumf>, %75, %cst_31 [1] : vector<8x10xf32> to vector<8xf32>
    %77 = vector.shape_cast %76 : vector<8xf32> to vector<8x1xf32>
    %78 = vector.broadcast %77 : vector<8x1xf32> to vector<8x10xf32>
    %79 = arith.subf %75, %78 : vector<8x10xf32>
    %80 = math.exp %79 : vector<8x10xf32>
    %cst_32 = arith.constant dense<0.000000e+00> : vector<8xf32>
    %81 = vector.multi_reduction <add>, %80, %cst_32 [1] : vector<8x10xf32> to vector<8xf32>
    %82 = vector.shape_cast %81 : vector<8xf32> to vector<8x1xf32>
    %83 = tpu.reciprocal %82 {approx = true} : vector<8x1xf32> -> vector<8x1xf32>
    %84 = vector.broadcast %83 : vector<8x1xf32> to vector<8x10xf32>
    %85 = arith.mulf %80, %84 : vector<8x10xf32>
    %86 = arith.truncf %85 : vector<8x10xf32> to vector<8x10xbf16>
    %cst_33 = arith.constant dense<0.000000e+00> : vector<8x8xf32>
    %87 = tpu.matmul %86, %72, %cst_33 {dimension_numbers = #tpu.dot_dimension_numbers<[1], [0], [0], [1], [0, 0, 1, 1], [], []>} : vector<8x10xbf16>, vector<10x8xbf16>, vector<8x8xf32> -> vector<8x8xf32>
    %88 = arith.truncf %87 : vector<8x8xf32> to vector<8x8xbf16>
    %c16 = arith.constant 16 : index
    %c0_34 = arith.constant 0 : index
    %89 = vector.load %arg7[%c16, %c0_34] : memref<32x32xbf16, #tpu.memory_space<vmem>>, vector<8x32xbf16>
    %cst_35 = arith.constant dense<0.000000e+00> : vector<8x32xf32>
    %90 = tpu.matmul %88, %89, %cst_35 {dimension_numbers = #tpu.dot_dimension_numbers<[1], [0], [0], [1], [0, 0, 1, 1], [], []>} : vector<8x8xbf16>, vector<8x32xbf16>, vector<8x32xf32> -> vector<8x32xf32>
    %91 = arith.addf %66, %90 : vector<8x32xf32>
    %92 = vector.extract_strided_slice %10 {offsets = [0, 24], sizes = [8, 8], strides = [1, 1]} : vector<8x32xf32> to vector<8x8xf32>
    %93 = arith.truncf %92 : vector<8x8xf32> to vector<8x8xbf16>
    %94 = vector.extract_strided_slice %16 {offsets = [0, 24], sizes = [10, 8], strides = [1, 1]} : vector<10x32xf32> to vector<10x8xf32>
    %95 = arith.truncf %94 : vector<10x8xf32> to vector<10x8xbf16>
    %96 = vector.extract_strided_slice %17 {offsets = [0, 24], sizes = [10, 8], strides = [1, 1]} : vector<10x32xf32> to vector<10x8xf32>
    %97 = arith.truncf %96 : vector<10x8xf32> to vector<10x8xbf16>
    %cst_36 = arith.constant dense<0.000000e+00> : vector<8x10xf32>
    %98 = tpu.matmul %93, %95, %cst_36 {dimension_numbers = #tpu.dot_dimension_numbers<[1], [1], [0], [0], [0, 0, 1, 0], [], []>} : vector<8x8xbf16>, vector<10x8xbf16>, vector<8x10xf32> -> vector<8x10xf32>
    %cst_37 = arith.constant 0.353553385 : f32
    %99 = vector.broadcast %cst_37 : f32 to vector<8x10xf32>
    %100 = arith.mulf %98, %99 : vector<8x10xf32>
    %cst_38 = arith.constant dense<0xFF800000> : vector<8xf32>
    %101 = vector.multi_reduction <maximumf>, %100, %cst_38 [1] : vector<8x10xf32> to vector<8xf32>
    %102 = vector.shape_cast %101 : vector<8xf32> to vector<8x1xf32>
    %103 = vector.broadcast %102 : vector<8x1xf32> to vector<8x10xf32>
    %104 = arith.subf %100, %103 : vector<8x10xf32>
    %105 = math.exp %104 : vector<8x10xf32>
    %cst_39 = arith.constant dense<0.000000e+00> : vector<8xf32>
    %106 = vector.multi_reduction <add>, %105, %cst_39 [1] : vector<8x10xf32> to vector<8xf32>
    %107 = vector.shape_cast %106 : vector<8xf32> to vector<8x1xf32>
    %108 = tpu.reciprocal %107 {approx = true} : vector<8x1xf32> -> vector<8x1xf32>
    %109 = vector.broadcast %108 : vector<8x1xf32> to vector<8x10xf32>
    %110 = arith.mulf %105, %109 : vector<8x10xf32>
    %111 = arith.truncf %110 : vector<8x10xf32> to vector<8x10xbf16>
    %cst_40 = arith.constant dense<0.000000e+00> : vector<8x8xf32>
    %112 = tpu.matmul %111, %97, %cst_40 {dimension_numbers = #tpu.dot_dimension_numbers<[1], [0], [0], [1], [0, 0, 1, 1], [], []>} : vector<8x10xbf16>, vector<10x8xbf16>, vector<8x8xf32> -> vector<8x8xf32>
    %113 = arith.truncf %112 : vector<8x8xf32> to vector<8x8xbf16>
    %c24 = arith.constant 24 : index
    %c0_41 = arith.constant 0 : index
    %114 = vector.load %arg7[%c24, %c0_41] : memref<32x32xbf16, #tpu.memory_space<vmem>>, vector<8x32xbf16>
    %cst_42 = arith.constant dense<0.000000e+00> : vector<8x32xf32>
    %115 = tpu.matmul %113, %114, %cst_42 {dimension_numbers = #tpu.dot_dimension_numbers<[1], [0], [0], [1], [0, 0, 1, 1], [], []>} : vector<8x8xbf16>, vector<8x32xbf16>, vector<8x32xf32> -> vector<8x32xf32>
    %116 = arith.addf %91, %115 : vector<8x32xf32>
    %c0_43 = arith.constant 0 : index
    %c0_44 = arith.constant 0 : index
    %117 = vector.load %arg8[%c0_43, %c0_44] : memref<1x32xf32, #tpu.memory_space<vmem>>, vector<1x32xf32>
    %118 = vector.broadcast %117 : vector<1x32xf32> to vector<8x32xf32>
    %119 = arith.addf %116, %118 : vector<8x32xf32>
    %120 = arith.addf %119, %1 : vector<8x32xf32>
    %c0_45 = arith.constant 0 : index
    %c0_46 = arith.constant 0 : index
    %121 = vector.load %arg9[%c0_45, %c0_46] : memref<1x32xf32, #tpu.memory_space<vmem>>, vector<1x32xf32>
    %c0_47 = arith.constant 0 : index
    %c0_48 = arith.constant 0 : index
    %122 = vector.load %arg10[%c0_47, %c0_48] : memref<1x32xf32, #tpu.memory_space<vmem>>, vector<1x32xf32>
    %cst_49 = arith.constant dense<0.000000e+00> : vector<8xf32>
    %123 = vector.multi_reduction <add>, %120, %cst_49 [1] : vector<8x32xf32> to vector<8xf32>
    %124 = vector.shape_cast %123 : vector<8xf32> to vector<8x1xf32>
    %cst_50 = arith.constant 3.200000e+01 : f32
    %125 = vector.broadcast %cst_50 : f32 to vector<8x1xf32>
    %126 = arith.divf %124, %125 : vector<8x1xf32>
    %127 = vector.broadcast %126 : vector<8x1xf32> to vector<8x32xf32>
    %128 = arith.subf %120, %127 : vector<8x32xf32>
    %129 = arith.mulf %128, %128 : vector<8x32xf32>
    %cst_51 = arith.constant dense<0.000000e+00> : vector<8xf32>
    %130 = vector.multi_reduction <add>, %129, %cst_51 [1] : vector<8x32xf32> to vector<8xf32>
    %131 = vector.shape_cast %130 : vector<8xf32> to vector<8x1xf32>
    %cst_52 = arith.constant 3.200000e+01 : f32
    %132 = vector.broadcast %cst_52 : f32 to vector<8x1xf32>
    %133 = arith.divf %131, %132 : vector<8x1xf32>
    %134 = vector.broadcast %126 : vector<8x1xf32> to vector<8x32xf32>
    %135 = arith.subf %120, %134 : vector<8x32xf32>
    %cst_53 = arith.constant 9.99999974E-6 : f32
    %136 = vector.broadcast %cst_53 : f32 to vector<8x1xf32>
    %137 = arith.addf %133, %136 : vector<8x1xf32>
    %138 = math.rsqrt %137 : vector<8x1xf32>
    %139 = vector.broadcast %138 : vector<8x1xf32> to vector<8x32xf32>
    %140 = arith.mulf %135, %139 : vector<8x32xf32>
    %141 = vector.broadcast %121 : vector<1x32xf32> to vector<8x32xf32>
    %142 = arith.mulf %140, %141 : vector<8x32xf32>
    %143 = vector.broadcast %122 : vector<1x32xf32> to vector<8x32xf32>
    %144 = arith.addf %142, %143 : vector<8x32xf32>
    %c0_54 = arith.constant 0 : index
    %c0_55 = arith.constant 0 : index
    %c0_56 = arith.constant 0 : index
    %145 = vector.load %arg11[%c0_54, %c0_55, %c0_56] : memref<1x8x32xf32, #tpu.memory_space<vmem>>, vector<1x8x32xf32>
    %146 = vector.shape_cast %145 : vector<1x8x32xf32> to vector<8x32xf32>
    %147 = vector.shape_cast %144 : vector<8x32xf32> to vector<1x8x32xf32>
    tpu.vector_store %arg11[%c0_54, %c0_55, %c0_56], %147 {strides = array<i32>} : memref<1x8x32xf32, #tpu.memory_space<vmem>>, vector<1x8x32xf32>,
    return
  }
  func.func @transform_0(%arg0: i32) -> (i32, i32, i32) {
    %c0_i32 = arith.constant 0 : i32
    %c0_i32_0 = arith.constant 0 : i32
    %c0_i32_1 = arith.constant 0 : i32
    return %arg0, %c0_i32, %c0_i32_0 : i32, i32, i32
  }
  func.func @transform_1(%arg0: i32) -> (i32, i32, i32) {
    %c0_i32 = arith.constant 0 : i32
    %c0_i32_0 = arith.constant 0 : i32
    %c0_i32_1 = arith.constant 0 : i32
    return %arg0, %c0_i32, %c0_i32_0 : i32, i32, i32
  }
  func.func @transform_2(%arg0: i32) -> (i32, i32) {
    %c0_i32 = arith.constant 0 : i32
    %c0_i32_0 = arith.constant 0 : i32
    %c0_i32_1 = arith.constant 0 : i32
    return %c0_i32, %c0_i32_0 : i32, i32
  }
  func.func @transform_3(%arg0: i32) -> (i32, i32) {
    %c0_i32 = arith.constant 0 : i32
    %c0_i32_0 = arith.constant 0 : i32
    %c0_i32_1 = arith.constant 0 : i32
    return %c0_i32, %c0_i32_0 : i32, i32
  }
  func.func @transform_4(%arg0: i32) -> (i32, i32) {
    %c0_i32 = arith.constant 0 : i32
    %c0_i32_0 = arith.constant 0 : i32
    %c0_i32_1 = arith.constant 0 : i32
    return %c0_i32, %c0_i32_0 : i32, i32
  }
  func.func @transform_5(%arg0: i32) -> (i32, i32) {
    %c0_i32 = arith.constant 0 : i32
    %c0_i32_0 = arith.constant 0 : i32
    %c0_i32_1 = arith.constant 0 : i32
    return %c0_i32, %c0_i32_0 : i32, i32
  }
  func.func @transform_6(%arg0: i32) -> (i32, i32) {
    %c0_i32 = arith.constant 0 : i32
    %c0_i32_0 = arith.constant 0 : i32
    %c0_i32_1 = arith.constant 0 : i32
    return %c0_i32, %c0_i32_0 : i32, i32
  }
  func.func @transform_7(%arg0: i32) -> (i32, i32) {
    %c0_i32 = arith.constant 0 : i32
    %c0_i32_0 = arith.constant 0 : i32
    %c0_i32_1 = arith.constant 0 : i32
    return %c0_i32, %c0_i32_0 : i32, i32
  }
  func.func @transform_8(%arg0: i32) -> (i32, i32) {
    %c0_i32 = arith.constant 0 : i32
    %c0_i32_0 = arith.constant 0 : i32
    %c0_i32_1 = arith.constant 0 : i32
    return %c0_i32, %c0_i32_0 : i32, i32
  }
  func.func @transform_9(%arg0: i32) -> (i32, i32) {
    %c0_i32 = arith.constant 0 : i32
    %c0_i32_0 = arith.constant 0 : i32
    %c0_i32_1 = arith.constant 0 : i32
    return %c0_i32, %c0_i32_0 : i32, i32
  }
  func.func @transform_10(%arg0: i32) -> (i32, i32, i32) {
    %c0_i32 = arith.constant 0 : i32
    %c0_i32_0 = arith.constant 0 : i32
    %c0_i32_1 = arith.constant 0 : i32
    return %arg0, %c0_i32, %c0_i32_0 : i32, i32, i32
  }
}

module attributes {stable_mosaic.version = 11 : i64} {
  func.func @_ffn_kernel(%arg0: i32, %arg1: memref<1x8x32xf32, #tpu.memory_space<vmem>>, %arg2: memref<32x64xbf16, #tpu.memory_space<vmem>>, %arg3: memref<1x64xf32, #tpu.memory_space<vmem>>, %arg4: memref<64x32xbf16, #tpu.memory_space<vmem>>, %arg5: memref<1x32xf32, #tpu.memory_space<vmem>>, %arg6: memref<1x32xf32, #tpu.memory_space<vmem>>, %arg7: memref<1x32xf32, #tpu.memory_space<vmem>>, %arg8: memref<1x8x32xf32, #tpu.memory_space<vmem>>) attributes {dimension_semantics = [#tpu.dimension_semantics<parallel>], iteration_bounds = array<i64: 2>, scalar_prefetch = 0 : i64, scratch_operands = 0 : i64, tpu.core_type = #tpu.core_type<tc>, window_params = [{transform_indices = @transform_0, window_bounds = array<i64: 1, 8, 32>}, {pipeline_mode = #tpu.pipeline_mode<synchronous>, transform_indices = @transform_1, window_bounds = array<i64: 32, 64>}, {pipeline_mode = #tpu.pipeline_mode<synchronous>, transform_indices = @transform_2, window_bounds = array<i64: 1, 64>}, {pipeline_mode = #tpu.pipeline_mode<synchronous>, transform_indices = @transform_3, window_bounds = array<i64: 64, 32>}, {pipeline_mode = #tpu.pipeline_mode<synchronous>, transform_indices = @transform_4, window_bounds = array<i64: 1, 32>}, {pipeline_mode = #tpu.pipeline_mode<synchronous>, transform_indices = @transform_5, window_bounds = array<i64: 1, 32>}, {pipeline_mode = #tpu.pipeline_mode<synchronous>, transform_indices = @transform_6, window_bounds = array<i64: 1, 32>}, {transform_indices = @transform_7, window_bounds = array<i64: 1, 8, 32>}]} {
    %c0 = arith.constant 0 : index
    %c0_0 = arith.constant 0 : index
    %c0_1 = arith.constant 0 : index
    %0 = vector.load %arg1[%c0, %c0_0, %c0_1] : memref<1x8x32xf32, #tpu.memory_space<vmem>>, vector<1x8x32xf32>
    %1 = vector.shape_cast %0 : vector<1x8x32xf32> to vector<8x32xf32>
    %2 = arith.truncf %1 : vector<8x32xf32> to vector<8x32xbf16>
    %c0_2 = arith.constant 0 : index
    %c0_3 = arith.constant 0 : index
    %3 = vector.load %arg2[%c0_2, %c0_3] : memref<32x64xbf16, #tpu.memory_space<vmem>>, vector<32x64xbf16>
    %cst = arith.constant dense<0.000000e+00> : vector<8x64xf32>
    %4 = tpu.matmul %2, %3, %cst {dimension_numbers = #tpu.dot_dimension_numbers<[1], [0], [0], [1], [0, 0, 1, 1], [], []>} : vector<8x32xbf16>, vector<32x64xbf16>, vector<8x64xf32> -> vector<8x64xf32>
    %c0_4 = arith.constant 0 : index
    %c0_5 = arith.constant 0 : index
    %5 = vector.load %arg3[%c0_4, %c0_5] : memref<1x64xf32, #tpu.memory_space<vmem>>, vector<1x64xf32>
    %6 = vector.broadcast %5 : vector<1x64xf32> to vector<8x64xf32>
    %7 = arith.addf %4, %6 : vector<8x64xf32>
    %cst_6 = arith.constant 0.000000e+00 : f32
    %8 = vector.broadcast %cst_6 : f32 to vector<8x64xf32>
    %9 = arith.maximumf %7, %8 : vector<8x64xf32>
    %10 = arith.truncf %9 : vector<8x64xf32> to vector<8x64xbf16>
    %c0_7 = arith.constant 0 : index
    %c0_8 = arith.constant 0 : index
    %11 = vector.load %arg4[%c0_7, %c0_8] : memref<64x32xbf16, #tpu.memory_space<vmem>>, vector<64x32xbf16>
    %cst_9 = arith.constant dense<0.000000e+00> : vector<8x32xf32>
    %12 = tpu.matmul %10, %11, %cst_9 {dimension_numbers = #tpu.dot_dimension_numbers<[1], [0], [0], [1], [0, 0, 1, 1], [], []>} : vector<8x64xbf16>, vector<64x32xbf16>, vector<8x32xf32> -> vector<8x32xf32>
    %c0_10 = arith.constant 0 : index
    %c0_11 = arith.constant 0 : index
    %13 = vector.load %arg5[%c0_10, %c0_11] : memref<1x32xf32, #tpu.memory_space<vmem>>, vector<1x32xf32>
    %14 = vector.broadcast %13 : vector<1x32xf32> to vector<8x32xf32>
    %15 = arith.addf %12, %14 : vector<8x32xf32>
    %16 = arith.addf %1, %15 : vector<8x32xf32>
    %c0_12 = arith.constant 0 : index
    %c0_13 = arith.constant 0 : index
    %17 = vector.load %arg6[%c0_12, %c0_13] : memref<1x32xf32, #tpu.memory_space<vmem>>, vector<1x32xf32>
    %c0_14 = arith.constant 0 : index
    %c0_15 = arith.constant 0 : index
    %18 = vector.load %arg7[%c0_14, %c0_15] : memref<1x32xf32, #tpu.memory_space<vmem>>, vector<1x32xf32>
    %cst_16 = arith.constant dense<0.000000e+00> : vector<8xf32>
    %19 = vector.multi_reduction <add>, %16, %cst_16 [1] : vector<8x32xf32> to vector<8xf32>
    %20 = vector.shape_cast %19 : vector<8xf32> to vector<8x1xf32>
    %cst_17 = arith.constant 3.200000e+01 : f32
    %21 = vector.broadcast %cst_17 : f32 to vector<8x1xf32>
    %22 = arith.divf %20, %21 : vector<8x1xf32>
    %23 = vector.broadcast %22 : vector<8x1xf32> to vector<8x32xf32>
    %24 = arith.subf %16, %23 : vector<8x32xf32>
    %25 = arith.mulf %24, %24 : vector<8x32xf32>
    %cst_18 = arith.constant dense<0.000000e+00> : vector<8xf32>
    %26 = vector.multi_reduction <add>, %25, %cst_18 [1] : vector<8x32xf32> to vector<8xf32>
    %27 = vector.shape_cast %26 : vector<8xf32> to vector<8x1xf32>
    %cst_19 = arith.constant 3.200000e+01 : f32
    %28 = vector.broadcast %cst_19 : f32 to vector<8x1xf32>
    %29 = arith.divf %27, %28 : vector<8x1xf32>
    %30 = vector.broadcast %22 : vector<8x1xf32> to vector<8x32xf32>
    %31 = arith.subf %16, %30 : vector<8x32xf32>
    %cst_20 = arith.constant 9.99999974E-6 : f32
    %32 = vector.broadcast %cst_20 : f32 to vector<8x1xf32>
    %33 = arith.addf %29, %32 : vector<8x1xf32>
    %34 = math.rsqrt %33 : vector<8x1xf32>
    %35 = vector.broadcast %34 : vector<8x1xf32> to vector<8x32xf32>
    %36 = arith.mulf %31, %35 : vector<8x32xf32>
    %37 = vector.broadcast %17 : vector<1x32xf32> to vector<8x32xf32>
    %38 = arith.mulf %36, %37 : vector<8x32xf32>
    %39 = vector.broadcast %18 : vector<1x32xf32> to vector<8x32xf32>
    %40 = arith.addf %38, %39 : vector<8x32xf32>
    %c0_21 = arith.constant 0 : index
    %c0_22 = arith.constant 0 : index
    %c0_23 = arith.constant 0 : index
    %41 = vector.load %arg8[%c0_21, %c0_22, %c0_23] : memref<1x8x32xf32, #tpu.memory_space<vmem>>, vector<1x8x32xf32>
    %42 = vector.shape_cast %41 : vector<1x8x32xf32> to vector<8x32xf32>
    %43 = vector.shape_cast %40 : vector<8x32xf32> to vector<1x8x32xf32>
    tpu.vector_store %arg8[%c0_21, %c0_22, %c0_23], %43 {strides = array<i32>} : memref<1x8x32xf32, #tpu.memory_space<vmem>>, vector<1x8x32xf32>,
    return
  }
  func.func @transform_0(%arg0: i32) -> (i32, i32, i32) {
    %c0_i32 = arith.constant 0 : i32
    %c0_i32_0 = arith.constant 0 : i32
    %c0_i32_1 = arith.constant 0 : i32
    return %arg0, %c0_i32, %c0_i32_0 : i32, i32, i32
  }
  func.func @transform_1(%arg0: i32) -> (i32, i32) {
    %c0_i32 = arith.constant 0 : i32
    %c0_i32_0 = arith.constant 0 : i32
    %c0_i32_1 = arith.constant 0 : i32
    return %c0_i32, %c0_i32_0 : i32, i32
  }
  func.func @transform_2(%arg0: i32) -> (i32, i32) {
    %c0_i32 = arith.constant 0 : i32
    %c0_i32_0 = arith.constant 0 : i32
    %c0_i32_1 = arith.constant 0 : i32
    return %c0_i32, %c0_i32_0 : i32, i32
  }
  func.func @transform_3(%arg0: i32) -> (i32, i32) {
    %c0_i32 = arith.constant 0 : i32
    %c0_i32_0 = arith.constant 0 : i32
    %c0_i32_1 = arith.constant 0 : i32
    return %c0_i32, %c0_i32_0 : i32, i32
  }
  func.func @transform_4(%arg0: i32) -> (i32, i32) {
    %c0_i32 = arith.constant 0 : i32
    %c0_i32_0 = arith.constant 0 : i32
    %c0_i32_1 = arith.constant 0 : i32
    return %c0_i32, %c0_i32_0 : i32, i32
  }
  func.func @transform_5(%arg0: i32) -> (i32, i32) {
    %c0_i32 = arith.constant 0 : i32
    %c0_i32_0 = arith.constant 0 : i32
    %c0_i32_1 = arith.constant 0 : i32
    return %c0_i32, %c0_i32_0 : i32, i32
  }
  func.func @transform_6(%arg0: i32) -> (i32, i32) {
    %c0_i32 = arith.constant 0 : i32
    %c0_i32_0 = arith.constant 0 : i32
    %c0_i32_1 = arith.constant 0 : i32
    return %c0_i32, %c0_i32_0 : i32, i32
  }
  func.func @transform_7(%arg0: i32) -> (i32, i32, i32) {
    %c0_i32 = arith.constant 0 : i32
    %c0_i32_0 = arith.constant 0 : i32
    %c0_i32_1 = arith.constant 0 : i32
    return %arg0, %c0_i32, %c0_i32_0 : i32, i32, i32
  }
}

module attributes {stable_mosaic.version = 11 : i64} {
  func.func @_mha_kernel(%arg0: i32, %arg1: memref<1x8x32xf32, #tpu.memory_space<vmem>>, %arg2: memref<1x8x32xf32, #tpu.memory_space<vmem>>, %arg3: memref<32x32xbf16, #tpu.memory_space<vmem>>, %arg4: memref<1x32xf32, #tpu.memory_space<vmem>>, %arg5: memref<32x64xbf16, #tpu.memory_space<vmem>>, %arg6: memref<1x64xf32, #tpu.memory_space<vmem>>, %arg7: memref<32x32xbf16, #tpu.memory_space<vmem>>, %arg8: memref<1x32xf32, #tpu.memory_space<vmem>>, %arg9: memref<1x32xf32, #tpu.memory_space<vmem>>, %arg10: memref<1x32xf32, #tpu.memory_space<vmem>>, %arg11: memref<1x8x32xf32, #tpu.memory_space<vmem>>) attributes {dimension_semantics = [#tpu.dimension_semantics<parallel>], iteration_bounds = array<i64: 2>, scalar_prefetch = 0 : i64, scratch_operands = 0 : i64, tpu.core_type = #tpu.core_type<tc>, window_params = [{transform_indices = @transform_0, window_bounds = array<i64: 1, 8, 32>}, {transform_indices = @transform_1, window_bounds = array<i64: 1, 8, 32>}, {pipeline_mode = #tpu.pipeline_mode<synchronous>, transform_indices = @transform_2, window_bounds = array<i64: 32, 32>}, {pipeline_mode = #tpu.pipeline_mode<synchronous>, transform_indices = @transform_3, window_bounds = array<i64: 1, 32>}, {pipeline_mode = #tpu.pipeline_mode<synchronous>, transform_indices = @transform_4, window_bounds = array<i64: 32, 64>}, {pipeline_mode = #tpu.pipeline_mode<synchronous>, transform_indices = @transform_5, window_bounds = array<i64: 1, 64>}, {pipeline_mode = #tpu.pipeline_mode<synchronous>, transform_indices = @transform_6, window_bounds = array<i64: 32, 32>}, {pipeline_mode = #tpu.pipeline_mode<synchronous>, transform_indices = @transform_7, window_bounds = array<i64: 1, 32>}, {pipeline_mode = #tpu.pipeline_mode<synchronous>, transform_indices = @transform_8, window_bounds = array<i64: 1, 32>}, {pipeline_mode = #tpu.pipeline_mode<synchronous>, transform_indices = @transform_9, window_bounds = array<i64: 1, 32>}, {transform_indices = @transform_10, window_bounds = array<i64: 1, 8, 32>}]} {
    %c0 = arith.constant 0 : index
    %c0_0 = arith.constant 0 : index
    %c0_1 = arith.constant 0 : index
    %0 = vector.load %arg1[%c0, %c0_0, %c0_1] : memref<1x8x32xf32, #tpu.memory_space<vmem>>, vector<1x8x32xf32>
    %1 = vector.shape_cast %0 : vector<1x8x32xf32> to vector<8x32xf32>
    %c0_2 = arith.constant 0 : index
    %c0_3 = arith.constant 0 : index
    %c0_4 = arith.constant 0 : index
    %2 = vector.load %arg2[%c0_2, %c0_3, %c0_4] : memref<1x8x32xf32, #tpu.memory_space<vmem>>, vector<1x8x32xf32>
    %3 = vector.shape_cast %2 : vector<1x8x32xf32> to vector<8x32xf32>
    %4 = arith.truncf %1 : vector<8x32xf32> to vector<8x32xbf16>
    %5 = arith.truncf %3 : vector<8x32xf32> to vector<8x32xbf16>
    %c0_5 = arith.constant 0 : index
    %c0_6 = arith.constant 0 : index
    %6 = vector.load %arg3[%c0_5, %c0_6] : memref<32x32xbf16, #tpu.memory_space<vmem>>, vector<32x32xbf16>
    %cst = arith.constant dense<0.000000e+00> : vector<8x32xf32>
    %7 = tpu.matmul %4, %6, %cst {dimension_numbers = #tpu.dot_dimension_numbers<[1], [0], [0], [1], [0, 0, 1, 1], [], []>} : vector<8x32xbf16>, vector<32x32xbf16>, vector<8x32xf32> -> vector<8x32xf32>
    %c0_7 = arith.constant 0 : index
    %c0_8 = arith.constant 0 : index
    %8 = vector.load %arg4[%c0_7, %c0_8] : memref<1x32xf32, #tpu.memory_space<vmem>>, vector<1x32xf32>
    %9 = vector.broadcast %8 : vector<1x32xf32> to vector<8x32xf32>
    %10 = arith.addf %7, %9 : vector<8x32xf32>
    %c0_9 = arith.constant 0 : index
    %c0_10 = arith.constant 0 : index
    %11 = vector.load %arg5[%c0_9, %c0_10] : memref<32x64xbf16, #tpu.memory_space<vmem>>, vector<32x64xbf16>
    %cst_11 = arith.constant dense<0.000000e+00> : vector<8x64xf32>
    %12 = tpu.matmul %5, %11, %cst_11 {dimension_numbers = #tpu.dot_dimension_numbers<[1], [0], [0], [1], [0, 0, 1, 1], [], []>} : vector<8x32xbf16>, vector<32x64xbf16>, vector<8x64xf32> -> vector<8x64xf32>
    %c0_12 = arith.constant 0 : index
    %c0_13 = arith.constant 0 : index
    %13 = vector.load %arg6[%c0_12, %c0_13] : memref<1x64xf32, #tpu.memory_space<vmem>>, vector<1x64xf32>
    %14 = vector.broadcast %13 : vector<1x64xf32> to vector<8x64xf32>
    %15 = arith.addf %12, %14 : vector<8x64xf32>
    %16 = vector.extract_strided_slice %15 {offsets = [0, 0], sizes = [8, 32], strides = [1, 1]} : vector<8x64xf32> to vector<8x32xf32>
    %17 = vector.extract_strided_slice %15 {offsets = [0, 32], sizes = [8, 32], strides = [1, 1]} : vector<8x64xf32> to vector<8x32xf32>
    %18 = tpu.iota {dimensions = array<i32: 0>} : vector<8x8xi32>
    %19 = tpu.iota {dimensions = array<i32: 1>} : vector<8x8xi32>
    %20 = arith.cmpi sle, %19, %18 : vector<8x8xi32>
    %cst_14 = arith.constant 0.000000e+00 : f32
    %cst_15 = arith.constant -1.000000e+09 : f32
    %21 = vector.broadcast %cst_14 : f32 to vector<8x8xf32>
    %22 = vector.broadcast %cst_15 : f32 to vector<8x8xf32>
    %23 = arith.select %20, %21, %22 : vector<8x8xi1>, vector<8x8xf32>
    %24 = vector.extract_strided_slice %10 {offsets = [0, 0], sizes = [8, 8], strides = [1, 1]} : vector<8x32xf32> to vector<8x8xf32>
    %25 = arith.truncf %24 : vector<8x8xf32> to vector<8x8xbf16>
    %26 = vector.extract_strided_slice %16 {offsets = [0, 0], sizes = [8, 8], strides = [1, 1]} : vector<8x32xf32> to vector<8x8xf32>
    %27 = arith.truncf %26 : vector<8x8xf32> to vector<8x8xbf16>
    %28 = vector.extract_strided_slice %17 {offsets = [0, 0], sizes = [8, 8], strides = [1, 1]} : vector<8x32xf32> to vector<8x8xf32>
    %29 = arith.truncf %28 : vector<8x8xf32> to vector<8x8xbf16>
    %cst_16 = arith.constant dense<0.000000e+00> : vector<8x8xf32>
    %30 = tpu.matmul %25, %27, %cst_16 {dimension_numbers = #tpu.dot_dimension_numbers<[1], [1], [0], [0], [0, 0, 1, 0], [], []>} : vector<8x8xbf16>, vector<8x8xbf16>, vector<8x8xf32> -> vector<8x8xf32>
    %cst_17 = arith.constant 0.353553385 : f32
    %31 = vector.broadcast %cst_17 : f32 to vector<8x8xf32>
    %32 = arith.mulf %30, %31 : vector<8x8xf32>
    %33 = arith.addf %32, %23 : vector<8x8xf32>
    %cst_18 = arith.constant dense<0xFF800000> : vector<8xf32>
    %34 = vector.multi_reduction <maximumf>, %33, %cst_18 [1] : vector<8x8xf32> to vector<8xf32>
    %35 = vector.shape_cast %34 : vector<8xf32> to vector<8x1xf32>
    %36 = vector.broadcast %35 : vector<8x1xf32> to vector<8x8xf32>
    %37 = arith.subf %33, %36 : vector<8x8xf32>
    %38 = math.exp %37 : vector<8x8xf32>
    %cst_19 = arith.constant dense<0.000000e+00> : vector<8xf32>
    %39 = vector.multi_reduction <add>, %38, %cst_19 [1] : vector<8x8xf32> to vector<8xf32>
    %40 = vector.shape_cast %39 : vector<8xf32> to vector<8x1xf32>
    %41 = tpu.reciprocal %40 {approx = true} : vector<8x1xf32> -> vector<8x1xf32>
    %42 = vector.broadcast %41 : vector<8x1xf32> to vector<8x8xf32>
    %43 = arith.mulf %38, %42 : vector<8x8xf32>
    %44 = arith.truncf %43 : vector<8x8xf32> to vector<8x8xbf16>
    %cst_20 = arith.constant dense<0.000000e+00> : vector<8x8xf32>
    %45 = tpu.matmul %44, %29, %cst_20 {dimension_numbers = #tpu.dot_dimension_numbers<[1], [0], [0], [1], [0, 0, 1, 1], [], []>} : vector<8x8xbf16>, vector<8x8xbf16>, vector<8x8xf32> -> vector<8x8xf32>
    %46 = arith.truncf %45 : vector<8x8xf32> to vector<8x8xbf16>
    %c0_21 = arith.constant 0 : index
    %c0_22 = arith.constant 0 : index
    %47 = vector.load %arg7[%c0_21, %c0_22] : memref<32x32xbf16, #tpu.memory_space<vmem>>, vector<8x32xbf16>
    %cst_23 = arith.constant dense<0.000000e+00> : vector<8x32xf32>
    %48 = tpu.matmul %46, %47, %cst_23 {dimension_numbers = #tpu.dot_dimension_numbers<[1], [0], [0], [1], [0, 0, 1, 1], [], []>} : vector<8x8xbf16>, vector<8x32xbf16>, vector<8x32xf32> -> vector<8x32xf32>
    %49 = vector.extract_strided_slice %10 {offsets = [0, 8], sizes = [8, 8], strides = [1, 1]} : vector<8x32xf32> to vector<8x8xf32>
    %50 = arith.truncf %49 : vector<8x8xf32> to vector<8x8xbf16>
    %51 = vector.extract_strided_slice %16 {offsets = [0, 8], sizes = [8, 8], strides = [1, 1]} : vector<8x32xf32> to vector<8x8xf32>
    %52 = arith.truncf %51 : vector<8x8xf32> to vector<8x8xbf16>
    %53 = vector.extract_strided_slice %17 {offsets = [0, 8], sizes = [8, 8], strides = [1, 1]} : vector<8x32xf32> to vector<8x8xf32>
    %54 = arith.truncf %53 : vector<8x8xf32> to vector<8x8xbf16>
    %cst_24 = arith.constant dense<0.000000e+00> : vector<8x8xf32>
    %55 = tpu.matmul %50, %52, %cst_24 {dimension_numbers = #tpu.dot_dimension_numbers<[1], [1], [0], [0], [0, 0, 1, 0], [], []>} : vector<8x8xbf16>, vector<8x8xbf16>, vector<8x8xf32> -> vector<8x8xf32>
    %cst_25 = arith.constant 0.353553385 : f32
    %56 = vector.broadcast %cst_25 : f32 to vector<8x8xf32>
    %57 = arith.mulf %55, %56 : vector<8x8xf32>
    %58 = arith.addf %57, %23 : vector<8x8xf32>
    %cst_26 = arith.constant dense<0xFF800000> : vector<8xf32>
    %59 = vector.multi_reduction <maximumf>, %58, %cst_26 [1] : vector<8x8xf32> to vector<8xf32>
    %60 = vector.shape_cast %59 : vector<8xf32> to vector<8x1xf32>
    %61 = vector.broadcast %60 : vector<8x1xf32> to vector<8x8xf32>
    %62 = arith.subf %58, %61 : vector<8x8xf32>
    %63 = math.exp %62 : vector<8x8xf32>
    %cst_27 = arith.constant dense<0.000000e+00> : vector<8xf32>
    %64 = vector.multi_reduction <add>, %63, %cst_27 [1] : vector<8x8xf32> to vector<8xf32>
    %65 = vector.shape_cast %64 : vector<8xf32> to vector<8x1xf32>
    %66 = tpu.reciprocal %65 {approx = true} : vector<8x1xf32> -> vector<8x1xf32>
    %67 = vector.broadcast %66 : vector<8x1xf32> to vector<8x8xf32>
    %68 = arith.mulf %63, %67 : vector<8x8xf32>
    %69 = arith.truncf %68 : vector<8x8xf32> to vector<8x8xbf16>
    %cst_28 = arith.constant dense<0.000000e+00> : vector<8x8xf32>
    %70 = tpu.matmul %69, %54, %cst_28 {dimension_numbers = #tpu.dot_dimension_numbers<[1], [0], [0], [1], [0, 0, 1, 1], [], []>} : vector<8x8xbf16>, vector<8x8xbf16>, vector<8x8xf32> -> vector<8x8xf32>
    %71 = arith.truncf %70 : vector<8x8xf32> to vector<8x8xbf16>
    %c8 = arith.constant 8 : index
    %c0_29 = arith.constant 0 : index
    %72 = vector.load %arg7[%c8, %c0_29] : memref<32x32xbf16, #tpu.memory_space<vmem>>, vector<8x32xbf16>
    %cst_30 = arith.constant dense<0.000000e+00> : vector<8x32xf32>
    %73 = tpu.matmul %71, %72, %cst_30 {dimension_numbers = #tpu.dot_dimension_numbers<[1], [0], [0], [1], [0, 0, 1, 1], [], []>} : vector<8x8xbf16>, vector<8x32xbf16>, vector<8x32xf32> -> vector<8x32xf32>
    %74 = arith.addf %48, %73 : vector<8x32xf32>
    %75 = vector.extract_strided_slice %10 {offsets = [0, 16], sizes = [8, 8], strides = [1, 1]} : vector<8x32xf32> to vector<8x8xf32>
    %76 = arith.truncf %75 : vector<8x8xf32> to vector<8x8xbf16>
    %77 = vector.extract_strided_slice %16 {offsets = [0, 16], sizes = [8, 8], strides = [1, 1]} : vector<8x32xf32> to vector<8x8xf32>
    %78 = arith.truncf %77 : vector<8x8xf32> to vector<8x8xbf16>
    %79 = vector.extract_strided_slice %17 {offsets = [0, 16], sizes = [8, 8], strides = [1, 1]} : vector<8x32xf32> to vector<8x8xf32>
    %80 = arith.truncf %79 : vector<8x8xf32> to vector<8x8xbf16>
    %cst_31 = arith.constant dense<0.000000e+00> : vector<8x8xf32>
    %81 = tpu.matmul %76, %78, %cst_31 {dimension_numbers = #tpu.dot_dimension_numbers<[1], [1], [0], [0], [0, 0, 1, 0], [], []>} : vector<8x8xbf16>, vector<8x8xbf16>, vector<8x8xf32> -> vector<8x8xf32>
    %cst_32 = arith.constant 0.353553385 : f32
    %82 = vector.broadcast %cst_32 : f32 to vector<8x8xf32>
    %83 = arith.mulf %81, %82 : vector<8x8xf32>
    %84 = arith.addf %83, %23 : vector<8x8xf32>
    %cst_33 = arith.constant dense<0xFF800000> : vector<8xf32>
    %85 = vector.multi_reduction <maximumf>, %84, %cst_33 [1] : vector<8x8xf32> to vector<8xf32>
    %86 = vector.shape_cast %85 : vector<8xf32> to vector<8x1xf32>
    %87 = vector.broadcast %86 : vector<8x1xf32> to vector<8x8xf32>
    %88 = arith.subf %84, %87 : vector<8x8xf32>
    %89 = math.exp %88 : vector<8x8xf32>
    %cst_34 = arith.constant dense<0.000000e+00> : vector<8xf32>
    %90 = vector.multi_reduction <add>, %89, %cst_34 [1] : vector<8x8xf32> to vector<8xf32>
    %91 = vector.shape_cast %90 : vector<8xf32> to vector<8x1xf32>
    %92 = tpu.reciprocal %91 {approx = true} : vector<8x1xf32> -> vector<8x1xf32>
    %93 = vector.broadcast %92 : vector<8x1xf32> to vector<8x8xf32>
    %94 = arith.mulf %89, %93 : vector<8x8xf32>
    %95 = arith.truncf %94 : vector<8x8xf32> to vector<8x8xbf16>
    %cst_35 = arith.constant dense<0.000000e+00> : vector<8x8xf32>
    %96 = tpu.matmul %95, %80, %cst_35 {dimension_numbers = #tpu.dot_dimension_numbers<[1], [0], [0], [1], [0, 0, 1, 1], [], []>} : vector<8x8xbf16>, vector<8x8xbf16>, vector<8x8xf32> -> vector<8x8xf32>
    %97 = arith.truncf %96 : vector<8x8xf32> to vector<8x8xbf16>
    %c16 = arith.constant 16 : index
    %c0_36 = arith.constant 0 : index
    %98 = vector.load %arg7[%c16, %c0_36] : memref<32x32xbf16, #tpu.memory_space<vmem>>, vector<8x32xbf16>
    %cst_37 = arith.constant dense<0.000000e+00> : vector<8x32xf32>
    %99 = tpu.matmul %97, %98, %cst_37 {dimension_numbers = #tpu.dot_dimension_numbers<[1], [0], [0], [1], [0, 0, 1, 1], [], []>} : vector<8x8xbf16>, vector<8x32xbf16>, vector<8x32xf32> -> vector<8x32xf32>
    %100 = arith.addf %74, %99 : vector<8x32xf32>
    %101 = vector.extract_strided_slice %10 {offsets = [0, 24], sizes = [8, 8], strides = [1, 1]} : vector<8x32xf32> to vector<8x8xf32>
    %102 = arith.truncf %101 : vector<8x8xf32> to vector<8x8xbf16>
    %103 = vector.extract_strided_slice %16 {offsets = [0, 24], sizes = [8, 8], strides = [1, 1]} : vector<8x32xf32> to vector<8x8xf32>
    %104 = arith.truncf %103 : vector<8x8xf32> to vector<8x8xbf16>
    %105 = vector.extract_strided_slice %17 {offsets = [0, 24], sizes = [8, 8], strides = [1, 1]} : vector<8x32xf32> to vector<8x8xf32>
    %106 = arith.truncf %105 : vector<8x8xf32> to vector<8x8xbf16>
    %cst_38 = arith.constant dense<0.000000e+00> : vector<8x8xf32>
    %107 = tpu.matmul %102, %104, %cst_38 {dimension_numbers = #tpu.dot_dimension_numbers<[1], [1], [0], [0], [0, 0, 1, 0], [], []>} : vector<8x8xbf16>, vector<8x8xbf16>, vector<8x8xf32> -> vector<8x8xf32>
    %cst_39 = arith.constant 0.353553385 : f32
    %108 = vector.broadcast %cst_39 : f32 to vector<8x8xf32>
    %109 = arith.mulf %107, %108 : vector<8x8xf32>
    %110 = arith.addf %109, %23 : vector<8x8xf32>
    %cst_40 = arith.constant dense<0xFF800000> : vector<8xf32>
    %111 = vector.multi_reduction <maximumf>, %110, %cst_40 [1] : vector<8x8xf32> to vector<8xf32>
    %112 = vector.shape_cast %111 : vector<8xf32> to vector<8x1xf32>
    %113 = vector.broadcast %112 : vector<8x1xf32> to vector<8x8xf32>
    %114 = arith.subf %110, %113 : vector<8x8xf32>
    %115 = math.exp %114 : vector<8x8xf32>
    %cst_41 = arith.constant dense<0.000000e+00> : vector<8xf32>
    %116 = vector.multi_reduction <add>, %115, %cst_41 [1] : vector<8x8xf32> to vector<8xf32>
    %117 = vector.shape_cast %116 : vector<8xf32> to vector<8x1xf32>
    %118 = tpu.reciprocal %117 {approx = true} : vector<8x1xf32> -> vector<8x1xf32>
    %119 = vector.broadcast %118 : vector<8x1xf32> to vector<8x8xf32>
    %120 = arith.mulf %115, %119 : vector<8x8xf32>
    %121 = arith.truncf %120 : vector<8x8xf32> to vector<8x8xbf16>
    %cst_42 = arith.constant dense<0.000000e+00> : vector<8x8xf32>
    %122 = tpu.matmul %121, %106, %cst_42 {dimension_numbers = #tpu.dot_dimension_numbers<[1], [0], [0], [1], [0, 0, 1, 1], [], []>} : vector<8x8xbf16>, vector<8x8xbf16>, vector<8x8xf32> -> vector<8x8xf32>
    %123 = arith.truncf %122 : vector<8x8xf32> to vector<8x8xbf16>
    %c24 = arith.constant 24 : index
    %c0_43 = arith.constant 0 : index
    %124 = vector.load %arg7[%c24, %c0_43] : memref<32x32xbf16, #tpu.memory_space<vmem>>, vector<8x32xbf16>
    %cst_44 = arith.constant dense<0.000000e+00> : vector<8x32xf32>
    %125 = tpu.matmul %123, %124, %cst_44 {dimension_numbers = #tpu.dot_dimension_numbers<[1], [0], [0], [1], [0, 0, 1, 1], [], []>} : vector<8x8xbf16>, vector<8x32xbf16>, vector<8x32xf32> -> vector<8x32xf32>
    %126 = arith.addf %100, %125 : vector<8x32xf32>
    %c0_45 = arith.constant 0 : index
    %c0_46 = arith.constant 0 : index
    %127 = vector.load %arg8[%c0_45, %c0_46] : memref<1x32xf32, #tpu.memory_space<vmem>>, vector<1x32xf32>
    %128 = vector.broadcast %127 : vector<1x32xf32> to vector<8x32xf32>
    %129 = arith.addf %126, %128 : vector<8x32xf32>
    %130 = arith.addf %129, %1 : vector<8x32xf32>
    %c0_47 = arith.constant 0 : index
    %c0_48 = arith.constant 0 : index
    %131 = vector.load %arg9[%c0_47, %c0_48] : memref<1x32xf32, #tpu.memory_space<vmem>>, vector<1x32xf32>
    %c0_49 = arith.constant 0 : index
    %c0_50 = arith.constant 0 : index
    %132 = vector.load %arg10[%c0_49, %c0_50] : memref<1x32xf32, #tpu.memory_space<vmem>>, vector<1x32xf32>
    %cst_51 = arith.constant dense<0.000000e+00> : vector<8xf32>
    %133 = vector.multi_reduction <add>, %130, %cst_51 [1] : vector<8x32xf32> to vector<8xf32>
    %134 = vector.shape_cast %133 : vector<8xf32> to vector<8x1xf32>
    %cst_52 = arith.constant 3.200000e+01 : f32
    %135 = vector.broadcast %cst_52 : f32 to vector<8x1xf32>
    %136 = arith.divf %134, %135 : vector<8x1xf32>
    %137 = vector.broadcast %136 : vector<8x1xf32> to vector<8x32xf32>
    %138 = arith.subf %130, %137 : vector<8x32xf32>
    %139 = arith.mulf %138, %138 : vector<8x32xf32>
    %cst_53 = arith.constant dense<0.000000e+00> : vector<8xf32>
    %140 = vector.multi_reduction <add>, %139, %cst_53 [1] : vector<8x32xf32> to vector<8xf32>
    %141 = vector.shape_cast %140 : vector<8xf32> to vector<8x1xf32>
    %cst_54 = arith.constant 3.200000e+01 : f32
    %142 = vector.broadcast %cst_54 : f32 to vector<8x1xf32>
    %143 = arith.divf %141, %142 : vector<8x1xf32>
    %144 = vector.broadcast %136 : vector<8x1xf32> to vector<8x32xf32>
    %145 = arith.subf %130, %144 : vector<8x32xf32>
    %cst_55 = arith.constant 9.99999974E-6 : f32
    %146 = vector.broadcast %cst_55 : f32 to vector<8x1xf32>
    %147 = arith.addf %143, %146 : vector<8x1xf32>
    %148 = math.rsqrt %147 : vector<8x1xf32>
    %149 = vector.broadcast %148 : vector<8x1xf32> to vector<8x32xf32>
    %150 = arith.mulf %145, %149 : vector<8x32xf32>
    %151 = vector.broadcast %131 : vector<1x32xf32> to vector<8x32xf32>
    %152 = arith.mulf %150, %151 : vector<8x32xf32>
    %153 = vector.broadcast %132 : vector<1x32xf32> to vector<8x32xf32>
    %154 = arith.addf %152, %153 : vector<8x32xf32>
    %c0_56 = arith.constant 0 : index
    %c0_57 = arith.constant 0 : index
    %c0_58 = arith.constant 0 : index
    %155 = vector.load %arg11[%c0_56, %c0_57, %c0_58] : memref<1x8x32xf32, #tpu.memory_space<vmem>>, vector<1x8x32xf32>
    %156 = vector.shape_cast %155 : vector<1x8x32xf32> to vector<8x32xf32>
    %157 = vector.shape_cast %154 : vector<8x32xf32> to vector<1x8x32xf32>
    tpu.vector_store %arg11[%c0_56, %c0_57, %c0_58], %157 {strides = array<i32>} : memref<1x8x32xf32, #tpu.memory_space<vmem>>, vector<1x8x32xf32>,
    return
  }
  func.func @transform_0(%arg0: i32) -> (i32, i32, i32) {
    %c0_i32 = arith.constant 0 : i32
    %c0_i32_0 = arith.constant 0 : i32
    %c0_i32_1 = arith.constant 0 : i32
    return %arg0, %c0_i32, %c0_i32_0 : i32, i32, i32
  }
  func.func @transform_1(%arg0: i32) -> (i32, i32, i32) {
    %c0_i32 = arith.constant 0 : i32
    %c0_i32_0 = arith.constant 0 : i32
    %c0_i32_1 = arith.constant 0 : i32
    return %arg0, %c0_i32, %c0_i32_0 : i32, i32, i32
  }
  func.func @transform_2(%arg0: i32) -> (i32, i32) {
    %c0_i32 = arith.constant 0 : i32
    %c0_i32_0 = arith.constant 0 : i32
    %c0_i32_1 = arith.constant 0 : i32
    return %c0_i32, %c0_i32_0 : i32, i32
  }
  func.func @transform_3(%arg0: i32) -> (i32, i32) {
    %c0_i32 = arith.constant 0 : i32
    %c0_i32_0 = arith.constant 0 : i32
    %c0_i32_1 = arith.constant 0 : i32
    return %c0_i32, %c0_i32_0 : i32, i32
  }
  func.func @transform_4(%arg0: i32) -> (i32, i32) {
    %c0_i32 = arith.constant 0 : i32
    %c0_i32_0 = arith.constant 0 : i32
    %c0_i32_1 = arith.constant 0 : i32
    return %c0_i32, %c0_i32_0 : i32, i32
  }
  func.func @transform_5(%arg0: i32) -> (i32, i32) {
    %c0_i32 = arith.constant 0 : i32
    %c0_i32_0 = arith.constant 0 : i32
    %c0_i32_1 = arith.constant 0 : i32
    return %c0_i32, %c0_i32_0 : i32, i32
  }
  func.func @transform_6(%arg0: i32) -> (i32, i32) {
    %c0_i32 = arith.constant 0 : i32
    %c0_i32_0 = arith.constant 0 : i32
    %c0_i32_1 = arith.constant 0 : i32
    return %c0_i32, %c0_i32_0 : i32, i32
  }
  func.func @transform_7(%arg0: i32) -> (i32, i32) {
    %c0_i32 = arith.constant 0 : i32
    %c0_i32_0 = arith.constant 0 : i32
    %c0_i32_1 = arith.constant 0 : i32
    return %c0_i32, %c0_i32_0 : i32, i32
  }
  func.func @transform_8(%arg0: i32) -> (i32, i32) {
    %c0_i32 = arith.constant 0 : i32
    %c0_i32_0 = arith.constant 0 : i32
    %c0_i32_1 = arith.constant 0 : i32
    return %c0_i32, %c0_i32_0 : i32, i32
  }
  func.func @transform_9(%arg0: i32) -> (i32, i32) {
    %c0_i32 = arith.constant 0 : i32
    %c0_i32_0 = arith.constant 0 : i32
    %c0_i32_1 = arith.constant 0 : i32
    return %c0_i32, %c0_i32_0 : i32, i32
  }
  func.func @transform_10(%arg0: i32) -> (i32, i32, i32) {
    %c0_i32 = arith.constant 0 : i32
    %c0_i32_0 = arith.constant 0 : i32
    %c0_i32_1 = arith.constant 0 : i32
    return %arg0, %c0_i32, %c0_i32_0 : i32, i32, i32
  }
}

module attributes {stable_mosaic.version = 11 : i64} {
  func.func @_mha_kernel(%arg0: i32, %arg1: memref<1x8x32xf32, #tpu.memory_space<vmem>>, %arg2: memref<1x10x32xf32, #tpu.memory_space<vmem>>, %arg3: memref<32x32xbf16, #tpu.memory_space<vmem>>, %arg4: memref<1x32xf32, #tpu.memory_space<vmem>>, %arg5: memref<32x64xbf16, #tpu.memory_space<vmem>>, %arg6: memref<1x64xf32, #tpu.memory_space<vmem>>, %arg7: memref<32x32xbf16, #tpu.memory_space<vmem>>, %arg8: memref<1x32xf32, #tpu.memory_space<vmem>>, %arg9: memref<1x32xf32, #tpu.memory_space<vmem>>, %arg10: memref<1x32xf32, #tpu.memory_space<vmem>>, %arg11: memref<1x8x32xf32, #tpu.memory_space<vmem>>) attributes {dimension_semantics = [#tpu.dimension_semantics<parallel>], iteration_bounds = array<i64: 2>, scalar_prefetch = 0 : i64, scratch_operands = 0 : i64, tpu.core_type = #tpu.core_type<tc>, window_params = [{transform_indices = @transform_0, window_bounds = array<i64: 1, 8, 32>}, {transform_indices = @transform_1, window_bounds = array<i64: 1, 10, 32>}, {pipeline_mode = #tpu.pipeline_mode<synchronous>, transform_indices = @transform_2, window_bounds = array<i64: 32, 32>}, {pipeline_mode = #tpu.pipeline_mode<synchronous>, transform_indices = @transform_3, window_bounds = array<i64: 1, 32>}, {pipeline_mode = #tpu.pipeline_mode<synchronous>, transform_indices = @transform_4, window_bounds = array<i64: 32, 64>}, {pipeline_mode = #tpu.pipeline_mode<synchronous>, transform_indices = @transform_5, window_bounds = array<i64: 1, 64>}, {pipeline_mode = #tpu.pipeline_mode<synchronous>, transform_indices = @transform_6, window_bounds = array<i64: 32, 32>}, {pipeline_mode = #tpu.pipeline_mode<synchronous>, transform_indices = @transform_7, window_bounds = array<i64: 1, 32>}, {pipeline_mode = #tpu.pipeline_mode<synchronous>, transform_indices = @transform_8, window_bounds = array<i64: 1, 32>}, {pipeline_mode = #tpu.pipeline_mode<synchronous>, transform_indices = @transform_9, window_bounds = array<i64: 1, 32>}, {transform_indices = @transform_10, window_bounds = array<i64: 1, 8, 32>}]} {
    %c0 = arith.constant 0 : index
    %c0_0 = arith.constant 0 : index
    %c0_1 = arith.constant 0 : index
    %0 = vector.load %arg1[%c0, %c0_0, %c0_1] : memref<1x8x32xf32, #tpu.memory_space<vmem>>, vector<1x8x32xf32>
    %1 = vector.shape_cast %0 : vector<1x8x32xf32> to vector<8x32xf32>
    %c0_2 = arith.constant 0 : index
    %c0_3 = arith.constant 0 : index
    %c0_4 = arith.constant 0 : index
    %2 = vector.load %arg2[%c0_2, %c0_3, %c0_4] : memref<1x10x32xf32, #tpu.memory_space<vmem>>, vector<1x10x32xf32>
    %3 = vector.shape_cast %2 : vector<1x10x32xf32> to vector<10x32xf32>
    %4 = arith.truncf %1 : vector<8x32xf32> to vector<8x32xbf16>
    %5 = arith.truncf %3 : vector<10x32xf32> to vector<10x32xbf16>
    %c0_5 = arith.constant 0 : index
    %c0_6 = arith.constant 0 : index
    %6 = vector.load %arg3[%c0_5, %c0_6] : memref<32x32xbf16, #tpu.memory_space<vmem>>, vector<32x32xbf16>
    %cst = arith.constant dense<0.000000e+00> : vector<8x32xf32>
    %7 = tpu.matmul %4, %6, %cst {dimension_numbers = #tpu.dot_dimension_numbers<[1], [0], [0], [1], [0, 0, 1, 1], [], []>} : vector<8x32xbf16>, vector<32x32xbf16>, vector<8x32xf32> -> vector<8x32xf32>
    %c0_7 = arith.constant 0 : index
    %c0_8 = arith.constant 0 : index
    %8 = vector.load %arg4[%c0_7, %c0_8] : memref<1x32xf32, #tpu.memory_space<vmem>>, vector<1x32xf32>
    %9 = vector.broadcast %8 : vector<1x32xf32> to vector<8x32xf32>
    %10 = arith.addf %7, %9 : vector<8x32xf32>
    %c0_9 = arith.constant 0 : index
    %c0_10 = arith.constant 0 : index
    %11 = vector.load %arg5[%c0_9, %c0_10] : memref<32x64xbf16, #tpu.memory_space<vmem>>, vector<32x64xbf16>
    %cst_11 = arith.constant dense<0.000000e+00> : vector<10x64xf32>
    %12 = tpu.matmul %5, %11, %cst_11 {dimension_numbers = #tpu.dot_dimension_numbers<[1], [0], [0], [1], [0, 0, 1, 1], [], []>} : vector<10x32xbf16>, vector<32x64xbf16>, vector<10x64xf32> -> vector<10x64xf32>
    %c0_12 = arith.constant 0 : index
    %c0_13 = arith.constant 0 : index
    %13 = vector.load %arg6[%c0_12, %c0_13] : memref<1x64xf32, #tpu.memory_space<vmem>>, vector<1x64xf32>
    %14 = vector.broadcast %13 : vector<1x64xf32> to vector<10x64xf32>
    %15 = arith.addf %12, %14 : vector<10x64xf32>
    %16 = vector.extract_strided_slice %15 {offsets = [0, 0], sizes = [10, 32], strides = [1, 1]} : vector<10x64xf32> to vector<10x32xf32>
    %17 = vector.extract_strided_slice %15 {offsets = [0, 32], sizes = [10, 32], strides = [1, 1]} : vector<10x64xf32> to vector<10x32xf32>
    %18 = vector.extract_strided_slice %10 {offsets = [0, 0], sizes = [8, 8], strides = [1, 1]} : vector<8x32xf32> to vector<8x8xf32>
    %19 = arith.truncf %18 : vector<8x8xf32> to vector<8x8xbf16>
    %20 = vector.extract_strided_slice %16 {offsets = [0, 0], sizes = [10, 8], strides = [1, 1]} : vector<10x32xf32> to vector<10x8xf32>
    %21 = arith.truncf %20 : vector<10x8xf32> to vector<10x8xbf16>
    %22 = vector.extract_strided_slice %17 {offsets = [0, 0], sizes = [10, 8], strides = [1, 1]} : vector<10x32xf32> to vector<10x8xf32>
    %23 = arith.truncf %22 : vector<10x8xf32> to vector<10x8xbf16>
    %cst_14 = arith.constant dense<0.000000e+00> : vector<8x10xf32>
    %24 = tpu.matmul %19, %21, %cst_14 {dimension_numbers = #tpu.dot_dimension_numbers<[1], [1], [0], [0], [0, 0, 1, 0], [], []>} : vector<8x8xbf16>, vector<10x8xbf16>, vector<8x10xf32> -> vector<8x10xf32>
    %cst_15 = arith.constant 0.353553385 : f32
    %25 = vector.broadcast %cst_15 : f32 to vector<8x10xf32>
    %26 = arith.mulf %24, %25 : vector<8x10xf32>
    %cst_16 = arith.constant dense<0xFF800000> : vector<8xf32>
    %27 = vector.multi_reduction <maximumf>, %26, %cst_16 [1] : vector<8x10xf32> to vector<8xf32>
    %28 = vector.shape_cast %27 : vector<8xf32> to vector<8x1xf32>
    %29 = vector.broadcast %28 : vector<8x1xf32> to vector<8x10xf32>
    %30 = arith.subf %26, %29 : vector<8x10xf32>
    %31 = math.exp %30 : vector<8x10xf32>
    %cst_17 = arith.constant dense<0.000000e+00> : vector<8xf32>
    %32 = vector.multi_reduction <add>, %31, %cst_17 [1] : vector<8x10xf32> to vector<8xf32>
    %33 = vector.shape_cast %32 : vector<8xf32> to vector<8x1xf32>
    %34 = tpu.reciprocal %33 {approx = true} : vector<8x1xf32> -> vector<8x1xf32>
    %35 = vector.broadcast %34 : vector<8x1xf32> to vector<8x10xf32>
    %36 = arith.mulf %31, %35 : vector<8x10xf32>
    %37 = arith.truncf %36 : vector<8x10xf32> to vector<8x10xbf16>
    %cst_18 = arith.constant dense<0.000000e+00> : vector<8x8xf32>
    %38 = tpu.matmul %37, %23, %cst_18 {dimension_numbers = #tpu.dot_dimension_numbers<[1], [0], [0], [1], [0, 0, 1, 1], [], []>} : vector<8x10xbf16>, vector<10x8xbf16>, vector<8x8xf32> -> vector<8x8xf32>
    %39 = arith.truncf %38 : vector<8x8xf32> to vector<8x8xbf16>
    %c0_19 = arith.constant 0 : index
    %c0_20 = arith.constant 0 : index
    %40 = vector.load %arg7[%c0_19, %c0_20] : memref<32x32xbf16, #tpu.memory_space<vmem>>, vector<8x32xbf16>
    %cst_21 = arith.constant dense<0.000000e+00> : vector<8x32xf32>
    %41 = tpu.matmul %39, %40, %cst_21 {dimension_numbers = #tpu.dot_dimension_numbers<[1], [0], [0], [1], [0, 0, 1, 1], [], []>} : vector<8x8xbf16>, vector<8x32xbf16>, vector<8x32xf32> -> vector<8x32xf32>
    %42 = vector.extract_strided_slice %10 {offsets = [0, 8], sizes = [8, 8], strides = [1, 1]} : vector<8x32xf32> to vector<8x8xf32>
    %43 = arith.truncf %42 : vector<8x8xf32> to vector<8x8xbf16>
    %44 = vector.extract_strided_slice %16 {offsets = [0, 8], sizes = [10, 8], strides = [1, 1]} : vector<10x32xf32> to vector<10x8xf32>
    %45 = arith.truncf %44 : vector<10x8xf32> to vector<10x8xbf16>
    %46 = vector.extract_strided_slice %17 {offsets = [0, 8], sizes = [10, 8], strides = [1, 1]} : vector<10x32xf32> to vector<10x8xf32>
    %47 = arith.truncf %46 : vector<10x8xf32> to vector<10x8xbf16>
    %cst_22 = arith.constant dense<0.000000e+00> : vector<8x10xf32>
    %48 = tpu.matmul %43, %45, %cst_22 {dimension_numbers = #tpu.dot_dimension_numbers<[1], [1], [0], [0], [0, 0, 1, 0], [], []>} : vector<8x8xbf16>, vector<10x8xbf16>, vector<8x10xf32> -> vector<8x10xf32>
    %cst_23 = arith.constant 0.353553385 : f32
    %49 = vector.broadcast %cst_23 : f32 to vector<8x10xf32>
    %50 = arith.mulf %48, %49 : vector<8x10xf32>
    %cst_24 = arith.constant dense<0xFF800000> : vector<8xf32>
    %51 = vector.multi_reduction <maximumf>, %50, %cst_24 [1] : vector<8x10xf32> to vector<8xf32>
    %52 = vector.shape_cast %51 : vector<8xf32> to vector<8x1xf32>
    %53 = vector.broadcast %52 : vector<8x1xf32> to vector<8x10xf32>
    %54 = arith.subf %50, %53 : vector<8x10xf32>
    %55 = math.exp %54 : vector<8x10xf32>
    %cst_25 = arith.constant dense<0.000000e+00> : vector<8xf32>
    %56 = vector.multi_reduction <add>, %55, %cst_25 [1] : vector<8x10xf32> to vector<8xf32>
    %57 = vector.shape_cast %56 : vector<8xf32> to vector<8x1xf32>
    %58 = tpu.reciprocal %57 {approx = true} : vector<8x1xf32> -> vector<8x1xf32>
    %59 = vector.broadcast %58 : vector<8x1xf32> to vector<8x10xf32>
    %60 = arith.mulf %55, %59 : vector<8x10xf32>
    %61 = arith.truncf %60 : vector<8x10xf32> to vector<8x10xbf16>
    %cst_26 = arith.constant dense<0.000000e+00> : vector<8x8xf32>
    %62 = tpu.matmul %61, %47, %cst_26 {dimension_numbers = #tpu.dot_dimension_numbers<[1], [0], [0], [1], [0, 0, 1, 1], [], []>} : vector<8x10xbf16>, vector<10x8xbf16>, vector<8x8xf32> -> vector<8x8xf32>
    %63 = arith.truncf %62 : vector<8x8xf32> to vector<8x8xbf16>
    %c8 = arith.constant 8 : index
    %c0_27 = arith.constant 0 : index
    %64 = vector.load %arg7[%c8, %c0_27] : memref<32x32xbf16, #tpu.memory_space<vmem>>, vector<8x32xbf16>
    %cst_28 = arith.constant dense<0.000000e+00> : vector<8x32xf32>
    %65 = tpu.matmul %63, %64, %cst_28 {dimension_numbers = #tpu.dot_dimension_numbers<[1], [0], [0], [1], [0, 0, 1, 1], [], []>} : vector<8x8xbf16>, vector<8x32xbf16>, vector<8x32xf32> -> vector<8x32xf32>
    %66 = arith.addf %41, %65 : vector<8x32xf32>
    %67 = vector.extract_strided_slice %10 {offsets = [0, 16], sizes = [8, 8], strides = [1, 1]} : vector<8x32xf32> to vector<8x8xf32>
    %68 = arith.truncf %67 : vector<8x8xf32> to vector<8x8xbf16>
    %69 = vector.extract_strided_slice %16 {offsets = [0, 16], sizes = [10, 8], strides = [1, 1]} : vector<10x32xf32> to vector<10x8xf32>
    %70 = arith.truncf %69 : vector<10x8xf32> to vector<10x8xbf16>
    %71 = vector.extract_strided_slice %17 {offsets = [0, 16], sizes = [10, 8], strides = [1, 1]} : vector<10x32xf32> to vector<10x8xf32>
    %72 = arith.truncf %71 : vector<10x8xf32> to vector<10x8xbf16>
    %cst_29 = arith.constant dense<0.000000e+00> : vector<8x10xf32>
    %73 = tpu.matmul %68, %70, %cst_29 {dimension_numbers = #tpu.dot_dimension_numbers<[1], [1], [0], [0], [0, 0, 1, 0], [], []>} : vector<8x8xbf16>, vector<10x8xbf16>, vector<8x10xf32> -> vector<8x10xf32>
    %cst_30 = arith.constant 0.353553385 : f32
    %74 = vector.broadcast %cst_30 : f32 to vector<8x10xf32>
    %75 = arith.mulf %73, %74 : vector<8x10xf32>
    %cst_31 = arith.constant dense<0xFF800000> : vector<8xf32>
    %76 = vector.multi_reduction <maximumf>, %75, %cst_31 [1] : vector<8x10xf32> to vector<8xf32>
    %77 = vector.shape_cast %76 : vector<8xf32> to vector<8x1xf32>
    %78 = vector.broadcast %77 : vector<8x1xf32> to vector<8x10xf32>
    %79 = arith.subf %75, %78 : vector<8x10xf32>
    %80 = math.exp %79 : vector<8x10xf32>
    %cst_32 = arith.constant dense<0.000000e+00> : vector<8xf32>
    %81 = vector.multi_reduction <add>, %80, %cst_32 [1] : vector<8x10xf32> to vector<8xf32>
    %82 = vector.shape_cast %81 : vector<8xf32> to vector<8x1xf32>
    %83 = tpu.reciprocal %82 {approx = true} : vector<8x1xf32> -> vector<8x1xf32>
    %84 = vector.broadcast %83 : vector<8x1xf32> to vector<8x10xf32>
    %85 = arith.mulf %80, %84 : vector<8x10xf32>
    %86 = arith.truncf %85 : vector<8x10xf32> to vector<8x10xbf16>
    %cst_33 = arith.constant dense<0.000000e+00> : vector<8x8xf32>
    %87 = tpu.matmul %86, %72, %cst_33 {dimension_numbers = #tpu.dot_dimension_numbers<[1], [0], [0], [1], [0, 0, 1, 1], [], []>} : vector<8x10xbf16>, vector<10x8xbf16>, vector<8x8xf32> -> vector<8x8xf32>
    %88 = arith.truncf %87 : vector<8x8xf32> to vector<8x8xbf16>
    %c16 = arith.constant 16 : index
    %c0_34 = arith.constant 0 : index
    %89 = vector.load %arg7[%c16, %c0_34] : memref<32x32xbf16, #tpu.memory_space<vmem>>, vector<8x32xbf16>
    %cst_35 = arith.constant dense<0.000000e+00> : vector<8x32xf32>
    %90 = tpu.matmul %88, %89, %cst_35 {dimension_numbers = #tpu.dot_dimension_numbers<[1], [0], [0], [1], [0, 0, 1, 1], [], []>} : vector<8x8xbf16>, vector<8x32xbf16>, vector<8x32xf32> -> vector<8x32xf32>
    %91 = arith.addf %66, %90 : vector<8x32xf32>
    %92 = vector.extract_strided_slice %10 {offsets = [0, 24], sizes = [8, 8], strides = [1, 1]} : vector<8x32xf32> to vector<8x8xf32>
    %93 = arith.truncf %92 : vector<8x8xf32> to vector<8x8xbf16>
    %94 = vector.extract_strided_slice %16 {offsets = [0, 24], sizes = [10, 8], strides = [1, 1]} : vector<10x32xf32> to vector<10x8xf32>
    %95 = arith.truncf %94 : vector<10x8xf32> to vector<10x8xbf16>
    %96 = vector.extract_strided_slice %17 {offsets = [0, 24], sizes = [10, 8], strides = [1, 1]} : vector<10x32xf32> to vector<10x8xf32>
    %97 = arith.truncf %96 : vector<10x8xf32> to vector<10x8xbf16>
    %cst_36 = arith.constant dense<0.000000e+00> : vector<8x10xf32>
    %98 = tpu.matmul %93, %95, %cst_36 {dimension_numbers = #tpu.dot_dimension_numbers<[1], [1], [0], [0], [0, 0, 1, 0], [], []>} : vector<8x8xbf16>, vector<10x8xbf16>, vector<8x10xf32> -> vector<8x10xf32>
    %cst_37 = arith.constant 0.353553385 : f32
    %99 = vector.broadcast %cst_37 : f32 to vector<8x10xf32>
    %100 = arith.mulf %98, %99 : vector<8x10xf32>
    %cst_38 = arith.constant dense<0xFF800000> : vector<8xf32>
    %101 = vector.multi_reduction <maximumf>, %100, %cst_38 [1] : vector<8x10xf32> to vector<8xf32>
    %102 = vector.shape_cast %101 : vector<8xf32> to vector<8x1xf32>
    %103 = vector.broadcast %102 : vector<8x1xf32> to vector<8x10xf32>
    %104 = arith.subf %100, %103 : vector<8x10xf32>
    %105 = math.exp %104 : vector<8x10xf32>
    %cst_39 = arith.constant dense<0.000000e+00> : vector<8xf32>
    %106 = vector.multi_reduction <add>, %105, %cst_39 [1] : vector<8x10xf32> to vector<8xf32>
    %107 = vector.shape_cast %106 : vector<8xf32> to vector<8x1xf32>
    %108 = tpu.reciprocal %107 {approx = true} : vector<8x1xf32> -> vector<8x1xf32>
    %109 = vector.broadcast %108 : vector<8x1xf32> to vector<8x10xf32>
    %110 = arith.mulf %105, %109 : vector<8x10xf32>
    %111 = arith.truncf %110 : vector<8x10xf32> to vector<8x10xbf16>
    %cst_40 = arith.constant dense<0.000000e+00> : vector<8x8xf32>
    %112 = tpu.matmul %111, %97, %cst_40 {dimension_numbers = #tpu.dot_dimension_numbers<[1], [0], [0], [1], [0, 0, 1, 1], [], []>} : vector<8x10xbf16>, vector<10x8xbf16>, vector<8x8xf32> -> vector<8x8xf32>
    %113 = arith.truncf %112 : vector<8x8xf32> to vector<8x8xbf16>
    %c24 = arith.constant 24 : index
    %c0_41 = arith.constant 0 : index
    %114 = vector.load %arg7[%c24, %c0_41] : memref<32x32xbf16, #tpu.memory_space<vmem>>, vector<8x32xbf16>
    %cst_42 = arith.constant dense<0.000000e+00> : vector<8x32xf32>
    %115 = tpu.matmul %113, %114, %cst_42 {dimension_numbers = #tpu.dot_dimension_numbers<[1], [0], [0], [1], [0, 0, 1, 1], [], []>} : vector<8x8xbf16>, vector<8x32xbf16>, vector<8x32xf32> -> vector<8x32xf32>
    %116 = arith.addf %91, %115 : vector<8x32xf32>
    %c0_43 = arith.constant 0 : index
    %c0_44 = arith.constant 0 : index
    %117 = vector.load %arg8[%c0_43, %c0_44] : memref<1x32xf32, #tpu.memory_space<vmem>>, vector<1x32xf32>
    %118 = vector.broadcast %117 : vector<1x32xf32> to vector<8x32xf32>
    %119 = arith.addf %116, %118 : vector<8x32xf32>
    %120 = arith.addf %119, %1 : vector<8x32xf32>
    %c0_45 = arith.constant 0 : index
    %c0_46 = arith.constant 0 : index
    %121 = vector.load %arg9[%c0_45, %c0_46] : memref<1x32xf32, #tpu.memory_space<vmem>>, vector<1x32xf32>
    %c0_47 = arith.constant 0 : index
    %c0_48 = arith.constant 0 : index
    %122 = vector.load %arg10[%c0_47, %c0_48] : memref<1x32xf32, #tpu.memory_space<vmem>>, vector<1x32xf32>
    %cst_49 = arith.constant dense<0.000000e+00> : vector<8xf32>
    %123 = vector.multi_reduction <add>, %120, %cst_49 [1] : vector<8x32xf32> to vector<8xf32>
    %124 = vector.shape_cast %123 : vector<8xf32> to vector<8x1xf32>
    %cst_50 = arith.constant 3.200000e+01 : f32
    %125 = vector.broadcast %cst_50 : f32 to vector<8x1xf32>
    %126 = arith.divf %124, %125 : vector<8x1xf32>
    %127 = vector.broadcast %126 : vector<8x1xf32> to vector<8x32xf32>
    %128 = arith.subf %120, %127 : vector<8x32xf32>
    %129 = arith.mulf %128, %128 : vector<8x32xf32>
    %cst_51 = arith.constant dense<0.000000e+00> : vector<8xf32>
    %130 = vector.multi_reduction <add>, %129, %cst_51 [1] : vector<8x32xf32> to vector<8xf32>
    %131 = vector.shape_cast %130 : vector<8xf32> to vector<8x1xf32>
    %cst_52 = arith.constant 3.200000e+01 : f32
    %132 = vector.broadcast %cst_52 : f32 to vector<8x1xf32>
    %133 = arith.divf %131, %132 : vector<8x1xf32>
    %134 = vector.broadcast %126 : vector<8x1xf32> to vector<8x32xf32>
    %135 = arith.subf %120, %134 : vector<8x32xf32>
    %cst_53 = arith.constant 9.99999974E-6 : f32
    %136 = vector.broadcast %cst_53 : f32 to vector<8x1xf32>
    %137 = arith.addf %133, %136 : vector<8x1xf32>
    %138 = math.rsqrt %137 : vector<8x1xf32>
    %139 = vector.broadcast %138 : vector<8x1xf32> to vector<8x32xf32>
    %140 = arith.mulf %135, %139 : vector<8x32xf32>
    %141 = vector.broadcast %121 : vector<1x32xf32> to vector<8x32xf32>
    %142 = arith.mulf %140, %141 : vector<8x32xf32>
    %143 = vector.broadcast %122 : vector<1x32xf32> to vector<8x32xf32>
    %144 = arith.addf %142, %143 : vector<8x32xf32>
    %c0_54 = arith.constant 0 : index
    %c0_55 = arith.constant 0 : index
    %c0_56 = arith.constant 0 : index
    %145 = vector.load %arg11[%c0_54, %c0_55, %c0_56] : memref<1x8x32xf32, #tpu.memory_space<vmem>>, vector<1x8x32xf32>
    %146 = vector.shape_cast %145 : vector<1x8x32xf32> to vector<8x32xf32>
    %147 = vector.shape_cast %144 : vector<8x32xf32> to vector<1x8x32xf32>
    tpu.vector_store %arg11[%c0_54, %c0_55, %c0_56], %147 {strides = array<i32>} : memref<1x8x32xf32, #tpu.memory_space<vmem>>, vector<1x8x32xf32>,
    return
  }
  func.func @transform_0(%arg0: i32) -> (i32, i32, i32) {
    %c0_i32 = arith.constant 0 : i32
    %c0_i32_0 = arith.constant 0 : i32
    %c0_i32_1 = arith.constant 0 : i32
    return %arg0, %c0_i32, %c0_i32_0 : i32, i32, i32
  }
  func.func @transform_1(%arg0: i32) -> (i32, i32, i32) {
    %c0_i32 = arith.constant 0 : i32
    %c0_i32_0 = arith.constant 0 : i32
    %c0_i32_1 = arith.constant 0 : i32
    return %arg0, %c0_i32, %c0_i32_0 : i32, i32, i32
  }
  func.func @transform_2(%arg0: i32) -> (i32, i32) {
    %c0_i32 = arith.constant 0 : i32
    %c0_i32_0 = arith.constant 0 : i32
    %c0_i32_1 = arith.constant 0 : i32
    return %c0_i32, %c0_i32_0 : i32, i32
  }
  func.func @transform_3(%arg0: i32) -> (i32, i32) {
    %c0_i32 = arith.constant 0 : i32
    %c0_i32_0 = arith.constant 0 : i32
    %c0_i32_1 = arith.constant 0 : i32
    return %c0_i32, %c0_i32_0 : i32, i32
  }
  func.func @transform_4(%arg0: i32) -> (i32, i32) {
    %c0_i32 = arith.constant 0 : i32
    %c0_i32_0 = arith.constant 0 : i32
    %c0_i32_1 = arith.constant 0 : i32
    return %c0_i32, %c0_i32_0 : i32, i32
  }
  func.func @transform_5(%arg0: i32) -> (i32, i32) {
    %c0_i32 = arith.constant 0 : i32
    %c0_i32_0 = arith.constant 0 : i32
    %c0_i32_1 = arith.constant 0 : i32
    return %c0_i32, %c0_i32_0 : i32, i32
  }
  func.func @transform_6(%arg0: i32) -> (i32, i32) {
    %c0_i32 = arith.constant 0 : i32
    %c0_i32_0 = arith.constant 0 : i32
    %c0_i32_1 = arith.constant 0 : i32
    return %c0_i32, %c0_i32_0 : i32, i32
  }
  func.func @transform_7(%arg0: i32) -> (i32, i32) {
    %c0_i32 = arith.constant 0 : i32
    %c0_i32_0 = arith.constant 0 : i32
    %c0_i32_1 = arith.constant 0 : i32
    return %c0_i32, %c0_i32_0 : i32, i32
  }
  func.func @transform_8(%arg0: i32) -> (i32, i32) {
    %c0_i32 = arith.constant 0 : i32
    %c0_i32_0 = arith.constant 0 : i32
    %c0_i32_1 = arith.constant 0 : i32
    return %c0_i32, %c0_i32_0 : i32, i32
  }
  func.func @transform_9(%arg0: i32) -> (i32, i32) {
    %c0_i32 = arith.constant 0 : i32
    %c0_i32_0 = arith.constant 0 : i32
    %c0_i32_1 = arith.constant 0 : i32
    return %c0_i32, %c0_i32_0 : i32, i32
  }
  func.func @transform_10(%arg0: i32) -> (i32, i32, i32) {
    %c0_i32 = arith.constant 0 : i32
    %c0_i32_0 = arith.constant 0 : i32
    %c0_i32_1 = arith.constant 0 : i32
    return %arg0, %c0_i32, %c0_i32_0 : i32, i32, i32
  }
}

module attributes {stable_mosaic.version = 11 : i64} {
  func.func @_ffn_kernel(%arg0: i32, %arg1: memref<1x8x32xf32, #tpu.memory_space<vmem>>, %arg2: memref<32x64xbf16, #tpu.memory_space<vmem>>, %arg3: memref<1x64xf32, #tpu.memory_space<vmem>>, %arg4: memref<64x32xbf16, #tpu.memory_space<vmem>>, %arg5: memref<1x32xf32, #tpu.memory_space<vmem>>, %arg6: memref<1x32xf32, #tpu.memory_space<vmem>>, %arg7: memref<1x32xf32, #tpu.memory_space<vmem>>, %arg8: memref<1x8x32xf32, #tpu.memory_space<vmem>>) attributes {dimension_semantics = [#tpu.dimension_semantics<parallel>], iteration_bounds = array<i64: 2>, scalar_prefetch = 0 : i64, scratch_operands = 0 : i64, tpu.core_type = #tpu.core_type<tc>, window_params = [{transform_indices = @transform_0, window_bounds = array<i64: 1, 8, 32>}, {pipeline_mode = #tpu.pipeline_mode<synchronous>, transform_indices = @transform_1, window_bounds = array<i64: 32, 64>}, {pipeline_mode = #tpu.pipeline_mode<synchronous>, transform_indices = @transform_2, window_bounds = array<i64: 1, 64>}, {pipeline_mode = #tpu.pipeline_mode<synchronous>, transform_indices = @transform_3, window_bounds = array<i64: 64, 32>}, {pipeline_mode = #tpu.pipeline_mode<synchronous>, transform_indices = @transform_4, window_bounds = array<i64: 1, 32>}, {pipeline_mode = #tpu.pipeline_mode<synchronous>, transform_indices = @transform_5, window_bounds = array<i64: 1, 32>}, {pipeline_mode = #tpu.pipeline_mode<synchronous>, transform_indices = @transform_6, window_bounds = array<i64: 1, 32>}, {transform_indices = @transform_7, window_bounds = array<i64: 1, 8, 32>}]} {
    %c0 = arith.constant 0 : index
    %c0_0 = arith.constant 0 : index
    %c0_1 = arith.constant 0 : index
    %0 = vector.load %arg1[%c0, %c0_0, %c0_1] : memref<1x8x32xf32, #tpu.memory_space<vmem>>, vector<1x8x32xf32>
    %1 = vector.shape_cast %0 : vector<1x8x32xf32> to vector<8x32xf32>
    %2 = arith.truncf %1 : vector<8x32xf32> to vector<8x32xbf16>
    %c0_2 = arith.constant 0 : index
    %c0_3 = arith.constant 0 : index
    %3 = vector.load %arg2[%c0_2, %c0_3] : memref<32x64xbf16, #tpu.memory_space<vmem>>, vector<32x64xbf16>
    %cst = arith.constant dense<0.000000e+00> : vector<8x64xf32>
    %4 = tpu.matmul %2, %3, %cst {dimension_numbers = #tpu.dot_dimension_numbers<[1], [0], [0], [1], [0, 0, 1, 1], [], []>} : vector<8x32xbf16>, vector<32x64xbf16>, vector<8x64xf32> -> vector<8x64xf32>
    %c0_4 = arith.constant 0 : index
    %c0_5 = arith.constant 0 : index
    %5 = vector.load %arg3[%c0_4, %c0_5] : memref<1x64xf32, #tpu.memory_space<vmem>>, vector<1x64xf32>
    %6 = vector.broadcast %5 : vector<1x64xf32> to vector<8x64xf32>
    %7 = arith.addf %4, %6 : vector<8x64xf32>
    %cst_6 = arith.constant 0.000000e+00 : f32
    %8 = vector.broadcast %cst_6 : f32 to vector<8x64xf32>
    %9 = arith.maximumf %7, %8 : vector<8x64xf32>
    %10 = arith.truncf %9 : vector<8x64xf32> to vector<8x64xbf16>
    %c0_7 = arith.constant 0 : index
    %c0_8 = arith.constant 0 : index
    %11 = vector.load %arg4[%c0_7, %c0_8] : memref<64x32xbf16, #tpu.memory_space<vmem>>, vector<64x32xbf16>
    %cst_9 = arith.constant dense<0.000000e+00> : vector<8x32xf32>
    %12 = tpu.matmul %10, %11, %cst_9 {dimension_numbers = #tpu.dot_dimension_numbers<[1], [0], [0], [1], [0, 0, 1, 1], [], []>} : vector<8x64xbf16>, vector<64x32xbf16>, vector<8x32xf32> -> vector<8x32xf32>
    %c0_10 = arith.constant 0 : index
    %c0_11 = arith.constant 0 : index
    %13 = vector.load %arg5[%c0_10, %c0_11] : memref<1x32xf32, #tpu.memory_space<vmem>>, vector<1x32xf32>
    %14 = vector.broadcast %13 : vector<1x32xf32> to vector<8x32xf32>
    %15 = arith.addf %12, %14 : vector<8x32xf32>
    %16 = arith.addf %1, %15 : vector<8x32xf32>
    %c0_12 = arith.constant 0 : index
    %c0_13 = arith.constant 0 : index
    %17 = vector.load %arg6[%c0_12, %c0_13] : memref<1x32xf32, #tpu.memory_space<vmem>>, vector<1x32xf32>
    %c0_14 = arith.constant 0 : index
    %c0_15 = arith.constant 0 : index
    %18 = vector.load %arg7[%c0_14, %c0_15] : memref<1x32xf32, #tpu.memory_space<vmem>>, vector<1x32xf32>
    %cst_16 = arith.constant dense<0.000000e+00> : vector<8xf32>
    %19 = vector.multi_reduction <add>, %16, %cst_16 [1] : vector<8x32xf32> to vector<8xf32>
    %20 = vector.shape_cast %19 : vector<8xf32> to vector<8x1xf32>
    %cst_17 = arith.constant 3.200000e+01 : f32
    %21 = vector.broadcast %cst_17 : f32 to vector<8x1xf32>
    %22 = arith.divf %20, %21 : vector<8x1xf32>
    %23 = vector.broadcast %22 : vector<8x1xf32> to vector<8x32xf32>
    %24 = arith.subf %16, %23 : vector<8x32xf32>
    %25 = arith.mulf %24, %24 : vector<8x32xf32>
    %cst_18 = arith.constant dense<0.000000e+00> : vector<8xf32>
    %26 = vector.multi_reduction <add>, %25, %cst_18 [1] : vector<8x32xf32> to vector<8xf32>
    %27 = vector.shape_cast %26 : vector<8xf32> to vector<8x1xf32>
    %cst_19 = arith.constant 3.200000e+01 : f32
    %28 = vector.broadcast %cst_19 : f32 to vector<8x1xf32>
    %29 = arith.divf %27, %28 : vector<8x1xf32>
    %30 = vector.broadcast %22 : vector<8x1xf32> to vector<8x32xf32>
    %31 = arith.subf %16, %30 : vector<8x32xf32>
    %cst_20 = arith.constant 9.99999974E-6 : f32
    %32 = vector.broadcast %cst_20 : f32 to vector<8x1xf32>
    %33 = arith.addf %29, %32 : vector<8x1xf32>
    %34 = math.rsqrt %33 : vector<8x1xf32>
    %35 = vector.broadcast %34 : vector<8x1xf32> to vector<8x32xf32>
    %36 = arith.mulf %31, %35 : vector<8x32xf32>
    %37 = vector.broadcast %17 : vector<1x32xf32> to vector<8x32xf32>
    %38 = arith.mulf %36, %37 : vector<8x32xf32>
    %39 = vector.broadcast %18 : vector<1x32xf32> to vector<8x32xf32>
    %40 = arith.addf %38, %39 : vector<8x32xf32>
    %c0_21 = arith.constant 0 : index
    %c0_22 = arith.constant 0 : index
    %c0_23 = arith.constant 0 : index
    %41 = vector.load %arg8[%c0_21, %c0_22, %c0_23] : memref<1x8x32xf32, #tpu.memory_space<vmem>>, vector<1x8x32xf32>
    %42 = vector.shape_cast %41 : vector<1x8x32xf32> to vector<8x32xf32>
    %43 = vector.shape_cast %40 : vector<8x32xf32> to vector<1x8x32xf32>
    tpu.vector_store %arg8[%c0_21, %c0_22, %c0_23], %43 {strides = array<i32>} : memref<1x8x32xf32, #tpu.memory_space<vmem>>, vector<1x8x32xf32>,
    return
  }
  func.func @transform_0(%arg0: i32) -> (i32, i32, i32) {
    %c0_i32 = arith.constant 0 : i32
    %c0_i32_0 = arith.constant 0 : i32
    %c0_i32_1 = arith.constant 0 : i32
    return %arg0, %c0_i32, %c0_i32_0 : i32, i32, i32
  }
  func.func @transform_1(%arg0: i32) -> (i32, i32) {
    %c0_i32 = arith.constant 0 : i32
    %c0_i32_0 = arith.constant 0 : i32
    %c0_i32_1 = arith.constant 0 : i32
    return %c0_i32, %c0_i32_0 : i32, i32
  }
  func.func @transform_2(%arg0: i32) -> (i32, i32) {
    %c0_i32 = arith.constant 0 : i32
    %c0_i32_0 = arith.constant 0 : i32
    %c0_i32_1 = arith.constant 0 : i32
    return %c0_i32, %c0_i32_0 : i32, i32
  }
  func.func @transform_3(%arg0: i32) -> (i32, i32) {
    %c0_i32 = arith.constant 0 : i32
    %c0_i32_0 = arith.constant 0 : i32
    %c0_i32_1 = arith.constant 0 : i32
    return %c0_i32, %c0_i32_0 : i32, i32
  }
  func.func @transform_4(%arg0: i32) -> (i32, i32) {
    %c0_i32 = arith.constant 0 : i32
    %c0_i32_0 = arith.constant 0 : i32
    %c0_i32_1 = arith.constant 0 : i32
    return %c0_i32, %c0_i32_0 : i32, i32
  }
  func.func @transform_5(%arg0: i32) -> (i32, i32) {
    %c0_i32 = arith.constant 0 : i32
    %c0_i32_0 = arith.constant 0 : i32
    %c0_i32_1 = arith.constant 0 : i32
    return %c0_i32, %c0_i32_0 : i32, i32
  }
  func.func @transform_6(%arg0: i32) -> (i32, i32) {
    %c0_i32 = arith.constant 0 : i32
    %c0_i32_0 = arith.constant 0 : i32
    %c0_i32_1 = arith.constant 0 : i32
    return %c0_i32, %c0_i32_0 : i32, i32
  }
  func.func @transform_7(%arg0: i32) -> (i32, i32, i32) {
    %c0_i32 = arith.constant 0 : i32
    %c0_i32_0 = arith.constant 0 : i32
    %c0_i32_1 = arith.constant 0 : i32
    return %arg0, %c0_i32, %c0_i32_0 : i32, i32, i32
  }
}

module attributes {stable_mosaic.version = 11 : i64} {
  func.func @_mha_kernel(%arg0: i32, %arg1: memref<1x8x32xf32, #tpu.memory_space<vmem>>, %arg2: memref<1x8x32xf32, #tpu.memory_space<vmem>>, %arg3: memref<32x32xbf16, #tpu.memory_space<vmem>>, %arg4: memref<1x32xf32, #tpu.memory_space<vmem>>, %arg5: memref<32x64xbf16, #tpu.memory_space<vmem>>, %arg6: memref<1x64xf32, #tpu.memory_space<vmem>>, %arg7: memref<32x32xbf16, #tpu.memory_space<vmem>>, %arg8: memref<1x32xf32, #tpu.memory_space<vmem>>, %arg9: memref<1x32xf32, #tpu.memory_space<vmem>>, %arg10: memref<1x32xf32, #tpu.memory_space<vmem>>, %arg11: memref<1x8x32xf32, #tpu.memory_space<vmem>>) attributes {dimension_semantics = [#tpu.dimension_semantics<parallel>], iteration_bounds = array<i64: 2>, scalar_prefetch = 0 : i64, scratch_operands = 0 : i64, tpu.core_type = #tpu.core_type<tc>, window_params = [{transform_indices = @transform_0, window_bounds = array<i64: 1, 8, 32>}, {transform_indices = @transform_1, window_bounds = array<i64: 1, 8, 32>}, {pipeline_mode = #tpu.pipeline_mode<synchronous>, transform_indices = @transform_2, window_bounds = array<i64: 32, 32>}, {pipeline_mode = #tpu.pipeline_mode<synchronous>, transform_indices = @transform_3, window_bounds = array<i64: 1, 32>}, {pipeline_mode = #tpu.pipeline_mode<synchronous>, transform_indices = @transform_4, window_bounds = array<i64: 32, 64>}, {pipeline_mode = #tpu.pipeline_mode<synchronous>, transform_indices = @transform_5, window_bounds = array<i64: 1, 64>}, {pipeline_mode = #tpu.pipeline_mode<synchronous>, transform_indices = @transform_6, window_bounds = array<i64: 32, 32>}, {pipeline_mode = #tpu.pipeline_mode<synchronous>, transform_indices = @transform_7, window_bounds = array<i64: 1, 32>}, {pipeline_mode = #tpu.pipeline_mode<synchronous>, transform_indices = @transform_8, window_bounds = array<i64: 1, 32>}, {pipeline_mode = #tpu.pipeline_mode<synchronous>, transform_indices = @transform_9, window_bounds = array<i64: 1, 32>}, {transform_indices = @transform_10, window_bounds = array<i64: 1, 8, 32>}]} {
    %c0 = arith.constant 0 : index
    %c0_0 = arith.constant 0 : index
    %c0_1 = arith.constant 0 : index
    %0 = vector.load %arg1[%c0, %c0_0, %c0_1] : memref<1x8x32xf32, #tpu.memory_space<vmem>>, vector<1x8x32xf32>
    %1 = vector.shape_cast %0 : vector<1x8x32xf32> to vector<8x32xf32>
    %c0_2 = arith.constant 0 : index
    %c0_3 = arith.constant 0 : index
    %c0_4 = arith.constant 0 : index
    %2 = vector.load %arg2[%c0_2, %c0_3, %c0_4] : memref<1x8x32xf32, #tpu.memory_space<vmem>>, vector<1x8x32xf32>
    %3 = vector.shape_cast %2 : vector<1x8x32xf32> to vector<8x32xf32>
    %4 = arith.truncf %1 : vector<8x32xf32> to vector<8x32xbf16>
    %5 = arith.truncf %3 : vector<8x32xf32> to vector<8x32xbf16>
    %c0_5 = arith.constant 0 : index
    %c0_6 = arith.constant 0 : index
    %6 = vector.load %arg3[%c0_5, %c0_6] : memref<32x32xbf16, #tpu.memory_space<vmem>>, vector<32x32xbf16>
    %cst = arith.constant dense<0.000000e+00> : vector<8x32xf32>
    %7 = tpu.matmul %4, %6, %cst {dimension_numbers = #tpu.dot_dimension_numbers<[1], [0], [0], [1], [0, 0, 1, 1], [], []>} : vector<8x32xbf16>, vector<32x32xbf16>, vector<8x32xf32> -> vector<8x32xf32>
    %c0_7 = arith.constant 0 : index
    %c0_8 = arith.constant 0 : index
    %8 = vector.load %arg4[%c0_7, %c0_8] : memref<1x32xf32, #tpu.memory_space<vmem>>, vector<1x32xf32>
    %9 = vector.broadcast %8 : vector<1x32xf32> to vector<8x32xf32>
    %10 = arith.addf %7, %9 : vector<8x32xf32>
    %c0_9 = arith.constant 0 : index
    %c0_10 = arith.constant 0 : index
    %11 = vector.load %arg5[%c0_9, %c0_10] : memref<32x64xbf16, #tpu.memory_space<vmem>>, vector<32x64xbf16>
    %cst_11 = arith.constant dense<0.000000e+00> : vector<8x64xf32>
    %12 = tpu.matmul %5, %11, %cst_11 {dimension_numbers = #tpu.dot_dimension_numbers<[1], [0], [0], [1], [0, 0, 1, 1], [], []>} : vector<8x32xbf16>, vector<32x64xbf16>, vector<8x64xf32> -> vector<8x64xf32>
    %c0_12 = arith.constant 0 : index
    %c0_13 = arith.constant 0 : index
    %13 = vector.load %arg6[%c0_12, %c0_13] : memref<1x64xf32, #tpu.memory_space<vmem>>, vector<1x64xf32>
    %14 = vector.broadcast %13 : vector<1x64xf32> to vector<8x64xf32>
    %15 = arith.addf %12, %14 : vector<8x64xf32>
    %16 = vector.extract_strided_slice %15 {offsets = [0, 0], sizes = [8, 32], strides = [1, 1]} : vector<8x64xf32> to vector<8x32xf32>
    %17 = vector.extract_strided_slice %15 {offsets = [0, 32], sizes = [8, 32], strides = [1, 1]} : vector<8x64xf32> to vector<8x32xf32>
    %18 = tpu.iota {dimensions = array<i32: 0>} : vector<8x8xi32>
    %19 = tpu.iota {dimensions = array<i32: 1>} : vector<8x8xi32>
    %20 = arith.cmpi sle, %19, %18 : vector<8x8xi32>
    %cst_14 = arith.constant 0.000000e+00 : f32
    %cst_15 = arith.constant -1.000000e+09 : f32
    %21 = vector.broadcast %cst_14 : f32 to vector<8x8xf32>
    %22 = vector.broadcast %cst_15 : f32 to vector<8x8xf32>
    %23 = arith.select %20, %21, %22 : vector<8x8xi1>, vector<8x8xf32>
    %24 = vector.extract_strided_slice %10 {offsets = [0, 0], sizes = [8, 8], strides = [1, 1]} : vector<8x32xf32> to vector<8x8xf32>
    %25 = arith.truncf %24 : vector<8x8xf32> to vector<8x8xbf16>
    %26 = vector.extract_strided_slice %16 {offsets = [0, 0], sizes = [8, 8], strides = [1, 1]} : vector<8x32xf32> to vector<8x8xf32>
    %27 = arith.truncf %26 : vector<8x8xf32> to vector<8x8xbf16>
    %28 = vector.extract_strided_slice %17 {offsets = [0, 0], sizes = [8, 8], strides = [1, 1]} : vector<8x32xf32> to vector<8x8xf32>
    %29 = arith.truncf %28 : vector<8x8xf32> to vector<8x8xbf16>
    %cst_16 = arith.constant dense<0.000000e+00> : vector<8x8xf32>
    %30 = tpu.matmul %25, %27, %cst_16 {dimension_numbers = #tpu.dot_dimension_numbers<[1], [1], [0], [0], [0, 0, 1, 0], [], []>} : vector<8x8xbf16>, vector<8x8xbf16>, vector<8x8xf32> -> vector<8x8xf32>
    %cst_17 = arith.constant 0.353553385 : f32
    %31 = vector.broadcast %cst_17 : f32 to vector<8x8xf32>
    %32 = arith.mulf %30, %31 : vector<8x8xf32>
    %33 = arith.addf %32, %23 : vector<8x8xf32>
    %cst_18 = arith.constant dense<0xFF800000> : vector<8xf32>
    %34 = vector.multi_reduction <maximumf>, %33, %cst_18 [1] : vector<8x8xf32> to vector<8xf32>
    %35 = vector.shape_cast %34 : vector<8xf32> to vector<8x1xf32>
    %36 = vector.broadcast %35 : vector<8x1xf32> to vector<8x8xf32>
    %37 = arith.subf %33, %36 : vector<8x8xf32>
    %38 = math.exp %37 : vector<8x8xf32>
    %cst_19 = arith.constant dense<0.000000e+00> : vector<8xf32>
    %39 = vector.multi_reduction <add>, %38, %cst_19 [1] : vector<8x8xf32> to vector<8xf32>
    %40 = vector.shape_cast %39 : vector<8xf32> to vector<8x1xf32>
    %41 = tpu.reciprocal %40 {approx = true} : vector<8x1xf32> -> vector<8x1xf32>
    %42 = vector.broadcast %41 : vector<8x1xf32> to vector<8x8xf32>
    %43 = arith.mulf %38, %42 : vector<8x8xf32>
    %44 = arith.truncf %43 : vector<8x8xf32> to vector<8x8xbf16>
    %cst_20 = arith.constant dense<0.000000e+00> : vector<8x8xf32>
    %45 = tpu.matmul %44, %29, %cst_20 {dimension_numbers = #tpu.dot_dimension_numbers<[1], [0], [0], [1], [0, 0, 1, 1], [], []>} : vector<8x8xbf16>, vector<8x8xbf16>, vector<8x8xf32> -> vector<8x8xf32>
    %46 = arith.truncf %45 : vector<8x8xf32> to vector<8x8xbf16>
    %c0_21 = arith.constant 0 : index
    %c0_22 = arith.constant 0 : index
    %47 = vector.load %arg7[%c0_21, %c0_22] : memref<32x32xbf16, #tpu.memory_space<vmem>>, vector<8x32xbf16>
    %cst_23 = arith.constant dense<0.000000e+00> : vector<8x32xf32>
    %48 = tpu.matmul %46, %47, %cst_23 {dimension_numbers = #tpu.dot_dimension_numbers<[1], [0], [0], [1], [0, 0, 1, 1], [], []>} : vector<8x8xbf16>, vector<8x32xbf16>, vector<8x32xf32> -> vector<8x32xf32>
    %49 = vector.extract_strided_slice %10 {offsets = [0, 8], sizes = [8, 8], strides = [1, 1]} : vector<8x32xf32> to vector<8x8xf32>
    %50 = arith.truncf %49 : vector<8x8xf32> to vector<8x8xbf16>
    %51 = vector.extract_strided_slice %16 {offsets = [0, 8], sizes = [8, 8], strides = [1, 1]} : vector<8x32xf32> to vector<8x8xf32>
    %52 = arith.truncf %51 : vector<8x8xf32> to vector<8x8xbf16>
    %53 = vector.extract_strided_slice %17 {offsets = [0, 8], sizes = [8, 8], strides = [1, 1]} : vector<8x32xf32> to vector<8x8xf32>
    %54 = arith.truncf %53 : vector<8x8xf32> to vector<8x8xbf16>
    %cst_24 = arith.constant dense<0.000000e+00> : vector<8x8xf32>
    %55 = tpu.matmul %50, %52, %cst_24 {dimension_numbers = #tpu.dot_dimension_numbers<[1], [1], [0], [0], [0, 0, 1, 0], [], []>} : vector<8x8xbf16>, vector<8x8xbf16>, vector<8x8xf32> -> vector<8x8xf32>
    %cst_25 = arith.constant 0.353553385 : f32
    %56 = vector.broadcast %cst_25 : f32 to vector<8x8xf32>
    %57 = arith.mulf %55, %56 : vector<8x8xf32>
    %58 = arith.addf %57, %23 : vector<8x8xf32>
    %cst_26 = arith.constant dense<0xFF800000> : vector<8xf32>
    %59 = vector.multi_reduction <maximumf>, %58, %cst_26 [1] : vector<8x8xf32> to vector<8xf32>
    %60 = vector.shape_cast %59 : vector<8xf32> to vector<8x1xf32>
    %61 = vector.broadcast %60 : vector<8x1xf32> to vector<8x8xf32>
    %62 = arith.subf %58, %61 : vector<8x8xf32>
    %63 = math.exp %62 : vector<8x8xf32>
    %cst_27 = arith.constant dense<0.000000e+00> : vector<8xf32>
    %64 = vector.multi_reduction <add>, %63, %cst_27 [1] : vector<8x8xf32> to vector<8xf32>
    %65 = vector.shape_cast %64 : vector<8xf32> to vector<8x1xf32>
    %66 = tpu.reciprocal %65 {approx = true} : vector<8x1xf32> -> vector<8x1xf32>
    %67 = vector.broadcast %66 : vector<8x1xf32> to vector<8x8xf32>
    %68 = arith.mulf %63, %67 : vector<8x8xf32>
    %69 = arith.truncf %68 : vector<8x8xf32> to vector<8x8xbf16>
    %cst_28 = arith.constant dense<0.000000e+00> : vector<8x8xf32>
    %70 = tpu.matmul %69, %54, %cst_28 {dimension_numbers = #tpu.dot_dimension_numbers<[1], [0], [0], [1], [0, 0, 1, 1], [], []>} : vector<8x8xbf16>, vector<8x8xbf16>, vector<8x8xf32> -> vector<8x8xf32>
    %71 = arith.truncf %70 : vector<8x8xf32> to vector<8x8xbf16>
    %c8 = arith.constant 8 : index
    %c0_29 = arith.constant 0 : index
    %72 = vector.load %arg7[%c8, %c0_29] : memref<32x32xbf16, #tpu.memory_space<vmem>>, vector<8x32xbf16>
    %cst_30 = arith.constant dense<0.000000e+00> : vector<8x32xf32>
    %73 = tpu.matmul %71, %72, %cst_30 {dimension_numbers = #tpu.dot_dimension_numbers<[1], [0], [0], [1], [0, 0, 1, 1], [], []>} : vector<8x8xbf16>, vector<8x32xbf16>, vector<8x32xf32> -> vector<8x32xf32>
    %74 = arith.addf %48, %73 : vector<8x32xf32>
    %75 = vector.extract_strided_slice %10 {offsets = [0, 16], sizes = [8, 8], strides = [1, 1]} : vector<8x32xf32> to vector<8x8xf32>
    %76 = arith.truncf %75 : vector<8x8xf32> to vector<8x8xbf16>
    %77 = vector.extract_strided_slice %16 {offsets = [0, 16], sizes = [8, 8], strides = [1, 1]} : vector<8x32xf32> to vector<8x8xf32>
    %78 = arith.truncf %77 : vector<8x8xf32> to vector<8x8xbf16>
    %79 = vector.extract_strided_slice %17 {offsets = [0, 16], sizes = [8, 8], strides = [1, 1]} : vector<8x32xf32> to vector<8x8xf32>
    %80 = arith.truncf %79 : vector<8x8xf32> to vector<8x8xbf16>
    %cst_31 = arith.constant dense<0.000000e+00> : vector<8x8xf32>
    %81 = tpu.matmul %76, %78, %cst_31 {dimension_numbers = #tpu.dot_dimension_numbers<[1], [1], [0], [0], [0, 0, 1, 0], [], []>} : vector<8x8xbf16>, vector<8x8xbf16>, vector<8x8xf32> -> vector<8x8xf32>
    %cst_32 = arith.constant 0.353553385 : f32
    %82 = vector.broadcast %cst_32 : f32 to vector<8x8xf32>
    %83 = arith.mulf %81, %82 : vector<8x8xf32>
    %84 = arith.addf %83, %23 : vector<8x8xf32>
    %cst_33 = arith.constant dense<0xFF800000> : vector<8xf32>
    %85 = vector.multi_reduction <maximumf>, %84, %cst_33 [1] : vector<8x8xf32> to vector<8xf32>
    %86 = vector.shape_cast %85 : vector<8xf32> to vector<8x1xf32>
    %87 = vector.broadcast %86 : vector<8x1xf32> to vector<8x8xf32>
    %88 = arith.subf %84, %87 : vector<8x8xf32>
    %89 = math.exp %88 : vector<8x8xf32>
    %cst_34 = arith.constant dense<0.000000e+00> : vector<8xf32>
    %90 = vector.multi_reduction <add>, %89, %cst_34 [1] : vector<8x8xf32> to vector<8xf32>
    %91 = vector.shape_cast %90 : vector<8xf32> to vector<8x1xf32>
    %92 = tpu.reciprocal %91 {approx = true} : vector<8x1xf32> -> vector<8x1xf32>
    %93 = vector.broadcast %92 : vector<8x1xf32> to vector<8x8xf32>
    %94 = arith.mulf %89, %93 : vector<8x8xf32>
    %95 = arith.truncf %94 : vector<8x8xf32> to vector<8x8xbf16>
    %cst_35 = arith.constant dense<0.000000e+00> : vector<8x8xf32>
    %96 = tpu.matmul %95, %80, %cst_35 {dimension_numbers = #tpu.dot_dimension_numbers<[1], [0], [0], [1], [0, 0, 1, 1], [], []>} : vector<8x8xbf16>, vector<8x8xbf16>, vector<8x8xf32> -> vector<8x8xf32>
    %97 = arith.truncf %96 : vector<8x8xf32> to vector<8x8xbf16>
    %c16 = arith.constant 16 : index
    %c0_36 = arith.constant 0 : index
    %98 = vector.load %arg7[%c16, %c0_36] : memref<32x32xbf16, #tpu.memory_space<vmem>>, vector<8x32xbf16>
    %cst_37 = arith.constant dense<0.000000e+00> : vector<8x32xf32>
    %99 = tpu.matmul %97, %98, %cst_37 {dimension_numbers = #tpu.dot_dimension_numbers<[1], [0], [0], [1], [0, 0, 1, 1], [], []>} : vector<8x8xbf16>, vector<8x32xbf16>, vector<8x32xf32> -> vector<8x32xf32>
    %100 = arith.addf %74, %99 : vector<8x32xf32>
    %101 = vector.extract_strided_slice %10 {offsets = [0, 24], sizes = [8, 8], strides = [1, 1]} : vector<8x32xf32> to vector<8x8xf32>
    %102 = arith.truncf %101 : vector<8x8xf32> to vector<8x8xbf16>
    %103 = vector.extract_strided_slice %16 {offsets = [0, 24], sizes = [8, 8], strides = [1, 1]} : vector<8x32xf32> to vector<8x8xf32>
    %104 = arith.truncf %103 : vector<8x8xf32> to vector<8x8xbf16>
    %105 = vector.extract_strided_slice %17 {offsets = [0, 24], sizes = [8, 8], strides = [1, 1]} : vector<8x32xf32> to vector<8x8xf32>
    %106 = arith.truncf %105 : vector<8x8xf32> to vector<8x8xbf16>
    %cst_38 = arith.constant dense<0.000000e+00> : vector<8x8xf32>
    %107 = tpu.matmul %102, %104, %cst_38 {dimension_numbers = #tpu.dot_dimension_numbers<[1], [1], [0], [0], [0, 0, 1, 0], [], []>} : vector<8x8xbf16>, vector<8x8xbf16>, vector<8x8xf32> -> vector<8x8xf32>
    %cst_39 = arith.constant 0.353553385 : f32
    %108 = vector.broadcast %cst_39 : f32 to vector<8x8xf32>
    %109 = arith.mulf %107, %108 : vector<8x8xf32>
    %110 = arith.addf %109, %23 : vector<8x8xf32>
    %cst_40 = arith.constant dense<0xFF800000> : vector<8xf32>
    %111 = vector.multi_reduction <maximumf>, %110, %cst_40 [1] : vector<8x8xf32> to vector<8xf32>
    %112 = vector.shape_cast %111 : vector<8xf32> to vector<8x1xf32>
    %113 = vector.broadcast %112 : vector<8x1xf32> to vector<8x8xf32>
    %114 = arith.subf %110, %113 : vector<8x8xf32>
    %115 = math.exp %114 : vector<8x8xf32>
    %cst_41 = arith.constant dense<0.000000e+00> : vector<8xf32>
    %116 = vector.multi_reduction <add>, %115, %cst_41 [1] : vector<8x8xf32> to vector<8xf32>
    %117 = vector.shape_cast %116 : vector<8xf32> to vector<8x1xf32>
    %118 = tpu.reciprocal %117 {approx = true} : vector<8x1xf32> -> vector<8x1xf32>
    %119 = vector.broadcast %118 : vector<8x1xf32> to vector<8x8xf32>
    %120 = arith.mulf %115, %119 : vector<8x8xf32>
    %121 = arith.truncf %120 : vector<8x8xf32> to vector<8x8xbf16>
    %cst_42 = arith.constant dense<0.000000e+00> : vector<8x8xf32>
    %122 = tpu.matmul %121, %106, %cst_42 {dimension_numbers = #tpu.dot_dimension_numbers<[1], [0], [0], [1], [0, 0, 1, 1], [], []>} : vector<8x8xbf16>, vector<8x8xbf16>, vector<8x8xf32> -> vector<8x8xf32>
    %123 = arith.truncf %122 : vector<8x8xf32> to vector<8x8xbf16>
    %c24 = arith.constant 24 : index
    %c0_43 = arith.constant 0 : index
    %124 = vector.load %arg7[%c24, %c0_43] : memref<32x32xbf16, #tpu.memory_space<vmem>>, vector<8x32xbf16>
    %cst_44 = arith.constant dense<0.000000e+00> : vector<8x32xf32>
    %125 = tpu.matmul %123, %124, %cst_44 {dimension_numbers = #tpu.dot_dimension_numbers<[1], [0], [0], [1], [0, 0, 1, 1], [], []>} : vector<8x8xbf16>, vector<8x32xbf16>, vector<8x32xf32> -> vector<8x32xf32>
    %126 = arith.addf %100, %125 : vector<8x32xf32>
    %c0_45 = arith.constant 0 : index
    %c0_46 = arith.constant 0 : index
    %127 = vector.load %arg8[%c0_45, %c0_46] : memref<1x32xf32, #tpu.memory_space<vmem>>, vector<1x32xf32>
    %128 = vector.broadcast %127 : vector<1x32xf32> to vector<8x32xf32>
    %129 = arith.addf %126, %128 : vector<8x32xf32>
    %130 = arith.addf %129, %1 : vector<8x32xf32>
    %c0_47 = arith.constant 0 : index
    %c0_48 = arith.constant 0 : index
    %131 = vector.load %arg9[%c0_47, %c0_48] : memref<1x32xf32, #tpu.memory_space<vmem>>, vector<1x32xf32>
    %c0_49 = arith.constant 0 : index
    %c0_50 = arith.constant 0 : index
    %132 = vector.load %arg10[%c0_49, %c0_50] : memref<1x32xf32, #tpu.memory_space<vmem>>, vector<1x32xf32>
    %cst_51 = arith.constant dense<0.000000e+00> : vector<8xf32>
    %133 = vector.multi_reduction <add>, %130, %cst_51 [1] : vector<8x32xf32> to vector<8xf32>
    %134 = vector.shape_cast %133 : vector<8xf32> to vector<8x1xf32>
    %cst_52 = arith.constant 3.200000e+01 : f32
    %135 = vector.broadcast %cst_52 : f32 to vector<8x1xf32>
    %136 = arith.divf %134, %135 : vector<8x1xf32>
    %137 = vector.broadcast %136 : vector<8x1xf32> to vector<8x32xf32>
    %138 = arith.subf %130, %137 : vector<8x32xf32>
    %139 = arith.mulf %138, %138 : vector<8x32xf32>
    %cst_53 = arith.constant dense<0.000000e+00> : vector<8xf32>
    %140 = vector.multi_reduction <add>, %139, %cst_53 [1] : vector<8x32xf32> to vector<8xf32>
    %141 = vector.shape_cast %140 : vector<8xf32> to vector<8x1xf32>
    %cst_54 = arith.constant 3.200000e+01 : f32
    %142 = vector.broadcast %cst_54 : f32 to vector<8x1xf32>
    %143 = arith.divf %141, %142 : vector<8x1xf32>
    %144 = vector.broadcast %136 : vector<8x1xf32> to vector<8x32xf32>
    %145 = arith.subf %130, %144 : vector<8x32xf32>
    %cst_55 = arith.constant 9.99999974E-6 : f32
    %146 = vector.broadcast %cst_55 : f32 to vector<8x1xf32>
    %147 = arith.addf %143, %146 : vector<8x1xf32>
    %148 = math.rsqrt %147 : vector<8x1xf32>
    %149 = vector.broadcast %148 : vector<8x1xf32> to vector<8x32xf32>
    %150 = arith.mulf %145, %149 : vector<8x32xf32>
    %151 = vector.broadcast %131 : vector<1x32xf32> to vector<8x32xf32>
    %152 = arith.mulf %150, %151 : vector<8x32xf32>
    %153 = vector.broadcast %132 : vector<1x32xf32> to vector<8x32xf32>
    %154 = arith.addf %152, %153 : vector<8x32xf32>
    %c0_56 = arith.constant 0 : index
    %c0_57 = arith.constant 0 : index
    %c0_58 = arith.constant 0 : index
    %155 = vector.load %arg11[%c0_56, %c0_57, %c0_58] : memref<1x8x32xf32, #tpu.memory_space<vmem>>, vector<1x8x32xf32>
    %156 = vector.shape_cast %155 : vector<1x8x32xf32> to vector<8x32xf32>
    %157 = vector.shape_cast %154 : vector<8x32xf32> to vector<1x8x32xf32>
    tpu.vector_store %arg11[%c0_56, %c0_57, %c0_58], %157 {strides = array<i32>} : memref<1x8x32xf32, #tpu.memory_space<vmem>>, vector<1x8x32xf32>,
    return
  }
  func.func @transform_0(%arg0: i32) -> (i32, i32, i32) {
    %c0_i32 = arith.constant 0 : i32
    %c0_i32_0 = arith.constant 0 : i32
    %c0_i32_1 = arith.constant 0 : i32
    return %arg0, %c0_i32, %c0_i32_0 : i32, i32, i32
  }
  func.func @transform_1(%arg0: i32) -> (i32, i32, i32) {
    %c0_i32 = arith.constant 0 : i32
    %c0_i32_0 = arith.constant 0 : i32
    %c0_i32_1 = arith.constant 0 : i32
    return %arg0, %c0_i32, %c0_i32_0 : i32, i32, i32
  }
  func.func @transform_2(%arg0: i32) -> (i32, i32) {
    %c0_i32 = arith.constant 0 : i32
    %c0_i32_0 = arith.constant 0 : i32
    %c0_i32_1 = arith.constant 0 : i32
    return %c0_i32, %c0_i32_0 : i32, i32
  }
  func.func @transform_3(%arg0: i32) -> (i32, i32) {
    %c0_i32 = arith.constant 0 : i32
    %c0_i32_0 = arith.constant 0 : i32
    %c0_i32_1 = arith.constant 0 : i32
    return %c0_i32, %c0_i32_0 : i32, i32
  }
  func.func @transform_4(%arg0: i32) -> (i32, i32) {
    %c0_i32 = arith.constant 0 : i32
    %c0_i32_0 = arith.constant 0 : i32
    %c0_i32_1 = arith.constant 0 : i32
    return %c0_i32, %c0_i32_0 : i32, i32
  }
  func.func @transform_5(%arg0: i32) -> (i32, i32) {
    %c0_i32 = arith.constant 0 : i32
    %c0_i32_0 = arith.constant 0 : i32
    %c0_i32_1 = arith.constant 0 : i32
    return %c0_i32, %c0_i32_0 : i32, i32
  }
  func.func @transform_6(%arg0: i32) -> (i32, i32) {
    %c0_i32 = arith.constant 0 : i32
    %c0_i32_0 = arith.constant 0 : i32
    %c0_i32_1 = arith.constant 0 : i32
    return %c0_i32, %c0_i32_0 : i32, i32
  }
  func.func @transform_7(%arg0: i32) -> (i32, i32) {
    %c0_i32 = arith.constant 0 : i32
    %c0_i32_0 = arith.constant 0 : i32
    %c0_i32_1 = arith.constant 0 : i32
    return %c0_i32, %c0_i32_0 : i32, i32
  }
  func.func @transform_8(%arg0: i32) -> (i32, i32) {
    %c0_i32 = arith.constant 0 : i32
    %c0_i32_0 = arith.constant 0 : i32
    %c0_i32_1 = arith.constant 0 : i32
    return %c0_i32, %c0_i32_0 : i32, i32
  }
  func.func @transform_9(%arg0: i32) -> (i32, i32) {
    %c0_i32 = arith.constant 0 : i32
    %c0_i32_0 = arith.constant 0 : i32
    %c0_i32_1 = arith.constant 0 : i32
    return %c0_i32, %c0_i32_0 : i32, i32
  }
  func.func @transform_10(%arg0: i32) -> (i32, i32, i32) {
    %c0_i32 = arith.constant 0 : i32
    %c0_i32_0 = arith.constant 0 : i32
    %c0_i32_1 = arith.constant 0 : i32
    return %arg0, %c0_i32, %c0_i32_0 : i32, i32, i32
  }
}

module attributes {stable_mosaic.version = 11 : i64} {
  func.func @_ln_head_kernel(%arg0: memref<16x32xf32, #tpu.memory_space<vmem>>, %arg1: memref<1x32xf32, #tpu.memory_space<vmem>>, %arg2: memref<1x32xf32, #tpu.memory_space<vmem>>, %arg3: memref<32x48xbf16, #tpu.memory_space<vmem>>, %arg4: memref<1x48xf32, #tpu.memory_space<vmem>>, %arg5: memref<16x48xf32, #tpu.memory_space<vmem>>) attributes {dimension_semantics = [], scalar_prefetch = 0 : i64, scratch_operands = 0 : i64, tpu.core_type = #tpu.core_type<tc>} {
    %c0 = arith.constant 0 : index
    %c0_0 = arith.constant 0 : index
    %0 = vector.load %arg0[%c0, %c0_0] : memref<16x32xf32, #tpu.memory_space<vmem>>, vector<16x32xf32>
    %c0_1 = arith.constant 0 : index
    %c0_2 = arith.constant 0 : index
    %1 = vector.load %arg1[%c0_1, %c0_2] : memref<1x32xf32, #tpu.memory_space<vmem>>, vector<1x32xf32>
    %c0_3 = arith.constant 0 : index
    %c0_4 = arith.constant 0 : index
    %2 = vector.load %arg2[%c0_3, %c0_4] : memref<1x32xf32, #tpu.memory_space<vmem>>, vector<1x32xf32>
    %cst = arith.constant dense<0.000000e+00> : vector<16xf32>
    %3 = vector.multi_reduction <add>, %0, %cst [1] : vector<16x32xf32> to vector<16xf32>
    %4 = vector.shape_cast %3 : vector<16xf32> to vector<16x1xf32>
    %cst_5 = arith.constant 3.200000e+01 : f32
    %5 = vector.broadcast %cst_5 : f32 to vector<16x1xf32>
    %6 = arith.divf %4, %5 : vector<16x1xf32>
    %7 = vector.broadcast %6 : vector<16x1xf32> to vector<16x32xf32>
    %8 = arith.subf %0, %7 : vector<16x32xf32>
    %9 = arith.mulf %8, %8 : vector<16x32xf32>
    %cst_6 = arith.constant dense<0.000000e+00> : vector<16xf32>
    %10 = vector.multi_reduction <add>, %9, %cst_6 [1] : vector<16x32xf32> to vector<16xf32>
    %11 = vector.shape_cast %10 : vector<16xf32> to vector<16x1xf32>
    %cst_7 = arith.constant 3.200000e+01 : f32
    %12 = vector.broadcast %cst_7 : f32 to vector<16x1xf32>
    %13 = arith.divf %11, %12 : vector<16x1xf32>
    %14 = vector.broadcast %6 : vector<16x1xf32> to vector<16x32xf32>
    %15 = arith.subf %0, %14 : vector<16x32xf32>
    %cst_8 = arith.constant 9.99999974E-6 : f32
    %16 = vector.broadcast %cst_8 : f32 to vector<16x1xf32>
    %17 = arith.addf %13, %16 : vector<16x1xf32>
    %18 = math.rsqrt %17 : vector<16x1xf32>
    %19 = vector.broadcast %18 : vector<16x1xf32> to vector<16x32xf32>
    %20 = arith.mulf %15, %19 : vector<16x32xf32>
    %21 = vector.broadcast %1 : vector<1x32xf32> to vector<16x32xf32>
    %22 = arith.mulf %20, %21 : vector<16x32xf32>
    %23 = vector.broadcast %2 : vector<1x32xf32> to vector<16x32xf32>
    %24 = arith.addf %22, %23 : vector<16x32xf32>
    %25 = arith.truncf %24 : vector<16x32xf32> to vector<16x32xbf16>
    %c0_9 = arith.constant 0 : index
    %c0_10 = arith.constant 0 : index
    %26 = vector.load %arg3[%c0_9, %c0_10] : memref<32x48xbf16, #tpu.memory_space<vmem>>, vector<32x48xbf16>
    %cst_11 = arith.constant dense<0.000000e+00> : vector<16x48xf32>
    %27 = tpu.matmul %25, %26, %cst_11 {dimension_numbers = #tpu.dot_dimension_numbers<[1], [0], [0], [1], [0, 0, 1, 1], [], []>} : vector<16x32xbf16>, vector<32x48xbf16>, vector<16x48xf32> -> vector<16x48xf32>
    %c0_12 = arith.constant 0 : index
    %c0_13 = arith.constant 0 : index
    %28 = vector.load %arg4[%c0_12, %c0_13] : memref<1x48xf32, #tpu.memory_space<vmem>>, vector<1x48xf32>
    %29 = vector.broadcast %28 : vector<1x48xf32> to vector<16x48xf32>
    %30 = arith.addf %27, %29 : vector<16x48xf32>
    %c0_14 = arith.constant 0 : index
    %c0_15 = arith.constant 0 : index
    %31 = vector.load %arg5[%c0_14, %c0_15] : memref<16x48xf32, #tpu.memory_space<vmem>>, vector<16x48xf32>
    tpu.vector_store %arg5[%c0_14, %c0_15], %30 {strides = array<i32>} : memref<16x48xf32, #tpu.memory_space<vmem>>, vector<16x48xf32>,
    return
  }
}

</mosaic_0001>

<llo_original>
// kernel: transformer_forward.23
$region0: #{transformer_forward.23}
  #allocation0 [shape = 'u32[]', space=smem, size = 0x4, offset = 0x4, fixed_abs, tag = 'smem constant byte address 0x4 - core index']
  #allocation1 [shape = 'u32[72,128]{1,0:T(1,128)}', space=vmem, size = 0x9000, scoped, tag = 'internal scratch']
  %s0 = inlined_call_operand.vmem [shape: f32[20,32], index: 0, kind: input, shape index: {}]
  %s1 = inlined_call_operand.vmem [shape: f32[1,32], index: 1, kind: input, shape index: {}]
  %s2 = inlined_call_operand.vmem [shape: f32[1,32], index: 2, kind: input, shape index: {}]
  %s3 = inlined_call_operand.vmem [shape: f32[20,32], index: 3, kind: output, shape index: {}]
  %s4 = sld [smem:[#allocation0]]
  $region22: #{transformer_forward.23} parent=0
    _
  %s6 = ssub.s32 1, %s4
  %s7 = scalar_select 0, %s6, %s4
  // Predicated region
  $region2: #{transformer_forward.23} parent=0 // pred_check
    _
  $region3: #{transformer_forward.23} parent=0 // pred_check_branch
    %9 = sbr.rel (0) target = $region5
  $region4: #{transformer_forward.23} parent=0 // pred_region
    _
  $region5: #{transformer_forward.23} parent=0 // pred_fallthru
    _
  // Predicated region
  $region6: #{transformer_forward.23} parent=0 // pred_check
    _
  $region7: #{transformer_forward.23} parent=0 // pred_check_branch
    %11 = sbr.rel (0) target = $region9
  $region8: #{transformer_forward.23} parent=0 // pred_region
    _
  $region9: #{transformer_forward.23} parent=0 // pred_fallthru
    _
  // Predicated region
  $region10: #{transformer_forward.23} parent=0 // pred_check
    _
  $region11: #{transformer_forward.23} parent=0 // pred_check_branch
    %13 = sbr.rel (0) target = $region13
  $region12: #{transformer_forward.23} parent=0 // pred_region
    _
  $region13: #{transformer_forward.23} parent=0 // pred_fallthru
    _
  %v14 = vld [vmem:[%s0] sm:$0xff]
  %v15 = vld [vmem:[%s0 + $0x8] sm:$0xff]
  %v16 = vld [vmem:[%s0 + $0x10] sm:$0xf]
  %v17 = vld [vmem:[%s1] sm:$0x1]
  %v18 = vld [vmem:[%s2] sm:$0x1]
  %vm19 = vcmask 261120
  %v20 = vsel %vm19, %v14, 0.0
  %21 = vadd.xlane.f32.xlu0 %v20
  %v22 = vpop.xlane.xlu0 %21
  %v23 = vsel %vm19, %v15, 0.0
  %24 = vadd.xlane.f32.xlu0 %v23
  %v25 = vpop.xlane.xlu0 %24
  %vm26 = vcmask 257024
  %v27 = vsel %vm26, %v16, 0.0
  %28 = vadd.xlane.f32.xlu0 %v27
  %v29 = vpop.xlane.xlu0 %28
  %v30 = vrcp.pop 32.0
  %v31 = vmul.f32 32.0, %v30
  %v32 = vsub.f32 1.0, %v31
  %v33 = vmul.f32 %v30, %v32
  %v34 = vadd.f32 %v30, %v33
  %vm35 = vweird.f32 %v30
  %v36 = vsel %vm35, %v30, %v34
  %v37 = vmul.f32 %v22, %v36
  %v38 = vmul.f32 %v25, %v36
  %v39 = vmul.f32 %v29, %v36
  %v40 = vsub.f32 %v14, %v37
  %v41 = vsub.f32 %v15, %v38
  %v42 = vsub.f32 %v16, %v39
  %v43 = vmul.f32 %v40, %v40
  %v44 = vmul.f32 %v41, %v41
  %v45 = vmul.f32 %v42, %v42
  %v46 = vsel %vm19, %v43, 0.0
  %47 = vadd.xlane.f32.xlu0 %v46
  %v48 = vpop.xlane.xlu0 %47
  %v49 = vsel %vm19, %v44, 0.0
  %50 = vadd.xlane.f32.xlu0 %v49
  %v51 = vpop.xlane.xlu0 %50
  %v52 = vsel %vm26, %v45, 0.0
  %53 = vadd.xlane.f32.xlu0 %v52
  %v54 = vpop.xlane.xlu0 %53
  %v55 = vmul.f32 %v48, %v36
  %v56 = vmul.f32 %v51, %v36
  %v57 = vmul.f32 %v54, %v36
  %v58 = vadd.f32 %v55, 1e-05
  %v59 = vadd.f32 %v56, 1e-05
  %v60 = vadd.f32 %v57, 1e-05
  %v61 = vrsqrt.pop %v58
  %v62 = vmul.f32 %v61, %v58
  %v63 = vmul.f32 %v62, %v61
  %v64 = vmul.f32 0.5, %v63
  %v65 = vsub.f32 1.5, %v64
  %v66 = vmul.f32 %v61, %v65
  %vm67 = vweird.f32 %v58
  %vm68 = vweird.f32 %v61
  %vm69 = vmor %vm67, %vm68
  %v70 = vsel %vm69, %v61, %v66
  %v71 = vrsqrt.pop %v59
  %v72 = vmul.f32 %v71, %v59
  %v73 = vmul.f32 %v72, %v71
  %v74 = vmul.f32 0.5, %v73
  %v75 = vsub.f32 1.5, %v74
  %v76 = vmul.f32 %v71, %v75
  %vm77 = vweird.f32 %v59
  %vm78 = vweird.f32 %v71
  %vm79 = vmor %vm77, %vm78
  %v80 = vsel %vm79, %v71, %v76
  %v81 = vrsqrt.pop %v60
  %v82 = vmul.f32 %v81, %v60
  %v83 = vmul.f32 %v82, %v81
  %v84 = vmul.f32 0.5, %v83
  %v85 = vsub.f32 1.5, %v84
  %v86 = vmul.f32 %v81, %v85
  %vm87 = vweird.f32 %v60
  %vm88 = vweird.f32 %v81
  %vm89 = vmor %vm87, %vm88
  %v90 = vsel %vm89, %v81, %v86
  %v91 = vmul.f32 %v40, %v70
  %v92 = vmul.f32 %v41, %v80
  %v93 = vmul.f32 %v42, %v90
  %v95 = vperm.slane %v17, 0
  %v97 = vmul.f32 %v91, %v95
  %v98 = vmul.f32 %v92, %v95
  %v99 = vmul.f32 %v93, %v95
  %v101 = vperm.slane %v18, 0
  %v103 = vadd.f32 %v97, %v101
  %v104 = vadd.f32 %v98, %v101
  %v105 = vadd.f32 %v99, %v101
  %106 = vst.msk [vmem:[%s3] sm:$0xff] %vm19, %v103
  %107 = vst.msk [vmem:[%s3 + $0x8] sm:$0xff] %vm19, %v104
  %108 = vst.msk [vmem:[%s3 + $0x10] sm:$0xf] %vm26, %v105
  // Predicated region
  $region14: #{transformer_forward.23} parent=0 // pred_check
    _
  $region15: #{transformer_forward.23} parent=0 // pred_check_branch
    %110 = sbr.rel (0) target = $region17
  $region16: #{transformer_forward.23} parent=0 // pred_region
    _
  $region17: #{transformer_forward.23} parent=0 // pred_fallthru
    _
  // Predicated region
  $region18: #{transformer_forward.23} parent=0 // pred_check
    _
  $region19: #{transformer_forward.23} parent=0 // pred_check_branch
    %112 = sbr.rel (0) target = $region21
  $region20: #{transformer_forward.23} parent=0 // pred_region
    _
  $region21: #{transformer_forward.23} parent=0 // pred_fallthru
    _

// kernel: transformer_forward.18
$region0: #{transformer_forward.18}
  #allocation0 [shape = 'u32[]', space=smem, size = 0x4, offset = 0x4, fixed_abs, tag = 'smem constant byte address 0x4 - core index']
  #allocation1 [shape = 'u32[72,128]{1,0:T(1,128)}', space=vmem, size = 0x9000, scoped, tag = 'internal scratch']
  %s0 = inlined_call_operand.vmem [shape: f32[2,10,32], index: 0, kind: input, shape index: {}]
  %s1 = inlined_call_operand.vmem [shape: bf16[32,64], index: 1, kind: input, shape index: {}]
  %s2 = inlined_call_operand.vmem [shape: f32[1,64], index: 2, kind: input, shape index: {}]
  %s3 = inlined_call_operand.vmem [shape: bf16[64,32], index: 3, kind: input, shape index: {}]
  %s4 = inlined_call_operand.vmem [shape: f32[1,32], index: 4, kind: input, shape index: {}]
  %s5 = inlined_call_operand.vmem [shape: f32[1,32], index: 5, kind: input, shape index: {}]
  %s6 = inlined_call_operand.vmem [shape: f32[1,32], index: 6, kind: input, shape index: {}]
  %s7 = inlined_call_operand.vmem [shape: f32[2,10,32], index: 7, kind: output, shape index: {}]
  %s8 = sld [smem:[#allocation0]]
  $region61: #{transformer_forward.18} parent=0
    _
  %s10 = ssub.s32 1, %s8
  %s11 = scalar_select 0, %s10, %s8
  loop: start=0, step=1, limit=4
  $region2: #{transformer_forward.18} parent=0 // loop_pre_header
    _
  $region3: #{transformer_forward.18} parent=0 // loop_header
    %s13 = sphi 0, %s17
    %p14 = scmp.ge.s32.totalorder %s13, 4
    %s23 = sphi 0, %s25
    %s26 = sphi 0, %s23
    %s27 = sphi 0, %s26
    %s43 = sphi 0, %s27
    %s47 = sphi 0, %s47
    %s49 = sphi 0, %s47
    %s50 = sphi 0, %s49
    %s64 = sphi 0, %s50
    %s68 = sphi 0, %s68
    %s70 = sphi 0, %s68
    %s71 = sphi 0, %s70
    %s85 = sphi 0, %s71
    %s89 = sphi 0, %s89
    %s91 = sphi 0, %s89
    %s92 = sphi 0, %s91
    %s106 = sphi 0, %s92
    %s110 = sphi 0, %s110
    %s112 = sphi 0, %s110
    %s113 = sphi 0, %s112
    %s127 = sphi 0, %s113
    %s131 = sphi 0, %s131
    %s133 = sphi 0, %s131
    %s134 = sphi 0, %s133
    %s148 = sphi 0, %s134
    %s152 = sphi 0, %s152
    %s154 = sphi 0, %s152
    %s155 = sphi 0, %s154
    %s169 = sphi 0, %s155
    %s175 = sphi 0, %s177
    %s178 = sphi 0, %s175
    %s179 = sphi 0, %s178
    %s195 = sphi 0, %s179
  $region4: #{transformer_forward.18} parent=0 // loop_header_branch
    %16 = sbr.rel (%p14) target = $region8
  $region5: #{transformer_forward.18} parent=0 // loop_body
    %s18 = ssub.s32 %s13, 1
    %s19 = ssub.s32 %s13, 2
    %s20 = sadd.s32 %s13, 1
    %s21 = ssub.s32 %s13, %s20
    %p22 = scmp.eq.s32.totalorder %s21, 0
    %s24 = sadd.s32 %s23, 1
    %s25 = scalar_select %p22, %s23, %s24
    %p28 = pneg %p22
    %p29 = scmp.eq.s32.totalorder %s13, 1
    %p30 = por %p28, %p29
    %p31 = scmp.ne.s32.totalorder %s23, %s26
    %p32 = scmp.eq.s32.totalorder %s13, 0
    %p33 = por %p31, %p32
    %p34 = scmp.ne.s32.totalorder %s23, %s26
    %p35 = scmp.eq.s32.totalorder %s18, 1
    %p36 = por %p34, %p35
    %p37 = scmp.ne.s32.totalorder %s26, %s27
    %p38 = scmp.eq.s32.totalorder %s18, 0
    %p39 = por %p37, %p38
    %p40 = scmp.ne.s32.totalorder %s26, %s27
    %p41 = scmp.eq.s32.totalorder %s19, 1
    %p42 = por %p40, %p41
    %p44 = scmp.ne.s32.totalorder %s27, %s43
    %p45 = scmp.eq.s32.totalorder %s19, 0
    %p46 = por %p44, %p45
    %s48 = sadd.s32 %s47, 1
    %p51 = scmp.eq.s32.totalorder %s13, 1
    %p52 = scmp.ne.s32.totalorder %s47, %s49
    %p53 = scmp.eq.s32.totalorder %s13, 0
    %p54 = por %p52, %p53
    %p55 = scmp.ne.s32.totalorder %s47, %s49
    %p56 = scmp.eq.s32.totalorder %s18, 1
    %p57 = por %p55, %p56
    %p58 = scmp.ne.s32.totalorder %s49, %s50
    %p59 = scmp.eq.s32.totalorder %s18, 0
    %p60 = por %p58, %p59
    %p61 = scmp.ne.s32.totalorder %s49, %s50
    %p62 = scmp.eq.s32.totalorder %s19, 1
    %p63 = por %p61, %p62
    %p65 = scmp.ne.s32.totalorder %s50, %s64
    %p66 = scmp.eq.s32.totalorder %s19, 0
    %p67 = por %p65, %p66
    %s69 = sadd.s32 %s68, 1
    %p72 = scmp.eq.s32.totalorder %s13, 1
    %p73 = scmp.ne.s32.totalorder %s68, %s70
    %p74 = scmp.eq.s32.totalorder %s13, 0
    %p75 = por %p73, %p74
    %p76 = scmp.ne.s32.totalorder %s68, %s70
    %p77 = scmp.eq.s32.totalorder %s18, 1
    %p78 = por %p76, %p77
    %p79 = scmp.ne.s32.totalorder %s70, %s71
    %p80 = scmp.eq.s32.totalorder %s18, 0
    %p81 = por %p79, %p80
    %p82 = scmp.ne.s32.totalorder %s70, %s71
    %p83 = scmp.eq.s32.totalorder %s19, 1
    %p84 = por %p82, %p83
    %p86 = scmp.ne.s32.totalorder %s71, %s85
    %p87 = scmp.eq.s32.totalorder %s19, 0
    %p88 = por %p86, %p87
    %s90 = sadd.s32 %s89, 1
    %p93 = scmp.eq.s32.totalorder %s13, 1
    %p94 = scmp.ne.s32.totalorder %s89, %s91
    %p95 = scmp.eq.s32.totalorder %s13, 0
    %p96 = por %p94, %p95
    %p97 = scmp.ne.s32.totalorder %s89, %s91
    %p98 = scmp.eq.s32.totalorder %s18, 1
    %p99 = por %p97, %p98
    %p100 = scmp.ne.s32.totalorder %s91, %s92
    %p101 = scmp.eq.s32.totalorder %s18, 0
    %p102 = por %p100, %p101
    %p103 = scmp.ne.s32.totalorder %s91, %s92
    %p104 = scmp.eq.s32.totalorder %s19, 1
    %p105 = por %p103, %p104
    %p107 = scmp.ne.s32.totalorder %s92, %s106
    %p108 = scmp.eq.s32.totalorder %s19, 0
    %p109 = por %p107, %p108
    %s111 = sadd.s32 %s110, 1
    %p114 = scmp.eq.s32.totalorder %s13, 1
    %p115 = scmp.ne.s32.totalorder %s110, %s112
    %p116 = scmp.eq.s32.totalorder %s13, 0
    %p117 = por %p115, %p116
    %p118 = scmp.ne.s32.totalorder %s110, %s112
    %p119 = scmp.eq.s32.totalorder %s18, 1
    %p120 = por %p118, %p119
    %p121 = scmp.ne.s32.totalorder %s112, %s113
    %p122 = scmp.eq.s32.totalorder %s18, 0
    %p123 = por %p121, %p122
    %p124 = scmp.ne.s32.totalorder %s112, %s113
    %p125 = scmp.eq.s32.totalorder %s19, 1
    %p126 = por %p124, %p125
    %p128 = scmp.ne.s32.totalorder %s113, %s127
    %p129 = scmp.eq.s32.totalorder %s19, 0
    %p130 = por %p128, %p129
    %s132 = sadd.s32 %s131, 1
    %p135 = scmp.eq.s32.totalorder %s13, 1
    %p136 = scmp.ne.s32.totalorder %s131, %s133
    %p137 = scmp.eq.s32.totalorder %s13, 0
    %p138 = por %p136, %p137
    %p139 = scmp.ne.s32.totalorder %s131, %s133
    %p140 = scmp.eq.s32.totalorder %s18, 1
    %p141 = por %p139, %p140
    %p142 = scmp.ne.s32.totalorder %s133, %s134
    %p143 = scmp.eq.s32.totalorder %s18, 0
    %p144 = por %p142, %p143
    %p145 = scmp.ne.s32.totalorder %s133, %s134
    %p146 = scmp.eq.s32.totalorder %s19, 1
    %p147 = por %p145, %p146
    %p149 = scmp.ne.s32.totalorder %s134, %s148
    %p150 = scmp.eq.s32.totalorder %s19, 0
    %p151 = por %p149, %p150
    %s153 = sadd.s32 %s152, 1
    %p156 = scmp.eq.s32.totalorder %s13, 1
    %p157 = scmp.ne.s32.totalorder %s152, %s154
    %p158 = scmp.eq.s32.totalorder %s13, 0
    %p159 = por %p157, %p158
    %p160 = scmp.ne.s32.totalorder %s152, %s154
    %p161 = scmp.eq.s32.totalorder %s18, 1
    %p162 = por %p160, %p161
    %p163 = scmp.ne.s32.totalorder %s154, %s155
    %p164 = scmp.eq.s32.totalorder %s18, 0
    %p165 = por %p163, %p164
    %p166 = scmp.ne.s32.totalorder %s154, %s155
    %p167 = scmp.eq.s32.totalorder %s19, 1
    %p168 = por %p166, %p167
    %p170 = scmp.ne.s32.totalorder %s155, %s169
    %p171 = scmp.eq.s32.totalorder %s19, 0
    %p172 = por %p170, %p171
    %s173 = ssub.s32 %s13, %s20
    %p174 = scmp.eq.s32.totalorder %s173, 0
    %s176 = sadd.s32 %s175, 1
    %s177 = scalar_select %p174, %s175, %s176
    %p180 = pneg %p174
    %p181 = scmp.eq.s32.totalorder %s13, 1
    %p182 = por %p180, %p181
    %p183 = scmp.ne.s32.totalorder %s175, %s178
    %p184 = scmp.eq.s32.totalorder %s13, 0
    %p185 = por %p183, %p184
    %p186 = scmp.ne.s32.totalorder %s175, %s178
    %p187 = scmp.eq.s32.totalorder %s18, 1
    %p188 = por %p186, %p187
    %p189 = scmp.ne.s32.totalorder %s178, %s179
    %p190 = scmp.eq.s32.totalorder %s18, 0
    %p191 = por %p189, %p190
    %p192 = scmp.ne.s32.totalorder %s178, %s179
    %p193 = scmp.eq.s32.totalorder %s19, 1
    %p194 = por %p192, %p193
    %p196 = scmp.ne.s32.totalorder %s179, %s195
    %p197 = scmp.eq.s32.totalorder %s19, 0
    %p198 = por %p196, %p197
    %p199 = scmp.le.s32.totalorder 1, %s13
    %p200 = scmp.lt.s32.totalorder %s13, 3
    %p201 = pnand %p199, %p200
    %p202 = pneg %p201
    // Predicated region
    $region9: #{transformer_forward.18} parent=5 // pred_check
      _
    $region10: #{transformer_forward.18} parent=5 // pred_check_branch
      %204 = sbr.rel (%p201) target = $region12
    $region11: #{transformer_forward.18} parent=5 // pred_region
      %s205 = ssub.s32 %s13, 1
      // Predicated region
      $region13: #{transformer_forward.18} parent=11 // pred_check
        %p206 = pneg %p60
      $region14: #{transformer_forward.18} parent=11 // pred_check_branch
        %208 = sbr.rel (%p206) target = $region16
      $region15: #{transformer_forward.18} parent=11 // pred_region
        _
      $region16: #{transformer_forward.18} parent=11 // pred_fallthru
        _
      // Predicated region
      $region17: #{transformer_forward.18} parent=11 // pred_check
        %p209 = pneg %p81
      $region18: #{transformer_forward.18} parent=11 // pred_check_branch
        %211 = sbr.rel (%p209) target = $region20
      $region19: #{transformer_forward.18} parent=11 // pred_region
        _
      $region20: #{transformer_forward.18} parent=11 // pred_fallthru
        _
      // Predicated region
      $region21: #{transformer_forward.18} parent=11 // pred_check
        %p212 = pneg %p102
      $region22: #{transformer_forward.18} parent=11 // pred_check_branch
        %214 = sbr.rel (%p212) target = $region24
      $region23: #{transformer_forward.18} parent=11 // pred_region
        _
      $region24: #{transformer_forward.18} parent=11 // pred_fallthru
        _
      // Predicated region
      $region25: #{transformer_forward.18} parent=11 // pred_check
        %p215 = pneg %p123
      $region26: #{transformer_forward.18} parent=11 // pred_check_branch
        %217 = sbr.rel (%p215) target = $region28
      $region27: #{transformer_forward.18} parent=11 // pred_region
        _
      $region28: #{transformer_forward.18} parent=11 // pred_fallthru
        _
      // Predicated region
      $region29: #{transformer_forward.18} parent=11 // pred_check
        %p218 = pneg %p144
      $region30: #{transformer_forward.18} parent=11 // pred_check_branch
        %220 = sbr.rel (%p218) target = $region32
      $region31: #{transformer_forward.18} parent=11 // pred_region
        _
      $region32: #{transformer_forward.18} parent=11 // pred_fallthru
        _
      // Predicated region
      $region33: #{transformer_forward.18} parent=11 // pred_check
        %p221 = pneg %p165
      $region34: #{transformer_forward.18} parent=11 // pred_check_branch
        %223 = sbr.rel (%p221) target = $region36
      $region35: #{transformer_forward.18} parent=11 // pred_region
        _
      $region36: #{transformer_forward.18} parent=11 // pred_fallthru
        _
    $region12: #{transformer_forward.18} parent=5 // pred_fallthru
      _
    %p224 = scmp.lt.s32.totalorder %s13, 2
    // Predicated region
    $region37: #{transformer_forward.18} parent=5 // pred_check
      %p225 = pneg %p224
    $region38: #{transformer_forward.18} parent=5 // pred_check_branch
      %227 = sbr.rel (%p225) target = $region40
    $region39: #{transformer_forward.18} parent=5 // pred_region
      // Predicated region
      $region41: #{transformer_forward.18} parent=39 // pred_check
        %p228 = pneg %p33
      $region42: #{transformer_forward.18} parent=39 // pred_check_branch
        %230 = sbr.rel (%p228) target = $region44
      $region43: #{transformer_forward.18} parent=39 // pred_region
        %p231 = scmp.lt.s32.totalorder %s13, 1
        %s232 = scalar_select %p231, %s13, 1
        %s233 = smul.addr %s232, 2
        %s234 = smul.addr %s233, 8
        %s235 = scalar_lea.vmem %s0, %s234
      $region44: #{transformer_forward.18} parent=39 // pred_fallthru
        _
    $region40: #{transformer_forward.18} parent=5 // pred_fallthru
      _
    %p236 = scmp.le.s32.totalorder 1, %s13
    %p237 = scmp.lt.s32.totalorder %s13, 3
    %p238 = pnand %p236, %p237
    %p239 = pneg %p238
    // Predicated region
    $region45: #{transformer_forward.18} parent=5 // pred_check
      _
    $region46: #{transformer_forward.18} parent=5 // pred_check_branch
      %241 = sbr.rel (%p238) target = $region48
    $region47: #{transformer_forward.18} parent=5 // pred_region
      %s242 = ssub.s32 %s13, 1
      %p243 = scmp.lt.s32.totalorder %s18, 1
      %s244 = scalar_select %p243, %s18, 1
      %s245 = smul.addr %s244, 2
      %s246 = smul.addr %s245, 8
      %s247 = scalar_lea.vmem %s0, %s246
      %p248 = pneg %p39
      %p249 = pneg %p36
      %p250 = pneg %p60
      %p251 = pneg %p57
      %p252 = pneg %p81
      %p253 = pneg %p78
      %p254 = pneg %p102
      %p255 = pneg %p99
      %p256 = pneg %p123
      %p257 = pneg %p120
      %p258 = pneg %p144
      %p259 = pneg %p141
      %p260 = pneg %p165
      %p261 = pneg %p162
      %p262 = pneg %p191
      %p263 = pneg %p188
      %p264 = scmp.lt.s32.totalorder %s18, 1
      %s265 = scalar_select %p264, %s18, 1
      %s266 = smul.addr %s265, 2
      %s267 = smul.addr %s266, 8
      %s268 = scalar_lea.vmem %s7, %s267
      %p269 = scmp.lt.s32.totalorder %s18, 1
      %s270 = scalar_select %p269, %s18, 1
      %s271 = smul.addr %s270, 2
      %s272 = smul.addr %s271, 8
      %s273 = scalar_lea.vmem %s0, %s272
      %p274 = scmp.lt.s32.totalorder %s18, 1
      %s275 = scalar_select %p274, %s18, 1
      %s276 = smul.addr %s275, 2
      %s277 = smul.addr %s276, 8
      %s278 = scalar_lea.vmem %s7, %s277
      %v280 = vld [vmem:[%s273] sm:$0xff]
      %v281 = vld [vmem:[%s273 + $0x8] sm:$0x3]
      %v282 = vpack.c.bf16 %v281, %v280
      %v283 = vld [vmem:[%s1] sm:$0xf]
      %v284 = vld [vmem:[%s1 + $0x4] sm:$0xf]
      %v285 = vld [vmem:[%s1 + $0x8] sm:$0xf]
      %v286 = vld [vmem:[%s1 + $0xc] sm:$0xf]
      %v287 = vld [vmem:[%s2] sm:$0x1]
      %v289 = vperm.slane %v287, 0
      %v295 = vunpack.c.l.b16 %v283
      %v296 = vunpack.c.l.b16 %v284
      %v297 = vunpack.c.l.b16 %v285
      %v298 = vunpack.c.l.b16 %v286
      %v299 = vpack.c.b16 %v296, %v295
      %v300 = vpack.c.b16 %v298, %v297
      %vm303 = vcmask 261120
      %v305 = vsel %vm303, %v282, 0
      %307 = vmatpush.bf16.msra.mxu0 0
      %308 = vmatpush.bf16.msra.mxu0 0
      %309 = vmatpush.bf16.msra.mxu0 0
      %310 = vmatpush.bf16.msra.mxu0 0
      %311 = vmatpush.bf16.msra.mxu0 0
      %312 = vmatpush.bf16.msra.mxu0 0
      %313 = vmatpush.bf16.msra.mxu0 %v300
      %314 = vmatpush.bf16.msra.mxu0 %v299
      %315 = vmatmul.bf16.gmra.mxu0 %v305
      %v316 = vpop.f32.mrf.mxu0
      %v317 = vadd.f32 %v289, %v316
      %v318 = vpop.f32.mrf.mxu0
      %v319 = vadd.f32 %v289, %v318
      %320 = vdwg.mxu0
      %v321 = vmax.f32 %v317, 0.0
      %v322 = vmax.f32 %v319, 0.0
      %v323 = vpack.c.bf16 %v322, %v321
      %v324 = vld [vmem:[%s3] sm:$0xf]
      %v325 = vld [vmem:[%s3 + $0x4] sm:$0xf]
      %v326 = vld [vmem:[%s3 + $0x8] sm:$0xf]
      %v327 = vld [vmem:[%s3 + $0xc] sm:$0xf]
      %v328 = vld [vmem:[%s3 + $0x10] sm:$0xf]
      %v329 = vld [vmem:[%s3 + $0x14] sm:$0xf]
      %v330 = vld [vmem:[%s3 + $0x18] sm:$0xf]
      %v331 = vld [vmem:[%s3 + $0x1c] sm:$0xf]
      %v332 = vld [vmem:[%s4] sm:$0x1]
      %v334 = vperm.slane %v332, 0
      %v344 = vunpack.c.l.b16 %v324
      %v345 = vunpack.c.l.b16 %v325
      %v346 = vunpack.c.l.b16 %v326
      %v347 = vunpack.c.l.b16 %v327
      %v348 = vunpack.c.l.b16 %v328
      %v349 = vunpack.c.l.b16 %v329
      %v350 = vunpack.c.l.b16 %v330
      %v351 = vunpack.c.l.b16 %v331
      %v352 = vpack.c.b16 %v345, %v344
      %v353 = vpack.c.b16 %v347, %v346
      %v354 = vpack.c.b16 %v349, %v348
      %v355 = vpack.c.b16 %v351, %v350
      %vm360 = vcmask 523264
      %v362 = vsel %vm360, %v323, 0
      %364 = vmatpush.bf16.msra.mxu0 0
      %365 = vmatpush.bf16.msra.mxu0 0
      %366 = vmatpush.bf16.msra.mxu0 0
      %367 = vmatpush.bf16.msra.mxu0 0
      %368 = vmatpush.bf16.msra.mxu0 %v355
      %369 = vmatpush.bf16.msra.mxu0 %v354
      %370 = vmatpush.bf16.msra.mxu0 %v353
      %371 = vmatpush.bf16.msra.mxu0 %v352
      %372 = vmatmul.bf16.gmra.mxu0 %v362
      %v373 = vpop.f32.mrf.mxu0
      %v374 = vadd.f32 %v334, %v373
      %v375 = vpop.f32.mrf.mxu0
      %v376 = vadd.f32 %v334, %v375
      %377 = vdwg.mxu0
      %v378 = vadd.f32 %v280, %v374
      %v379 = vadd.f32 %v281, %v376
      %v380 = vld [vmem:[%s5] sm:$0x1]
      %v381 = vld [vmem:[%s6] sm:$0x1]
      %v382 = vsel %vm303, %v378, 0.0
      %383 = vadd.xlane.f32.xlu0 %v382
      %v384 = vpop.xlane.xlu0 %383
      %vm385 = vcmask 254976
      %v386 = vsel %vm385, %v379, 0.0
      %387 = vadd.xlane.f32.xlu0 %v386
      %v388 = vpop.xlane.xlu0 %387
      %v389 = vrcp.pop 32.0
      %v390 = vmul.f32 32.0, %v389
      %v391 = vsub.f32 1.0, %v390
      %v392 = vmul.f32 %v389, %v391
      %v393 = vadd.f32 %v389, %v392
      %vm394 = vweird.f32 %v389
      %v395 = vsel %vm394, %v389, %v393
      %v396 = vmul.f32 %v384, %v395
      %v397 = vmul.f32 %v388, %v395
      %v398 = vsub.f32 %v378, %v396
      %v399 = vsub.f32 %v379, %v397
      %v400 = vmul.f32 %v398, %v398
      %v401 = vmul.f32 %v399, %v399
      %v402 = vsel %vm303, %v400, 0.0
      %403 = vadd.xlane.f32.xlu0 %v402
      %v404 = vpop.xlane.xlu0 %403
      %v405 = vsel %vm385, %v401, 0.0
      %406 = vadd.xlane.f32.xlu0 %v405
      %v407 = vpop.xlane.xlu0 %406
      %v408 = vmul.f32 %v404, %v395
      %v409 = vmul.f32 %v407, %v395
      %v410 = vadd.f32 %v408, 1e-05
      %v411 = vadd.f32 %v409, 1e-05
      %v412 = vrsqrt.pop %v410
      %v413 = vmul.f32 %v412, %v410
      %v414 = vmul.f32 %v413, %v412
      %v415 = vmul.f32 0.5, %v414
      %v416 = vsub.f32 1.5, %v415
      %v417 = vmul.f32 %v412, %v416
      %vm418 = vweird.f32 %v410
      %vm419 = vweird.f32 %v412
      %vm420 = vmor %vm418, %vm419
      %v421 = vsel %vm420, %v412, %v417
      %v422 = vrsqrt.pop %v411
      %v423 = vmul.f32 %v422, %v411
      %v424 = vmul.f32 %v423, %v422
      %v425 = vmul.f32 0.5, %v424
      %v426 = vsub.f32 1.5, %v425
      %v427 = vmul.f32 %v422, %v426
      %vm428 = vweird.f32 %v411
      %vm429 = vweird.f32 %v422
      %vm430 = vmor %vm428, %vm429
      %v431 = vsel %vm430, %v422, %v427
      %v432 = vmul.f32 %v398, %v421
      %v433 = vmul.f32 %v399, %v431
      %v435 = vperm.slane %v380, 0
      %v437 = vmul.f32 %v432, %v435
      %v438 = vmul.f32 %v433, %v435
      %v440 = vperm.slane %v381, 0
      %v442 = vadd.f32 %v437, %v440
      %v443 = vadd.f32 %v438, %v440
      %444 = vst.msk [vmem:[%s278] sm:$0xff] %vm303, %v442
      %445 = vst.msk [vmem:[%s278 + $0x8] sm:$0x3] %vm385, %v443
      %p446 = scmp.lt.s32.totalorder %s18, 1
      %s447 = scalar_select %p446, %s18, 1
      %s448 = smul.addr %s447, 2
      %s449 = smul.addr %s448, 8
      %s450 = scalar_lea.vmem %s7, %s449
      // Predicated region
      $region49: #{transformer_forward.18} parent=47 // pred_check
        %p451 = pneg %p188
      $region50: #{transformer_forward.18} parent=47 // pred_check_branch
        %453 = sbr.rel (%p451) target = $region52
      $region51: #{transformer_forward.18} parent=47 // pred_region
        _
      $region52: #{transformer_forward.18} parent=47 // pred_fallthru
        _
    $region48: #{transformer_forward.18} parent=5 // pred_fallthru
      _
    %p454 = scmp.le.s32.totalorder 2, %s13
    // Predicated region
    $region53: #{transformer_forward.18} parent=5 // pred_check
      %p455 = pneg %p454
    $region54: #{transformer_forward.18} parent=5 // pred_check_branch
      %457 = sbr.rel (%p455) target = $region56
    $region55: #{transformer_forward.18} parent=5 // pred_region
      %s458 = ssub.s32 %s13, 2
      // Predicated region
      $region57: #{transformer_forward.18} parent=55 // pred_check
        %p459 = pneg %p194
      $region58: #{transformer_forward.18} parent=55 // pred_check_branch
        %461 = sbr.rel (%p459) target = $region60
      $region59: #{transformer_forward.18} parent=55 // pred_region
        %p462 = scmp.lt.s32.totalorder %s19, 1
        %s463 = scalar_select %p462, %s19, 1
        %s464 = smul.addr %s463, 2
        %s465 = smul.addr %s464, 8
        %s466 = scalar_lea.vmem %s7, %s465
      $region60: #{transformer_forward.18} parent=55 // pred_fallthru
        _
    $region56: #{transformer_forward.18} parent=5 // pred_fallthru
      _
  $region6: #{transformer_forward.18} parent=0 // loop_footer
    %s17 = sadd.s32 1, %s13
  $region7: #{transformer_forward.18} parent=0 // loop_footer_branch
    %12 = sbr.rel target = $region3
  $region8: #{transformer_forward.18} parent=0 // loop_exit
    _

// kernel: transformer_forward.17
$region0: #{transformer_forward.17}
  #allocation0 [shape = 'u32[]', space=smem, size = 0x4, offset = 0x4, fixed_abs, tag = 'smem constant byte address 0x4 - core index']
  #allocation1 [shape = 'u32[72,128]{1,0:T(1,128)}', space=vmem, size = 0x9000, scoped, tag = 'internal scratch']
  %s0 = inlined_call_operand.vmem [shape: f32[2,10,32], index: 0, kind: input, shape index: {}, may-alias: {0,1}]
  %s1 = inlined_call_operand.vmem [shape: f32[2,10,32], index: 1, kind: input, shape index: {}, may-alias: {0,1}]
  %s2 = inlined_call_operand.vmem [shape: bf16[32,32], index: 2, kind: input, shape index: {}]
  %s3 = inlined_call_operand.vmem [shape: f32[1,32], index: 3, kind: input, shape index: {}]
  %s4 = inlined_call_operand.vmem [shape: bf16[32,64], index: 4, kind: input, shape index: {}]
  %s5 = inlined_call_operand.vmem [shape: f32[1,64], index: 5, kind: input, shape index: {}]
  %s6 = inlined_call_operand.vmem [shape: bf16[32,32], index: 6, kind: input, shape index: {}]
  %s7 = inlined_call_operand.vmem [shape: f32[1,32], index: 7, kind: input, shape index: {}]
  %s8 = inlined_call_operand.vmem [shape: f32[1,32], index: 8, kind: input, shape index: {}]
  %s9 = inlined_call_operand.vmem [shape: f32[1,32], index: 9, kind: input, shape index: {}]
  %s10 = inlined_call_operand.vmem [shape: f32[2,1,10], index: 10, kind: input, shape index: {}]
  %s11 = inlined_call_operand.vmem [shape: f32[2,10,32], index: 11, kind: output, shape index: {}]
  %s12 = sld [smem:[#allocation0]]
  $region77: #{transformer_forward.17} parent=0
    _
  %s14 = ssub.s32 1, %s12
  %s15 = scalar_select 0, %s14, %s12
  loop: start=0, step=1, limit=4
  $region2: #{transformer_forward.17} parent=0 // loop_pre_header
    _
  $region3: #{transformer_forward.17} parent=0 // loop_header
    %s17 = sphi 0, %s21
    %p18 = scmp.ge.s32.totalorder %s17, 4
    %s27 = sphi 0, %s29
    %s30 = sphi 0, %s27
    %s31 = sphi 0, %s30
    %s47 = sphi 0, %s31
    %s53 = sphi 0, %s55
    %s56 = sphi 0, %s53
    %s57 = sphi 0, %s56
    %s73 = sphi 0, %s57
    %s77 = sphi 0, %s77
    %s79 = sphi 0, %s77
    %s80 = sphi 0, %s79
    %s94 = sphi 0, %s80
    %s98 = sphi 0, %s98
    %s100 = sphi 0, %s98
    %s101 = sphi 0, %s100
    %s115 = sphi 0, %s101
    %s119 = sphi 0, %s119
    %s121 = sphi 0, %s119
    %s122 = sphi 0, %s121
    %s136 = sphi 0, %s122
    %s140 = sphi 0, %s140
    %s142 = sphi 0, %s140
    %s143 = sphi 0, %s142
    %s157 = sphi 0, %s143
    %s161 = sphi 0, %s161
    %s163 = sphi 0, %s161
    %s164 = sphi 0, %s163
    %s178 = sphi 0, %s164
    %s182 = sphi 0, %s182
    %s184 = sphi 0, %s182
    %s185 = sphi 0, %s184
    %s199 = sphi 0, %s185
    %s203 = sphi 0, %s203
    %s205 = sphi 0, %s203
    %s206 = sphi 0, %s205
    %s220 = sphi 0, %s206
    %s224 = sphi 0, %s224
    %s226 = sphi 0, %s224
    %s227 = sphi 0, %s226
    %s241 = sphi 0, %s227
    %s247 = sphi 0, %s249
    %s250 = sphi 0, %s247
    %s251 = sphi 0, %s250
    %s267 = sphi 0, %s251
    %s273 = sphi 0, %s275
    %s276 = sphi 0, %s273
    %s277 = sphi 0, %s276
    %s293 = sphi 0, %s277
  $region4: #{transformer_forward.17} parent=0 // loop_header_branch
    %20 = sbr.rel (%p18) target = $region8
  $region5: #{transformer_forward.17} parent=0 // loop_body
    %s22 = ssub.s32 %s17, 1
    %s23 = ssub.s32 %s17, 2
    %s24 = sadd.s32 %s17, 1
    %s25 = ssub.s32 %s17, %s24
    %p26 = scmp.eq.s32.totalorder %s25, 0
    %s28 = sadd.s32 %s27, 1
    %s29 = scalar_select %p26, %s27, %s28
    %p32 = pneg %p26
    %p33 = scmp.eq.s32.totalorder %s17, 1
    %p34 = por %p32, %p33
    %p35 = scmp.ne.s32.totalorder %s27, %s30
    %p36 = scmp.eq.s32.totalorder %s17, 0
    %p37 = por %p35, %p36
    %p38 = scmp.ne.s32.totalorder %s27, %s30
    %p39 = scmp.eq.s32.totalorder %s22, 1
    %p40 = por %p38, %p39
    %p41 = scmp.ne.s32.totalorder %s30, %s31
    %p42 = scmp.eq.s32.totalorder %s22, 0
    %p43 = por %p41, %p42
    %p44 = scmp.ne.s32.totalorder %s30, %s31
    %p45 = scmp.eq.s32.totalorder %s23, 1
    %p46 = por %p44, %p45
    %p48 = scmp.ne.s32.totalorder %s31, %s47
    %p49 = scmp.eq.s32.totalorder %s23, 0
    %p50 = por %p48, %p49
    %s51 = ssub.s32 %s17, %s24
    %p52 = scmp.eq.s32.totalorder %s51, 0
    %s54 = sadd.s32 %s53, 1
    %s55 = scalar_select %p52, %s53, %s54
    %p58 = pneg %p52
    %p59 = scmp.eq.s32.totalorder %s17, 1
    %p60 = por %p58, %p59
    %p61 = scmp.ne.s32.totalorder %s53, %s56
    %p62 = scmp.eq.s32.totalorder %s17, 0
    %p63 = por %p61, %p62
    %p64 = scmp.ne.s32.totalorder %s53, %s56
    %p65 = scmp.eq.s32.totalorder %s22, 1
    %p66 = por %p64, %p65
    %p67 = scmp.ne.s32.totalorder %s56, %s57
    %p68 = scmp.eq.s32.totalorder %s22, 0
    %p69 = por %p67, %p68
    %p70 = scmp.ne.s32.totalorder %s56, %s57
    %p71 = scmp.eq.s32.totalorder %s23, 1
    %p72 = por %p70, %p71
    %p74 = scmp.ne.s32.totalorder %s57, %s73
    %p75 = scmp.eq.s32.totalorder %s23, 0
    %p76 = por %p74, %p75
    %s78 = sadd.s32 %s77, 1
    %p81 = scmp.eq.s32.totalorder %s17, 1
    %p82 = scmp.ne.s32.totalorder %s77, %s79
    %p83 = scmp.eq.s32.totalorder %s17, 0
    %p84 = por %p82, %p83
    %p85 = scmp.ne.s32.totalorder %s77, %s79
    %p86 = scmp.eq.s32.totalorder %s22, 1
    %p87 = por %p85, %p86
    %p88 = scmp.ne.s32.totalorder %s79, %s80
    %p89 = scmp.eq.s32.totalorder %s22, 0
    %p90 = por %p88, %p89
    %p91 = scmp.ne.s32.totalorder %s79, %s80
    %p92 = scmp.eq.s32.totalorder %s23, 1
    %p93 = por %p91, %p92
    %p95 = scmp.ne.s32.totalorder %s80, %s94
    %p96 = scmp.eq.s32.totalorder %s23, 0
    %p97 = por %p95, %p96
    %s99 = sadd.s32 %s98, 1
    %p102 = scmp.eq.s32.totalorder %s17, 1
    %p103 = scmp.ne.s32.totalorder %s98, %s100
    %p104 = scmp.eq.s32.totalorder %s17, 0
    %p105 = por %p103, %p104
    %p106 = scmp.ne.s32.totalorder %s98, %s100
    %p107 = scmp.eq.s32.totalorder %s22, 1
    %p108 = por %p106, %p107
    %p109 = scmp.ne.s32.totalorder %s100, %s101
    %p110 = scmp.eq.s32.totalorder %s22, 0
    %p111 = por %p109, %p110
    %p112 = scmp.ne.s32.totalorder %s100, %s101
    %p113 = scmp.eq.s32.totalorder %s23, 1
    %p114 = por %p112, %p113
    %p116 = scmp.ne.s32.totalorder %s101, %s115
    %p117 = scmp.eq.s32.totalorder %s23, 0
    %p118 = por %p116, %p117
    %s120 = sadd.s32 %s119, 1
    %p123 = scmp.eq.s32.totalorder %s17, 1
    %p124 = scmp.ne.s32.totalorder %s119, %s121
    %p125 = scmp.eq.s32.totalorder %s17, 0
    %p126 = por %p124, %p125
    %p127 = scmp.ne.s32.totalorder %s119, %s121
    %p128 = scmp.eq.s32.totalorder %s22, 1
    %p129 = por %p127, %p128
    %p130 = scmp.ne.s32.totalorder %s121, %s122
    %p131 = scmp.eq.s32.totalorder %s22, 0
    %p132 = por %p130, %p131
    %p133 = scmp.ne.s32.totalorder %s121, %s122
    %p134 = scmp.eq.s32.totalorder %s23, 1
    %p135 = por %p133, %p134
    %p137 = scmp.ne.s32.totalorder %s122, %s136
    %p138 = scmp.eq.s32.totalorder %s23, 0
    %p139 = por %p137, %p138
    %s141 = sadd.s32 %s140, 1
    %p144 = scmp.eq.s32.totalorder %s17, 1
    %p145 = scmp.ne.s32.totalorder %s140, %s142
    %p146 = scmp.eq.s32.totalorder %s17, 0
    %p147 = por %p145, %p146
    %p148 = scmp.ne.s32.totalorder %s140, %s142
    %p149 = scmp.eq.s32.totalorder %s22, 1
    %p150 = por %p148, %p149
    %p151 = scmp.ne.s32.totalorder %s142, %s143
    %p152 = scmp.eq.s32.totalorder %s22, 0
    %p153 = por %p151, %p152
    %p154 = scmp.ne.s32.totalorder %s142, %s143
    %p155 = scmp.eq.s32.totalorder %s23, 1
    %p156 = por %p154, %p155
    %p158 = scmp.ne.s32.totalorder %s143, %s157
    %p159 = scmp.eq.s32.totalorder %s23, 0
    %p160 = por %p158, %p159
    %s162 = sadd.s32 %s161, 1
    %p165 = scmp.eq.s32.totalorder %s17, 1
    %p166 = scmp.ne.s32.totalorder %s161, %s163
    %p167 = scmp.eq.s32.totalorder %s17, 0
    %p168 = por %p166, %p167
    %p169 = scmp.ne.s32.totalorder %s161, %s163
    %p170 = scmp.eq.s32.totalorder %s22, 1
    %p171 = por %p169, %p170
    %p172 = scmp.ne.s32.totalorder %s163, %s164
    %p173 = scmp.eq.s32.totalorder %s22, 0
    %p174 = por %p172, %p173
    %p175 = scmp.ne.s32.totalorder %s163, %s164
    %p176 = scmp.eq.s32.totalorder %s23, 1
    %p177 = por %p175, %p176
    %p179 = scmp.ne.s32.totalorder %s164, %s178
    %p180 = scmp.eq.s32.totalorder %s23, 0
    %p181 = por %p179, %p180
    %s183 = sadd.s32 %s182, 1
    %p186 = scmp.eq.s32.totalorder %s17, 1
    %p187 = scmp.ne.s32.totalorder %s182, %s184
    %p188 = scmp.eq.s32.totalorder %s17, 0
    %p189 = por %p187, %p188
    %p190 = scmp.ne.s32.totalorder %s182, %s184
    %p191 = scmp.eq.s32.totalorder %s22, 1
    %p192 = por %p190, %p191
    %p193 = scmp.ne.s32.totalorder %s184, %s185
    %p194 = scmp.eq.s32.totalorder %s22, 0
    %p195 = por %p193, %p194
    %p196 = scmp.ne.s32.totalorder %s184, %s185
    %p197 = scmp.eq.s32.totalorder %s23, 1
    %p198 = por %p196, %p197
    %p200 = scmp.ne.s32.totalorder %s185, %s199
    %p201 = scmp.eq.s32.totalorder %s23, 0
    %p202 = por %p200, %p201
    %s204 = sadd.s32 %s203, 1
    %p207 = scmp.eq.s32.totalorder %s17, 1
    %p208 = scmp.ne.s32.totalorder %s203, %s205
    %p209 = scmp.eq.s32.totalorder %s17, 0
    %p210 = por %p208, %p209
    %p211 = scmp.ne.s32.totalorder %s203, %s205
    %p212 = scmp.eq.s32.totalorder %s22, 1
    %p213 = por %p211, %p212
    %p214 = scmp.ne.s32.totalorder %s205, %s206
    %p215 = scmp.eq.s32.totalorder %s22, 0
    %p216 = por %p214, %p215
    %p217 = scmp.ne.s32.totalorder %s205, %s206
    %p218 = scmp.eq.s32.totalorder %s23, 1
    %p219 = por %p217, %p218
    %p221 = scmp.ne.s32.totalorder %s206, %s220
    %p222 = scmp.eq.s32.totalorder %s23, 0
    %p223 = por %p221, %p222
    %s225 = sadd.s32 %s224, 1
    %p228 = scmp.eq.s32.totalorder %s17, 1
    %p229 = scmp.ne.s32.totalorder %s224, %s226
    %p230 = scmp.eq.s32.totalorder %s17, 0
    %p231 = por %p229, %p230
    %p232 = scmp.ne.s32.totalorder %s224, %s226
    %p233 = scmp.eq.s32.totalorder %s22, 1
    %p234 = por %p232, %p233
    %p235 = scmp.ne.s32.totalorder %s226, %s227
    %p236 = scmp.eq.s32.totalorder %s22, 0
    %p237 = por %p235, %p236
    %p238 = scmp.ne.s32.totalorder %s226, %s227
    %p239 = scmp.eq.s32.totalorder %s23, 1
    %p240 = por %p238, %p239
    %p242 = scmp.ne.s32.totalorder %s227, %s241
    %p243 = scmp.eq.s32.totalorder %s23, 0
    %p244 = por %p242, %p243
    %s245 = ssub.s32 %s17, %s24
    %p246 = scmp.eq.s32.totalorder %s245, 0
    %s248 = sadd.s32 %s247, 1
    %s249 = scalar_select %p246, %s247, %s248
    %p252 = pneg %p246
    %p253 = scmp.eq.s32.totalorder %s17, 1
    %p254 = por %p252, %p253
    %p255 = scmp.ne.s32.totalorder %s247, %s250
    %p256 = scmp.eq.s32.totalorder %s17, 0
    %p257 = por %p255, %p256
    %p258 = scmp.ne.s32.totalorder %s247, %s250
    %p259 = scmp.eq.s32.totalorder %s22, 1
    %p260 = por %p258, %p259
    %p261 = scmp.ne.s32.totalorder %s250, %s251
    %p262 = scmp.eq.s32.totalorder %s22, 0
    %p263 = por %p261, %p262
    %p264 = scmp.ne.s32.totalorder %s250, %s251
    %p265 = scmp.eq.s32.totalorder %s23, 1
    %p266 = por %p264, %p265
    %p268 = scmp.ne.s32.totalorder %s251, %s267
    %p269 = scmp.eq.s32.totalorder %s23, 0
    %p270 = por %p268, %p269
    %s271 = ssub.s32 %s17, %s24
    %p272 = scmp.eq.s32.totalorder %s271, 0
    %s274 = sadd.s32 %s273, 1
    %s275 = scalar_select %p272, %s273, %s274
    %p278 = pneg %p272
    %p279 = scmp.eq.s32.totalorder %s17, 1
    %p280 = por %p278, %p279
    %p281 = scmp.ne.s32.totalorder %s273, %s276
    %p282 = scmp.eq.s32.totalorder %s17, 0
    %p283 = por %p281, %p282
    %p284 = scmp.ne.s32.totalorder %s273, %s276
    %p285 = scmp.eq.s32.totalorder %s22, 1
    %p286 = por %p284, %p285
    %p287 = scmp.ne.s32.totalorder %s276, %s277
    %p288 = scmp.eq.s32.totalorder %s22, 0
    %p289 = por %p287, %p288
    %p290 = scmp.ne.s32.totalorder %s276, %s277
    %p291 = scmp.eq.s32.totalorder %s23, 1
    %p292 = por %p290, %p291
    %p294 = scmp.ne.s32.totalorder %s277, %s293
    %p295 = scmp.eq.s32.totalorder %s23, 0
    %p296 = por %p294, %p295
    %p297 = scmp.le.s32.totalorder 1, %s17
    %p298 = scmp.lt.s32.totalorder %s17, 3
    %p299 = pnand %p297, %p298
    %p300 = pneg %p299
    // Predicated region
    $region9: #{transformer_forward.17} parent=5 // pred_check
      _
    $region10: #{transformer_forward.17} parent=5 // pred_check_branch
      %302 = sbr.rel (%p299) target = $region12
    $region11: #{transformer_forward.17} parent=5 // pred_region
      %s303 = ssub.s32 %s17, 1
      // Predicated region
      $region13: #{transformer_forward.17} parent=11 // pred_check
        %p304 = pneg %p90
      $region14: #{transformer_forward.17} parent=11 // pred_check_branch
        %306 = sbr.rel (%p304) target = $region16
      $region15: #{transformer_forward.17} parent=11 // pred_region
        _
      $region16: #{transformer_forward.17} parent=11 // pred_fallthru
        _
      // Predicated region
      $region17: #{transformer_forward.17} parent=11 // pred_check
        %p307 = pneg %p111
      $region18: #{transformer_forward.17} parent=11 // pred_check_branch
        %309 = sbr.rel (%p307) target = $region20
      $region19: #{transformer_forward.17} parent=11 // pred_region
        _
      $region20: #{transformer_forward.17} parent=11 // pred_fallthru
        _
      // Predicated region
      $region21: #{transformer_forward.17} parent=11 // pred_check
        %p310 = pneg %p132
      $region22: #{transformer_forward.17} parent=11 // pred_check_branch
        %312 = sbr.rel (%p310) target = $region24
      $region23: #{transformer_forward.17} parent=11 // pred_region
        _
      $region24: #{transformer_forward.17} parent=11 // pred_fallthru
        _
      // Predicated region
      $region25: #{transformer_forward.17} parent=11 // pred_check
        %p313 = pneg %p153
      $region26: #{transformer_forward.17} parent=11 // pred_check_branch
        %315 = sbr.rel (%p313) target = $region28
      $region27: #{transformer_forward.17} parent=11 // pred_region
        _
      $region28: #{transformer_forward.17} parent=11 // pred_fallthru
        _
      // Predicated region
      $region29: #{transformer_forward.17} parent=11 // pred_check
        %p316 = pneg %p174
      $region30: #{transformer_forward.17} parent=11 // pred_check_branch
        %318 = sbr.rel (%p316) target = $region32
      $region31: #{transformer_forward.17} parent=11 // pred_region
        _
      $region32: #{transformer_forward.17} parent=11 // pred_fallthru
        _
      // Predicated region
      $region33: #{transformer_forward.17} parent=11 // pred_check
        %p319 = pneg %p195
      $region34: #{transformer_forward.17} parent=11 // pred_check_branch
        %321 = sbr.rel (%p319) target = $region36
      $region35: #{transformer_forward.17} parent=11 // pred_region
        _
      $region36: #{transformer_forward.17} parent=11 // pred_fallthru
        _
      // Predicated region
      $region37: #{transformer_forward.17} parent=11 // pred_check
        %p322 = pneg %p216
      $region38: #{transformer_forward.17} parent=11 // pred_check_branch
        %324 = sbr.rel (%p322) target = $region40
      $region39: #{transformer_forward.17} parent=11 // pred_region
        _
      $region40: #{transformer_forward.17} parent=11 // pred_fallthru
        _
      // Predicated region
      $region41: #{transformer_forward.17} parent=11 // pred_check
        %p325 = pneg %p237
      $region42: #{transformer_forward.17} parent=11 // pred_check_branch
        %327 = sbr.rel (%p325) target = $region44
      $region43: #{transformer_forward.17} parent=11 // pred_region
        _
      $region44: #{transformer_forward.17} parent=11 // pred_fallthru
        _
    $region12: #{transformer_forward.17} parent=5 // pred_fallthru
      _
    %p328 = scmp.lt.s32.totalorder %s17, 2
    // Predicated region
    $region45: #{transformer_forward.17} parent=5 // pred_check
      %p329 = pneg %p328
    $region46: #{transformer_forward.17} parent=5 // pred_check_branch
      %331 = sbr.rel (%p329) target = $region48
    $region47: #{transformer_forward.17} parent=5 // pred_region
      // Predicated region
      $region49: #{transformer_forward.17} parent=47 // pred_check
        %p332 = pneg %p37
      $region50: #{transformer_forward.17} parent=47 // pred_check_branch
        %334 = sbr.rel (%p332) target = $region52
      $region51: #{transformer_forward.17} parent=47 // pred_region
        %p335 = scmp.lt.s32.totalorder %s17, 1
        %s336 = scalar_select %p335, %s17, 1
        %s337 = smul.addr %s336, 2
        %s338 = smul.addr %s337, 8
        %s339 = scalar_lea.vmem %s0, %s338
      $region52: #{transformer_forward.17} parent=47 // pred_fallthru
        _
      // Predicated region
      $region53: #{transformer_forward.17} parent=47 // pred_check
        %p340 = pneg %p63
      $region54: #{transformer_forward.17} parent=47 // pred_check_branch
        %342 = sbr.rel (%p340) target = $region56
      $region55: #{transformer_forward.17} parent=47 // pred_region
        %p343 = scmp.lt.s32.totalorder %s17, 1
        %s344 = scalar_select %p343, %s17, 1
        %s345 = smul.addr %s344, 2
        %s346 = smul.addr %s345, 8
        %s347 = scalar_lea.vmem %s1, %s346
      $region56: #{transformer_forward.17} parent=47 // pred_fallthru
        _
      // Predicated region
      $region57: #{transformer_forward.17} parent=47 // pred_check
        %p348 = pneg %p257
      $region58: #{transformer_forward.17} parent=47 // pred_check_branch
        %350 = sbr.rel (%p348) target = $region60
      $region59: #{transformer_forward.17} parent=47 // pred_region
        %p351 = scmp.lt.s32.totalorder %s17, 1
        %s352 = scalar_select %p351, %s17, 1
        %s353 = scalar_lea.vmem %s10, %s352
      $region60: #{transformer_forward.17} parent=47 // pred_fallthru
        _
    $region48: #{transformer_forward.17} parent=5 // pred_fallthru
      _
    %p354 = scmp.le.s32.totalorder 1, %s17
    %p355 = scmp.lt.s32.totalorder %s17, 3
    %p356 = pnand %p354, %p355
    %p357 = pneg %p356
    // Predicated region
    $region61: #{transformer_forward.17} parent=5 // pred_check
      _
    $region62: #{transformer_forward.17} parent=5 // pred_check_branch
      %359 = sbr.rel (%p356) target = $region64
    $region63: #{transformer_forward.17} parent=5 // pred_region
      %s360 = ssub.s32 %s17, 1
      %p361 = scmp.lt.s32.totalorder %s22, 1
      %s362 = scalar_select %p361, %s22, 1
      %s363 = smul.addr %s362, 2
      %s364 = smul.addr %s363, 8
      %s365 = scalar_lea.vmem %s0, %s364
      %p366 = pneg %p43
      %p367 = pneg %p40
      %p368 = scmp.lt.s32.totalorder %s22, 1
      %s369 = scalar_select %p368, %s22, 1
      %s370 = smul.addr %s369, 2
      %s371 = smul.addr %s370, 8
      %s372 = scalar_lea.vmem %s1, %s371
      %p373 = pneg %p69
      %p374 = pneg %p66
      %p375 = pneg %p90
      %p376 = pneg %p87
      %p377 = pneg %p111
      %p378 = pneg %p108
      %p379 = pneg %p132
      %p380 = pneg %p129
      %p381 = pneg %p153
      %p382 = pneg %p150
      %p383 = pneg %p174
      %p384 = pneg %p171
      %p385 = pneg %p195
      %p386 = pneg %p192
      %p387 = pneg %p216
      %p388 = pneg %p213
      %p389 = pneg %p237
      %p390 = pneg %p234
      %p391 = scmp.lt.s32.totalorder %s22, 1
      %s392 = scalar_select %p391, %s22, 1
      %s393 = scalar_lea.vmem %s10, %s392
      %p394 = pneg %p263
      %p395 = pneg %p260
      %p396 = pneg %p289
      %p397 = pneg %p286
      %p398 = scmp.lt.s32.totalorder %s22, 1
      %s399 = scalar_select %p398, %s22, 1
      %s400 = smul.addr %s399, 2
      %s401 = smul.addr %s400, 8
      %s402 = scalar_lea.vmem %s11, %s401
      %p403 = scmp.lt.s32.totalorder %s22, 1
      %s404 = scalar_select %p403, %s22, 1
      %s405 = smul.addr %s404, 2
      %s406 = smul.addr %s405, 8
      %s407 = scalar_lea.vmem %s0, %s406
      %p408 = scmp.lt.s32.totalorder %s22, 1
      %s409 = scalar_select %p408, %s22, 1
      %s410 = smul.addr %s409, 2
      %s411 = smul.addr %s410, 8
      %s412 = scalar_lea.vmem %s1, %s411
      %p413 = scmp.lt.s32.totalorder %s22, 1
      %s414 = scalar_select %p413, %s22, 1
      %s415 = scalar_lea.vmem %s10, %s414
      %p416 = scmp.lt.s32.totalorder %s22, 1
      %s417 = scalar_select %p416, %s22, 1
      %s418 = smul.addr %s417, 2
      %s419 = smul.addr %s418, 8
      %s420 = scalar_lea.vmem %s11, %s419
      %v422 = vld [vmem:[%s407] sm:$0xff]
      %v423 = vld [vmem:[%s407 + $0x8] sm:$0x3]
      %v424 = vld [vmem:[%s412] sm:$0xff]
      %v425 = vld [vmem:[%s412 + $0x8] sm:$0x3]
      %v426 = vpack.c.bf16 %v423, %v422
      %v427 = vpack.c.bf16 %v425, %v424
      %v428 = vld [vmem:[%s2] sm:$0xf]
      %v429 = vld [vmem:[%s2 + $0x4] sm:$0xf]
      %v430 = vld [vmem:[%s2 + $0x8] sm:$0xf]
      %v431 = vld [vmem:[%s2 + $0xc] sm:$0xf]
      %v432 = vld [vmem:[%s3] sm:$0x1]
      %v434 = vperm.slane %v432, 0
      %v440 = vunpack.c.l.b16 %v428
      %v441 = vunpack.c.l.b16 %v429
      %v442 = vunpack.c.l.b16 %v430
      %v443 = vunpack.c.l.b16 %v431
      %v444 = vpack.c.b16 %v441, %v440
      %v445 = vpack.c.b16 %v443, %v442
      %vm448 = vcmask 261120
      %v450 = vsel %vm448, %v426, 0
      %452 = vmatpush.bf16.msra.mxu0 0
      %453 = vmatpush.bf16.msra.mxu0 0
      %454 = vmatpush.bf16.msra.mxu0 0
      %455 = vmatpush.bf16.msra.mxu0 0
      %456 = vmatpush.bf16.msra.mxu0 0
      %457 = vmatpush.bf16.msra.mxu0 0
      %458 = vmatpush.bf16.msra.mxu0 %v445
      %459 = vmatpush.bf16.msra.mxu0 %v444
      %460 = vmatmul.bf16.gmra.mxu0 %v450
      %v461 = vpop.f32.mrf.mxu0
      %v462 = vadd.f32 %v434, %v461
      %v463 = vpop.f32.mrf.mxu0
      %v464 = vadd.f32 %v434, %v463
      %465 = vdwg.mxu0
      %v466 = vld [vmem:[%s4] sm:$0xf]
      %v467 = vld [vmem:[%s4 + $0x4] sm:$0xf]
      %v468 = vld [vmem:[%s4 + $0x8] sm:$0xf]
      %v469 = vld [vmem:[%s4 + $0xc] sm:$0xf]
      %v470 = vld [vmem:[%s5] sm:$0x1]
      %v472 = vperm.slane %v470, 0
      %v478 = vunpack.c.l.b16 %v466
      %v479 = vunpack.c.l.b16 %v467
      %v480 = vunpack.c.l.b16 %v468
      %v481 = vunpack.c.l.b16 %v469
      %v482 = vpack.c.b16 %v479, %v478
      %v483 = vpack.c.b16 %v481, %v480
      %v487 = vsel %vm448, %v427, 0
      %489 = vmatpush.bf16.msra.mxu0 0
      %490 = vmatpush.bf16.msra.mxu0 0
      %491 = vmatpush.bf16.msra.mxu0 0
      %492 = vmatpush.bf16.msra.mxu0 0
      %493 = vmatpush.bf16.msra.mxu0 0
      %494 = vmatpush.bf16.msra.mxu0 0
      %495 = vmatpush.bf16.msra.mxu0 %v483
      %496 = vmatpush.bf16.msra.mxu0 %v482
      %497 = vmatmul.bf16.gmra.mxu0 %v487
      %v498 = vpop.f32.mrf.mxu0
      %v499 = vadd.f32 %v472, %v498
      %v500 = vpop.f32.mrf.mxu0
      %v501 = vadd.f32 %v472, %v500
      %502 = vdwg.mxu0
      %v503 = vld [vmem:[%s415] sm:$0x1]
      %v504 = vpack.c.bf16 %v464, %v462
      %v505 = vpack.c.bf16 %v501, %v499
      %vm506 = vcmask 64512
      %v508 = vsel %vm506, %v504, 0
      %v511 = vsel %vm506, %v505, 0
      %513 = vmatpush.bf16.xpose.msra.mxu0 0
      %514 = vmatpush.bf16.xpose.msra.mxu0 0
      %515 = vmatpush.bf16.xpose.msra.mxu0 0
      %516 = vmatpush.bf16.xpose.msra.mxu0 0
      %517 = vmatpush.bf16.xpose.msra.mxu0 0
      %518 = vmatpush.bf16.xpose.msra.mxu0 0
      %519 = vmatpush.bf16.xpose.msra.mxu0 0
      %520 = vmatpush.bf16.xpose.msra.mxu0 %v511
      %521 = vmatmul.bf16.gmra.mxu0 %v508
      %v522 = vpop.f32.mrf.mxu0
      %v523 = vadd.f32 0.0, %v522
      %v524 = vpop.f32.mrf.mxu0
      %v525 = vadd.f32 0.0, %v524
      %526 = vdwg.mxu0
      %v527 = vmul.f32 %v523, 0.35355338
      %v528 = vmul.f32 %v525, 0.35355338
      %v530 = vperm.slane %v503, 0
      %v532 = vadd.f32 %v527, %v530
      %v533 = vadd.f32 %v528, %v530
      %vm534 = vcmask 80896
      %v535 = vsel %vm534, %v532, -inf
      %536 = vmax.xlane.f32.xlu0 %v535
      %v537 = vpop.xlane.xlu0 %536
      %vm538 = vcmask 74752
      %v539 = vsel %vm538, %v533, -inf
      %540 = vmax.xlane.f32.xlu0 %v539
      %v541 = vpop.xlane.xlu0 %540
      %v542 = vsub.f32 %v532, %v537
      %v543 = vsub.f32 %v533, %v541
      %v544 = vmul.f32 %v542, 1.442695
      %v545 = vpow.pop %v544
      %v546 = vmul.f32 %v543, 1.442695
      %v547 = vpow.pop %v546
      %v548 = vsel %vm534, %v545, 0.0
      %549 = vadd.xlane.f32.xlu0 %v548
      %v550 = vpop.xlane.xlu0 %549
      %v551 = vsel %vm538, %v547, 0.0
      %552 = vadd.xlane.f32.xlu0 %v551
      %v553 = vpop.xlane.xlu0 %552
      %v554 = vrcp.pop %v550
      %v555 = vrcp.pop %v553
      %v556 = vmul.f32 %v545, %v554
      %v557 = vmul.f32 %v547, %v555
      %v558 = vpack.c.bf16 %v557, %v556
      %560 = vrot.lane.b32.xlu0 %v505, 96
      %v561 = vpop.permute.xlu0 %560
      %v563 = vsel %vm534, %v558, 0
      %vm565 = vcmask 1044480
      %v567 = vsel %vm565, %v561, 0
      %569 = vmatpush.bf16.msra.mxu0 0
      %570 = vmatpush.bf16.msra.mxu0 0
      %571 = vmatpush.bf16.msra.mxu0 0
      %572 = vmatpush.bf16.msra.mxu0 0
      %573 = vmatpush.bf16.msra.mxu0 0
      %574 = vmatpush.bf16.msra.mxu0 0
      %575 = vmatpush.bf16.msra.mxu0 0
      %576 = vmatpush.bf16.msra.mxu0 %v567
      %577 = vmatmul.bf16.gmra.mxu0 %v563
      %v578 = vpop.f32.mrf.mxu0
      %v579 = vadd.f32 0.0, %v578
      %v580 = vpop.f32.mrf.mxu0
      %v581 = vadd.f32 0.0, %v580
      %582 = vdwg.mxu0
      %v583 = vpack.c.bf16 %v581, %v579
      %v584 = vld [vmem:[%s6] sm:$0xf]
      %586 = vrot.lane.b32.xlu0 %v504, 120
      %v587 = vpop.permute.xlu0 %586
      %588 = vrot.lane.b32.xlu0 %v505, 120
      %v589 = vpop.permute.xlu0 %588
      %v591 = vsel %vm506, %v587, 0
      %v594 = vsel %vm506, %v589, 0
      %596 = vmatpush.bf16.xpose.msra.mxu0 0
      %597 = vmatpush.bf16.xpose.msra.mxu0 0
      %598 = vmatpush.bf16.xpose.msra.mxu0 0
      %599 = vmatpush.bf16.xpose.msra.mxu0 0
      %600 = vmatpush.bf16.xpose.msra.mxu0 0
      %601 = vmatpush.bf16.xpose.msra.mxu0 0
      %602 = vmatpush.bf16.xpose.msra.mxu0 0
      %603 = vmatpush.bf16.xpose.msra.mxu0 %v594
      %604 = vmatmul.bf16.gmra.mxu0 %v591
      %v605 = vpop.f32.mrf.mxu0
      %v606 = vadd.f32 0.0, %v605
      %v607 = vpop.f32.mrf.mxu0
      %v608 = vadd.f32 0.0, %v607
      %609 = vdwg.mxu0
      %v610 = vmul.f32 %v606, 0.35355338
      %v611 = vmul.f32 %v608, 0.35355338
      %v612 = vadd.f32 %v610, %v530
      %v613 = vadd.f32 %v611, %v530
      %v614 = vsel %vm534, %v612, -inf
      %615 = vmax.xlane.f32.xlu0 %v614
      %v616 = vpop.xlane.xlu0 %615
      %v617 = vsel %vm538, %v613, -inf
      %618 = vmax.xlane.f32.xlu0 %v617
      %v619 = vpop.xlane.xlu0 %618
      %v620 = vsub.f32 %v612, %v616
      %v621 = vsub.f32 %v613, %v619
      %v622 = vmul.f32 %v620, 1.442695
      %v623 = vpow.pop %v622
      %v624 = vmul.f32 %v621, 1.442695
      %v625 = vpow.pop %v624
      %v626 = vsel %vm534, %v623, 0.0
      %627 = vadd.xlane.f32.xlu0 %v626
      %v628 = vpop.xlane.xlu0 %627
      %v629 = vsel %vm538, %v625, 0.0
      %630 = vadd.xlane.f32.xlu0 %v629
      %v631 = vpop.xlane.xlu0 %630
      %v632 = vrcp.pop %v628
      %v633 = vrcp.pop %v631
      %v634 = vmul.f32 %v623, %v632
      %v635 = vmul.f32 %v625, %v633
      %v636 = vpack.c.bf16 %v635, %v634
      %637 = vrot.lane.b32.xlu0 %v505, 88
      %v638 = vpop.permute.xlu0 %637
      %v640 = vsel %vm534, %v636, 0
      %v643 = vsel %vm565, %v638, 0
      %645 = vmatpush.bf16.msra.mxu0 0
      %646 = vmatpush.bf16.msra.mxu0 0
      %647 = vmatpush.bf16.msra.mxu0 0
      %648 = vmatpush.bf16.msra.mxu0 0
      %649 = vmatpush.bf16.msra.mxu0 0
      %650 = vmatpush.bf16.msra.mxu0 0
      %651 = vmatpush.bf16.msra.mxu0 0
      %652 = vmatpush.bf16.msra.mxu0 %v643
      %653 = vmatmul.bf16.gmra.mxu0 %v640
      %v654 = vpop.f32.mrf.mxu0
      %v655 = vadd.f32 0.0, %v654
      %v656 = vpop.f32.mrf.mxu0
      %v657 = vadd.f32 0.0, %v656
      %658 = vdwg.mxu0
      %v659 = vpack.c.bf16 %v657, %v655
      %v660 = vld [vmem:[%s6 + $0x4] sm:$0xf]
      %v662 = vsel %vm506, %v659, 0
      %vm664 = vcmask 1043456
      %v666 = vsel %vm664, %v660, 0
      %668 = vmatpush.bf16.msra.mxu0 0
      %669 = vmatpush.bf16.msra.mxu0 0
      %670 = vmatpush.bf16.msra.mxu0 0
      %671 = vmatpush.bf16.msra.mxu0 0
      %672 = vmatpush.bf16.msra.mxu0 0
      %673 = vmatpush.bf16.msra.mxu0 0
      %674 = vmatpush.bf16.msra.mxu0 0
      %675 = vmatpush.bf16.msra.mxu0 %v666
      %676 = vmatmul.bf16.gmra.mxu0 %v662
      %v677 = vpop.f32.mrf.mxu0
      %v678 = vadd.f32 0.0, %v677
      %v679 = vpop.f32.mrf.mxu0
      %v680 = vadd.f32 0.0, %v679
      %681 = vdwg.mxu0
      %v683 = vsel %vm506, %v583, 0
      %v686 = vsel %vm664, %v584, 0
      %688 = vmatpush.bf16.msra.mxu0 0
      %689 = vmatpush.bf16.msra.mxu0 0
      %690 = vmatpush.bf16.msra.mxu0 0
      %691 = vmatpush.bf16.msra.mxu0 0
      %692 = vmatpush.bf16.msra.mxu0 0
      %693 = vmatpush.bf16.msra.mxu0 0
      %694 = vmatpush.bf16.msra.mxu0 0
      %695 = vmatpush.bf16.msra.mxu0 %v686
      %696 = vmatmul.bf16.gmra.mxu0 %v683
      %v697 = vpop.f32.mrf.mxu0
      %v698 = vadd.f32 %v678, %v697
      %v699 = vpop.f32.mrf.mxu0
      %v700 = vadd.f32 %v680, %v699
      %701 = vdwg.mxu0
      %702 = vrot.lane.b32.xlu0 %v504, 112
      %v703 = vpop.permute.xlu0 %702
      %704 = vrot.lane.b32.xlu0 %v505, 112
      %v705 = vpop.permute.xlu0 %704
      %v707 = vsel %vm506, %v703, 0
      %v710 = vsel %vm506, %v705, 0
      %712 = vmatpush.bf16.xpose.msra.mxu0 0
      %713 = vmatpush.bf16.xpose.msra.mxu0 0
      %714 = vmatpush.bf16.xpose.msra.mxu0 0
      %715 = vmatpush.bf16.xpose.msra.mxu0 0
      %716 = vmatpush.bf16.xpose.msra.mxu0 0
      %717 = vmatpush.bf16.xpose.msra.mxu0 0
      %718 = vmatpush.bf16.xpose.msra.mxu0 0
      %719 = vmatpush.bf16.xpose.msra.mxu0 %v710
      %720 = vmatmul.bf16.gmra.mxu0 %v707
      %v721 = vpop.f32.mrf.mxu0
      %v722 = vadd.f32 0.0, %v721
      %v723 = vpop.f32.mrf.mxu0
      %v724 = vadd.f32 0.0, %v723
      %725 = vdwg.mxu0
      %v726 = vmul.f32 %v722, 0.35355338
      %v727 = vmul.f32 %v724, 0.35355338
      %v728 = vadd.f32 %v726, %v530
      %v729 = vadd.f32 %v727, %v530
      %v730 = vsel %vm534, %v728, -inf
      %731 = vmax.xlane.f32.xlu0 %v730
      %v732 = vpop.xlane.xlu0 %731
      %v733 = vsel %vm538, %v729, -inf
      %734 = vmax.xlane.f32.xlu0 %v733
      %v735 = vpop.xlane.xlu0 %734
      %v736 = vsub.f32 %v728, %v732
      %v737 = vsub.f32 %v729, %v735
      %v738 = vmul.f32 %v736, 1.442695
      %v739 = vpow.pop %v738
      %v740 = vmul.f32 %v737, 1.442695
      %v741 = vpow.pop %v740
      %v742 = vsel %vm534, %v739, 0.0
      %743 = vadd.xlane.f32.xlu0 %v742
      %v744 = vpop.xlane.xlu0 %743
      %v745 = vsel %vm538, %v741, 0.0
      %746 = vadd.xlane.f32.xlu0 %v745
      %v747 = vpop.xlane.xlu0 %746
      %v748 = vrcp.pop %v744
      %v749 = vrcp.pop %v747
      %v750 = vmul.f32 %v739, %v748
      %v751 = vmul.f32 %v741, %v749
      %v752 = vpack.c.bf16 %v751, %v750
      %753 = vrot.lane.b32.xlu0 %v505, 80
      %v754 = vpop.permute.xlu0 %753
      %v756 = vsel %vm534, %v752, 0
      %v759 = vsel %vm565, %v754, 0
      %761 = vmatpush.bf16.msra.mxu0 0
      %762 = vmatpush.bf16.msra.mxu0 0
      %763 = vmatpush.bf16.msra.mxu0 0
      %764 = vmatpush.bf16.msra.mxu0 0
      %765 = vmatpush.bf16.msra.mxu0 0
      %766 = vmatpush.bf16.msra.mxu0 0
      %767 = vmatpush.bf16.msra.mxu0 0
      %768 = vmatpush.bf16.msra.mxu0 %v759
      %769 = vmatmul.bf16.gmra.mxu0 %v756
      %v770 = vpop.f32.mrf.mxu0
      %v771 = vadd.f32 0.0, %v770
      %v772 = vpop.f32.mrf.mxu0
      %v773 = vadd.f32 0.0, %v772
      %774 = vdwg.mxu0
      %v775 = vpack.c.bf16 %v773, %v771
      %v776 = vld [vmem:[%s6 + $0x8] sm:$0xf]
      %v778 = vsel %vm506, %v775, 0
      %v781 = vsel %vm664, %v776, 0
      %783 = vmatpush.bf16.msra.mxu0 0
      %784 = vmatpush.bf16.msra.mxu0 0
      %785 = vmatpush.bf16.msra.mxu0 0
      %786 = vmatpush.bf16.msra.mxu0 0
      %787 = vmatpush.bf16.msra.mxu0 0
      %788 = vmatpush.bf16.msra.mxu0 0
      %789 = vmatpush.bf16.msra.mxu0 0
      %790 = vmatpush.bf16.msra.mxu0 %v781
      %791 = vmatmul.bf16.gmra.mxu0 %v778
      %v792 = vpop.f32.mrf.mxu0
      %v793 = vadd.f32 0.0, %v792
      %v794 = vpop.f32.mrf.mxu0
      %v795 = vadd.f32 0.0, %v794
      %796 = vdwg.mxu0
      %v797 = vadd.f32 %v698, %v793
      %v798 = vadd.f32 %v700, %v795
      %799 = vrot.lane.b32.xlu0 %v504, 104
      %v800 = vpop.permute.xlu0 %799
      %801 = vrot.lane.b32.xlu0 %v505, 104
      %v802 = vpop.permute.xlu0 %801
      %v804 = vsel %vm506, %v800, 0
      %v807 = vsel %vm506, %v802, 0
      %809 = vmatpush.bf16.xpose.msra.mxu0 0
      %810 = vmatpush.bf16.xpose.msra.mxu0 0
      %811 = vmatpush.bf16.xpose.msra.mxu0 0
      %812 = vmatpush.bf16.xpose.msra.mxu0 0
      %813 = vmatpush.bf16.xpose.msra.mxu0 0
      %814 = vmatpush.bf16.xpose.msra.mxu0 0
      %815 = vmatpush.bf16.xpose.msra.mxu0 0
      %816 = vmatpush.bf16.xpose.msra.mxu0 %v807
      %817 = vmatmul.bf16.gmra.mxu0 %v804
      %v818 = vpop.f32.mrf.mxu0
      %v819 = vadd.f32 0.0, %v818
      %v820 = vpop.f32.mrf.mxu0
      %v821 = vadd.f32 0.0, %v820
      %822 = vdwg.mxu0
      %v823 = vmul.f32 %v819, 0.35355338
      %v824 = vmul.f32 %v821, 0.35355338
      %v825 = vadd.f32 %v823, %v530
      %v826 = vadd.f32 %v824, %v530
      %v827 = vsel %vm534, %v825, -inf
      %828 = vmax.xlane.f32.xlu0 %v827
      %v829 = vpop.xlane.xlu0 %828
      %v830 = vsel %vm538, %v826, -inf
      %831 = vmax.xlane.f32.xlu0 %v830
      %v832 = vpop.xlane.xlu0 %831
      %v833 = vsub.f32 %v825, %v829
      %v834 = vsub.f32 %v826, %v832
      %v835 = vmul.f32 %v833, 1.442695
      %v836 = vpow.pop %v835
      %v837 = vmul.f32 %v834, 1.442695
      %v838 = vpow.pop %v837
      %v839 = vsel %vm534, %v836, 0.0
      %840 = vadd.xlane.f32.xlu0 %v839
      %v841 = vpop.xlane.xlu0 %840
      %v842 = vsel %vm538, %v838, 0.0
      %843 = vadd.xlane.f32.xlu0 %v842
      %v844 = vpop.xlane.xlu0 %843
      %v845 = vrcp.pop %v841
      %v846 = vrcp.pop %v844
      %v847 = vmul.f32 %v836, %v845
      %v848 = vmul.f32 %v838, %v846
      %v849 = vpack.c.bf16 %v848, %v847
      %850 = vrot.lane.b32.xlu0 %v505, 72
      %v851 = vpop.permute.xlu0 %850
      %v853 = vsel %vm534, %v849, 0
      %v856 = vsel %vm565, %v851, 0
      %858 = vmatpush.bf16.msra.mxu0 0
      %859 = vmatpush.bf16.msra.mxu0 0
      %860 = vmatpush.bf16.msra.mxu0 0
      %861 = vmatpush.bf16.msra.mxu0 0
      %862 = vmatpush.bf16.msra.mxu0 0
      %863 = vmatpush.bf16.msra.mxu0 0
      %864 = vmatpush.bf16.msra.mxu0 0
      %865 = vmatpush.bf16.msra.mxu0 %v856
      %866 = vmatmul.bf16.gmra.mxu0 %v853
      %v867 = vpop.f32.mrf.mxu0
      %v868 = vadd.f32 0.0, %v867
      %v869 = vpop.f32.mrf.mxu0
      %v870 = vadd.f32 0.0, %v869
      %871 = vdwg.mxu0
      %v872 = vpack.c.bf16 %v870, %v868
      %v873 = vld [vmem:[%s6 + $0xc] sm:$0xf]
      %v875 = vsel %vm506, %v872, 0
      %v878 = vsel %vm664, %v873, 0
      %880 = vmatpush.bf16.msra.mxu0 0
      %881 = vmatpush.bf16.msra.mxu0 0
      %882 = vmatpush.bf16.msra.mxu0 0
      %883 = vmatpush.bf16.msra.mxu0 0
      %884 = vmatpush.bf16.msra.mxu0 0
      %885 = vmatpush.bf16.msra.mxu0 0
      %886 = vmatpush.bf16.msra.mxu0 0
      %887 = vmatpush.bf16.msra.mxu0 %v878
      %888 = vmatmul.bf16.gmra.mxu0 %v875
      %v889 = vpop.f32.mrf.mxu0
      %v890 = vadd.f32 0.0, %v889
      %v891 = vpop.f32.mrf.mxu0
      %v892 = vadd.f32 0.0, %v891
      %893 = vdwg.mxu0
      %v894 = vadd.f32 %v797, %v890
      %v895 = vadd.f32 %v798, %v892
      %v896 = vld [vmem:[%s7] sm:$0x1]
      %v898 = vperm.slane %v896, 0
      %v900 = vadd.f32 %v894, %v898
      %v901 = vadd.f32 %v895, %v898
      %v902 = vadd.f32 %v900, %v422
      %v903 = vadd.f32 %v901, %v423
      %v904 = vld [vmem:[%s8] sm:$0x1]
      %v905 = vld [vmem:[%s9] sm:$0x1]
      %v906 = vsel %vm448, %v902, 0.0
      %907 = vadd.xlane.f32.xlu0 %v906
      %v908 = vpop.xlane.xlu0 %907
      %vm909 = vcmask 254976
      %v910 = vsel %vm909, %v903, 0.0
      %911 = vadd.xlane.f32.xlu0 %v910
      %v912 = vpop.xlane.xlu0 %911
      %v913 = vrcp.pop 32.0
      %v914 = vmul.f32 32.0, %v913
      %v915 = vsub.f32 1.0, %v914
      %v916 = vmul.f32 %v913, %v915
      %v917 = vadd.f32 %v913, %v916
      %vm918 = vweird.f32 %v913
      %v919 = vsel %vm918, %v913, %v917
      %v920 = vmul.f32 %v908, %v919
      %v921 = vmul.f32 %v912, %v919
      %v922 = vsub.f32 %v902, %v920
      %v923 = vsub.f32 %v903, %v921
      %v924 = vmul.f32 %v922, %v922
      %v925 = vmul.f32 %v923, %v923
      %v926 = vsel %vm448, %v924, 0.0
      %927 = vadd.xlane.f32.xlu0 %v926
      %v928 = vpop.xlane.xlu0 %927
      %v929 = vsel %vm909, %v925, 0.0
      %930 = vadd.xlane.f32.xlu0 %v929
      %v931 = vpop.xlane.xlu0 %930
      %v932 = vmul.f32 %v928, %v919
      %v933 = vmul.f32 %v931, %v919
      %v934 = vadd.f32 %v932, 1e-05
      %v935 = vadd.f32 %v933, 1e-05
      %v936 = vrsqrt.pop %v934
      %v937 = vmul.f32 %v936, %v934
      %v938 = vmul.f32 %v937, %v936
      %v939 = vmul.f32 0.5, %v938
      %v940 = vsub.f32 1.5, %v939
      %v941 = vmul.f32 %v936, %v940
      %vm942 = vweird.f32 %v934
      %vm943 = vweird.f32 %v936
      %vm944 = vmor %vm942, %vm943
      %v945 = vsel %vm944, %v936, %v941
      %v946 = vrsqrt.pop %v935
      %v947 = vmul.f32 %v946, %v935
      %v948 = vmul.f32 %v947, %v946
      %v949 = vmul.f32 0.5, %v948
      %v950 = vsub.f32 1.5, %v949
      %v951 = vmul.f32 %v946, %v950
      %vm952 = vweird.f32 %v935
      %vm953 = vweird.f32 %v946
      %vm954 = vmor %vm952, %vm953
      %v955 = vsel %vm954, %v946, %v951
      %v956 = vmul.f32 %v922, %v945
      %v957 = vmul.f32 %v923, %v955
      %v959 = vperm.slane %v904, 0
      %v961 = vmul.f32 %v956, %v959
      %v962 = vmul.f32 %v957, %v959
      %v964 = vperm.slane %v905, 0
      %v966 = vadd.f32 %v961, %v964
      %v967 = vadd.f32 %v962, %v964
      %968 = vst.msk [vmem:[%s420] sm:$0xff] %vm448, %v966
      %969 = vst.msk [vmem:[%s420 + $0x8] sm:$0x3] %vm909, %v967
      %p970 = scmp.lt.s32.totalorder %s22, 1
      %s971 = scalar_select %p970, %s22, 1
      %s972 = smul.addr %s971, 2
      %s973 = smul.addr %s972, 8
      %s974 = scalar_lea.vmem %s11, %s973
      // Predicated region
      $region65: #{transformer_forward.17} parent=63 // pred_check
        %p975 = pneg %p286
      $region66: #{transformer_forward.17} parent=63 // pred_check_branch
        %977 = sbr.rel (%p975) target = $region68
      $region67: #{transformer_forward.17} parent=63 // pred_region
        _
      $region68: #{transformer_forward.17} parent=63 // pred_fallthru
        _
    $region64: #{transformer_forward.17} parent=5 // pred_fallthru
      _
    %p978 = scmp.le.s32.totalorder 2, %s17
    // Predicated region
    $region69: #{transformer_forward.17} parent=5 // pred_check
      %p979 = pneg %p978
    $region70: #{transformer_forward.17} parent=5 // pred_check_branch
      %981 = sbr.rel (%p979) target = $region72
    $region71: #{transformer_forward.17} parent=5 // pred_region
      %s982 = ssub.s32 %s17, 2
      // Predicated region
      $region73: #{transformer_forward.17} parent=71 // pred_check
        %p983 = pneg %p292
      $region74: #{transformer_forward.17} parent=71 // pred_check_branch
        %985 = sbr.rel (%p983) target = $region76
      $region75: #{transformer_forward.17} parent=71 // pred_region
        %p986 = scmp.lt.s32.totalorder %s23, 1
        %s987 = scalar_select %p986, %s23, 1
        %s988 = smul.addr %s987, 2
        %s989 = smul.addr %s988, 8
        %s990 = scalar_lea.vmem %s11, %s989
      $region76: #{transformer_forward.17} parent=71 // pred_fallthru
        _
    $region72: #{transformer_forward.17} parent=5 // pred_fallthru
      _
  $region6: #{transformer_forward.17} parent=0 // loop_footer
    %s21 = sadd.s32 1, %s17
  $region7: #{transformer_forward.17} parent=0 // loop_footer_branch
    %16 = sbr.rel target = $region3
  $region8: #{transformer_forward.17} parent=0 // loop_exit
    _

// kernel: transformer_forward.24
$region0: #{transformer_forward.24}
  #allocation0 [shape = 'u32[]', space=smem, size = 0x4, offset = 0x4, fixed_abs, tag = 'smem constant byte address 0x4 - core index']
  #allocation1 [shape = 'u32[72,128]{1,0:T(1,128)}', space=vmem, size = 0x9000, scoped, tag = 'internal scratch']
  %s0 = inlined_call_operand.vmem [shape: f32[2,8,32], index: 0, kind: input, shape index: {}, may-alias: {0,1}]
  %s1 = inlined_call_operand.vmem [shape: f32[2,8,32], index: 1, kind: input, shape index: {}, may-alias: {0,1}]
  %s2 = inlined_call_operand.vmem [shape: bf16[32,32], index: 2, kind: input, shape index: {}]
  %s3 = inlined_call_operand.vmem [shape: f32[1,32], index: 3, kind: input, shape index: {}]
  %s4 = inlined_call_operand.vmem [shape: bf16[32,64], index: 4, kind: input, shape index: {}]
  %s5 = inlined_call_operand.vmem [shape: f32[1,64], index: 5, kind: input, shape index: {}]
  %s6 = inlined_call_operand.vmem [shape: bf16[32,32], index: 6, kind: input, shape index: {}]
  %s7 = inlined_call_operand.vmem [shape: f32[1,32], index: 7, kind: input, shape index: {}]
  %s8 = inlined_call_operand.vmem [shape: f32[1,32], index: 8, kind: input, shape index: {}]
  %s9 = inlined_call_operand.vmem [shape: f32[1,32], index: 9, kind: input, shape index: {}]
  %s10 = inlined_call_operand.vmem [shape: f32[2,8,32], index: 10, kind: output, shape index: {}]
  %s11 = sld [smem:[#allocation0]]
  $region73: #{transformer_forward.24} parent=0
    _
  %s13 = ssub.s32 1, %s11
  %s14 = scalar_select 0, %s13, %s11
  loop: start=0, step=1, limit=4
  $region2: #{transformer_forward.24} parent=0 // loop_pre_header
    _
  $region3: #{transformer_forward.24} parent=0 // loop_header
    %s16 = sphi 0, %s20
    %p17 = scmp.ge.s32.totalorder %s16, 4
    %s26 = sphi 0, %s28
    %s29 = sphi 0, %s26
    %s30 = sphi 0, %s29
    %s46 = sphi 0, %s30
    %s52 = sphi 0, %s54
    %s55 = sphi 0, %s52
    %s56 = sphi 0, %s55
    %s72 = sphi 0, %s56
    %s76 = sphi 0, %s76
    %s78 = sphi 0, %s76
    %s79 = sphi 0, %s78
    %s93 = sphi 0, %s79
    %s97 = sphi 0, %s97
    %s99 = sphi 0, %s97
    %s100 = sphi 0, %s99
    %s114 = sphi 0, %s100
    %s118 = sphi 0, %s118
    %s120 = sphi 0, %s118
    %s121 = sphi 0, %s120
    %s135 = sphi 0, %s121
    %s139 = sphi 0, %s139
    %s141 = sphi 0, %s139
    %s142 = sphi 0, %s141
    %s156 = sphi 0, %s142
    %s160 = sphi 0, %s160
    %s162 = sphi 0, %s160
    %s163 = sphi 0, %s162
    %s177 = sphi 0, %s163
    %s181 = sphi 0, %s181
    %s183 = sphi 0, %s181
    %s184 = sphi 0, %s183
    %s198 = sphi 0, %s184
    %s202 = sphi 0, %s202
    %s204 = sphi 0, %s202
    %s205 = sphi 0, %s204
    %s219 = sphi 0, %s205
    %s223 = sphi 0, %s223
    %s225 = sphi 0, %s223
    %s226 = sphi 0, %s225
    %s240 = sphi 0, %s226
    %s246 = sphi 0, %s248
    %s249 = sphi 0, %s246
    %s250 = sphi 0, %s249
    %s266 = sphi 0, %s250
  $region4: #{transformer_forward.24} parent=0 // loop_header_branch
    %19 = sbr.rel (%p17) target = $region8
  $region5: #{transformer_forward.24} parent=0 // loop_body
    %s21 = ssub.s32 %s16, 1
    %s22 = ssub.s32 %s16, 2
    %s23 = sadd.s32 %s16, 1
    %s24 = ssub.s32 %s16, %s23
    %p25 = scmp.eq.s32.totalorder %s24, 0
    %s27 = sadd.s32 %s26, 1
    %s28 = scalar_select %p25, %s26, %s27
    %p31 = pneg %p25
    %p32 = scmp.eq.s32.totalorder %s16, 1
    %p33 = por %p31, %p32
    %p34 = scmp.ne.s32.totalorder %s26, %s29
    %p35 = scmp.eq.s32.totalorder %s16, 0
    %p36 = por %p34, %p35
    %p37 = scmp.ne.s32.totalorder %s26, %s29
    %p38 = scmp.eq.s32.totalorder %s21, 1
    %p39 = por %p37, %p38
    %p40 = scmp.ne.s32.totalorder %s29, %s30
    %p41 = scmp.eq.s32.totalorder %s21, 0
    %p42 = por %p40, %p41
    %p43 = scmp.ne.s32.totalorder %s29, %s30
    %p44 = scmp.eq.s32.totalorder %s22, 1
    %p45 = por %p43, %p44
    %p47 = scmp.ne.s32.totalorder %s30, %s46
    %p48 = scmp.eq.s32.totalorder %s22, 0
    %p49 = por %p47, %p48
    %s50 = ssub.s32 %s16, %s23
    %p51 = scmp.eq.s32.totalorder %s50, 0
    %s53 = sadd.s32 %s52, 1
    %s54 = scalar_select %p51, %s52, %s53
    %p57 = pneg %p51
    %p58 = scmp.eq.s32.totalorder %s16, 1
    %p59 = por %p57, %p58
    %p60 = scmp.ne.s32.totalorder %s52, %s55
    %p61 = scmp.eq.s32.totalorder %s16, 0
    %p62 = por %p60, %p61
    %p63 = scmp.ne.s32.totalorder %s52, %s55
    %p64 = scmp.eq.s32.totalorder %s21, 1
    %p65 = por %p63, %p64
    %p66 = scmp.ne.s32.totalorder %s55, %s56
    %p67 = scmp.eq.s32.totalorder %s21, 0
    %p68 = por %p66, %p67
    %p69 = scmp.ne.s32.totalorder %s55, %s56
    %p70 = scmp.eq.s32.totalorder %s22, 1
    %p71 = por %p69, %p70
    %p73 = scmp.ne.s32.totalorder %s56, %s72
    %p74 = scmp.eq.s32.totalorder %s22, 0
    %p75 = por %p73, %p74
    %s77 = sadd.s32 %s76, 1
    %p80 = scmp.eq.s32.totalorder %s16, 1
    %p81 = scmp.ne.s32.totalorder %s76, %s78
    %p82 = scmp.eq.s32.totalorder %s16, 0
    %p83 = por %p81, %p82
    %p84 = scmp.ne.s32.totalorder %s76, %s78
    %p85 = scmp.eq.s32.totalorder %s21, 1
    %p86 = por %p84, %p85
    %p87 = scmp.ne.s32.totalorder %s78, %s79
    %p88 = scmp.eq.s32.totalorder %s21, 0
    %p89 = por %p87, %p88
    %p90 = scmp.ne.s32.totalorder %s78, %s79
    %p91 = scmp.eq.s32.totalorder %s22, 1
    %p92 = por %p90, %p91
    %p94 = scmp.ne.s32.totalorder %s79, %s93
    %p95 = scmp.eq.s32.totalorder %s22, 0
    %p96 = por %p94, %p95
    %s98 = sadd.s32 %s97, 1
    %p101 = scmp.eq.s32.totalorder %s16, 1
    %p102 = scmp.ne.s32.totalorder %s97, %s99
    %p103 = scmp.eq.s32.totalorder %s16, 0
    %p104 = por %p102, %p103
    %p105 = scmp.ne.s32.totalorder %s97, %s99
    %p106 = scmp.eq.s32.totalorder %s21, 1
    %p107 = por %p105, %p106
    %p108 = scmp.ne.s32.totalorder %s99, %s100
    %p109 = scmp.eq.s32.totalorder %s21, 0
    %p110 = por %p108, %p109
    %p111 = scmp.ne.s32.totalorder %s99, %s100
    %p112 = scmp.eq.s32.totalorder %s22, 1
    %p113 = por %p111, %p112
    %p115 = scmp.ne.s32.totalorder %s100, %s114
    %p116 = scmp.eq.s32.totalorder %s22, 0
    %p117 = por %p115, %p116
    %s119 = sadd.s32 %s118, 1
    %p122 = scmp.eq.s32.totalorder %s16, 1
    %p123 = scmp.ne.s32.totalorder %s118, %s120
    %p124 = scmp.eq.s32.totalorder %s16, 0
    %p125 = por %p123, %p124
    %p126 = scmp.ne.s32.totalorder %s118, %s120
    %p127 = scmp.eq.s32.totalorder %s21, 1
    %p128 = por %p126, %p127
    %p129 = scmp.ne.s32.totalorder %s120, %s121
    %p130 = scmp.eq.s32.totalorder %s21, 0
    %p131 = por %p129, %p130
    %p132 = scmp.ne.s32.totalorder %s120, %s121
    %p133 = scmp.eq.s32.totalorder %s22, 1
    %p134 = por %p132, %p133
    %p136 = scmp.ne.s32.totalorder %s121, %s135
    %p137 = scmp.eq.s32.totalorder %s22, 0
    %p138 = por %p136, %p137
    %s140 = sadd.s32 %s139, 1
    %p143 = scmp.eq.s32.totalorder %s16, 1
    %p144 = scmp.ne.s32.totalorder %s139, %s141
    %p145 = scmp.eq.s32.totalorder %s16, 0
    %p146 = por %p144, %p145
    %p147 = scmp.ne.s32.totalorder %s139, %s141
    %p148 = scmp.eq.s32.totalorder %s21, 1
    %p149 = por %p147, %p148
    %p150 = scmp.ne.s32.totalorder %s141, %s142
    %p151 = scmp.eq.s32.totalorder %s21, 0
    %p152 = por %p150, %p151
    %p153 = scmp.ne.s32.totalorder %s141, %s142
    %p154 = scmp.eq.s32.totalorder %s22, 1
    %p155 = por %p153, %p154
    %p157 = scmp.ne.s32.totalorder %s142, %s156
    %p158 = scmp.eq.s32.totalorder %s22, 0
    %p159 = por %p157, %p158
    %s161 = sadd.s32 %s160, 1
    %p164 = scmp.eq.s32.totalorder %s16, 1
    %p165 = scmp.ne.s32.totalorder %s160, %s162
    %p166 = scmp.eq.s32.totalorder %s16, 0
    %p167 = por %p165, %p166
    %p168 = scmp.ne.s32.totalorder %s160, %s162
    %p169 = scmp.eq.s32.totalorder %s21, 1
    %p170 = por %p168, %p169
    %p171 = scmp.ne.s32.totalorder %s162, %s163
    %p172 = scmp.eq.s32.totalorder %s21, 0
    %p173 = por %p171, %p172
    %p174 = scmp.ne.s32.totalorder %s162, %s163
    %p175 = scmp.eq.s32.totalorder %s22, 1
    %p176 = por %p174, %p175
    %p178 = scmp.ne.s32.totalorder %s163, %s177
    %p179 = scmp.eq.s32.totalorder %s22, 0
    %p180 = por %p178, %p179
    %s182 = sadd.s32 %s181, 1
    %p185 = scmp.eq.s32.totalorder %s16, 1
    %p186 = scmp.ne.s32.totalorder %s181, %s183
    %p187 = scmp.eq.s32.totalorder %s16, 0
    %p188 = por %p186, %p187
    %p189 = scmp.ne.s32.totalorder %s181, %s183
    %p190 = scmp.eq.s32.totalorder %s21, 1
    %p191 = por %p189, %p190
    %p192 = scmp.ne.s32.totalorder %s183, %s184
    %p193 = scmp.eq.s32.totalorder %s21, 0
    %p194 = por %p192, %p193
    %p195 = scmp.ne.s32.totalorder %s183, %s184
    %p196 = scmp.eq.s32.totalorder %s22, 1
    %p197 = por %p195, %p196
    %p199 = scmp.ne.s32.totalorder %s184, %s198
    %p200 = scmp.eq.s32.totalorder %s22, 0
    %p201 = por %p199, %p200
    %s203 = sadd.s32 %s202, 1
    %p206 = scmp.eq.s32.totalorder %s16, 1
    %p207 = scmp.ne.s32.totalorder %s202, %s204
    %p208 = scmp.eq.s32.totalorder %s16, 0
    %p209 = por %p207, %p208
    %p210 = scmp.ne.s32.totalorder %s202, %s204
    %p211 = scmp.eq.s32.totalorder %s21, 1
    %p212 = por %p210, %p211
    %p213 = scmp.ne.s32.totalorder %s204, %s205
    %p214 = scmp.eq.s32.totalorder %s21, 0
    %p215 = por %p213, %p214
    %p216 = scmp.ne.s32.totalorder %s204, %s205
    %p217 = scmp.eq.s32.totalorder %s22, 1
    %p218 = por %p216, %p217
    %p220 = scmp.ne.s32.totalorder %s205, %s219
    %p221 = scmp.eq.s32.totalorder %s22, 0
    %p222 = por %p220, %p221
    %s224 = sadd.s32 %s223, 1
    %p227 = scmp.eq.s32.totalorder %s16, 1
    %p228 = scmp.ne.s32.totalorder %s223, %s225
    %p229 = scmp.eq.s32.totalorder %s16, 0
    %p230 = por %p228, %p229
    %p231 = scmp.ne.s32.totalorder %s223, %s225
    %p232 = scmp.eq.s32.totalorder %s21, 1
    %p233 = por %p231, %p232
    %p234 = scmp.ne.s32.totalorder %s225, %s226
    %p235 = scmp.eq.s32.totalorder %s21, 0
    %p236 = por %p234, %p235
    %p237 = scmp.ne.s32.totalorder %s225, %s226
    %p238 = scmp.eq.s32.totalorder %s22, 1
    %p239 = por %p237, %p238
    %p241 = scmp.ne.s32.totalorder %s226, %s240
    %p242 = scmp.eq.s32.totalorder %s22, 0
    %p243 = por %p241, %p242
    %s244 = ssub.s32 %s16, %s23
    %p245 = scmp.eq.s32.totalorder %s244, 0
    %s247 = sadd.s32 %s246, 1
    %s248 = scalar_select %p245, %s246, %s247
    %p251 = pneg %p245
    %p252 = scmp.eq.s32.totalorder %s16, 1
    %p253 = por %p251, %p252
    %p254 = scmp.ne.s32.totalorder %s246, %s249
    %p255 = scmp.eq.s32.totalorder %s16, 0
    %p256 = por %p254, %p255
    %p257 = scmp.ne.s32.totalorder %s246, %s249
    %p258 = scmp.eq.s32.totalorder %s21, 1
    %p259 = por %p257, %p258
    %p260 = scmp.ne.s32.totalorder %s249, %s250
    %p261 = scmp.eq.s32.totalorder %s21, 0
    %p262 = por %p260, %p261
    %p263 = scmp.ne.s32.totalorder %s249, %s250
    %p264 = scmp.eq.s32.totalorder %s22, 1
    %p265 = por %p263, %p264
    %p267 = scmp.ne.s32.totalorder %s250, %s266
    %p268 = scmp.eq.s32.totalorder %s22, 0
    %p269 = por %p267, %p268
    %p270 = scmp.le.s32.totalorder 1, %s16
    %p271 = scmp.lt.s32.totalorder %s16, 3
    %p272 = pnand %p270, %p271
    %p273 = pneg %p272
    // Predicated region
    $region9: #{transformer_forward.24} parent=5 // pred_check
      _
    $region10: #{transformer_forward.24} parent=5 // pred_check_branch
      %275 = sbr.rel (%p272) target = $region12
    $region11: #{transformer_forward.24} parent=5 // pred_region
      %s276 = ssub.s32 %s16, 1
      // Predicated region
      $region13: #{transformer_forward.24} parent=11 // pred_check
        %p277 = pneg %p89
      $region14: #{transformer_forward.24} parent=11 // pred_check_branch
        %279 = sbr.rel (%p277) target = $region16
      $region15: #{transformer_forward.24} parent=11 // pred_region
        _
      $region16: #{transformer_forward.24} parent=11 // pred_fallthru
        _
      // Predicated region
      $region17: #{transformer_forward.24} parent=11 // pred_check
        %p280 = pneg %p110
      $region18: #{transformer_forward.24} parent=11 // pred_check_branch
        %282 = sbr.rel (%p280) target = $region20
      $region19: #{transformer_forward.24} parent=11 // pred_region
        _
      $region20: #{transformer_forward.24} parent=11 // pred_fallthru
        _
      // Predicated region
      $region21: #{transformer_forward.24} parent=11 // pred_check
        %p283 = pneg %p131
      $region22: #{transformer_forward.24} parent=11 // pred_check_branch
        %285 = sbr.rel (%p283) target = $region24
      $region23: #{transformer_forward.24} parent=11 // pred_region
        _
      $region24: #{transformer_forward.24} parent=11 // pred_fallthru
        _
      // Predicated region
      $region25: #{transformer_forward.24} parent=11 // pred_check
        %p286 = pneg %p152
      $region26: #{transformer_forward.24} parent=11 // pred_check_branch
        %288 = sbr.rel (%p286) target = $region28
      $region27: #{transformer_forward.24} parent=11 // pred_region
        _
      $region28: #{transformer_forward.24} parent=11 // pred_fallthru
        _
      // Predicated region
      $region29: #{transformer_forward.24} parent=11 // pred_check
        %p289 = pneg %p173
      $region30: #{transformer_forward.24} parent=11 // pred_check_branch
        %291 = sbr.rel (%p289) target = $region32
      $region31: #{transformer_forward.24} parent=11 // pred_region
        _
      $region32: #{transformer_forward.24} parent=11 // pred_fallthru
        _
      // Predicated region
      $region33: #{transformer_forward.24} parent=11 // pred_check
        %p292 = pneg %p194
      $region34: #{transformer_forward.24} parent=11 // pred_check_branch
        %294 = sbr.rel (%p292) target = $region36
      $region35: #{transformer_forward.24} parent=11 // pred_region
        _
      $region36: #{transformer_forward.24} parent=11 // pred_fallthru
        _
      // Predicated region
      $region37: #{transformer_forward.24} parent=11 // pred_check
        %p295 = pneg %p215
      $region38: #{transformer_forward.24} parent=11 // pred_check_branch
        %297 = sbr.rel (%p295) target = $region40
      $region39: #{transformer_forward.24} parent=11 // pred_region
        _
      $region40: #{transformer_forward.24} parent=11 // pred_fallthru
        _
      // Predicated region
      $region41: #{transformer_forward.24} parent=11 // pred_check
        %p298 = pneg %p236
      $region42: #{transformer_forward.24} parent=11 // pred_check_branch
        %300 = sbr.rel (%p298) target = $region44
      $region43: #{transformer_forward.24} parent=11 // pred_region
        _
      $region44: #{transformer_forward.24} parent=11 // pred_fallthru
        _
    $region12: #{transformer_forward.24} parent=5 // pred_fallthru
      _
    %p301 = scmp.lt.s32.totalorder %s16, 2
    // Predicated region
    $region45: #{transformer_forward.24} parent=5 // pred_check
      %p302 = pneg %p301
    $region46: #{transformer_forward.24} parent=5 // pred_check_branch
      %304 = sbr.rel (%p302) target = $region48
    $region47: #{transformer_forward.24} parent=5 // pred_region
      // Predicated region
      $region49: #{transformer_forward.24} parent=47 // pred_check
        %p305 = pneg %p36
      $region50: #{transformer_forward.24} parent=47 // pred_check_branch
        %307 = sbr.rel (%p305) target = $region52
      $region51: #{transformer_forward.24} parent=47 // pred_region
        %p308 = scmp.lt.s32.totalorder %s16, 1
        %s309 = scalar_select %p308, %s16, 1
        %s310 = smul.addr %s309, 8
        %s311 = scalar_lea.vmem %s0, %s310
      $region52: #{transformer_forward.24} parent=47 // pred_fallthru
        _
      // Predicated region
      $region53: #{transformer_forward.24} parent=47 // pred_check
        %p312 = pneg %p62
      $region54: #{transformer_forward.24} parent=47 // pred_check_branch
        %314 = sbr.rel (%p312) target = $region56
      $region55: #{transformer_forward.24} parent=47 // pred_region
        %p315 = scmp.lt.s32.totalorder %s16, 1
        %s316 = scalar_select %p315, %s16, 1
        %s317 = smul.addr %s316, 8
        %s318 = scalar_lea.vmem %s1, %s317
      $region56: #{transformer_forward.24} parent=47 // pred_fallthru
        _
    $region48: #{transformer_forward.24} parent=5 // pred_fallthru
      _
    %p319 = scmp.le.s32.totalorder 1, %s16
    %p320 = scmp.lt.s32.totalorder %s16, 3
    %p321 = pnand %p319, %p320
    %p322 = pneg %p321
    // Predicated region
    $region57: #{transformer_forward.24} parent=5 // pred_check
      _
    $region58: #{transformer_forward.24} parent=5 // pred_check_branch
      %324 = sbr.rel (%p321) target = $region60
    $region59: #{transformer_forward.24} parent=5 // pred_region
      %s325 = ssub.s32 %s16, 1
      %p326 = scmp.lt.s32.totalorder %s21, 1
      %s327 = scalar_select %p326, %s21, 1
      %s328 = smul.addr %s327, 8
      %s329 = scalar_lea.vmem %s0, %s328
      %p330 = pneg %p42
      %p331 = pneg %p39
      %p332 = scmp.lt.s32.totalorder %s21, 1
      %s333 = scalar_select %p332, %s21, 1
      %s334 = smul.addr %s333, 8
      %s335 = scalar_lea.vmem %s1, %s334
      %p336 = pneg %p68
      %p337 = pneg %p65
      %p338 = pneg %p89
      %p339 = pneg %p86
      %p340 = pneg %p110
      %p341 = pneg %p107
      %p342 = pneg %p131
      %p343 = pneg %p128
      %p344 = pneg %p152
      %p345 = pneg %p149
      %p346 = pneg %p173
      %p347 = pneg %p170
      %p348 = pneg %p194
      %p349 = pneg %p191
      %p350 = pneg %p215
      %p351 = pneg %p212
      %p352 = pneg %p236
      %p353 = pneg %p233
      %p354 = pneg %p262
      %p355 = pneg %p259
      %p356 = scmp.lt.s32.totalorder %s21, 1
      %s357 = scalar_select %p356, %s21, 1
      %s358 = smul.addr %s357, 8
      %s359 = scalar_lea.vmem %s10, %s358
      %p360 = scmp.lt.s32.totalorder %s21, 1
      %s361 = scalar_select %p360, %s21, 1
      %s362 = smul.addr %s361, 8
      %s363 = scalar_lea.vmem %s0, %s362
      %p364 = scmp.lt.s32.totalorder %s21, 1
      %s365 = scalar_select %p364, %s21, 1
      %s366 = smul.addr %s365, 8
      %s367 = scalar_lea.vmem %s1, %s366
      %p368 = scmp.lt.s32.totalorder %s21, 1
      %s369 = scalar_select %p368, %s21, 1
      %s370 = smul.addr %s369, 8
      %s371 = scalar_lea.vmem %s10, %s370
      %v373 = vld [vmem:[%s363] sm:$0xff]
      %v374 = vld [vmem:[%s367] sm:$0xff]
      %v375 = vpack.c.bf16 %v373, %v373
      %v376 = vpack.c.bf16 %v374, %v374
      %v377 = vld [vmem:[%s2] sm:$0xf]
      %v378 = vld [vmem:[%s2 + $0x4] sm:$0xf]
      %v379 = vld [vmem:[%s2 + $0x8] sm:$0xf]
      %v380 = vld [vmem:[%s2 + $0xc] sm:$0xf]
      %v381 = vld [vmem:[%s3] sm:$0x1]
      %v383 = vperm.slane %v381, 0
      %v389 = vunpack.c.l.b16 %v377
      %v390 = vunpack.c.l.b16 %v378
      %v391 = vunpack.c.l.b16 %v379
      %v392 = vunpack.c.l.b16 %v380
      %v393 = vpack.c.b16 %v390, %v389
      %v394 = vpack.c.b16 %v392, %v391
      %vm397 = vcmask 261120
      %v399 = vsel %vm397, %v375, 0
      %401 = vmatpush.bf16.msra.mxu0 0
      %402 = vmatpush.bf16.msra.mxu0 0
      %403 = vmatpush.bf16.msra.mxu0 0
      %404 = vmatpush.bf16.msra.mxu0 0
      %405 = vmatpush.bf16.msra.mxu0 0
      %406 = vmatpush.bf16.msra.mxu0 0
      %407 = vmatpush.bf16.msra.mxu0 %v394
      %408 = vmatpush.bf16.msra.mxu0 %v393
      %409 = vmatmul.bf16.gmra.mxu0 %v399
      %v410 = vpop.f32.mrf.mxu0
      %v411 = vadd.f32 %v383, %v410
      %v412 = vpop.f32.mrf.mxu0
      %413 = vdwg.mxu0
      %v414 = vld [vmem:[%s4] sm:$0xf]
      %v415 = vld [vmem:[%s4 + $0x4] sm:$0xf]
      %v416 = vld [vmem:[%s4 + $0x8] sm:$0xf]
      %v417 = vld [vmem:[%s4 + $0xc] sm:$0xf]
      %v418 = vld [vmem:[%s5] sm:$0x1]
      %v420 = vperm.slane %v418, 0
      %v426 = vunpack.c.l.b16 %v414
      %v427 = vunpack.c.l.b16 %v415
      %v428 = vunpack.c.l.b16 %v416
      %v429 = vunpack.c.l.b16 %v417
      %v430 = vpack.c.b16 %v427, %v426
      %v431 = vpack.c.b16 %v429, %v428
      %v435 = vsel %vm397, %v376, 0
      %437 = vmatpush.bf16.msra.mxu0 0
      %438 = vmatpush.bf16.msra.mxu0 0
      %439 = vmatpush.bf16.msra.mxu0 0
      %440 = vmatpush.bf16.msra.mxu0 0
      %441 = vmatpush.bf16.msra.mxu0 0
      %442 = vmatpush.bf16.msra.mxu0 0
      %443 = vmatpush.bf16.msra.mxu0 %v431
      %444 = vmatpush.bf16.msra.mxu0 %v430
      %445 = vmatmul.bf16.gmra.mxu0 %v435
      %v446 = vpop.f32.mrf.mxu0
      %v447 = vadd.f32 %v420, %v446
      %v448 = vpop.f32.mrf.mxu0
      %449 = vdwg.mxu0
      %v450 = vlaneseq
      %v451 = vshrl.u32 %v450, 7
      %v452 = vlaneseq
      %v453 = vand.u32 %v452, 127
      %vm454 = vcmp.le.s32.totalorder %v453, %v451
      %v455 = vsel %vm454, 0.0, -1e+09
      %v456 = vpack.c.bf16 %v411, %v411
      %v457 = vpack.c.bf16 %v447, %v447
      %vm458 = vcmask 64512
      %v460 = vsel %vm458, %v456, 0
      %v463 = vsel %vm458, %v457, 0
      %465 = vmatpush.bf16.xpose.msra.mxu0 0
      %466 = vmatpush.bf16.xpose.msra.mxu0 0
      %467 = vmatpush.bf16.xpose.msra.mxu0 0
      %468 = vmatpush.bf16.xpose.msra.mxu0 0
      %469 = vmatpush.bf16.xpose.msra.mxu0 0
      %470 = vmatpush.bf16.xpose.msra.mxu0 0
      %471 = vmatpush.bf16.xpose.msra.mxu0 0
      %472 = vmatpush.bf16.xpose.msra.mxu0 %v463
      %473 = vmatmul.bf16.gmra.mxu0 %v460
      %v474 = vpop.f32.mrf.mxu0
      %v475 = vadd.f32 0.0, %v474
      %v476 = vpop.f32.mrf.mxu0
      %477 = vdwg.mxu0
      %v478 = vmul.f32 %v475, 0.35355338
      %v479 = vadd.f32 %v478, %v455
      %v480 = vsel %vm458, %v479, -inf
      %481 = vmax.xlane.f32.xlu0 %v480
      %v482 = vpop.xlane.xlu0 %481
      %v483 = vsub.f32 %v479, %v482
      %v484 = vmul.f32 %v483, 1.442695
      %v485 = vpow.pop %v484
      %v486 = vsel %vm458, %v485, 0.0
      %487 = vadd.xlane.f32.xlu0 %v486
      %v488 = vpop.xlane.xlu0 %487
      %v489 = vrcp.pop %v488
      %v490 = vmul.f32 %v485, %v489
      %v491 = vpack.c.bf16 %v490, %v490
      %493 = vrot.lane.b32.xlu0 %v457, 96
      %v494 = vpop.permute.xlu0 %493
      %v496 = vsel %vm458, %v491, 0
      %vm498 = vcmask 1043456
      %v500 = vsel %vm498, %v494, 0
      %502 = vmatpush.bf16.msra.mxu0 0
      %503 = vmatpush.bf16.msra.mxu0 0
      %504 = vmatpush.bf16.msra.mxu0 0
      %505 = vmatpush.bf16.msra.mxu0 0
      %506 = vmatpush.bf16.msra.mxu0 0
      %507 = vmatpush.bf16.msra.mxu0 0
      %508 = vmatpush.bf16.msra.mxu0 0
      %509 = vmatpush.bf16.msra.mxu0 %v500
      %510 = vmatmul.bf16.gmra.mxu0 %v496
      %v511 = vpop.f32.mrf.mxu0
      %v512 = vadd.f32 0.0, %v511
      %v513 = vpop.f32.mrf.mxu0
      %514 = vdwg.mxu0
      %v515 = vpack.c.bf16 %v512, %v512
      %v516 = vld [vmem:[%s6] sm:$0xf]
      %518 = vrot.lane.b32.xlu0 %v456, 120
      %v519 = vpop.permute.xlu0 %518
      %520 = vrot.lane.b32.xlu0 %v457, 120
      %v521 = vpop.permute.xlu0 %520
      %v523 = vsel %vm458, %v519, 0
      %v526 = vsel %vm458, %v521, 0
      %528 = vmatpush.bf16.xpose.msra.mxu0 0
      %529 = vmatpush.bf16.xpose.msra.mxu0 0
      %530 = vmatpush.bf16.xpose.msra.mxu0 0
      %531 = vmatpush.bf16.xpose.msra.mxu0 0
      %532 = vmatpush.bf16.xpose.msra.mxu0 0
      %533 = vmatpush.bf16.xpose.msra.mxu0 0
      %534 = vmatpush.bf16.xpose.msra.mxu0 0
      %535 = vmatpush.bf16.xpose.msra.mxu0 %v526
      %536 = vmatmul.bf16.gmra.mxu0 %v523
      %v537 = vpop.f32.mrf.mxu0
      %v538 = vadd.f32 0.0, %v537
      %v539 = vpop.f32.mrf.mxu0
      %540 = vdwg.mxu0
      %v541 = vmul.f32 %v538, 0.35355338
      %v542 = vadd.f32 %v541, %v455
      %v543 = vsel %vm458, %v542, -inf
      %544 = vmax.xlane.f32.xlu0 %v543
      %v545 = vpop.xlane.xlu0 %544
      %v546 = vsub.f32 %v542, %v545
      %v547 = vmul.f32 %v546, 1.442695
      %v548 = vpow.pop %v547
      %v549 = vsel %vm458, %v548, 0.0
      %550 = vadd.xlane.f32.xlu0 %v549
      %v551 = vpop.xlane.xlu0 %550
      %v552 = vrcp.pop %v551
      %v553 = vmul.f32 %v548, %v552
      %v554 = vpack.c.bf16 %v553, %v553
      %555 = vrot.lane.b32.xlu0 %v457, 88
      %v556 = vpop.permute.xlu0 %555
      %v558 = vsel %vm458, %v554, 0
      %v561 = vsel %vm498, %v556, 0
      %563 = vmatpush.bf16.msra.mxu0 0
      %564 = vmatpush.bf16.msra.mxu0 0
      %565 = vmatpush.bf16.msra.mxu0 0
      %566 = vmatpush.bf16.msra.mxu0 0
      %567 = vmatpush.bf16.msra.mxu0 0
      %568 = vmatpush.bf16.msra.mxu0 0
      %569 = vmatpush.bf16.msra.mxu0 0
      %570 = vmatpush.bf16.msra.mxu0 %v561
      %571 = vmatmul.bf16.gmra.mxu0 %v558
      %v572 = vpop.f32.mrf.mxu0
      %v573 = vadd.f32 0.0, %v572
      %v574 = vpop.f32.mrf.mxu0
      %575 = vdwg.mxu0
      %v576 = vpack.c.bf16 %v573, %v573
      %v577 = vld [vmem:[%s6 + $0x4] sm:$0xf]
      %v579 = vsel %vm458, %v576, 0
      %v582 = vsel %vm498, %v577, 0
      %584 = vmatpush.bf16.msra.mxu0 0
      %585 = vmatpush.bf16.msra.mxu0 0
      %586 = vmatpush.bf16.msra.mxu0 0
      %587 = vmatpush.bf16.msra.mxu0 0
      %588 = vmatpush.bf16.msra.mxu0 0
      %589 = vmatpush.bf16.msra.mxu0 0
      %590 = vmatpush.bf16.msra.mxu0 0
      %591 = vmatpush.bf16.msra.mxu0 %v582
      %592 = vmatmul.bf16.gmra.mxu0 %v579
      %v593 = vpop.f32.mrf.mxu0
      %v594 = vadd.f32 0.0, %v593
      %v595 = vpop.f32.mrf.mxu0
      %596 = vdwg.mxu0
      %v598 = vsel %vm458, %v515, 0
      %v601 = vsel %vm498, %v516, 0
      %603 = vmatpush.bf16.msra.mxu0 0
      %604 = vmatpush.bf16.msra.mxu0 0
      %605 = vmatpush.bf16.msra.mxu0 0
      %606 = vmatpush.bf16.msra.mxu0 0
      %607 = vmatpush.bf16.msra.mxu0 0
      %608 = vmatpush.bf16.msra.mxu0 0
      %609 = vmatpush.bf16.msra.mxu0 0
      %610 = vmatpush.bf16.msra.mxu0 %v601
      %611 = vmatmul.bf16.gmra.mxu0 %v598
      %v612 = vpop.f32.mrf.mxu0
      %v613 = vadd.f32 %v594, %v612
      %v614 = vpop.f32.mrf.mxu0
      %615 = vdwg.mxu0
      %616 = vrot.lane.b32.xlu0 %v456, 112
      %v617 = vpop.permute.xlu0 %616
      %618 = vrot.lane.b32.xlu0 %v457, 112
      %v619 = vpop.permute.xlu0 %618
      %v621 = vsel %vm458, %v617, 0
      %v624 = vsel %vm458, %v619, 0
      %626 = vmatpush.bf16.xpose.msra.mxu0 0
      %627 = vmatpush.bf16.xpose.msra.mxu0 0
      %628 = vmatpush.bf16.xpose.msra.mxu0 0
      %629 = vmatpush.bf16.xpose.msra.mxu0 0
      %630 = vmatpush.bf16.xpose.msra.mxu0 0
      %631 = vmatpush.bf16.xpose.msra.mxu0 0
      %632 = vmatpush.bf16.xpose.msra.mxu0 0
      %633 = vmatpush.bf16.xpose.msra.mxu0 %v624
      %634 = vmatmul.bf16.gmra.mxu0 %v621
      %v635 = vpop.f32.mrf.mxu0
      %v636 = vadd.f32 0.0, %v635
      %v637 = vpop.f32.mrf.mxu0
      %638 = vdwg.mxu0
      %v639 = vmul.f32 %v636, 0.35355338
      %v640 = vadd.f32 %v639, %v455
      %v641 = vsel %vm458, %v640, -inf
      %642 = vmax.xlane.f32.xlu0 %v641
      %v643 = vpop.xlane.xlu0 %642
      %v644 = vsub.f32 %v640, %v643
      %v645 = vmul.f32 %v644, 1.442695
      %v646 = vpow.pop %v645
      %v647 = vsel %vm458, %v646, 0.0
      %648 = vadd.xlane.f32.xlu0 %v647
      %v649 = vpop.xlane.xlu0 %648
      %v650 = vrcp.pop %v649
      %v651 = vmul.f32 %v646, %v650
      %v652 = vpack.c.bf16 %v651, %v651
      %653 = vrot.lane.b32.xlu0 %v457, 80
      %v654 = vpop.permute.xlu0 %653
      %v656 = vsel %vm458, %v652, 0
      %v659 = vsel %vm498, %v654, 0
      %661 = vmatpush.bf16.msra.mxu0 0
      %662 = vmatpush.bf16.msra.mxu0 0
      %663 = vmatpush.bf16.msra.mxu0 0
      %664 = vmatpush.bf16.msra.mxu0 0
      %665 = vmatpush.bf16.msra.mxu0 0
      %666 = vmatpush.bf16.msra.mxu0 0
      %667 = vmatpush.bf16.msra.mxu0 0
      %668 = vmatpush.bf16.msra.mxu0 %v659
      %669 = vmatmul.bf16.gmra.mxu0 %v656
      %v670 = vpop.f32.mrf.mxu0
      %v671 = vadd.f32 0.0, %v670
      %v672 = vpop.f32.mrf.mxu0
      %673 = vdwg.mxu0
      %v674 = vpack.c.bf16 %v671, %v671
      %v675 = vld [vmem:[%s6 + $0x8] sm:$0xf]
      %v677 = vsel %vm458, %v674, 0
      %v680 = vsel %vm498, %v675, 0
      %682 = vmatpush.bf16.msra.mxu0 0
      %683 = vmatpush.bf16.msra.mxu0 0
      %684 = vmatpush.bf16.msra.mxu0 0
      %685 = vmatpush.bf16.msra.mxu0 0
      %686 = vmatpush.bf16.msra.mxu0 0
      %687 = vmatpush.bf16.msra.mxu0 0
      %688 = vmatpush.bf16.msra.mxu0 0
      %689 = vmatpush.bf16.msra.mxu0 %v680
      %690 = vmatmul.bf16.gmra.mxu0 %v677
      %v691 = vpop.f32.mrf.mxu0
      %v692 = vadd.f32 0.0, %v691
      %v693 = vpop.f32.mrf.mxu0
      %694 = vdwg.mxu0
      %v695 = vadd.f32 %v613, %v692
      %696 = vrot.lane.b32.xlu0 %v456, 104
      %v697 = vpop.permute.xlu0 %696
      %698 = vrot.lane.b32.xlu0 %v457, 104
      %v699 = vpop.permute.xlu0 %698
      %v701 = vsel %vm458, %v697, 0
      %v704 = vsel %vm458, %v699, 0
      %706 = vmatpush.bf16.xpose.msra.mxu0 0
      %707 = vmatpush.bf16.xpose.msra.mxu0 0
      %708 = vmatpush.bf16.xpose.msra.mxu0 0
      %709 = vmatpush.bf16.xpose.msra.mxu0 0
      %710 = vmatpush.bf16.xpose.msra.mxu0 0
      %711 = vmatpush.bf16.xpose.msra.mxu0 0
      %712 = vmatpush.bf16.xpose.msra.mxu0 0
      %713 = vmatpush.bf16.xpose.msra.mxu0 %v704
      %714 = vmatmul.bf16.gmra.mxu0 %v701
      %v715 = vpop.f32.mrf.mxu0
      %v716 = vadd.f32 0.0, %v715
      %v717 = vpop.f32.mrf.mxu0
      %718 = vdwg.mxu0
      %v719 = vmul.f32 %v716, 0.35355338
      %v720 = vadd.f32 %v719, %v455
      %v721 = vsel %vm458, %v720, -inf
      %722 = vmax.xlane.f32.xlu0 %v721
      %v723 = vpop.xlane.xlu0 %722
      %v724 = vsub.f32 %v720, %v723
      %v725 = vmul.f32 %v724, 1.442695
      %v726 = vpow.pop %v725
      %v727 = vsel %vm458, %v726, 0.0
      %728 = vadd.xlane.f32.xlu0 %v727
      %v729 = vpop.xlane.xlu0 %728
      %v730 = vrcp.pop %v729
      %v731 = vmul.f32 %v726, %v730
      %v732 = vpack.c.bf16 %v731, %v731
      %733 = vrot.lane.b32.xlu0 %v457, 72
      %v734 = vpop.permute.xlu0 %733
      %v736 = vsel %vm458, %v732, 0
      %v739 = vsel %vm498, %v734, 0
      %741 = vmatpush.bf16.msra.mxu0 0
      %742 = vmatpush.bf16.msra.mxu0 0
      %743 = vmatpush.bf16.msra.mxu0 0
      %744 = vmatpush.bf16.msra.mxu0 0
      %745 = vmatpush.bf16.msra.mxu0 0
      %746 = vmatpush.bf16.msra.mxu0 0
      %747 = vmatpush.bf16.msra.mxu0 0
      %748 = vmatpush.bf16.msra.mxu0 %v739
      %749 = vmatmul.bf16.gmra.mxu0 %v736
      %v750 = vpop.f32.mrf.mxu0
      %v751 = vadd.f32 0.0, %v750
      %v752 = vpop.f32.mrf.mxu0
      %753 = vdwg.mxu0
      %v754 = vpack.c.bf16 %v751, %v751
      %v755 = vld [vmem:[%s6 + $0xc] sm:$0xf]
      %v757 = vsel %vm458, %v754, 0
      %v760 = vsel %vm498, %v755, 0
      %762 = vmatpush.bf16.msra.mxu0 0
      %763 = vmatpush.bf16.msra.mxu0 0
      %764 = vmatpush.bf16.msra.mxu0 0
      %765 = vmatpush.bf16.msra.mxu0 0
      %766 = vmatpush.bf16.msra.mxu0 0
      %767 = vmatpush.bf16.msra.mxu0 0
      %768 = vmatpush.bf16.msra.mxu0 0
      %769 = vmatpush.bf16.msra.mxu0 %v760
      %770 = vmatmul.bf16.gmra.mxu0 %v757
      %v771 = vpop.f32.mrf.mxu0
      %v772 = vadd.f32 0.0, %v771
      %v773 = vpop.f32.mrf.mxu0
      %774 = vdwg.mxu0
      %v775 = vadd.f32 %v695, %v772
      %v776 = vld [vmem:[%s7] sm:$0x1]
      %v778 = vperm.slane %v776, 0
      %v780 = vadd.f32 %v775, %v778
      %v781 = vadd.f32 %v780, %v373
      %v782 = vld [vmem:[%s8] sm:$0x1]
      %v783 = vld [vmem:[%s9] sm:$0x1]
      %v784 = vsel %vm397, %v781, 0.0
      %785 = vadd.xlane.f32.xlu0 %v784
      %v786 = vpop.xlane.xlu0 %785
      %v787 = vrcp.pop 32.0
      %v788 = vmul.f32 32.0, %v787
      %v789 = vsub.f32 1.0, %v788
      %v790 = vmul.f32 %v787, %v789
      %v791 = vadd.f32 %v787, %v790
      %vm792 = vweird.f32 %v787
      %v793 = vsel %vm792, %v787, %v791
      %v794 = vmul.f32 %v786, %v793
      %v795 = vsub.f32 %v781, %v794
      %v796 = vmul.f32 %v795, %v795
      %v797 = vsel %vm397, %v796, 0.0
      %798 = vadd.xlane.f32.xlu0 %v797
      %v799 = vpop.xlane.xlu0 %798
      %v800 = vmul.f32 %v799, %v793
      %v801 = vadd.f32 %v800, 1e-05
      %v802 = vrsqrt.pop %v801
      %v803 = vmul.f32 %v802, %v801
      %v804 = vmul.f32 %v803, %v802
      %v805 = vmul.f32 0.5, %v804
      %v806 = vsub.f32 1.5, %v805
      %v807 = vmul.f32 %v802, %v806
      %vm808 = vweird.f32 %v801
      %vm809 = vweird.f32 %v802
      %vm810 = vmor %vm808, %vm809
      %v811 = vsel %vm810, %v802, %v807
      %v812 = vmul.f32 %v795, %v811
      %v814 = vperm.slane %v782, 0
      %v816 = vmul.f32 %v812, %v814
      %v818 = vperm.slane %v783, 0
      %v820 = vadd.f32 %v816, %v818
      %821 = vst.msk [vmem:[%s371] sm:$0xff] %vm397, %v820
      %p822 = scmp.lt.s32.totalorder %s21, 1
      %s823 = scalar_select %p822, %s21, 1
      %s824 = smul.addr %s823, 8
      %s825 = scalar_lea.vmem %s10, %s824
      // Predicated region
      $region61: #{transformer_forward.24} parent=59 // pred_check
        %p826 = pneg %p259
      $region62: #{transformer_forward.24} parent=59 // pred_check_branch
        %828 = sbr.rel (%p826) target = $region64
      $region63: #{transformer_forward.24} parent=59 // pred_region
        _
      $region64: #{transformer_forward.24} parent=59 // pred_fallthru
        _
    $region60: #{transformer_forward.24} parent=5 // pred_fallthru
      _
    %p829 = scmp.le.s32.totalorder 2, %s16
    // Predicated region
    $region65: #{transformer_forward.24} parent=5 // pred_check
      %p830 = pneg %p829
    $region66: #{transformer_forward.24} parent=5 // pred_check_branch
      %832 = sbr.rel (%p830) target = $region68
    $region67: #{transformer_forward.24} parent=5 // pred_region
      %s833 = ssub.s32 %s16, 2
      // Predicated region
      $region69: #{transformer_forward.24} parent=67 // pred_check
        %p834 = pneg %p265
      $region70: #{transformer_forward.24} parent=67 // pred_check_branch
        %836 = sbr.rel (%p834) target = $region72
      $region71: #{transformer_forward.24} parent=67 // pred_region
        %p837 = scmp.lt.s32.totalorder %s22, 1
        %s838 = scalar_select %p837, %s22, 1
        %s839 = smul.addr %s838, 8
        %s840 = scalar_lea.vmem %s10, %s839
      $region72: #{transformer_forward.24} parent=67 // pred_fallthru
        _
    $region68: #{transformer_forward.24} parent=5 // pred_fallthru
      _
  $region6: #{transformer_forward.24} parent=0 // loop_footer
    %s20 = sadd.s32 1, %s16
  $region7: #{transformer_forward.24} parent=0 // loop_footer_branch
    %15 = sbr.rel target = $region3
  $region8: #{transformer_forward.24} parent=0 // loop_exit
    _

// kernel: transformer_forward.26
$region0: #{transformer_forward.26}
  #allocation0 [shape = 'u32[]', space=smem, size = 0x4, offset = 0x4, fixed_abs, tag = 'smem constant byte address 0x4 - core index']
  #allocation1 [shape = 'u32[72,128]{1,0:T(1,128)}', space=vmem, size = 0x9000, scoped, tag = 'internal scratch']
  %s0 = inlined_call_operand.vmem [shape: f32[2,8,32], index: 0, kind: input, shape index: {}]
  %s1 = inlined_call_operand.vmem [shape: bf16[32,64], index: 1, kind: input, shape index: {}]
  %s2 = inlined_call_operand.vmem [shape: f32[1,64], index: 2, kind: input, shape index: {}]
  %s3 = inlined_call_operand.vmem [shape: bf16[64,32], index: 3, kind: input, shape index: {}]
  %s4 = inlined_call_operand.vmem [shape: f32[1,32], index: 4, kind: input, shape index: {}]
  %s5 = inlined_call_operand.vmem [shape: f32[1,32], index: 5, kind: input, shape index: {}]
  %s6 = inlined_call_operand.vmem [shape: f32[1,32], index: 6, kind: input, shape index: {}]
  %s7 = inlined_call_operand.vmem [shape: f32[2,8,32], index: 7, kind: output, shape index: {}]
  %s8 = sld [smem:[#allocation0]]
  $region61: #{transformer_forward.26} parent=0
    _
  %s10 = ssub.s32 1, %s8
  %s11 = scalar_select 0, %s10, %s8
  loop: start=0, step=1, limit=4
  $region2: #{transformer_forward.26} parent=0 // loop_pre_header
    _
  $region3: #{transformer_forward.26} parent=0 // loop_header
    %s13 = sphi 0, %s17
    %p14 = scmp.ge.s32.totalorder %s13, 4
    %s23 = sphi 0, %s25
    %s26 = sphi 0, %s23
    %s27 = sphi 0, %s26
    %s43 = sphi 0, %s27
    %s47 = sphi 0, %s47
    %s49 = sphi 0, %s47
    %s50 = sphi 0, %s49
    %s64 = sphi 0, %s50
    %s68 = sphi 0, %s68
    %s70 = sphi 0, %s68
    %s71 = sphi 0, %s70
    %s85 = sphi 0, %s71
    %s89 = sphi 0, %s89
    %s91 = sphi 0, %s89
    %s92 = sphi 0, %s91
    %s106 = sphi 0, %s92
    %s110 = sphi 0, %s110
    %s112 = sphi 0, %s110
    %s113 = sphi 0, %s112
    %s127 = sphi 0, %s113
    %s131 = sphi 0, %s131
    %s133 = sphi 0, %s131
    %s134 = sphi 0, %s133
    %s148 = sphi 0, %s134
    %s152 = sphi 0, %s152
    %s154 = sphi 0, %s152
    %s155 = sphi 0, %s154
    %s169 = sphi 0, %s155
    %s175 = sphi 0, %s177
    %s178 = sphi 0, %s175
    %s179 = sphi 0, %s178
    %s195 = sphi 0, %s179
  $region4: #{transformer_forward.26} parent=0 // loop_header_branch
    %16 = sbr.rel (%p14) target = $region8
  $region5: #{transformer_forward.26} parent=0 // loop_body
    %s18 = ssub.s32 %s13, 1
    %s19 = ssub.s32 %s13, 2
    %s20 = sadd.s32 %s13, 1
    %s21 = ssub.s32 %s13, %s20
    %p22 = scmp.eq.s32.totalorder %s21, 0
    %s24 = sadd.s32 %s23, 1
    %s25 = scalar_select %p22, %s23, %s24
    %p28 = pneg %p22
    %p29 = scmp.eq.s32.totalorder %s13, 1
    %p30 = por %p28, %p29
    %p31 = scmp.ne.s32.totalorder %s23, %s26
    %p32 = scmp.eq.s32.totalorder %s13, 0
    %p33 = por %p31, %p32
    %p34 = scmp.ne.s32.totalorder %s23, %s26
    %p35 = scmp.eq.s32.totalorder %s18, 1
    %p36 = por %p34, %p35
    %p37 = scmp.ne.s32.totalorder %s26, %s27
    %p38 = scmp.eq.s32.totalorder %s18, 0
    %p39 = por %p37, %p38
    %p40 = scmp.ne.s32.totalorder %s26, %s27
    %p41 = scmp.eq.s32.totalorder %s19, 1
    %p42 = por %p40, %p41
    %p44 = scmp.ne.s32.totalorder %s27, %s43
    %p45 = scmp.eq.s32.totalorder %s19, 0
    %p46 = por %p44, %p45
    %s48 = sadd.s32 %s47, 1
    %p51 = scmp.eq.s32.totalorder %s13, 1
    %p52 = scmp.ne.s32.totalorder %s47, %s49
    %p53 = scmp.eq.s32.totalorder %s13, 0
    %p54 = por %p52, %p53
    %p55 = scmp.ne.s32.totalorder %s47, %s49
    %p56 = scmp.eq.s32.totalorder %s18, 1
    %p57 = por %p55, %p56
    %p58 = scmp.ne.s32.totalorder %s49, %s50
    %p59 = scmp.eq.s32.totalorder %s18, 0
    %p60 = por %p58, %p59
    %p61 = scmp.ne.s32.totalorder %s49, %s50
    %p62 = scmp.eq.s32.totalorder %s19, 1
    %p63 = por %p61, %p62
    %p65 = scmp.ne.s32.totalorder %s50, %s64
    %p66 = scmp.eq.s32.totalorder %s19, 0
    %p67 = por %p65, %p66
    %s69 = sadd.s32 %s68, 1
    %p72 = scmp.eq.s32.totalorder %s13, 1
    %p73 = scmp.ne.s32.totalorder %s68, %s70
    %p74 = scmp.eq.s32.totalorder %s13, 0
    %p75 = por %p73, %p74
    %p76 = scmp.ne.s32.totalorder %s68, %s70
    %p77 = scmp.eq.s32.totalorder %s18, 1
    %p78 = por %p76, %p77
    %p79 = scmp.ne.s32.totalorder %s70, %s71
    %p80 = scmp.eq.s32.totalorder %s18, 0
    %p81 = por %p79, %p80
    %p82 = scmp.ne.s32.totalorder %s70, %s71
    %p83 = scmp.eq.s32.totalorder %s19, 1
    %p84 = por %p82, %p83
    %p86 = scmp.ne.s32.totalorder %s71, %s85
    %p87 = scmp.eq.s32.totalorder %s19, 0
    %p88 = por %p86, %p87
    %s90 = sadd.s32 %s89, 1
    %p93 = scmp.eq.s32.totalorder %s13, 1
    %p94 = scmp.ne.s32.totalorder %s89, %s91
    %p95 = scmp.eq.s32.totalorder %s13, 0
    %p96 = por %p94, %p95
    %p97 = scmp.ne.s32.totalorder %s89, %s91
    %p98 = scmp.eq.s32.totalorder %s18, 1
    %p99 = por %p97, %p98
    %p100 = scmp.ne.s32.totalorder %s91, %s92
    %p101 = scmp.eq.s32.totalorder %s18, 0
    %p102 = por %p100, %p101
    %p103 = scmp.ne.s32.totalorder %s91, %s92
    %p104 = scmp.eq.s32.totalorder %s19, 1
    %p105 = por %p103, %p104
    %p107 = scmp.ne.s32.totalorder %s92, %s106
    %p108 = scmp.eq.s32.totalorder %s19, 0
    %p109 = por %p107, %p108
    %s111 = sadd.s32 %s110, 1
    %p114 = scmp.eq.s32.totalorder %s13, 1
    %p115 = scmp.ne.s32.totalorder %s110, %s112
    %p116 = scmp.eq.s32.totalorder %s13, 0
    %p117 = por %p115, %p116
    %p118 = scmp.ne.s32.totalorder %s110, %s112
    %p119 = scmp.eq.s32.totalorder %s18, 1
    %p120 = por %p118, %p119
    %p121 = scmp.ne.s32.totalorder %s112, %s113
    %p122 = scmp.eq.s32.totalorder %s18, 0
    %p123 = por %p121, %p122
    %p124 = scmp.ne.s32.totalorder %s112, %s113
    %p125 = scmp.eq.s32.totalorder %s19, 1
    %p126 = por %p124, %p125
    %p128 = scmp.ne.s32.totalorder %s113, %s127
    %p129 = scmp.eq.s32.totalorder %s19, 0
    %p130 = por %p128, %p129
    %s132 = sadd.s32 %s131, 1
    %p135 = scmp.eq.s32.totalorder %s13, 1
    %p136 = scmp.ne.s32.totalorder %s131, %s133
    %p137 = scmp.eq.s32.totalorder %s13, 0
    %p138 = por %p136, %p137
    %p139 = scmp.ne.s32.totalorder %s131, %s133
    %p140 = scmp.eq.s32.totalorder %s18, 1
    %p141 = por %p139, %p140
    %p142 = scmp.ne.s32.totalorder %s133, %s134
    %p143 = scmp.eq.s32.totalorder %s18, 0
    %p144 = por %p142, %p143
    %p145 = scmp.ne.s32.totalorder %s133, %s134
    %p146 = scmp.eq.s32.totalorder %s19, 1
    %p147 = por %p145, %p146
    %p149 = scmp.ne.s32.totalorder %s134, %s148
    %p150 = scmp.eq.s32.totalorder %s19, 0
    %p151 = por %p149, %p150
    %s153 = sadd.s32 %s152, 1
    %p156 = scmp.eq.s32.totalorder %s13, 1
    %p157 = scmp.ne.s32.totalorder %s152, %s154
    %p158 = scmp.eq.s32.totalorder %s13, 0
    %p159 = por %p157, %p158
    %p160 = scmp.ne.s32.totalorder %s152, %s154
    %p161 = scmp.eq.s32.totalorder %s18, 1
    %p162 = por %p160, %p161
    %p163 = scmp.ne.s32.totalorder %s154, %s155
    %p164 = scmp.eq.s32.totalorder %s18, 0
    %p165 = por %p163, %p164
    %p166 = scmp.ne.s32.totalorder %s154, %s155
    %p167 = scmp.eq.s32.totalorder %s19, 1
    %p168 = por %p166, %p167
    %p170 = scmp.ne.s32.totalorder %s155, %s169
    %p171 = scmp.eq.s32.totalorder %s19, 0
    %p172 = por %p170, %p171
    %s173 = ssub.s32 %s13, %s20
    %p174 = scmp.eq.s32.totalorder %s173, 0
    %s176 = sadd.s32 %s175, 1
    %s177 = scalar_select %p174, %s175, %s176
    %p180 = pneg %p174
    %p181 = scmp.eq.s32.totalorder %s13, 1
    %p182 = por %p180, %p181
    %p183 = scmp.ne.s32.totalorder %s175, %s178
    %p184 = scmp.eq.s32.totalorder %s13, 0
    %p185 = por %p183, %p184
    %p186 = scmp.ne.s32.totalorder %s175, %s178
    %p187 = scmp.eq.s32.totalorder %s18, 1
    %p188 = por %p186, %p187
    %p189 = scmp.ne.s32.totalorder %s178, %s179
    %p190 = scmp.eq.s32.totalorder %s18, 0
    %p191 = por %p189, %p190
    %p192 = scmp.ne.s32.totalorder %s178, %s179
    %p193 = scmp.eq.s32.totalorder %s19, 1
    %p194 = por %p192, %p193
    %p196 = scmp.ne.s32.totalorder %s179, %s195
    %p197 = scmp.eq.s32.totalorder %s19, 0
    %p198 = por %p196, %p197
    %p199 = scmp.le.s32.totalorder 1, %s13
    %p200 = scmp.lt.s32.totalorder %s13, 3
    %p201 = pnand %p199, %p200
    %p202 = pneg %p201
    // Predicated region
    $region9: #{transformer_forward.26} parent=5 // pred_check
      _
    $region10: #{transformer_forward.26} parent=5 // pred_check_branch
      %204 = sbr.rel (%p201) target = $region12
    $region11: #{transformer_forward.26} parent=5 // pred_region
      %s205 = ssub.s32 %s13, 1
      // Predicated region
      $region13: #{transformer_forward.26} parent=11 // pred_check
        %p206 = pneg %p60
      $region14: #{transformer_forward.26} parent=11 // pred_check_branch
        %208 = sbr.rel (%p206) target = $region16
      $region15: #{transformer_forward.26} parent=11 // pred_region
        _
      $region16: #{transformer_forward.26} parent=11 // pred_fallthru
        _
      // Predicated region
      $region17: #{transformer_forward.26} parent=11 // pred_check
        %p209 = pneg %p81
      $region18: #{transformer_forward.26} parent=11 // pred_check_branch
        %211 = sbr.rel (%p209) target = $region20
      $region19: #{transformer_forward.26} parent=11 // pred_region
        _
      $region20: #{transformer_forward.26} parent=11 // pred_fallthru
        _
      // Predicated region
      $region21: #{transformer_forward.26} parent=11 // pred_check
        %p212 = pneg %p102
      $region22: #{transformer_forward.26} parent=11 // pred_check_branch
        %214 = sbr.rel (%p212) target = $region24
      $region23: #{transformer_forward.26} parent=11 // pred_region
        _
      $region24: #{transformer_forward.26} parent=11 // pred_fallthru
        _
      // Predicated region
      $region25: #{transformer_forward.26} parent=11 // pred_check
        %p215 = pneg %p123
      $region26: #{transformer_forward.26} parent=11 // pred_check_branch
        %217 = sbr.rel (%p215) target = $region28
      $region27: #{transformer_forward.26} parent=11 // pred_region
        _
      $region28: #{transformer_forward.26} parent=11 // pred_fallthru
        _
      // Predicated region
      $region29: #{transformer_forward.26} parent=11 // pred_check
        %p218 = pneg %p144
      $region30: #{transformer_forward.26} parent=11 // pred_check_branch
        %220 = sbr.rel (%p218) target = $region32
      $region31: #{transformer_forward.26} parent=11 // pred_region
        _
      $region32: #{transformer_forward.26} parent=11 // pred_fallthru
        _
      // Predicated region
      $region33: #{transformer_forward.26} parent=11 // pred_check
        %p221 = pneg %p165
      $region34: #{transformer_forward.26} parent=11 // pred_check_branch
        %223 = sbr.rel (%p221) target = $region36
      $region35: #{transformer_forward.26} parent=11 // pred_region
        _
      $region36: #{transformer_forward.26} parent=11 // pred_fallthru
        _
    $region12: #{transformer_forward.26} parent=5 // pred_fallthru
      _
    %p224 = scmp.lt.s32.totalorder %s13, 2
    // Predicated region
    $region37: #{transformer_forward.26} parent=5 // pred_check
      %p225 = pneg %p224
    $region38: #{transformer_forward.26} parent=5 // pred_check_branch
      %227 = sbr.rel (%p225) target = $region40
    $region39: #{transformer_forward.26} parent=5 // pred_region
      // Predicated region
      $region41: #{transformer_forward.26} parent=39 // pred_check
        %p228 = pneg %p33
      $region42: #{transformer_forward.26} parent=39 // pred_check_branch
        %230 = sbr.rel (%p228) target = $region44
      $region43: #{transformer_forward.26} parent=39 // pred_region
        %p231 = scmp.lt.s32.totalorder %s13, 1
        %s232 = scalar_select %p231, %s13, 1
        %s233 = smul.addr %s232, 8
        %s234 = scalar_lea.vmem %s0, %s233
      $region44: #{transformer_forward.26} parent=39 // pred_fallthru
        _
    $region40: #{transformer_forward.26} parent=5 // pred_fallthru
      _
    %p235 = scmp.le.s32.totalorder 1, %s13
    %p236 = scmp.lt.s32.totalorder %s13, 3
    %p237 = pnand %p235, %p236
    %p238 = pneg %p237
    // Predicated region
    $region45: #{transformer_forward.26} parent=5 // pred_check
      _
    $region46: #{transformer_forward.26} parent=5 // pred_check_branch
      %240 = sbr.rel (%p237) target = $region48
    $region47: #{transformer_forward.26} parent=5 // pred_region
      %s241 = ssub.s32 %s13, 1
      %p242 = scmp.lt.s32.totalorder %s18, 1
      %s243 = scalar_select %p242, %s18, 1
      %s244 = smul.addr %s243, 8
      %s245 = scalar_lea.vmem %s0, %s244
      %p246 = pneg %p39
      %p247 = pneg %p36
      %p248 = pneg %p60
      %p249 = pneg %p57
      %p250 = pneg %p81
      %p251 = pneg %p78
      %p252 = pneg %p102
      %p253 = pneg %p99
      %p254 = pneg %p123
      %p255 = pneg %p120
      %p256 = pneg %p144
      %p257 = pneg %p141
      %p258 = pneg %p165
      %p259 = pneg %p162
      %p260 = pneg %p191
      %p261 = pneg %p188
      %p262 = scmp.lt.s32.totalorder %s18, 1
      %s263 = scalar_select %p262, %s18, 1
      %s264 = smul.addr %s263, 8
      %s265 = scalar_lea.vmem %s7, %s264
      %p266 = scmp.lt.s32.totalorder %s18, 1
      %s267 = scalar_select %p266, %s18, 1
      %s268 = smul.addr %s267, 8
      %s269 = scalar_lea.vmem %s0, %s268
      %p270 = scmp.lt.s32.totalorder %s18, 1
      %s271 = scalar_select %p270, %s18, 1
      %s272 = smul.addr %s271, 8
      %s273 = scalar_lea.vmem %s7, %s272
      %v275 = vld [vmem:[%s269] sm:$0xff]
      %v276 = vpack.c.bf16 %v275, %v275
      %v277 = vld [vmem:[%s1] sm:$0xf]
      %v278 = vld [vmem:[%s1 + $0x4] sm:$0xf]
      %v279 = vld [vmem:[%s1 + $0x8] sm:$0xf]
      %v280 = vld [vmem:[%s1 + $0xc] sm:$0xf]
      %v281 = vld [vmem:[%s2] sm:$0x1]
      %v283 = vperm.slane %v281, 0
      %v289 = vunpack.c.l.b16 %v277
      %v290 = vunpack.c.l.b16 %v278
      %v291 = vunpack.c.l.b16 %v279
      %v292 = vunpack.c.l.b16 %v280
      %v293 = vpack.c.b16 %v290, %v289
      %v294 = vpack.c.b16 %v292, %v291
      %vm297 = vcmask 261120
      %v299 = vsel %vm297, %v276, 0
      %301 = vmatpush.bf16.msra.mxu0 0
      %302 = vmatpush.bf16.msra.mxu0 0
      %303 = vmatpush.bf16.msra.mxu0 0
      %304 = vmatpush.bf16.msra.mxu0 0
      %305 = vmatpush.bf16.msra.mxu0 0
      %306 = vmatpush.bf16.msra.mxu0 0
      %307 = vmatpush.bf16.msra.mxu0 %v294
      %308 = vmatpush.bf16.msra.mxu0 %v293
      %309 = vmatmul.bf16.gmra.mxu0 %v299
      %v310 = vpop.f32.mrf.mxu0
      %v311 = vadd.f32 %v283, %v310
      %v312 = vpop.f32.mrf.mxu0
      %313 = vdwg.mxu0
      %v314 = vmax.f32 %v311, 0.0
      %v315 = vpack.c.bf16 %v314, %v314
      %v316 = vld [vmem:[%s3] sm:$0xf]
      %v317 = vld [vmem:[%s3 + $0x4] sm:$0xf]
      %v318 = vld [vmem:[%s3 + $0x8] sm:$0xf]
      %v319 = vld [vmem:[%s3 + $0xc] sm:$0xf]
      %v320 = vld [vmem:[%s3 + $0x10] sm:$0xf]
      %v321 = vld [vmem:[%s3 + $0x14] sm:$0xf]
      %v322 = vld [vmem:[%s3 + $0x18] sm:$0xf]
      %v323 = vld [vmem:[%s3 + $0x1c] sm:$0xf]
      %v324 = vld [vmem:[%s4] sm:$0x1]
      %v326 = vperm.slane %v324, 0
      %v336 = vunpack.c.l.b16 %v316
      %v337 = vunpack.c.l.b16 %v317
      %v338 = vunpack.c.l.b16 %v318
      %v339 = vunpack.c.l.b16 %v319
      %v340 = vunpack.c.l.b16 %v320
      %v341 = vunpack.c.l.b16 %v321
      %v342 = vunpack.c.l.b16 %v322
      %v343 = vunpack.c.l.b16 %v323
      %v344 = vpack.c.b16 %v337, %v336
      %v345 = vpack.c.b16 %v339, %v338
      %v346 = vpack.c.b16 %v341, %v340
      %v347 = vpack.c.b16 %v343, %v342
      %vm352 = vcmask 523264
      %v354 = vsel %vm352, %v315, 0
      %356 = vmatpush.bf16.msra.mxu0 0
      %357 = vmatpush.bf16.msra.mxu0 0
      %358 = vmatpush.bf16.msra.mxu0 0
      %359 = vmatpush.bf16.msra.mxu0 0
      %360 = vmatpush.bf16.msra.mxu0 %v347
      %361 = vmatpush.bf16.msra.mxu0 %v346
      %362 = vmatpush.bf16.msra.mxu0 %v345
      %363 = vmatpush.bf16.msra.mxu0 %v344
      %364 = vmatmul.bf16.gmra.mxu0 %v354
      %v365 = vpop.f32.mrf.mxu0
      %v366 = vadd.f32 %v326, %v365
      %v367 = vpop.f32.mrf.mxu0
      %368 = vdwg.mxu0
      %v369 = vadd.f32 %v275, %v366
      %v370 = vld [vmem:[%s5] sm:$0x1]
      %v371 = vld [vmem:[%s6] sm:$0x1]
      %v372 = vsel %vm297, %v369, 0.0
      %373 = vadd.xlane.f32.xlu0 %v372
      %v374 = vpop.xlane.xlu0 %373
      %v375 = vrcp.pop 32.0
      %v376 = vmul.f32 32.0, %v375
      %v377 = vsub.f32 1.0, %v376
      %v378 = vmul.f32 %v375, %v377
      %v379 = vadd.f32 %v375, %v378
      %vm380 = vweird.f32 %v375
      %v381 = vsel %vm380, %v375, %v379
      %v382 = vmul.f32 %v374, %v381
      %v383 = vsub.f32 %v369, %v382
      %v384 = vmul.f32 %v383, %v383
      %v385 = vsel %vm297, %v384, 0.0
      %386 = vadd.xlane.f32.xlu0 %v385
      %v387 = vpop.xlane.xlu0 %386
      %v388 = vmul.f32 %v387, %v381
      %v389 = vadd.f32 %v388, 1e-05
      %v390 = vrsqrt.pop %v389
      %v391 = vmul.f32 %v390, %v389
      %v392 = vmul.f32 %v391, %v390
      %v393 = vmul.f32 0.5, %v392
      %v394 = vsub.f32 1.5, %v393
      %v395 = vmul.f32 %v390, %v394
      %vm396 = vweird.f32 %v389
      %vm397 = vweird.f32 %v390
      %vm398 = vmor %vm396, %vm397
      %v399 = vsel %vm398, %v390, %v395
      %v400 = vmul.f32 %v383, %v399
      %v402 = vperm.slane %v370, 0
      %v404 = vmul.f32 %v400, %v402
      %v406 = vperm.slane %v371, 0
      %v408 = vadd.f32 %v404, %v406
      %409 = vst.msk [vmem:[%s273] sm:$0xff] %vm297, %v408
      %p410 = scmp.lt.s32.totalorder %s18, 1
      %s411 = scalar_select %p410, %s18, 1
      %s412 = smul.addr %s411, 8
      %s413 = scalar_lea.vmem %s7, %s412
      // Predicated region
      $region49: #{transformer_forward.26} parent=47 // pred_check
        %p414 = pneg %p188
      $region50: #{transformer_forward.26} parent=47 // pred_check_branch
        %416 = sbr.rel (%p414) target = $region52
      $region51: #{transformer_forward.26} parent=47 // pred_region
        _
      $region52: #{transformer_forward.26} parent=47 // pred_fallthru
        _
    $region48: #{transformer_forward.26} parent=5 // pred_fallthru
      _
    %p417 = scmp.le.s32.totalorder 2, %s13
    // Predicated region
    $region53: #{transformer_forward.26} parent=5 // pred_check
      %p418 = pneg %p417
    $region54: #{transformer_forward.26} parent=5 // pred_check_branch
      %420 = sbr.rel (%p418) target = $region56
    $region55: #{transformer_forward.26} parent=5 // pred_region
      %s421 = ssub.s32 %s13, 2
      // Predicated region
      $region57: #{transformer_forward.26} parent=55 // pred_check
        %p422 = pneg %p194
      $region58: #{transformer_forward.26} parent=55 // pred_check_branch
        %424 = sbr.rel (%p422) target = $region60
      $region59: #{transformer_forward.26} parent=55 // pred_region
        %p425 = scmp.lt.s32.totalorder %s19, 1
        %s426 = scalar_select %p425, %s19, 1
        %s427 = smul.addr %s426, 8
        %s428 = scalar_lea.vmem %s7, %s427
      $region60: #{transformer_forward.26} parent=55 // pred_fallthru
        _
    $region56: #{transformer_forward.26} parent=5 // pred_fallthru
      _
  $region6: #{transformer_forward.26} parent=0 // loop_footer
    %s17 = sadd.s32 1, %s13
  $region7: #{transformer_forward.26} parent=0 // loop_footer_branch
    %12 = sbr.rel target = $region3
  $region8: #{transformer_forward.26} parent=0 // loop_exit
    _

// kernel: transformer_forward.25
$region0: #{transformer_forward.25}
  #allocation0 [shape = 'u32[]', space=smem, size = 0x4, offset = 0x4, fixed_abs, tag = 'smem constant byte address 0x4 - core index']
  #allocation1 [shape = 'u32[72,128]{1,0:T(1,128)}', space=vmem, size = 0x9000, scoped, tag = 'internal scratch']
  %s0 = inlined_call_operand.vmem [shape: f32[2,8,32], index: 0, kind: input, shape index: {}]
  %s1 = inlined_call_operand.vmem [shape: f32[2,10,32], index: 1, kind: input, shape index: {}]
  %s2 = inlined_call_operand.vmem [shape: bf16[32,32], index: 2, kind: input, shape index: {}]
  %s3 = inlined_call_operand.vmem [shape: f32[1,32], index: 3, kind: input, shape index: {}]
  %s4 = inlined_call_operand.vmem [shape: bf16[32,64], index: 4, kind: input, shape index: {}]
  %s5 = inlined_call_operand.vmem [shape: f32[1,64], index: 5, kind: input, shape index: {}]
  %s6 = inlined_call_operand.vmem [shape: bf16[32,32], index: 6, kind: input, shape index: {}]
  %s7 = inlined_call_operand.vmem [shape: f32[1,32], index: 7, kind: input, shape index: {}]
  %s8 = inlined_call_operand.vmem [shape: f32[1,32], index: 8, kind: input, shape index: {}]
  %s9 = inlined_call_operand.vmem [shape: f32[1,32], index: 9, kind: input, shape index: {}]
  %s10 = inlined_call_operand.vmem [shape: f32[2,8,32], index: 10, kind: output, shape index: {}]
  %s11 = sld [smem:[#allocation0]]
  $region73: #{transformer_forward.25} parent=0
    _
  %s13 = ssub.s32 1, %s11
  %s14 = scalar_select 0, %s13, %s11
  loop: start=0, step=1, limit=4
  $region2: #{transformer_forward.25} parent=0 // loop_pre_header
    _
  $region3: #{transformer_forward.25} parent=0 // loop_header
    %s16 = sphi 0, %s20
    %p17 = scmp.ge.s32.totalorder %s16, 4
    %s26 = sphi 0, %s28
    %s29 = sphi 0, %s26
    %s30 = sphi 0, %s29
    %s46 = sphi 0, %s30
    %s52 = sphi 0, %s54
    %s55 = sphi 0, %s52
    %s56 = sphi 0, %s55
    %s72 = sphi 0, %s56
    %s76 = sphi 0, %s76
    %s78 = sphi 0, %s76
    %s79 = sphi 0, %s78
    %s93 = sphi 0, %s79
    %s97 = sphi 0, %s97
    %s99 = sphi 0, %s97
    %s100 = sphi 0, %s99
    %s114 = sphi 0, %s100
    %s118 = sphi 0, %s118
    %s120 = sphi 0, %s118
    %s121 = sphi 0, %s120
    %s135 = sphi 0, %s121
    %s139 = sphi 0, %s139
    %s141 = sphi 0, %s139
    %s142 = sphi 0, %s141
    %s156 = sphi 0, %s142
    %s160 = sphi 0, %s160
    %s162 = sphi 0, %s160
    %s163 = sphi 0, %s162
    %s177 = sphi 0, %s163
    %s181 = sphi 0, %s181
    %s183 = sphi 0, %s181
    %s184 = sphi 0, %s183
    %s198 = sphi 0, %s184
    %s202 = sphi 0, %s202
    %s204 = sphi 0, %s202
    %s205 = sphi 0, %s204
    %s219 = sphi 0, %s205
    %s223 = sphi 0, %s223
    %s225 = sphi 0, %s223
    %s226 = sphi 0, %s225
    %s240 = sphi 0, %s226
    %s246 = sphi 0, %s248
    %s249 = sphi 0, %s246
    %s250 = sphi 0, %s249
    %s266 = sphi 0, %s250
  $region4: #{transformer_forward.25} parent=0 // loop_header_branch
    %19 = sbr.rel (%p17) target = $region8
  $region5: #{transformer_forward.25} parent=0 // loop_body
    %s21 = ssub.s32 %s16, 1
    %s22 = ssub.s32 %s16, 2
    %s23 = sadd.s32 %s16, 1
    %s24 = ssub.s32 %s16, %s23
    %p25 = scmp.eq.s32.totalorder %s24, 0
    %s27 = sadd.s32 %s26, 1
    %s28 = scalar_select %p25, %s26, %s27
    %p31 = pneg %p25
    %p32 = scmp.eq.s32.totalorder %s16, 1
    %p33 = por %p31, %p32
    %p34 = scmp.ne.s32.totalorder %s26, %s29
    %p35 = scmp.eq.s32.totalorder %s16, 0
    %p36 = por %p34, %p35
    %p37 = scmp.ne.s32.totalorder %s26, %s29
    %p38 = scmp.eq.s32.totalorder %s21, 1
    %p39 = por %p37, %p38
    %p40 = scmp.ne.s32.totalorder %s29, %s30
    %p41 = scmp.eq.s32.totalorder %s21, 0
    %p42 = por %p40, %p41
    %p43 = scmp.ne.s32.totalorder %s29, %s30
    %p44 = scmp.eq.s32.totalorder %s22, 1
    %p45 = por %p43, %p44
    %p47 = scmp.ne.s32.totalorder %s30, %s46
    %p48 = scmp.eq.s32.totalorder %s22, 0
    %p49 = por %p47, %p48
    %s50 = ssub.s32 %s16, %s23
    %p51 = scmp.eq.s32.totalorder %s50, 0
    %s53 = sadd.s32 %s52, 1
    %s54 = scalar_select %p51, %s52, %s53
    %p57 = pneg %p51
    %p58 = scmp.eq.s32.totalorder %s16, 1
    %p59 = por %p57, %p58
    %p60 = scmp.ne.s32.totalorder %s52, %s55
    %p61 = scmp.eq.s32.totalorder %s16, 0
    %p62 = por %p60, %p61
    %p63 = scmp.ne.s32.totalorder %s52, %s55
    %p64 = scmp.eq.s32.totalorder %s21, 1
    %p65 = por %p63, %p64
    %p66 = scmp.ne.s32.totalorder %s55, %s56
    %p67 = scmp.eq.s32.totalorder %s21, 0
    %p68 = por %p66, %p67
    %p69 = scmp.ne.s32.totalorder %s55, %s56
    %p70 = scmp.eq.s32.totalorder %s22, 1
    %p71 = por %p69, %p70
    %p73 = scmp.ne.s32.totalorder %s56, %s72
    %p74 = scmp.eq.s32.totalorder %s22, 0
    %p75 = por %p73, %p74
    %s77 = sadd.s32 %s76, 1
    %p80 = scmp.eq.s32.totalorder %s16, 1
    %p81 = scmp.ne.s32.totalorder %s76, %s78
    %p82 = scmp.eq.s32.totalorder %s16, 0
    %p83 = por %p81, %p82
    %p84 = scmp.ne.s32.totalorder %s76, %s78
    %p85 = scmp.eq.s32.totalorder %s21, 1
    %p86 = por %p84, %p85
    %p87 = scmp.ne.s32.totalorder %s78, %s79
    %p88 = scmp.eq.s32.totalorder %s21, 0
    %p89 = por %p87, %p88
    %p90 = scmp.ne.s32.totalorder %s78, %s79
    %p91 = scmp.eq.s32.totalorder %s22, 1
    %p92 = por %p90, %p91
    %p94 = scmp.ne.s32.totalorder %s79, %s93
    %p95 = scmp.eq.s32.totalorder %s22, 0
    %p96 = por %p94, %p95
    %s98 = sadd.s32 %s97, 1
    %p101 = scmp.eq.s32.totalorder %s16, 1
    %p102 = scmp.ne.s32.totalorder %s97, %s99
    %p103 = scmp.eq.s32.totalorder %s16, 0
    %p104 = por %p102, %p103
    %p105 = scmp.ne.s32.totalorder %s97, %s99
    %p106 = scmp.eq.s32.totalorder %s21, 1
    %p107 = por %p105, %p106
    %p108 = scmp.ne.s32.totalorder %s99, %s100
    %p109 = scmp.eq.s32.totalorder %s21, 0
    %p110 = por %p108, %p109
    %p111 = scmp.ne.s32.totalorder %s99, %s100
    %p112 = scmp.eq.s32.totalorder %s22, 1
    %p113 = por %p111, %p112
    %p115 = scmp.ne.s32.totalorder %s100, %s114
    %p116 = scmp.eq.s32.totalorder %s22, 0
    %p117 = por %p115, %p116
    %s119 = sadd.s32 %s118, 1
    %p122 = scmp.eq.s32.totalorder %s16, 1
    %p123 = scmp.ne.s32.totalorder %s118, %s120
    %p124 = scmp.eq.s32.totalorder %s16, 0
    %p125 = por %p123, %p124
    %p126 = scmp.ne.s32.totalorder %s118, %s120
    %p127 = scmp.eq.s32.totalorder %s21, 1
    %p128 = por %p126, %p127
    %p129 = scmp.ne.s32.totalorder %s120, %s121
    %p130 = scmp.eq.s32.totalorder %s21, 0
    %p131 = por %p129, %p130
    %p132 = scmp.ne.s32.totalorder %s120, %s121
    %p133 = scmp.eq.s32.totalorder %s22, 1
    %p134 = por %p132, %p133
    %p136 = scmp.ne.s32.totalorder %s121, %s135
    %p137 = scmp.eq.s32.totalorder %s22, 0
    %p138 = por %p136, %p137
    %s140 = sadd.s32 %s139, 1
    %p143 = scmp.eq.s32.totalorder %s16, 1
    %p144 = scmp.ne.s32.totalorder %s139, %s141
    %p145 = scmp.eq.s32.totalorder %s16, 0
    %p146 = por %p144, %p145
    %p147 = scmp.ne.s32.totalorder %s139, %s141
    %p148 = scmp.eq.s32.totalorder %s21, 1
    %p149 = por %p147, %p148
    %p150 = scmp.ne.s32.totalorder %s141, %s142
    %p151 = scmp.eq.s32.totalorder %s21, 0
    %p152 = por %p150, %p151
    %p153 = scmp.ne.s32.totalorder %s141, %s142
    %p154 = scmp.eq.s32.totalorder %s22, 1
    %p155 = por %p153, %p154
    %p157 = scmp.ne.s32.totalorder %s142, %s156
    %p158 = scmp.eq.s32.totalorder %s22, 0
    %p159 = por %p157, %p158
    %s161 = sadd.s32 %s160, 1
    %p164 = scmp.eq.s32.totalorder %s16, 1
    %p165 = scmp.ne.s32.totalorder %s160, %s162
    %p166 = scmp.eq.s32.totalorder %s16, 0
    %p167 = por %p165, %p166
    %p168 = scmp.ne.s32.totalorder %s160, %s162
    %p169 = scmp.eq.s32.totalorder %s21, 1
    %p170 = por %p168, %p169
    %p171 = scmp.ne.s32.totalorder %s162, %s163
    %p172 = scmp.eq.s32.totalorder %s21, 0
    %p173 = por %p171, %p172
    %p174 = scmp.ne.s32.totalorder %s162, %s163
    %p175 = scmp.eq.s32.totalorder %s22, 1
    %p176 = por %p174, %p175
    %p178 = scmp.ne.s32.totalorder %s163, %s177
    %p179 = scmp.eq.s32.totalorder %s22, 0
    %p180 = por %p178, %p179
    %s182 = sadd.s32 %s181, 1
    %p185 = scmp.eq.s32.totalorder %s16, 1
    %p186 = scmp.ne.s32.totalorder %s181, %s183
    %p187 = scmp.eq.s32.totalorder %s16, 0
    %p188 = por %p186, %p187
    %p189 = scmp.ne.s32.totalorder %s181, %s183
    %p190 = scmp.eq.s32.totalorder %s21, 1
    %p191 = por %p189, %p190
    %p192 = scmp.ne.s32.totalorder %s183, %s184
    %p193 = scmp.eq.s32.totalorder %s21, 0
    %p194 = por %p192, %p193
    %p195 = scmp.ne.s32.totalorder %s183, %s184
    %p196 = scmp.eq.s32.totalorder %s22, 1
    %p197 = por %p195, %p196
    %p199 = scmp.ne.s32.totalorder %s184, %s198
    %p200 = scmp.eq.s32.totalorder %s22, 0
    %p201 = por %p199, %p200
    %s203 = sadd.s32 %s202, 1
    %p206 = scmp.eq.s32.totalorder %s16, 1
    %p207 = scmp.ne.s32.totalorder %s202, %s204
    %p208 = scmp.eq.s32.totalorder %s16, 0
    %p209 = por %p207, %p208
    %p210 = scmp.ne.s32.totalorder %s202, %s204
    %p211 = scmp.eq.s32.totalorder %s21, 1
    %p212 = por %p210, %p211
    %p213 = scmp.ne.s32.totalorder %s204, %s205
    %p214 = scmp.eq.s32.totalorder %s21, 0
    %p215 = por %p213, %p214
    %p216 = scmp.ne.s32.totalorder %s204, %s205
    %p217 = scmp.eq.s32.totalorder %s22, 1
    %p218 = por %p216, %p217
    %p220 = scmp.ne.s32.totalorder %s205, %s219
    %p221 = scmp.eq.s32.totalorder %s22, 0
    %p222 = por %p220, %p221
    %s224 = sadd.s32 %s223, 1
    %p227 = scmp.eq.s32.totalorder %s16, 1
    %p228 = scmp.ne.s32.totalorder %s223, %s225
    %p229 = scmp.eq.s32.totalorder %s16, 0
    %p230 = por %p228, %p229
    %p231 = scmp.ne.s32.totalorder %s223, %s225
    %p232 = scmp.eq.s32.totalorder %s21, 1
    %p233 = por %p231, %p232
    %p234 = scmp.ne.s32.totalorder %s225, %s226
    %p235 = scmp.eq.s32.totalorder %s21, 0
    %p236 = por %p234, %p235
    %p237 = scmp.ne.s32.totalorder %s225, %s226
    %p238 = scmp.eq.s32.totalorder %s22, 1
    %p239 = por %p237, %p238
    %p241 = scmp.ne.s32.totalorder %s226, %s240
    %p242 = scmp.eq.s32.totalorder %s22, 0
    %p243 = por %p241, %p242
    %s244 = ssub.s32 %s16, %s23
    %p245 = scmp.eq.s32.totalorder %s244, 0
    %s247 = sadd.s32 %s246, 1
    %s248 = scalar_select %p245, %s246, %s247
    %p251 = pneg %p245
    %p252 = scmp.eq.s32.totalorder %s16, 1
    %p253 = por %p251, %p252
    %p254 = scmp.ne.s32.totalorder %s246, %s249
    %p255 = scmp.eq.s32.totalorder %s16, 0
    %p256 = por %p254, %p255
    %p257 = scmp.ne.s32.totalorder %s246, %s249
    %p258 = scmp.eq.s32.totalorder %s21, 1
    %p259 = por %p257, %p258
    %p260 = scmp.ne.s32.totalorder %s249, %s250
    %p261 = scmp.eq.s32.totalorder %s21, 0
    %p262 = por %p260, %p261
    %p263 = scmp.ne.s32.totalorder %s249, %s250
    %p264 = scmp.eq.s32.totalorder %s22, 1
    %p265 = por %p263, %p264
    %p267 = scmp.ne.s32.totalorder %s250, %s266
    %p268 = scmp.eq.s32.totalorder %s22, 0
    %p269 = por %p267, %p268
    %p270 = scmp.le.s32.totalorder 1, %s16
    %p271 = scmp.lt.s32.totalorder %s16, 3
    %p272 = pnand %p270, %p271
    %p273 = pneg %p272
    // Predicated region
    $region9: #{transformer_forward.25} parent=5 // pred_check
      _
    $region10: #{transformer_forward.25} parent=5 // pred_check_branch
      %275 = sbr.rel (%p272) target = $region12
    $region11: #{transformer_forward.25} parent=5 // pred_region
      %s276 = ssub.s32 %s16, 1
      // Predicated region
      $region13: #{transformer_forward.25} parent=11 // pred_check
        %p277 = pneg %p89
      $region14: #{transformer_forward.25} parent=11 // pred_check_branch
        %279 = sbr.rel (%p277) target = $region16
      $region15: #{transformer_forward.25} parent=11 // pred_region
        _
      $region16: #{transformer_forward.25} parent=11 // pred_fallthru
        _
      // Predicated region
      $region17: #{transformer_forward.25} parent=11 // pred_check
        %p280 = pneg %p110
      $region18: #{transformer_forward.25} parent=11 // pred_check_branch
        %282 = sbr.rel (%p280) target = $region20
      $region19: #{transformer_forward.25} parent=11 // pred_region
        _
      $region20: #{transformer_forward.25} parent=11 // pred_fallthru
        _
      // Predicated region
      $region21: #{transformer_forward.25} parent=11 // pred_check
        %p283 = pneg %p131
      $region22: #{transformer_forward.25} parent=11 // pred_check_branch
        %285 = sbr.rel (%p283) target = $region24
      $region23: #{transformer_forward.25} parent=11 // pred_region
        _
      $region24: #{transformer_forward.25} parent=11 // pred_fallthru
        _
      // Predicated region
      $region25: #{transformer_forward.25} parent=11 // pred_check
        %p286 = pneg %p152
      $region26: #{transformer_forward.25} parent=11 // pred_check_branch
        %288 = sbr.rel (%p286) target = $region28
      $region27: #{transformer_forward.25} parent=11 // pred_region
        _
      $region28: #{transformer_forward.25} parent=11 // pred_fallthru
        _
      // Predicated region
      $region29: #{transformer_forward.25} parent=11 // pred_check
        %p289 = pneg %p173
      $region30: #{transformer_forward.25} parent=11 // pred_check_branch
        %291 = sbr.rel (%p289) target = $region32
      $region31: #{transformer_forward.25} parent=11 // pred_region
        _
      $region32: #{transformer_forward.25} parent=11 // pred_fallthru
        _
      // Predicated region
      $region33: #{transformer_forward.25} parent=11 // pred_check
        %p292 = pneg %p194
      $region34: #{transformer_forward.25} parent=11 // pred_check_branch
        %294 = sbr.rel (%p292) target = $region36
      $region35: #{transformer_forward.25} parent=11 // pred_region
        _
      $region36: #{transformer_forward.25} parent=11 // pred_fallthru
        _
      // Predicated region
      $region37: #{transformer_forward.25} parent=11 // pred_check
        %p295 = pneg %p215
      $region38: #{transformer_forward.25} parent=11 // pred_check_branch
        %297 = sbr.rel (%p295) target = $region40
      $region39: #{transformer_forward.25} parent=11 // pred_region
        _
      $region40: #{transformer_forward.25} parent=11 // pred_fallthru
        _
      // Predicated region
      $region41: #{transformer_forward.25} parent=11 // pred_check
        %p298 = pneg %p236
      $region42: #{transformer_forward.25} parent=11 // pred_check_branch
        %300 = sbr.rel (%p298) target = $region44
      $region43: #{transformer_forward.25} parent=11 // pred_region
        _
      $region44: #{transformer_forward.25} parent=11 // pred_fallthru
        _
    $region12: #{transformer_forward.25} parent=5 // pred_fallthru
      _
    %p301 = scmp.lt.s32.totalorder %s16, 2
    // Predicated region
    $region45: #{transformer_forward.25} parent=5 // pred_check
      %p302 = pneg %p301
    $region46: #{transformer_forward.25} parent=5 // pred_check_branch
      %304 = sbr.rel (%p302) target = $region48
    $region47: #{transformer_forward.25} parent=5 // pred_region
      // Predicated region
      $region49: #{transformer_forward.25} parent=47 // pred_check
        %p305 = pneg %p36
      $region50: #{transformer_forward.25} parent=47 // pred_check_branch
        %307 = sbr.rel (%p305) target = $region52
      $region51: #{transformer_forward.25} parent=47 // pred_region
        %p308 = scmp.lt.s32.totalorder %s16, 1
        %s309 = scalar_select %p308, %s16, 1
        %s310 = smul.addr %s309, 8
        %s311 = scalar_lea.vmem %s0, %s310
      $region52: #{transformer_forward.25} parent=47 // pred_fallthru
        _
      // Predicated region
      $region53: #{transformer_forward.25} parent=47 // pred_check
        %p312 = pneg %p62
      $region54: #{transformer_forward.25} parent=47 // pred_check_branch
        %314 = sbr.rel (%p312) target = $region56
      $region55: #{transformer_forward.25} parent=47 // pred_region
        %p315 = scmp.lt.s32.totalorder %s16, 1
        %s316 = scalar_select %p315, %s16, 1
        %s317 = smul.addr %s316, 2
        %s318 = smul.addr %s317, 8
        %s319 = scalar_lea.vmem %s1, %s318
      $region56: #{transformer_forward.25} parent=47 // pred_fallthru
        _
    $region48: #{transformer_forward.25} parent=5 // pred_fallthru
      _
    %p320 = scmp.le.s32.totalorder 1, %s16
    %p321 = scmp.lt.s32.totalorder %s16, 3
    %p322 = pnand %p320, %p321
    %p323 = pneg %p322
    // Predicated region
    $region57: #{transformer_forward.25} parent=5 // pred_check
      _
    $region58: #{transformer_forward.25} parent=5 // pred_check_branch
      %325 = sbr.rel (%p322) target = $region60
    $region59: #{transformer_forward.25} parent=5 // pred_region
      %s326 = ssub.s32 %s16, 1
      %p327 = scmp.lt.s32.totalorder %s21, 1
      %s328 = scalar_select %p327, %s21, 1
      %s329 = smul.addr %s328, 8
      %s330 = scalar_lea.vmem %s0, %s329
      %p331 = pneg %p42
      %p332 = pneg %p39
      %p333 = scmp.lt.s32.totalorder %s21, 1
      %s334 = scalar_select %p333, %s21, 1
      %s335 = smul.addr %s334, 2
      %s336 = smul.addr %s335, 8
      %s337 = scalar_lea.vmem %s1, %s336
      %p338 = pneg %p68
      %p339 = pneg %p65
      %p340 = pneg %p89
      %p341 = pneg %p86
      %p342 = pneg %p110
      %p343 = pneg %p107
      %p344 = pneg %p131
      %p345 = pneg %p128
      %p346 = pneg %p152
      %p347 = pneg %p149
      %p348 = pneg %p173
      %p349 = pneg %p170
      %p350 = pneg %p194
      %p351 = pneg %p191
      %p352 = pneg %p215
      %p353 = pneg %p212
      %p354 = pneg %p236
      %p355 = pneg %p233
      %p356 = pneg %p262
      %p357 = pneg %p259
      %p358 = scmp.lt.s32.totalorder %s21, 1
      %s359 = scalar_select %p358, %s21, 1
      %s360 = smul.addr %s359, 8
      %s361 = scalar_lea.vmem %s10, %s360
      %p362 = scmp.lt.s32.totalorder %s21, 1
      %s363 = scalar_select %p362, %s21, 1
      %s364 = smul.addr %s363, 8
      %s365 = scalar_lea.vmem %s0, %s364
      %p366 = scmp.lt.s32.totalorder %s21, 1
      %s367 = scalar_select %p366, %s21, 1
      %s368 = smul.addr %s367, 2
      %s369 = smul.addr %s368, 8
      %s370 = scalar_lea.vmem %s1, %s369
      %p371 = scmp.lt.s32.totalorder %s21, 1
      %s372 = scalar_select %p371, %s21, 1
      %s373 = smul.addr %s372, 8
      %s374 = scalar_lea.vmem %s10, %s373
      %v376 = vld [vmem:[%s365] sm:$0xff]
      %v377 = vld [vmem:[%s370] sm:$0xff]
      %v378 = vld [vmem:[%s370 + $0x8] sm:$0x3]
      %v379 = vpack.c.bf16 %v376, %v376
      %v380 = vpack.c.bf16 %v378, %v377
      %v381 = vld [vmem:[%s2] sm:$0xf]
      %v382 = vld [vmem:[%s2 + $0x4] sm:$0xf]
      %v383 = vld [vmem:[%s2 + $0x8] sm:$0xf]
      %v384 = vld [vmem:[%s2 + $0xc] sm:$0xf]
      %v385 = vld [vmem:[%s3] sm:$0x1]
      %v387 = vperm.slane %v385, 0
      %v393 = vunpack.c.l.b16 %v381
      %v394 = vunpack.c.l.b16 %v382
      %v395 = vunpack.c.l.b16 %v383
      %v396 = vunpack.c.l.b16 %v384
      %v397 = vpack.c.b16 %v394, %v393
      %v398 = vpack.c.b16 %v396, %v395
      %vm401 = vcmask 261120
      %v403 = vsel %vm401, %v379, 0
      %405 = vmatpush.bf16.msra.mxu0 0
      %406 = vmatpush.bf16.msra.mxu0 0
      %407 = vmatpush.bf16.msra.mxu0 0
      %408 = vmatpush.bf16.msra.mxu0 0
      %409 = vmatpush.bf16.msra.mxu0 0
      %410 = vmatpush.bf16.msra.mxu0 0
      %411 = vmatpush.bf16.msra.mxu0 %v398
      %412 = vmatpush.bf16.msra.mxu0 %v397
      %413 = vmatmul.bf16.gmra.mxu0 %v403
      %v414 = vpop.f32.mrf.mxu0
      %v415 = vadd.f32 %v387, %v414
      %v416 = vpop.f32.mrf.mxu0
      %417 = vdwg.mxu0
      %v418 = vld [vmem:[%s4] sm:$0xf]
      %v419 = vld [vmem:[%s4 + $0x4] sm:$0xf]
      %v420 = vld [vmem:[%s4 + $0x8] sm:$0xf]
      %v421 = vld [vmem:[%s4 + $0xc] sm:$0xf]
      %v422 = vld [vmem:[%s5] sm:$0x1]
      %v424 = vperm.slane %v422, 0
      %v430 = vunpack.c.l.b16 %v418
      %v431 = vunpack.c.l.b16 %v419
      %v432 = vunpack.c.l.b16 %v420
      %v433 = vunpack.c.l.b16 %v421
      %v434 = vpack.c.b16 %v431, %v430
      %v435 = vpack.c.b16 %v433, %v432
      %v439 = vsel %vm401, %v380, 0
      %441 = vmatpush.bf16.msra.mxu0 0
      %442 = vmatpush.bf16.msra.mxu0 0
      %443 = vmatpush.bf16.msra.mxu0 0
      %444 = vmatpush.bf16.msra.mxu0 0
      %445 = vmatpush.bf16.msra.mxu0 0
      %446 = vmatpush.bf16.msra.mxu0 0
      %447 = vmatpush.bf16.msra.mxu0 %v435
      %448 = vmatpush.bf16.msra.mxu0 %v434
      %449 = vmatmul.bf16.gmra.mxu0 %v439
      %v450 = vpop.f32.mrf.mxu0
      %v451 = vadd.f32 %v424, %v450
      %v452 = vpop.f32.mrf.mxu0
      %v453 = vadd.f32 %v424, %v452
      %454 = vdwg.mxu0
      %v455 = vpack.c.bf16 %v415, %v415
      %v456 = vpack.c.bf16 %v453, %v451
      %vm457 = vcmask 64512
      %v459 = vsel %vm457, %v455, 0
      %v462 = vsel %vm457, %v456, 0
      %464 = vmatpush.bf16.xpose.msra.mxu0 0
      %465 = vmatpush.bf16.xpose.msra.mxu0 0
      %466 = vmatpush.bf16.xpose.msra.mxu0 0
      %467 = vmatpush.bf16.xpose.msra.mxu0 0
      %468 = vmatpush.bf16.xpose.msra.mxu0 0
      %469 = vmatpush.bf16.xpose.msra.mxu0 0
      %470 = vmatpush.bf16.xpose.msra.mxu0 0
      %471 = vmatpush.bf16.xpose.msra.mxu0 %v462
      %472 = vmatmul.bf16.gmra.mxu0 %v459
      %v473 = vpop.f32.mrf.mxu0
      %v474 = vadd.f32 0.0, %v473
      %v475 = vpop.f32.mrf.mxu0
      %476 = vdwg.mxu0
      %v477 = vmul.f32 %v474, 0.35355338
      %vm478 = vcmask 80896
      %v479 = vsel %vm478, %v477, -inf
      %480 = vmax.xlane.f32.xlu0 %v479
      %v481 = vpop.xlane.xlu0 %480
      %v482 = vsub.f32 %v477, %v481
      %v483 = vmul.f32 %v482, 1.442695
      %v484 = vpow.pop %v483
      %v485 = vsel %vm478, %v484, 0.0
      %486 = vadd.xlane.f32.xlu0 %v485
      %v487 = vpop.xlane.xlu0 %486
      %v488 = vrcp.pop %v487
      %v489 = vmul.f32 %v484, %v488
      %v490 = vpack.c.bf16 %v489, %v489
      %492 = vrot.lane.b32.xlu0 %v456, 96
      %v493 = vpop.permute.xlu0 %492
      %v495 = vsel %vm478, %v490, 0
      %vm497 = vcmask 1044480
      %v499 = vsel %vm497, %v493, 0
      %501 = vmatpush.bf16.msra.mxu0 0
      %502 = vmatpush.bf16.msra.mxu0 0
      %503 = vmatpush.bf16.msra.mxu0 0
      %504 = vmatpush.bf16.msra.mxu0 0
      %505 = vmatpush.bf16.msra.mxu0 0
      %506 = vmatpush.bf16.msra.mxu0 0
      %507 = vmatpush.bf16.msra.mxu0 0
      %508 = vmatpush.bf16.msra.mxu0 %v499
      %509 = vmatmul.bf16.gmra.mxu0 %v495
      %v510 = vpop.f32.mrf.mxu0
      %v511 = vadd.f32 0.0, %v510
      %v512 = vpop.f32.mrf.mxu0
      %513 = vdwg.mxu0
      %v514 = vpack.c.bf16 %v511, %v511
      %v515 = vld [vmem:[%s6] sm:$0xf]
      %517 = vrot.lane.b32.xlu0 %v455, 120
      %v518 = vpop.permute.xlu0 %517
      %519 = vrot.lane.b32.xlu0 %v456, 120
      %v520 = vpop.permute.xlu0 %519
      %v522 = vsel %vm457, %v518, 0
      %v525 = vsel %vm457, %v520, 0
      %527 = vmatpush.bf16.xpose.msra.mxu0 0
      %528 = vmatpush.bf16.xpose.msra.mxu0 0
      %529 = vmatpush.bf16.xpose.msra.mxu0 0
      %530 = vmatpush.bf16.xpose.msra.mxu0 0
      %531 = vmatpush.bf16.xpose.msra.mxu0 0
      %532 = vmatpush.bf16.xpose.msra.mxu0 0
      %533 = vmatpush.bf16.xpose.msra.mxu0 0
      %534 = vmatpush.bf16.xpose.msra.mxu0 %v525
      %535 = vmatmul.bf16.gmra.mxu0 %v522
      %v536 = vpop.f32.mrf.mxu0
      %v537 = vadd.f32 0.0, %v536
      %v538 = vpop.f32.mrf.mxu0
      %539 = vdwg.mxu0
      %v540 = vmul.f32 %v537, 0.35355338
      %v541 = vsel %vm478, %v540, -inf
      %542 = vmax.xlane.f32.xlu0 %v541
      %v543 = vpop.xlane.xlu0 %542
      %v544 = vsub.f32 %v540, %v543
      %v545 = vmul.f32 %v544, 1.442695
      %v546 = vpow.pop %v545
      %v547 = vsel %vm478, %v546, 0.0
      %548 = vadd.xlane.f32.xlu0 %v547
      %v549 = vpop.xlane.xlu0 %548
      %v550 = vrcp.pop %v549
      %v551 = vmul.f32 %v546, %v550
      %v552 = vpack.c.bf16 %v551, %v551
      %553 = vrot.lane.b32.xlu0 %v456, 88
      %v554 = vpop.permute.xlu0 %553
      %v556 = vsel %vm478, %v552, 0
      %v559 = vsel %vm497, %v554, 0
      %561 = vmatpush.bf16.msra.mxu0 0
      %562 = vmatpush.bf16.msra.mxu0 0
      %563 = vmatpush.bf16.msra.mxu0 0
      %564 = vmatpush.bf16.msra.mxu0 0
      %565 = vmatpush.bf16.msra.mxu0 0
      %566 = vmatpush.bf16.msra.mxu0 0
      %567 = vmatpush.bf16.msra.mxu0 0
      %568 = vmatpush.bf16.msra.mxu0 %v559
      %569 = vmatmul.bf16.gmra.mxu0 %v556
      %v570 = vpop.f32.mrf.mxu0
      %v571 = vadd.f32 0.0, %v570
      %v572 = vpop.f32.mrf.mxu0
      %573 = vdwg.mxu0
      %v574 = vpack.c.bf16 %v571, %v571
      %v575 = vld [vmem:[%s6 + $0x4] sm:$0xf]
      %v577 = vsel %vm457, %v574, 0
      %vm579 = vcmask 1043456
      %v581 = vsel %vm579, %v575, 0
      %583 = vmatpush.bf16.msra.mxu0 0
      %584 = vmatpush.bf16.msra.mxu0 0
      %585 = vmatpush.bf16.msra.mxu0 0
      %586 = vmatpush.bf16.msra.mxu0 0
      %587 = vmatpush.bf16.msra.mxu0 0
      %588 = vmatpush.bf16.msra.mxu0 0
      %589 = vmatpush.bf16.msra.mxu0 0
      %590 = vmatpush.bf16.msra.mxu0 %v581
      %591 = vmatmul.bf16.gmra.mxu0 %v577
      %v592 = vpop.f32.mrf.mxu0
      %v593 = vadd.f32 0.0, %v592
      %v594 = vpop.f32.mrf.mxu0
      %595 = vdwg.mxu0
      %v597 = vsel %vm457, %v514, 0
      %v600 = vsel %vm579, %v515, 0
      %602 = vmatpush.bf16.msra.mxu0 0
      %603 = vmatpush.bf16.msra.mxu0 0
      %604 = vmatpush.bf16.msra.mxu0 0
      %605 = vmatpush.bf16.msra.mxu0 0
      %606 = vmatpush.bf16.msra.mxu0 0
      %607 = vmatpush.bf16.msra.mxu0 0
      %608 = vmatpush.bf16.msra.mxu0 0
      %609 = vmatpush.bf16.msra.mxu0 %v600
      %610 = vmatmul.bf16.gmra.mxu0 %v597
      %v611 = vpop.f32.mrf.mxu0
      %v612 = vadd.f32 %v593, %v611
      %v613 = vpop.f32.mrf.mxu0
      %614 = vdwg.mxu0
      %615 = vrot.lane.b32.xlu0 %v455, 112
      %v616 = vpop.permute.xlu0 %615
      %617 = vrot.lane.b32.xlu0 %v456, 112
      %v618 = vpop.permute.xlu0 %617
      %v620 = vsel %vm457, %v616, 0
      %v623 = vsel %vm457, %v618, 0
      %625 = vmatpush.bf16.xpose.msra.mxu0 0
      %626 = vmatpush.bf16.xpose.msra.mxu0 0
      %627 = vmatpush.bf16.xpose.msra.mxu0 0
      %628 = vmatpush.bf16.xpose.msra.mxu0 0
      %629 = vmatpush.bf16.xpose.msra.mxu0 0
      %630 = vmatpush.bf16.xpose.msra.mxu0 0
      %631 = vmatpush.bf16.xpose.msra.mxu0 0
      %632 = vmatpush.bf16.xpose.msra.mxu0 %v623
      %633 = vmatmul.bf16.gmra.mxu0 %v620
      %v634 = vpop.f32.mrf.mxu0
      %v635 = vadd.f32 0.0, %v634
      %v636 = vpop.f32.mrf.mxu0
      %637 = vdwg.mxu0
      %v638 = vmul.f32 %v635, 0.35355338
      %v639 = vsel %vm478, %v638, -inf
      %640 = vmax.xlane.f32.xlu0 %v639
      %v641 = vpop.xlane.xlu0 %640
      %v642 = vsub.f32 %v638, %v641
      %v643 = vmul.f32 %v642, 1.442695
      %v644 = vpow.pop %v643
      %v645 = vsel %vm478, %v644, 0.0
      %646 = vadd.xlane.f32.xlu0 %v645
      %v647 = vpop.xlane.xlu0 %646
      %v648 = vrcp.pop %v647
      %v649 = vmul.f32 %v644, %v648
      %v650 = vpack.c.bf16 %v649, %v649
      %651 = vrot.lane.b32.xlu0 %v456, 80
      %v652 = vpop.permute.xlu0 %651
      %v654 = vsel %vm478, %v650, 0
      %v657 = vsel %vm497, %v652, 0
      %659 = vmatpush.bf16.msra.mxu0 0
      %660 = vmatpush.bf16.msra.mxu0 0
      %661 = vmatpush.bf16.msra.mxu0 0
      %662 = vmatpush.bf16.msra.mxu0 0
      %663 = vmatpush.bf16.msra.mxu0 0
      %664 = vmatpush.bf16.msra.mxu0 0
      %665 = vmatpush.bf16.msra.mxu0 0
      %666 = vmatpush.bf16.msra.mxu0 %v657
      %667 = vmatmul.bf16.gmra.mxu0 %v654
      %v668 = vpop.f32.mrf.mxu0
      %v669 = vadd.f32 0.0, %v668
      %v670 = vpop.f32.mrf.mxu0
      %671 = vdwg.mxu0
      %v672 = vpack.c.bf16 %v669, %v669
      %v673 = vld [vmem:[%s6 + $0x8] sm:$0xf]
      %v675 = vsel %vm457, %v672, 0
      %v678 = vsel %vm579, %v673, 0
      %680 = vmatpush.bf16.msra.mxu0 0
      %681 = vmatpush.bf16.msra.mxu0 0
      %682 = vmatpush.bf16.msra.mxu0 0
      %683 = vmatpush.bf16.msra.mxu0 0
      %684 = vmatpush.bf16.msra.mxu0 0
      %685 = vmatpush.bf16.msra.mxu0 0
      %686 = vmatpush.bf16.msra.mxu0 0
      %687 = vmatpush.bf16.msra.mxu0 %v678
      %688 = vmatmul.bf16.gmra.mxu0 %v675
      %v689 = vpop.f32.mrf.mxu0
      %v690 = vadd.f32 0.0, %v689
      %v691 = vpop.f32.mrf.mxu0
      %692 = vdwg.mxu0
      %v693 = vadd.f32 %v612, %v690
      %694 = vrot.lane.b32.xlu0 %v455, 104
      %v695 = vpop.permute.xlu0 %694
      %696 = vrot.lane.b32.xlu0 %v456, 104
      %v697 = vpop.permute.xlu0 %696
      %v699 = vsel %vm457, %v695, 0
      %v702 = vsel %vm457, %v697, 0
      %704 = vmatpush.bf16.xpose.msra.mxu0 0
      %705 = vmatpush.bf16.xpose.msra.mxu0 0
      %706 = vmatpush.bf16.xpose.msra.mxu0 0
      %707 = vmatpush.bf16.xpose.msra.mxu0 0
      %708 = vmatpush.bf16.xpose.msra.mxu0 0
      %709 = vmatpush.bf16.xpose.msra.mxu0 0
      %710 = vmatpush.bf16.xpose.msra.mxu0 0
      %711 = vmatpush.bf16.xpose.msra.mxu0 %v702
      %712 = vmatmul.bf16.gmra.mxu0 %v699
      %v713 = vpop.f32.mrf.mxu0
      %v714 = vadd.f32 0.0, %v713
      %v715 = vpop.f32.mrf.mxu0
      %716 = vdwg.mxu0
      %v717 = vmul.f32 %v714, 0.35355338
      %v718 = vsel %vm478, %v717, -inf
      %719 = vmax.xlane.f32.xlu0 %v718
      %v720 = vpop.xlane.xlu0 %719
      %v721 = vsub.f32 %v717, %v720
      %v722 = vmul.f32 %v721, 1.442695
      %v723 = vpow.pop %v722
      %v724 = vsel %vm478, %v723, 0.0
      %725 = vadd.xlane.f32.xlu0 %v724
      %v726 = vpop.xlane.xlu0 %725
      %v727 = vrcp.pop %v726
      %v728 = vmul.f32 %v723, %v727
      %v729 = vpack.c.bf16 %v728, %v728
      %730 = vrot.lane.b32.xlu0 %v456, 72
      %v731 = vpop.permute.xlu0 %730
      %v733 = vsel %vm478, %v729, 0
      %v736 = vsel %vm497, %v731, 0
      %738 = vmatpush.bf16.msra.mxu0 0
      %739 = vmatpush.bf16.msra.mxu0 0
      %740 = vmatpush.bf16.msra.mxu0 0
      %741 = vmatpush.bf16.msra.mxu0 0
      %742 = vmatpush.bf16.msra.mxu0 0
      %743 = vmatpush.bf16.msra.mxu0 0
      %744 = vmatpush.bf16.msra.mxu0 0
      %745 = vmatpush.bf16.msra.mxu0 %v736
      %746 = vmatmul.bf16.gmra.mxu0 %v733
      %v747 = vpop.f32.mrf.mxu0
      %v748 = vadd.f32 0.0, %v747
      %v749 = vpop.f32.mrf.mxu0
      %750 = vdwg.mxu0
      %v751 = vpack.c.bf16 %v748, %v748
      %v752 = vld [vmem:[%s6 + $0xc] sm:$0xf]
      %v754 = vsel %vm457, %v751, 0
      %v757 = vsel %vm579, %v752, 0
      %759 = vmatpush.bf16.msra.mxu0 0
      %760 = vmatpush.bf16.msra.mxu0 0
      %761 = vmatpush.bf16.msra.mxu0 0
      %762 = vmatpush.bf16.msra.mxu0 0
      %763 = vmatpush.bf16.msra.mxu0 0
      %764 = vmatpush.bf16.msra.mxu0 0
      %765 = vmatpush.bf16.msra.mxu0 0
      %766 = vmatpush.bf16.msra.mxu0 %v757
      %767 = vmatmul.bf16.gmra.mxu0 %v754
      %v768 = vpop.f32.mrf.mxu0
      %v769 = vadd.f32 0.0, %v768
      %v770 = vpop.f32.mrf.mxu0
      %771 = vdwg.mxu0
      %v772 = vadd.f32 %v693, %v769
      %v773 = vld [vmem:[%s7] sm:$0x1]
      %v775 = vperm.slane %v773, 0
      %v777 = vadd.f32 %v772, %v775
      %v778 = vadd.f32 %v777, %v376
      %v779 = vld [vmem:[%s8] sm:$0x1]
      %v780 = vld [vmem:[%s9] sm:$0x1]
      %v781 = vsel %vm401, %v778, 0.0
      %782 = vadd.xlane.f32.xlu0 %v781
      %v783 = vpop.xlane.xlu0 %782
      %v784 = vrcp.pop 32.0
      %v785 = vmul.f32 32.0, %v784
      %v786 = vsub.f32 1.0, %v785
      %v787 = vmul.f32 %v784, %v786
      %v788 = vadd.f32 %v784, %v787
      %vm789 = vweird.f32 %v784
      %v790 = vsel %vm789, %v784, %v788
      %v791 = vmul.f32 %v783, %v790
      %v792 = vsub.f32 %v778, %v791
      %v793 = vmul.f32 %v792, %v792
      %v794 = vsel %vm401, %v793, 0.0
      %795 = vadd.xlane.f32.xlu0 %v794
      %v796 = vpop.xlane.xlu0 %795
      %v797 = vmul.f32 %v796, %v790
      %v798 = vadd.f32 %v797, 1e-05
      %v799 = vrsqrt.pop %v798
      %v800 = vmul.f32 %v799, %v798
      %v801 = vmul.f32 %v800, %v799
      %v802 = vmul.f32 0.5, %v801
      %v803 = vsub.f32 1.5, %v802
      %v804 = vmul.f32 %v799, %v803
      %vm805 = vweird.f32 %v798
      %vm806 = vweird.f32 %v799
      %vm807 = vmor %vm805, %vm806
      %v808 = vsel %vm807, %v799, %v804
      %v809 = vmul.f32 %v792, %v808
      %v811 = vperm.slane %v779, 0
      %v813 = vmul.f32 %v809, %v811
      %v815 = vperm.slane %v780, 0
      %v817 = vadd.f32 %v813, %v815
      %818 = vst.msk [vmem:[%s374] sm:$0xff] %vm401, %v817
      %p819 = scmp.lt.s32.totalorder %s21, 1
      %s820 = scalar_select %p819, %s21, 1
      %s821 = smul.addr %s820, 8
      %s822 = scalar_lea.vmem %s10, %s821
      // Predicated region
      $region61: #{transformer_forward.25} parent=59 // pred_check
        %p823 = pneg %p259
      $region62: #{transformer_forward.25} parent=59 // pred_check_branch
        %825 = sbr.rel (%p823) target = $region64
      $region63: #{transformer_forward.25} parent=59 // pred_region
        _
      $region64: #{transformer_forward.25} parent=59 // pred_fallthru
        _
    $region60: #{transformer_forward.25} parent=5 // pred_fallthru
      _
    %p826 = scmp.le.s32.totalorder 2, %s16
    // Predicated region
    $region65: #{transformer_forward.25} parent=5 // pred_check
      %p827 = pneg %p826
    $region66: #{transformer_forward.25} parent=5 // pred_check_branch
      %829 = sbr.rel (%p827) target = $region68
    $region67: #{transformer_forward.25} parent=5 // pred_region
      %s830 = ssub.s32 %s16, 2
      // Predicated region
      $region69: #{transformer_forward.25} parent=67 // pred_check
        %p831 = pneg %p265
      $region70: #{transformer_forward.25} parent=67 // pred_check_branch
        %833 = sbr.rel (%p831) target = $region72
      $region71: #{transformer_forward.25} parent=67 // pred_region
        %p834 = scmp.lt.s32.totalorder %s22, 1
        %s835 = scalar_select %p834, %s22, 1
        %s836 = smul.addr %s835, 8
        %s837 = scalar_lea.vmem %s10, %s836
      $region72: #{transformer_forward.25} parent=67 // pred_fallthru
        _
    $region68: #{transformer_forward.25} parent=5 // pred_fallthru
      _
  $region6: #{transformer_forward.25} parent=0 // loop_footer
    %s20 = sadd.s32 1, %s16
  $region7: #{transformer_forward.25} parent=0 // loop_footer_branch
    %15 = sbr.rel target = $region3
  $region8: #{transformer_forward.25} parent=0 // loop_exit
    _

// kernel: transformer_forward.29
$region0: #{transformer_forward.29}
  #allocation0 [shape = 'u32[]', space=smem, size = 0x4, offset = 0x4, fixed_abs, tag = 'smem constant byte address 0x4 - core index']
  #allocation1 [shape = 'u32[72,128]{1,0:T(1,128)}', space=vmem, size = 0x9000, scoped, tag = 'internal scratch']
  %s0 = inlined_call_operand.vmem [shape: f32[2,8,32], index: 0, kind: input, shape index: {}]
  %s1 = inlined_call_operand.vmem [shape: bf16[32,64], index: 1, kind: input, shape index: {}]
  %s2 = inlined_call_operand.hbm [shape: f32[1,64], index: 2, kind: input, shape index: {}]
  %s3 = inlined_call_operand.vmem [shape: bf16[64,32], index: 3, kind: input, shape index: {}]
  %s4 = inlined_call_operand.hbm [shape: f32[1,32], index: 4, kind: input, shape index: {}]
  %s5 = inlined_call_operand.hbm [shape: f32[1,32], index: 5, kind: input, shape index: {}]
  %s6 = inlined_call_operand.hbm [shape: f32[1,32], index: 6, kind: input, shape index: {}]
  %s7 = inlined_call_operand.vmem [shape: f32[2,8,32], index: 7, kind: output, shape index: {}]
  %s8 = sld [smem:[#allocation0]]
  $region77: #{transformer_forward.29} parent=0
    _
  %s10 = ssub.s32 1, %s8
  %s11 = scalar_select 0, %s10, %s8
  $region1: #{transformer_forward.29} parent=0
    #allocation2 [shape = 'u8[512]{0}', space=vmem, size = 0x400, scoped, tag = 'input window, operand 2, single buffered']
    #allocation3 [shape = 's32[2]{0}', space=sflag, size = 0x8, scoped, tag = 'scoped memory for transformer_forward.29']
    #allocation4 [shape = 'u8[512]{0}', space=vmem, size = 0x400, scoped, tag = 'input window, operand 4, single buffered']
    #allocation5 [shape = 's32[1]{0}', space=sflag, size = 0x4, scoped, tag = 'scoped memory for transformer_forward.29']
    #allocation6 [shape = 'u8[512]{0}', space=vmem, size = 0x400, scoped, tag = 'input window, operand 5, single buffered']
    #allocation7 [shape = 'u8[512]{0}', space=vmem, size = 0x400, scoped, tag = 'input window, operand 6, single buffered']
    #allocation8 [shape = 's32[1]{0}', space=sflag, size = 0x4, scoped, tag = 'scoped memory for transformer_forward.29']
    %12 = vsyncpa [#allocation3], 0
    %13 = vsyncpa [#allocation5], 0
    %14 = vsyncpa [#allocation8], 0
    loop: start=0, step=1, limit=4
    $region2: #{transformer_forward.29} parent=1 // loop_pre_header
      _
    $region3: #{transformer_forward.29} parent=1 // loop_header
      %s16 = sphi 0, %s20
      %p17 = scmp.ge.s32.totalorder %s16, 4
      %s26 = sphi 0, %s28
      %s29 = sphi 0, %s26
      %s30 = sphi 0, %s29
      %s46 = sphi 0, %s30
      %s50 = sphi 0, %s50
      %s52 = sphi 0, %s50
      %s53 = sphi 0, %s52
      %s67 = sphi 0, %s53
      %s71 = sphi 0, %s71
      %s73 = sphi 0, %s71
      %s74 = sphi 0, %s73
      %s88 = sphi 0, %s74
      %s92 = sphi 0, %s92
      %s94 = sphi 0, %s92
      %s95 = sphi 0, %s94
      %s109 = sphi 0, %s95
      %s113 = sphi 0, %s113
      %s115 = sphi 0, %s113
      %s116 = sphi 0, %s115
      %s130 = sphi 0, %s116
      %s134 = sphi 0, %s134
      %s136 = sphi 0, %s134
      %s137 = sphi 0, %s136
      %s151 = sphi 0, %s137
      %s155 = sphi 0, %s155
      %s157 = sphi 0, %s155
      %s158 = sphi 0, %s157
      %s172 = sphi 0, %s158
      %s178 = sphi 0, %s180
      %s181 = sphi 0, %s178
      %s182 = sphi 0, %s181
      %s198 = sphi 0, %s182
    $region4: #{transformer_forward.29} parent=1 // loop_header_branch
      %19 = sbr.rel (%p17) target = $region8
    $region5: #{transformer_forward.29} parent=1 // loop_body
      %s21 = ssub.s32 %s16, 1
      %s22 = ssub.s32 %s16, 2
      %s23 = sadd.s32 %s16, 1
      %s24 = ssub.s32 %s16, %s23
      %p25 = scmp.eq.s32.totalorder %s24, 0
      %s27 = sadd.s32 %s26, 1
      %s28 = scalar_select %p25, %s26, %s27
      %p31 = pneg %p25
      %p32 = scmp.eq.s32.totalorder %s16, 1
      %p33 = por %p31, %p32
      %p34 = scmp.ne.s32.totalorder %s26, %s29
      %p35 = scmp.eq.s32.totalorder %s16, 0
      %p36 = por %p34, %p35
      %p37 = scmp.ne.s32.totalorder %s26, %s29
      %p38 = scmp.eq.s32.totalorder %s21, 1
      %p39 = por %p37, %p38
      %p40 = scmp.ne.s32.totalorder %s29, %s30
      %p41 = scmp.eq.s32.totalorder %s21, 0
      %p42 = por %p40, %p41
      %p43 = scmp.ne.s32.totalorder %s29, %s30
      %p44 = scmp.eq.s32.totalorder %s22, 1
      %p45 = por %p43, %p44
      %p47 = scmp.ne.s32.totalorder %s30, %s46
      %p48 = scmp.eq.s32.totalorder %s22, 0
      %p49 = por %p47, %p48
      %s51 = sadd.s32 %s50, 1
      %p54 = scmp.eq.s32.totalorder %s16, 1
      %p55 = scmp.ne.s32.totalorder %s50, %s52
      %p56 = scmp.eq.s32.totalorder %s16, 0
      %p57 = por %p55, %p56
      %p58 = scmp.ne.s32.totalorder %s50, %s52
      %p59 = scmp.eq.s32.totalorder %s21, 1
      %p60 = por %p58, %p59
      %p61 = scmp.ne.s32.totalorder %s52, %s53
      %p62 = scmp.eq.s32.totalorder %s21, 0
      %p63 = por %p61, %p62
      %p64 = scmp.ne.s32.totalorder %s52, %s53
      %p65 = scmp.eq.s32.totalorder %s22, 1
      %p66 = por %p64, %p65
      %p68 = scmp.ne.s32.totalorder %s53, %s67
      %p69 = scmp.eq.s32.totalorder %s22, 0
      %p70 = por %p68, %p69
      %s72 = sadd.s32 %s71, 1
      %p75 = scmp.eq.s32.totalorder %s16, 1
      %p76 = scmp.ne.s32.totalorder %s71, %s73
      %p77 = scmp.eq.s32.totalorder %s16, 0
      %p78 = por %p76, %p77
      %p79 = scmp.ne.s32.totalorder %s71, %s73
      %p80 = scmp.eq.s32.totalorder %s21, 1
      %p81 = por %p79, %p80
      %p82 = scmp.ne.s32.totalorder %s73, %s74
      %p83 = scmp.eq.s32.totalorder %s21, 0
      %p84 = por %p82, %p83
      %p85 = scmp.ne.s32.totalorder %s73, %s74
      %p86 = scmp.eq.s32.totalorder %s22, 1
      %p87 = por %p85, %p86
      %p89 = scmp.ne.s32.totalorder %s74, %s88
      %p90 = scmp.eq.s32.totalorder %s22, 0
      %p91 = por %p89, %p90
      %s93 = sadd.s32 %s92, 1
      %p96 = scmp.eq.s32.totalorder %s16, 1
      %p97 = scmp.ne.s32.totalorder %s92, %s94
      %p98 = scmp.eq.s32.totalorder %s16, 0
      %p99 = por %p97, %p98
      %p100 = scmp.ne.s32.totalorder %s92, %s94
      %p101 = scmp.eq.s32.totalorder %s21, 1
      %p102 = por %p100, %p101
      %p103 = scmp.ne.s32.totalorder %s94, %s95
      %p104 = scmp.eq.s32.totalorder %s21, 0
      %p105 = por %p103, %p104
      %p106 = scmp.ne.s32.totalorder %s94, %s95
      %p107 = scmp.eq.s32.totalorder %s22, 1
      %p108 = por %p106, %p107
      %p110 = scmp.ne.s32.totalorder %s95, %s109
      %p111 = scmp.eq.s32.totalorder %s22, 0
      %p112 = por %p110, %p111
      %s114 = sadd.s32 %s113, 1
      %p117 = scmp.eq.s32.totalorder %s16, 1
      %p118 = scmp.ne.s32.totalorder %s113, %s115
      %p119 = scmp.eq.s32.totalorder %s16, 0
      %p120 = por %p118, %p119
      %p121 = scmp.ne.s32.totalorder %s113, %s115
      %p122 = scmp.eq.s32.totalorder %s21, 1
      %p123 = por %p121, %p122
      %p124 = scmp.ne.s32.totalorder %s115, %s116
      %p125 = scmp.eq.s32.totalorder %s21, 0
      %p126 = por %p124, %p125
      %p127 = scmp.ne.s32.totalorder %s115, %s116
      %p128 = scmp.eq.s32.totalorder %s22, 1
      %p129 = por %p127, %p128
      %p131 = scmp.ne.s32.totalorder %s116, %s130
      %p132 = scmp.eq.s32.totalorder %s22, 0
      %p133 = por %p131, %p132
      %s135 = sadd.s32 %s134, 1
      %p138 = scmp.eq.s32.totalorder %s16, 1
      %p139 = scmp.ne.s32.totalorder %s134, %s136
      %p140 = scmp.eq.s32.totalorder %s16, 0
      %p141 = por %p139, %p140
      %p142 = scmp.ne.s32.totalorder %s134, %s136
      %p143 = scmp.eq.s32.totalorder %s21, 1
      %p144 = por %p142, %p143
      %p145 = scmp.ne.s32.totalorder %s136, %s137
      %p146 = scmp.eq.s32.totalorder %s21, 0
      %p147 = por %p145, %p146
      %p148 = scmp.ne.s32.totalorder %s136, %s137
      %p149 = scmp.eq.s32.totalorder %s22, 1
      %p150 = por %p148, %p149
      %p152 = scmp.ne.s32.totalorder %s137, %s151
      %p153 = scmp.eq.s32.totalorder %s22, 0
      %p154 = por %p152, %p153
      %s156 = sadd.s32 %s155, 1
      %p159 = scmp.eq.s32.totalorder %s16, 1
      %p160 = scmp.ne.s32.totalorder %s155, %s157
      %p161 = scmp.eq.s32.totalorder %s16, 0
      %p162 = por %p160, %p161
      %p163 = scmp.ne.s32.totalorder %s155, %s157
      %p164 = scmp.eq.s32.totalorder %s21, 1
      %p165 = por %p163, %p164
      %p166 = scmp.ne.s32.totalorder %s157, %s158
      %p167 = scmp.eq.s32.totalorder %s21, 0
      %p168 = por %p166, %p167
      %p169 = scmp.ne.s32.totalorder %s157, %s158
      %p170 = scmp.eq.s32.totalorder %s22, 1
      %p171 = por %p169, %p170
      %p173 = scmp.ne.s32.totalorder %s158, %s172
      %p174 = scmp.eq.s32.totalorder %s22, 0
      %p175 = por %p173, %p174
      %s176 = ssub.s32 %s16, %s23
      %p177 = scmp.eq.s32.totalorder %s176, 0
      %s179 = sadd.s32 %s178, 1
      %s180 = scalar_select %p177, %s178, %s179
      %p183 = pneg %p177
      %p184 = scmp.eq.s32.totalorder %s16, 1
      %p185 = por %p183, %p184
      %p186 = scmp.ne.s32.totalorder %s178, %s181
      %p187 = scmp.eq.s32.totalorder %s16, 0
      %p188 = por %p186, %p187
      %p189 = scmp.ne.s32.totalorder %s178, %s181
      %p190 = scmp.eq.s32.totalorder %s21, 1
      %p191 = por %p189, %p190
      %p192 = scmp.ne.s32.totalorder %s181, %s182
      %p193 = scmp.eq.s32.totalorder %s21, 0
      %p194 = por %p192, %p193
      %p195 = scmp.ne.s32.totalorder %s181, %s182
      %p196 = scmp.eq.s32.totalorder %s22, 1
      %p197 = por %p195, %p196
      %p199 = scmp.ne.s32.totalorder %s182, %s198
      %p200 = scmp.eq.s32.totalorder %s22, 0
      %p201 = por %p199, %p200
      %p202 = scmp.le.s32.totalorder 1, %s16
      %p203 = scmp.lt.s32.totalorder %s16, 3
      %p204 = pnand %p202, %p203
      %p205 = pneg %p204
      // Predicated region
      $region9: #{transformer_forward.29} parent=5 // pred_check
        _
      $region10: #{transformer_forward.29} parent=5 // pred_check_branch
        %207 = sbr.rel (%p204) target = $region12
      $region11: #{transformer_forward.29} parent=5 // pred_region
        %s208 = ssub.s32 %s16, 1
        // Predicated region
        $region13: #{transformer_forward.29} parent=11 // pred_check
          %p209 = pneg %p63
        $region14: #{transformer_forward.29} parent=11 // pred_check_branch
          %211 = sbr.rel (%p209) target = $region16
        $region15: #{transformer_forward.29} parent=11 // pred_region
          _
        $region16: #{transformer_forward.29} parent=11 // pred_fallthru
          _
        // Predicated region
        $region17: #{transformer_forward.29} parent=11 // pred_check
          %p212 = pneg %p84
        $region18: #{transformer_forward.29} parent=11 // pred_check_branch
          %214 = sbr.rel (%p212) target = $region20
        $region19: #{transformer_forward.29} parent=11 // pred_region
          %216 = vsyncadd [#allocation3], 0
          %s218 = sshll.u32 %s2, 4
          %s219 = int_to_ptr.hbm [resolvable:$true] %s218
          %s220 = sshll.u32 [#allocation2], 4
          %s221 = int_to_ptr.vmem [resolvable:$true] %s220
          %223 = dma.hbm_to_vmem [thread:$0]  %s219, 16, %s221, [#allocation3]
        $region20: #{transformer_forward.29} parent=11 // pred_fallthru
          _
        // Predicated region
        $region21: #{transformer_forward.29} parent=11 // pred_check
          %p224 = pneg %p105
        $region22: #{transformer_forward.29} parent=11 // pred_check_branch
          %226 = sbr.rel (%p224) target = $region24
        $region23: #{transformer_forward.29} parent=11 // pred_region
          _
        $region24: #{transformer_forward.29} parent=11 // pred_fallthru
          _
        // Predicated region
        $region25: #{transformer_forward.29} parent=11 // pred_check
          %p227 = pneg %p126
        $region26: #{transformer_forward.29} parent=11 // pred_check_branch
          %229 = sbr.rel (%p227) target = $region28
        $region27: #{transformer_forward.29} parent=11 // pred_region
          %231 = vsyncadd [#allocation5], 0
          %s233 = sshll.u32 %s4, 4
          %s234 = int_to_ptr.hbm [resolvable:$true] %s233
          %s235 = sshll.u32 [#allocation4], 4
          %s236 = int_to_ptr.vmem [resolvable:$true] %s235
          %238 = dma.hbm_to_vmem [thread:$0]  %s234, 16, %s236, [#allocation5]
        $region28: #{transformer_forward.29} parent=11 // pred_fallthru
          _
        // Predicated region
        $region29: #{transformer_forward.29} parent=11 // pred_check
          %p239 = pneg %p147
        $region30: #{transformer_forward.29} parent=11 // pred_check_branch
          %241 = sbr.rel (%p239) target = $region32
        $region31: #{transformer_forward.29} parent=11 // pred_region
          %243 = vsyncadd [#allocation5], 0
          %s245 = sshll.u32 %s5, 4
          %s246 = int_to_ptr.hbm [resolvable:$true] %s245
          %s247 = sshll.u32 [#allocation6], 4
          %s248 = int_to_ptr.vmem [resolvable:$true] %s247
          %250 = dma.hbm_to_vmem [thread:$0]  %s246, 16, %s248, [#allocation5]
        $region32: #{transformer_forward.29} parent=11 // pred_fallthru
          _
        // Predicated region
        $region33: #{transformer_forward.29} parent=11 // pred_check
          %p251 = pneg %p168
        $region34: #{transformer_forward.29} parent=11 // pred_check_branch
          %253 = sbr.rel (%p251) target = $region36
        $region35: #{transformer_forward.29} parent=11 // pred_region
          %255 = vsyncadd [#allocation8], 0
          %s257 = sshll.u32 %s6, 4
          %s258 = int_to_ptr.hbm [resolvable:$true] %s257
          %s259 = sshll.u32 [#allocation7], 4
          %s260 = int_to_ptr.vmem [resolvable:$true] %s259
          %262 = dma.hbm_to_vmem [thread:$0]  %s258, 16, %s260, [#allocation8]
        $region36: #{transformer_forward.29} parent=11 // pred_fallthru
          _
      $region12: #{transformer_forward.29} parent=5 // pred_fallthru
        _
      %p263 = scmp.lt.s32.totalorder %s16, 2
      // Predicated region
      $region37: #{transformer_forward.29} parent=5 // pred_check
        %p264 = pneg %p263
      $region38: #{transformer_forward.29} parent=5 // pred_check_branch
        %266 = sbr.rel (%p264) target = $region40
      $region39: #{transformer_forward.29} parent=5 // pred_region
        // Predicated region
        $region41: #{transformer_forward.29} parent=39 // pred_check
          %p267 = pneg %p36
        $region42: #{transformer_forward.29} parent=39 // pred_check_branch
          %269 = sbr.rel (%p267) target = $region44
        $region43: #{transformer_forward.29} parent=39 // pred_region
          %p270 = scmp.lt.s32.totalorder %s16, 1
          %s271 = scalar_select %p270, %s16, 1
          %s272 = smul.addr %s271, 8
          %s273 = scalar_lea.vmem %s0, %s272
        $region44: #{transformer_forward.29} parent=39 // pred_fallthru
          _
      $region40: #{transformer_forward.29} parent=5 // pred_fallthru
        _
      %p274 = scmp.le.s32.totalorder 1, %s16
      %p275 = scmp.lt.s32.totalorder %s16, 3
      %p276 = pnand %p274, %p275
      %p277 = pneg %p276
      // Predicated region
      $region45: #{transformer_forward.29} parent=5 // pred_check
        _
      $region46: #{transformer_forward.29} parent=5 // pred_check_branch
        %279 = sbr.rel (%p276) target = $region48
      $region47: #{transformer_forward.29} parent=5 // pred_region
        %s280 = ssub.s32 %s16, 1
        // Predicated region
        $region49: #{transformer_forward.29} parent=47 // pred_check
          %p281 = pneg %p84
        $region50: #{transformer_forward.29} parent=47 // pred_check_branch
          %283 = sbr.rel (%p281) target = $region52
        $region51: #{transformer_forward.29} parent=47 // pred_region
          %285 = dma.done [#allocation3], 16
        $region52: #{transformer_forward.29} parent=47 // pred_fallthru
          _
        // Predicated region
        $region53: #{transformer_forward.29} parent=47 // pred_check
          %p286 = pneg %p126
        $region54: #{transformer_forward.29} parent=47 // pred_check_branch
          %288 = sbr.rel (%p286) target = $region56
        $region55: #{transformer_forward.29} parent=47 // pred_region
          %290 = dma.done [#allocation5], 16
        $region56: #{transformer_forward.29} parent=47 // pred_fallthru
          _
        // Predicated region
        $region57: #{transformer_forward.29} parent=47 // pred_check
          %p291 = pneg %p147
        $region58: #{transformer_forward.29} parent=47 // pred_check_branch
          %293 = sbr.rel (%p291) target = $region60
        $region59: #{transformer_forward.29} parent=47 // pred_region
          %295 = dma.done [#allocation5], 16
        $region60: #{transformer_forward.29} parent=47 // pred_fallthru
          _
        // Predicated region
        $region61: #{transformer_forward.29} parent=47 // pred_check
          %p296 = pneg %p168
        $region62: #{transformer_forward.29} parent=47 // pred_check_branch
          %298 = sbr.rel (%p296) target = $region64
        $region63: #{transformer_forward.29} parent=47 // pred_region
          %300 = dma.done [#allocation8], 16
        $region64: #{transformer_forward.29} parent=47 // pred_fallthru
          _
        %p301 = scmp.lt.s32.totalorder %s21, 1
        %s302 = scalar_select %p301, %s21, 1
        %s303 = smul.addr %s302, 8
        %s304 = scalar_lea.vmem %s0, %s303
        %p305 = pneg %p42
        %p306 = pneg %p39
        %p307 = pneg %p63
        %p308 = pneg %p60
        %p309 = pneg %p84
        %p310 = pneg %p81
        %p311 = pneg %p105
        %p312 = pneg %p102
        %p313 = pneg %p126
        %p314 = pneg %p123
        %p315 = pneg %p147
        %p316 = pneg %p144
        %p317 = pneg %p168
        %p318 = pneg %p165
        %p319 = pneg %p194
        %p320 = pneg %p191
        %p321 = scmp.lt.s32.totalorder %s21, 1
        %s322 = scalar_select %p321, %s21, 1
        %s323 = smul.addr %s322, 8
        %s324 = scalar_lea.vmem %s7, %s323
        %p325 = scmp.lt.s32.totalorder %s21, 1
        %s326 = scalar_select %p325, %s21, 1
        %s327 = smul.addr %s326, 8
        %s328 = scalar_lea.vmem %s0, %s327
        %p329 = scmp.lt.s32.totalorder %s21, 1
        %s330 = scalar_select %p329, %s21, 1
        %s331 = smul.addr %s330, 8
        %s332 = scalar_lea.vmem %s7, %s331
        %v334 = vld [vmem:[%s328] sm:$0xff]
        %v335 = vpack.c.bf16 %v334, %v334
        %v336 = vld [vmem:[%s1] sm:$0xf]
        %v337 = vld [vmem:[%s1 + $0x4] sm:$0xf]
        %v338 = vld [vmem:[%s1 + $0x8] sm:$0xf]
        %v339 = vld [vmem:[%s1 + $0xc] sm:$0xf]
        %v340 = vld [vmem:[#allocation2] sm:$0x1]
        %v342 = vperm.slane %v340, 0
        %v348 = vunpack.c.l.b16 %v336
        %v349 = vunpack.c.l.b16 %v337
        %v350 = vunpack.c.l.b16 %v338
        %v351 = vunpack.c.l.b16 %v339
        %v352 = vpack.c.b16 %v349, %v348
        %v353 = vpack.c.b16 %v351, %v350
        %vm356 = vcmask 261120
        %v358 = vsel %vm356, %v335, 0
        %360 = vmatpush.bf16.msra.mxu0 0
        %361 = vmatpush.bf16.msra.mxu0 0
        %362 = vmatpush.bf16.msra.mxu0 0
        %363 = vmatpush.bf16.msra.mxu0 0
        %364 = vmatpush.bf16.msra.mxu0 0
        %365 = vmatpush.bf16.msra.mxu0 0
        %366 = vmatpush.bf16.msra.mxu0 %v353
        %367 = vmatpush.bf16.msra.mxu0 %v352
        %368 = vmatmul.bf16.gmra.mxu0 %v358
        %v369 = vpop.f32.mrf.mxu0
        %v370 = vadd.f32 %v342, %v369
        %v371 = vpop.f32.mrf.mxu0
        %372 = vdwg.mxu0
        %v373 = vmax.f32 %v370, 0.0
        %v374 = vpack.c.bf16 %v373, %v373
        %v375 = vld [vmem:[%s3] sm:$0xf]
        %v376 = vld [vmem:[%s3 + $0x4] sm:$0xf]
        %v377 = vld [vmem:[%s3 + $0x8] sm:$0xf]
        %v378 = vld [vmem:[%s3 + $0xc] sm:$0xf]
        %v379 = vld [vmem:[%s3 + $0x10] sm:$0xf]
        %v380 = vld [vmem:[%s3 + $0x14] sm:$0xf]
        %v381 = vld [vmem:[%s3 + $0x18] sm:$0xf]
        %v382 = vld [vmem:[%s3 + $0x1c] sm:$0xf]
        %v383 = vld [vmem:[#allocation4] sm:$0x1]
        %v385 = vperm.slane %v383, 0
        %v395 = vunpack.c.l.b16 %v375
        %v396 = vunpack.c.l.b16 %v376
        %v397 = vunpack.c.l.b16 %v377
        %v398 = vunpack.c.l.b16 %v378
        %v399 = vunpack.c.l.b16 %v379
        %v400 = vunpack.c.l.b16 %v380
        %v401 = vunpack.c.l.b16 %v381
        %v402 = vunpack.c.l.b16 %v382
        %v403 = vpack.c.b16 %v396, %v395
        %v404 = vpack.c.b16 %v398, %v397
        %v405 = vpack.c.b16 %v400, %v399
        %v406 = vpack.c.b16 %v402, %v401
        %vm411 = vcmask 523264
        %v413 = vsel %vm411, %v374, 0
        %415 = vmatpush.bf16.msra.mxu0 0
        %416 = vmatpush.bf16.msra.mxu0 0
        %417 = vmatpush.bf16.msra.mxu0 0
        %418 = vmatpush.bf16.msra.mxu0 0
        %419 = vmatpush.bf16.msra.mxu0 %v406
        %420 = vmatpush.bf16.msra.mxu0 %v405
        %421 = vmatpush.bf16.msra.mxu0 %v404
        %422 = vmatpush.bf16.msra.mxu0 %v403
        %423 = vmatmul.bf16.gmra.mxu0 %v413
        %v424 = vpop.f32.mrf.mxu0
        %v425 = vadd.f32 %v385, %v424
        %v426 = vpop.f32.mrf.mxu0
        %427 = vdwg.mxu0
        %v428 = vadd.f32 %v334, %v425
        %v429 = vld [vmem:[#allocation6] sm:$0x1]
        %v430 = vld [vmem:[#allocation7] sm:$0x1]
        %v431 = vsel %vm356, %v428, 0.0
        %432 = vadd.xlane.f32.xlu0 %v431
        %v433 = vpop.xlane.xlu0 %432
        %v434 = vrcp.pop 32.0
        %v435 = vmul.f32 32.0, %v434
        %v436 = vsub.f32 1.0, %v435
        %v437 = vmul.f32 %v434, %v436
        %v438 = vadd.f32 %v434, %v437
        %vm439 = vweird.f32 %v434
        %v440 = vsel %vm439, %v434, %v438
        %v441 = vmul.f32 %v433, %v440
        %v442 = vsub.f32 %v428, %v441
        %v443 = vmul.f32 %v442, %v442
        %v444 = vsel %vm356, %v443, 0.0
        %445 = vadd.xlane.f32.xlu0 %v444
        %v446 = vpop.xlane.xlu0 %445
        %v447 = vmul.f32 %v446, %v440
        %v448 = vadd.f32 %v447, 1e-05
        %v449 = vrsqrt.pop %v448
        %v450 = vmul.f32 %v449, %v448
        %v451 = vmul.f32 %v450, %v449
        %v452 = vmul.f32 0.5, %v451
        %v453 = vsub.f32 1.5, %v452
        %v454 = vmul.f32 %v449, %v453
        %vm455 = vweird.f32 %v448
        %vm456 = vweird.f32 %v449
        %vm457 = vmor %vm455, %vm456
        %v458 = vsel %vm457, %v449, %v454
        %v459 = vmul.f32 %v442, %v458
        %v461 = vperm.slane %v429, 0
        %v463 = vmul.f32 %v459, %v461
        %v465 = vperm.slane %v430, 0
        %v467 = vadd.f32 %v463, %v465
        %468 = vst.msk [vmem:[%s332] sm:$0xff] %vm356, %v467
        %p469 = scmp.lt.s32.totalorder %s21, 1
        %s470 = scalar_select %p469, %s21, 1
        %s471 = smul.addr %s470, 8
        %s472 = scalar_lea.vmem %s7, %s471
        // Predicated region
        $region65: #{transformer_forward.29} parent=47 // pred_check
          %p473 = pneg %p191
        $region66: #{transformer_forward.29} parent=47 // pred_check_branch
          %475 = sbr.rel (%p473) target = $region68
        $region67: #{transformer_forward.29} parent=47 // pred_region
          _
        $region68: #{transformer_forward.29} parent=47 // pred_fallthru
          _
      $region48: #{transformer_forward.29} parent=5 // pred_fallthru
        _
      %p476 = scmp.le.s32.totalorder 2, %s16
      // Predicated region
      $region69: #{transformer_forward.29} parent=5 // pred_check
        %p477 = pneg %p476
      $region70: #{transformer_forward.29} parent=5 // pred_check_branch
        %479 = sbr.rel (%p477) target = $region72
      $region71: #{transformer_forward.29} parent=5 // pred_region
        %s480 = ssub.s32 %s16, 2
        // Predicated region
        $region73: #{transformer_forward.29} parent=71 // pred_check
          %p481 = pneg %p197
        $region74: #{transformer_forward.29} parent=71 // pred_check_branch
          %483 = sbr.rel (%p481) target = $region76
        $region75: #{transformer_forward.29} parent=71 // pred_region
          %p484 = scmp.lt.s32.totalorder %s22, 1
          %s485 = scalar_select %p484, %s22, 1
          %s486 = smul.addr %s485, 8
          %s487 = scalar_lea.vmem %s7, %s486
        $region76: #{transformer_forward.29} parent=71 // pred_fallthru
          _
      $region72: #{transformer_forward.29} parent=5 // pred_fallthru
        _
    $region6: #{transformer_forward.29} parent=1 // loop_footer
      %s20 = sadd.s32 1, %s16
    $region7: #{transformer_forward.29} parent=1 // loop_footer_branch
      %15 = sbr.rel target = $region3
    $region8: #{transformer_forward.29} parent=1 // loop_exit
      _
    %488 = vsyncpa [#allocation3], 1
    %s489 = scalar_lea.sflag [#allocation3], 1
    %490 = vsyncpa %s489, 1
    %491 = vsyncpa [#allocation5], 1
    %492 = vsyncpa [#allocation8], 1

// kernel: transformer_forward.27
$region0: #{transformer_forward.27}
  #allocation0 [shape = 'u32[]', space=smem, size = 0x4, offset = 0x4, fixed_abs, tag = 'smem constant byte address 0x4 - core index']
  #allocation1 [shape = 'u32[72,128]{1,0:T(1,128)}', space=vmem, size = 0x9000, scoped, tag = 'internal scratch']
  %s0 = inlined_call_operand.vmem [shape: f32[2,8,32], index: 0, kind: input, shape index: {}, may-alias: {0,1}]
  %s1 = inlined_call_operand.vmem [shape: f32[2,8,32], index: 1, kind: input, shape index: {}, may-alias: {0,1}]
  %s2 = inlined_call_operand.vmem [shape: bf16[32,32], index: 2, kind: input, shape index: {}]
  %s3 = inlined_call_operand.vmem [shape: f32[1,32], index: 3, kind: input, shape index: {}]
  %s4 = inlined_call_operand.vmem [shape: bf16[32,64], index: 4, kind: input, shape index: {}]
  %s5 = inlined_call_operand.vmem [shape: f32[1,64], index: 5, kind: input, shape index: {}]
  %s6 = inlined_call_operand.vmem [shape: bf16[32,32], index: 6, kind: input, shape index: {}]
  %s7 = inlined_call_operand.vmem [shape: f32[1,32], index: 7, kind: input, shape index: {}]
  %s8 = inlined_call_operand.hbm [shape: f32[1,32], index: 8, kind: input, shape index: {}]
  %s9 = inlined_call_operand.hbm [shape: f32[1,32], index: 9, kind: input, shape index: {}]
  %s10 = inlined_call_operand.vmem [shape: f32[2,8,32], index: 10, kind: output, shape index: {}]
  %s11 = sld [smem:[#allocation0]]
  $region81: #{transformer_forward.27} parent=0
    _
  %s13 = ssub.s32 1, %s11
  %s14 = scalar_select 0, %s13, %s11
  $region1: #{transformer_forward.27} parent=0
    #allocation2 [shape = 'u8[512]{0}', space=vmem, size = 0x400, scoped, tag = 'input window, operand 8, single buffered']
    #allocation3 [shape = 's32[2]{0}', space=sflag, size = 0x8, scoped, tag = 'scoped memory for transformer_forward.27']
    #allocation4 [shape = 'u8[512]{0}', space=vmem, size = 0x400, scoped, tag = 'input window, operand 9, single buffered']
    #allocation5 [shape = 's32[1]{0}', space=sflag, size = 0x4, scoped, tag = 'scoped memory for transformer_forward.27']
    %15 = vsyncpa [#allocation3], 0
    %16 = vsyncpa [#allocation5], 0
    loop: start=0, step=1, limit=4
    $region2: #{transformer_forward.27} parent=1 // loop_pre_header
      _
    $region3: #{transformer_forward.27} parent=1 // loop_header
      %s18 = sphi 0, %s22
      %p19 = scmp.ge.s32.totalorder %s18, 4
      %s28 = sphi 0, %s30
      %s31 = sphi 0, %s28
      %s32 = sphi 0, %s31
      %s48 = sphi 0, %s32
      %s54 = sphi 0, %s56
      %s57 = sphi 0, %s54
      %s58 = sphi 0, %s57
      %s74 = sphi 0, %s58
      %s78 = sphi 0, %s78
      %s80 = sphi 0, %s78
      %s81 = sphi 0, %s80
      %s95 = sphi 0, %s81
      %s99 = sphi 0, %s99
      %s101 = sphi 0, %s99
      %s102 = sphi 0, %s101
      %s116 = sphi 0, %s102
      %s120 = sphi 0, %s120
      %s122 = sphi 0, %s120
      %s123 = sphi 0, %s122
      %s137 = sphi 0, %s123
      %s141 = sphi 0, %s141
      %s143 = sphi 0, %s141
      %s144 = sphi 0, %s143
      %s158 = sphi 0, %s144
      %s162 = sphi 0, %s162
      %s164 = sphi 0, %s162
      %s165 = sphi 0, %s164
      %s179 = sphi 0, %s165
      %s183 = sphi 0, %s183
      %s185 = sphi 0, %s183
      %s186 = sphi 0, %s185
      %s200 = sphi 0, %s186
      %s204 = sphi 0, %s204
      %s206 = sphi 0, %s204
      %s207 = sphi 0, %s206
      %s221 = sphi 0, %s207
      %s225 = sphi 0, %s225
      %s227 = sphi 0, %s225
      %s228 = sphi 0, %s227
      %s242 = sphi 0, %s228
      %s248 = sphi 0, %s250
      %s251 = sphi 0, %s248
      %s252 = sphi 0, %s251
      %s268 = sphi 0, %s252
    $region4: #{transformer_forward.27} parent=1 // loop_header_branch
      %21 = sbr.rel (%p19) target = $region8
    $region5: #{transformer_forward.27} parent=1 // loop_body
      %s23 = ssub.s32 %s18, 1
      %s24 = ssub.s32 %s18, 2
      %s25 = sadd.s32 %s18, 1
      %s26 = ssub.s32 %s18, %s25
      %p27 = scmp.eq.s32.totalorder %s26, 0
      %s29 = sadd.s32 %s28, 1
      %s30 = scalar_select %p27, %s28, %s29
      %p33 = pneg %p27
      %p34 = scmp.eq.s32.totalorder %s18, 1
      %p35 = por %p33, %p34
      %p36 = scmp.ne.s32.totalorder %s28, %s31
      %p37 = scmp.eq.s32.totalorder %s18, 0
      %p38 = por %p36, %p37
      %p39 = scmp.ne.s32.totalorder %s28, %s31
      %p40 = scmp.eq.s32.totalorder %s23, 1
      %p41 = por %p39, %p40
      %p42 = scmp.ne.s32.totalorder %s31, %s32
      %p43 = scmp.eq.s32.totalorder %s23, 0
      %p44 = por %p42, %p43
      %p45 = scmp.ne.s32.totalorder %s31, %s32
      %p46 = scmp.eq.s32.totalorder %s24, 1
      %p47 = por %p45, %p46
      %p49 = scmp.ne.s32.totalorder %s32, %s48
      %p50 = scmp.eq.s32.totalorder %s24, 0
      %p51 = por %p49, %p50
      %s52 = ssub.s32 %s18, %s25
      %p53 = scmp.eq.s32.totalorder %s52, 0
      %s55 = sadd.s32 %s54, 1
      %s56 = scalar_select %p53, %s54, %s55
      %p59 = pneg %p53
      %p60 = scmp.eq.s32.totalorder %s18, 1
      %p61 = por %p59, %p60
      %p62 = scmp.ne.s32.totalorder %s54, %s57
      %p63 = scmp.eq.s32.totalorder %s18, 0
      %p64 = por %p62, %p63
      %p65 = scmp.ne.s32.totalorder %s54, %s57
      %p66 = scmp.eq.s32.totalorder %s23, 1
      %p67 = por %p65, %p66
      %p68 = scmp.ne.s32.totalorder %s57, %s58
      %p69 = scmp.eq.s32.totalorder %s23, 0
      %p70 = por %p68, %p69
      %p71 = scmp.ne.s32.totalorder %s57, %s58
      %p72 = scmp.eq.s32.totalorder %s24, 1
      %p73 = por %p71, %p72
      %p75 = scmp.ne.s32.totalorder %s58, %s74
      %p76 = scmp.eq.s32.totalorder %s24, 0
      %p77 = por %p75, %p76
      %s79 = sadd.s32 %s78, 1
      %p82 = scmp.eq.s32.totalorder %s18, 1
      %p83 = scmp.ne.s32.totalorder %s78, %s80
      %p84 = scmp.eq.s32.totalorder %s18, 0
      %p85 = por %p83, %p84
      %p86 = scmp.ne.s32.totalorder %s78, %s80
      %p87 = scmp.eq.s32.totalorder %s23, 1
      %p88 = por %p86, %p87
      %p89 = scmp.ne.s32.totalorder %s80, %s81
      %p90 = scmp.eq.s32.totalorder %s23, 0
      %p91 = por %p89, %p90
      %p92 = scmp.ne.s32.totalorder %s80, %s81
      %p93 = scmp.eq.s32.totalorder %s24, 1
      %p94 = por %p92, %p93
      %p96 = scmp.ne.s32.totalorder %s81, %s95
      %p97 = scmp.eq.s32.totalorder %s24, 0
      %p98 = por %p96, %p97
      %s100 = sadd.s32 %s99, 1
      %p103 = scmp.eq.s32.totalorder %s18, 1
      %p104 = scmp.ne.s32.totalorder %s99, %s101
      %p105 = scmp.eq.s32.totalorder %s18, 0
      %p106 = por %p104, %p105
      %p107 = scmp.ne.s32.totalorder %s99, %s101
      %p108 = scmp.eq.s32.totalorder %s23, 1
      %p109 = por %p107, %p108
      %p110 = scmp.ne.s32.totalorder %s101, %s102
      %p111 = scmp.eq.s32.totalorder %s23, 0
      %p112 = por %p110, %p111
      %p113 = scmp.ne.s32.totalorder %s101, %s102
      %p114 = scmp.eq.s32.totalorder %s24, 1
      %p115 = por %p113, %p114
      %p117 = scmp.ne.s32.totalorder %s102, %s116
      %p118 = scmp.eq.s32.totalorder %s24, 0
      %p119 = por %p117, %p118
      %s121 = sadd.s32 %s120, 1
      %p124 = scmp.eq.s32.totalorder %s18, 1
      %p125 = scmp.ne.s32.totalorder %s120, %s122
      %p126 = scmp.eq.s32.totalorder %s18, 0
      %p127 = por %p125, %p126
      %p128 = scmp.ne.s32.totalorder %s120, %s122
      %p129 = scmp.eq.s32.totalorder %s23, 1
      %p130 = por %p128, %p129
      %p131 = scmp.ne.s32.totalorder %s122, %s123
      %p132 = scmp.eq.s32.totalorder %s23, 0
      %p133 = por %p131, %p132
      %p134 = scmp.ne.s32.totalorder %s122, %s123
      %p135 = scmp.eq.s32.totalorder %s24, 1
      %p136 = por %p134, %p135
      %p138 = scmp.ne.s32.totalorder %s123, %s137
      %p139 = scmp.eq.s32.totalorder %s24, 0
      %p140 = por %p138, %p139
      %s142 = sadd.s32 %s141, 1
      %p145 = scmp.eq.s32.totalorder %s18, 1
      %p146 = scmp.ne.s32.totalorder %s141, %s143
      %p147 = scmp.eq.s32.totalorder %s18, 0
      %p148 = por %p146, %p147
      %p149 = scmp.ne.s32.totalorder %s141, %s143
      %p150 = scmp.eq.s32.totalorder %s23, 1
      %p151 = por %p149, %p150
      %p152 = scmp.ne.s32.totalorder %s143, %s144
      %p153 = scmp.eq.s32.totalorder %s23, 0
      %p154 = por %p152, %p153
      %p155 = scmp.ne.s32.totalorder %s143, %s144
      %p156 = scmp.eq.s32.totalorder %s24, 1
      %p157 = por %p155, %p156
      %p159 = scmp.ne.s32.totalorder %s144, %s158
      %p160 = scmp.eq.s32.totalorder %s24, 0
      %p161 = por %p159, %p160
      %s163 = sadd.s32 %s162, 1
      %p166 = scmp.eq.s32.totalorder %s18, 1
      %p167 = scmp.ne.s32.totalorder %s162, %s164
      %p168 = scmp.eq.s32.totalorder %s18, 0
      %p169 = por %p167, %p168
      %p170 = scmp.ne.s32.totalorder %s162, %s164
      %p171 = scmp.eq.s32.totalorder %s23, 1
      %p172 = por %p170, %p171
      %p173 = scmp.ne.s32.totalorder %s164, %s165
      %p174 = scmp.eq.s32.totalorder %s23, 0
      %p175 = por %p173, %p174
      %p176 = scmp.ne.s32.totalorder %s164, %s165
      %p177 = scmp.eq.s32.totalorder %s24, 1
      %p178 = por %p176, %p177
      %p180 = scmp.ne.s32.totalorder %s165, %s179
      %p181 = scmp.eq.s32.totalorder %s24, 0
      %p182 = por %p180, %p181
      %s184 = sadd.s32 %s183, 1
      %p187 = scmp.eq.s32.totalorder %s18, 1
      %p188 = scmp.ne.s32.totalorder %s183, %s185
      %p189 = scmp.eq.s32.totalorder %s18, 0
      %p190 = por %p188, %p189
      %p191 = scmp.ne.s32.totalorder %s183, %s185
      %p192 = scmp.eq.s32.totalorder %s23, 1
      %p193 = por %p191, %p192
      %p194 = scmp.ne.s32.totalorder %s185, %s186
      %p195 = scmp.eq.s32.totalorder %s23, 0
      %p196 = por %p194, %p195
      %p197 = scmp.ne.s32.totalorder %s185, %s186
      %p198 = scmp.eq.s32.totalorder %s24, 1
      %p199 = por %p197, %p198
      %p201 = scmp.ne.s32.totalorder %s186, %s200
      %p202 = scmp.eq.s32.totalorder %s24, 0
      %p203 = por %p201, %p202
      %s205 = sadd.s32 %s204, 1
      %p208 = scmp.eq.s32.totalorder %s18, 1
      %p209 = scmp.ne.s32.totalorder %s204, %s206
      %p210 = scmp.eq.s32.totalorder %s18, 0
      %p211 = por %p209, %p210
      %p212 = scmp.ne.s32.totalorder %s204, %s206
      %p213 = scmp.eq.s32.totalorder %s23, 1
      %p214 = por %p212, %p213
      %p215 = scmp.ne.s32.totalorder %s206, %s207
      %p216 = scmp.eq.s32.totalorder %s23, 0
      %p217 = por %p215, %p216
      %p218 = scmp.ne.s32.totalorder %s206, %s207
      %p219 = scmp.eq.s32.totalorder %s24, 1
      %p220 = por %p218, %p219
      %p222 = scmp.ne.s32.totalorder %s207, %s221
      %p223 = scmp.eq.s32.totalorder %s24, 0
      %p224 = por %p222, %p223
      %s226 = sadd.s32 %s225, 1
      %p229 = scmp.eq.s32.totalorder %s18, 1
      %p230 = scmp.ne.s32.totalorder %s225, %s227
      %p231 = scmp.eq.s32.totalorder %s18, 0
      %p232 = por %p230, %p231
      %p233 = scmp.ne.s32.totalorder %s225, %s227
      %p234 = scmp.eq.s32.totalorder %s23, 1
      %p235 = por %p233, %p234
      %p236 = scmp.ne.s32.totalorder %s227, %s228
      %p237 = scmp.eq.s32.totalorder %s23, 0
      %p238 = por %p236, %p237
      %p239 = scmp.ne.s32.totalorder %s227, %s228
      %p240 = scmp.eq.s32.totalorder %s24, 1
      %p241 = por %p239, %p240
      %p243 = scmp.ne.s32.totalorder %s228, %s242
      %p244 = scmp.eq.s32.totalorder %s24, 0
      %p245 = por %p243, %p244
      %s246 = ssub.s32 %s18, %s25
      %p247 = scmp.eq.s32.totalorder %s246, 0
      %s249 = sadd.s32 %s248, 1
      %s250 = scalar_select %p247, %s248, %s249
      %p253 = pneg %p247
      %p254 = scmp.eq.s32.totalorder %s18, 1
      %p255 = por %p253, %p254
      %p256 = scmp.ne.s32.totalorder %s248, %s251
      %p257 = scmp.eq.s32.totalorder %s18, 0
      %p258 = por %p256, %p257
      %p259 = scmp.ne.s32.totalorder %s248, %s251
      %p260 = scmp.eq.s32.totalorder %s23, 1
      %p261 = por %p259, %p260
      %p262 = scmp.ne.s32.totalorder %s251, %s252
      %p263 = scmp.eq.s32.totalorder %s23, 0
      %p264 = por %p262, %p263
      %p265 = scmp.ne.s32.totalorder %s251, %s252
      %p266 = scmp.eq.s32.totalorder %s24, 1
      %p267 = por %p265, %p266
      %p269 = scmp.ne.s32.totalorder %s252, %s268
      %p270 = scmp.eq.s32.totalorder %s24, 0
      %p271 = por %p269, %p270
      %p272 = scmp.le.s32.totalorder 1, %s18
      %p273 = scmp.lt.s32.totalorder %s18, 3
      %p274 = pnand %p272, %p273
      %p275 = pneg %p274
      // Predicated region
      $region9: #{transformer_forward.27} parent=5 // pred_check
        _
      $region10: #{transformer_forward.27} parent=5 // pred_check_branch
        %277 = sbr.rel (%p274) target = $region12
      $region11: #{transformer_forward.27} parent=5 // pred_region
        %s278 = ssub.s32 %s18, 1
        // Predicated region
        $region13: #{transformer_forward.27} parent=11 // pred_check
          %p279 = pneg %p91
        $region14: #{transformer_forward.27} parent=11 // pred_check_branch
          %281 = sbr.rel (%p279) target = $region16
        $region15: #{transformer_forward.27} parent=11 // pred_region
          _
        $region16: #{transformer_forward.27} parent=11 // pred_fallthru
          _
        // Predicated region
        $region17: #{transformer_forward.27} parent=11 // pred_check
          %p282 = pneg %p112
        $region18: #{transformer_forward.27} parent=11 // pred_check_branch
          %284 = sbr.rel (%p282) target = $region20
        $region19: #{transformer_forward.27} parent=11 // pred_region
          _
        $region20: #{transformer_forward.27} parent=11 // pred_fallthru
          _
        // Predicated region
        $region21: #{transformer_forward.27} parent=11 // pred_check
          %p285 = pneg %p133
        $region22: #{transformer_forward.27} parent=11 // pred_check_branch
          %287 = sbr.rel (%p285) target = $region24
        $region23: #{transformer_forward.27} parent=11 // pred_region
          _
        $region24: #{transformer_forward.27} parent=11 // pred_fallthru
          _
        // Predicated region
        $region25: #{transformer_forward.27} parent=11 // pred_check
          %p288 = pneg %p154
        $region26: #{transformer_forward.27} parent=11 // pred_check_branch
          %290 = sbr.rel (%p288) target = $region28
        $region27: #{transformer_forward.27} parent=11 // pred_region
          _
        $region28: #{transformer_forward.27} parent=11 // pred_fallthru
          _
        // Predicated region
        $region29: #{transformer_forward.27} parent=11 // pred_check
          %p291 = pneg %p175
        $region30: #{transformer_forward.27} parent=11 // pred_check_branch
          %293 = sbr.rel (%p291) target = $region32
        $region31: #{transformer_forward.27} parent=11 // pred_region
          _
        $region32: #{transformer_forward.27} parent=11 // pred_fallthru
          _
        // Predicated region
        $region33: #{transformer_forward.27} parent=11 // pred_check
          %p294 = pneg %p196
        $region34: #{transformer_forward.27} parent=11 // pred_check_branch
          %296 = sbr.rel (%p294) target = $region36
        $region35: #{transformer_forward.27} parent=11 // pred_region
          _
        $region36: #{transformer_forward.27} parent=11 // pred_fallthru
          _
        // Predicated region
        $region37: #{transformer_forward.27} parent=11 // pred_check
          %p297 = pneg %p217
        $region38: #{transformer_forward.27} parent=11 // pred_check_branch
          %299 = sbr.rel (%p297) target = $region40
        $region39: #{transformer_forward.27} parent=11 // pred_region
          %301 = vsyncadd [#allocation3], 0
          %s303 = sshll.u32 %s8, 4
          %s304 = int_to_ptr.hbm [resolvable:$true] %s303
          %s305 = sshll.u32 [#allocation2], 4
          %s306 = int_to_ptr.vmem [resolvable:$true] %s305
          %308 = dma.hbm_to_vmem [thread:$0]  %s304, 16, %s306, [#allocation3]
        $region40: #{transformer_forward.27} parent=11 // pred_fallthru
          _
        // Predicated region
        $region41: #{transformer_forward.27} parent=11 // pred_check
          %p309 = pneg %p238
        $region42: #{transformer_forward.27} parent=11 // pred_check_branch
          %311 = sbr.rel (%p309) target = $region44
        $region43: #{transformer_forward.27} parent=11 // pred_region
          %313 = vsyncadd [#allocation5], 0
          %s315 = sshll.u32 %s9, 4
          %s316 = int_to_ptr.hbm [resolvable:$true] %s315
          %s317 = sshll.u32 [#allocation4], 4
          %s318 = int_to_ptr.vmem [resolvable:$true] %s317
          %320 = dma.hbm_to_vmem [thread:$0]  %s316, 16, %s318, [#allocation5]
        $region44: #{transformer_forward.27} parent=11 // pred_fallthru
          _
      $region12: #{transformer_forward.27} parent=5 // pred_fallthru
        _
      %p321 = scmp.lt.s32.totalorder %s18, 2
      // Predicated region
      $region45: #{transformer_forward.27} parent=5 // pred_check
        %p322 = pneg %p321
      $region46: #{transformer_forward.27} parent=5 // pred_check_branch
        %324 = sbr.rel (%p322) target = $region48
      $region47: #{transformer_forward.27} parent=5 // pred_region
        // Predicated region
        $region49: #{transformer_forward.27} parent=47 // pred_check
          %p325 = pneg %p38
        $region50: #{transformer_forward.27} parent=47 // pred_check_branch
          %327 = sbr.rel (%p325) target = $region52
        $region51: #{transformer_forward.27} parent=47 // pred_region
          %p328 = scmp.lt.s32.totalorder %s18, 1
          %s329 = scalar_select %p328, %s18, 1
          %s330 = smul.addr %s329, 8
          %s331 = scalar_lea.vmem %s0, %s330
        $region52: #{transformer_forward.27} parent=47 // pred_fallthru
          _
        // Predicated region
        $region53: #{transformer_forward.27} parent=47 // pred_check
          %p332 = pneg %p64
        $region54: #{transformer_forward.27} parent=47 // pred_check_branch
          %334 = sbr.rel (%p332) target = $region56
        $region55: #{transformer_forward.27} parent=47 // pred_region
          %p335 = scmp.lt.s32.totalorder %s18, 1
          %s336 = scalar_select %p335, %s18, 1
          %s337 = smul.addr %s336, 8
          %s338 = scalar_lea.vmem %s1, %s337
        $region56: #{transformer_forward.27} parent=47 // pred_fallthru
          _
      $region48: #{transformer_forward.27} parent=5 // pred_fallthru
        _
      %p339 = scmp.le.s32.totalorder 1, %s18
      %p340 = scmp.lt.s32.totalorder %s18, 3
      %p341 = pnand %p339, %p340
      %p342 = pneg %p341
      // Predicated region
      $region57: #{transformer_forward.27} parent=5 // pred_check
        _
      $region58: #{transformer_forward.27} parent=5 // pred_check_branch
        %344 = sbr.rel (%p341) target = $region60
      $region59: #{transformer_forward.27} parent=5 // pred_region
        %s345 = ssub.s32 %s18, 1
        // Predicated region
        $region61: #{transformer_forward.27} parent=59 // pred_check
          %p346 = pneg %p217
        $region62: #{transformer_forward.27} parent=59 // pred_check_branch
          %348 = sbr.rel (%p346) target = $region64
        $region63: #{transformer_forward.27} parent=59 // pred_region
          %350 = dma.done [#allocation3], 16
        $region64: #{transformer_forward.27} parent=59 // pred_fallthru
          _
        // Predicated region
        $region65: #{transformer_forward.27} parent=59 // pred_check
          %p351 = pneg %p238
        $region66: #{transformer_forward.27} parent=59 // pred_check_branch
          %353 = sbr.rel (%p351) target = $region68
        $region67: #{transformer_forward.27} parent=59 // pred_region
          %355 = dma.done [#allocation5], 16
        $region68: #{transformer_forward.27} parent=59 // pred_fallthru
          _
        %p356 = scmp.lt.s32.totalorder %s23, 1
        %s357 = scalar_select %p356, %s23, 1
        %s358 = smul.addr %s357, 8
        %s359 = scalar_lea.vmem %s0, %s358
        %p360 = pneg %p44
        %p361 = pneg %p41
        %p362 = scmp.lt.s32.totalorder %s23, 1
        %s363 = scalar_select %p362, %s23, 1
        %s364 = smul.addr %s363, 8
        %s365 = scalar_lea.vmem %s1, %s364
        %p366 = pneg %p70
        %p367 = pneg %p67
        %p368 = pneg %p91
        %p369 = pneg %p88
        %p370 = pneg %p112
        %p371 = pneg %p109
        %p372 = pneg %p133
        %p373 = pneg %p130
        %p374 = pneg %p154
        %p375 = pneg %p151
        %p376 = pneg %p175
        %p377 = pneg %p172
        %p378 = pneg %p196
        %p379 = pneg %p193
        %p380 = pneg %p217
        %p381 = pneg %p214
        %p382 = pneg %p238
        %p383 = pneg %p235
        %p384 = pneg %p264
        %p385 = pneg %p261
        %p386 = scmp.lt.s32.totalorder %s23, 1
        %s387 = scalar_select %p386, %s23, 1
        %s388 = smul.addr %s387, 8
        %s389 = scalar_lea.vmem %s10, %s388
        %p390 = scmp.lt.s32.totalorder %s23, 1
        %s391 = scalar_select %p390, %s23, 1
        %s392 = smul.addr %s391, 8
        %s393 = scalar_lea.vmem %s0, %s392
        %p394 = scmp.lt.s32.totalorder %s23, 1
        %s395 = scalar_select %p394, %s23, 1
        %s396 = smul.addr %s395, 8
        %s397 = scalar_lea.vmem %s1, %s396
        %p398 = scmp.lt.s32.totalorder %s23, 1
        %s399 = scalar_select %p398, %s23, 1
        %s400 = smul.addr %s399, 8
        %s401 = scalar_lea.vmem %s10, %s400
        %v403 = vld [vmem:[%s393] sm:$0xff]
        %v404 = vld [vmem:[%s397] sm:$0xff]
        %v405 = vpack.c.bf16 %v403, %v403
        %v406 = vpack.c.bf16 %v404, %v404
        %v407 = vld [vmem:[%s2] sm:$0xf]
        %v408 = vld [vmem:[%s2 + $0x4] sm:$0xf]
        %v409 = vld [vmem:[%s2 + $0x8] sm:$0xf]
        %v410 = vld [vmem:[%s2 + $0xc] sm:$0xf]
        %v411 = vld [vmem:[%s3] sm:$0x1]
        %v413 = vperm.slane %v411, 0
        %v419 = vunpack.c.l.b16 %v407
        %v420 = vunpack.c.l.b16 %v408
        %v421 = vunpack.c.l.b16 %v409
        %v422 = vunpack.c.l.b16 %v410
        %v423 = vpack.c.b16 %v420, %v419
        %v424 = vpack.c.b16 %v422, %v421
        %vm427 = vcmask 261120
        %v429 = vsel %vm427, %v405, 0
        %431 = vmatpush.bf16.msra.mxu0 0
        %432 = vmatpush.bf16.msra.mxu0 0
        %433 = vmatpush.bf16.msra.mxu0 0
        %434 = vmatpush.bf16.msra.mxu0 0
        %435 = vmatpush.bf16.msra.mxu0 0
        %436 = vmatpush.bf16.msra.mxu0 0
        %437 = vmatpush.bf16.msra.mxu0 %v424
        %438 = vmatpush.bf16.msra.mxu0 %v423
        %439 = vmatmul.bf16.gmra.mxu0 %v429
        %v440 = vpop.f32.mrf.mxu0
        %v441 = vadd.f32 %v413, %v440
        %v442 = vpop.f32.mrf.mxu0
        %443 = vdwg.mxu0
        %v444 = vld [vmem:[%s4] sm:$0xf]
        %v445 = vld [vmem:[%s4 + $0x4] sm:$0xf]
        %v446 = vld [vmem:[%s4 + $0x8] sm:$0xf]
        %v447 = vld [vmem:[%s4 + $0xc] sm:$0xf]
        %v448 = vld [vmem:[%s5] sm:$0x1]
        %v450 = vperm.slane %v448, 0
        %v456 = vunpack.c.l.b16 %v444
        %v457 = vunpack.c.l.b16 %v445
        %v458 = vunpack.c.l.b16 %v446
        %v459 = vunpack.c.l.b16 %v447
        %v460 = vpack.c.b16 %v457, %v456
        %v461 = vpack.c.b16 %v459, %v458
        %v465 = vsel %vm427, %v406, 0
        %467 = vmatpush.bf16.msra.mxu0 0
        %468 = vmatpush.bf16.msra.mxu0 0
        %469 = vmatpush.bf16.msra.mxu0 0
        %470 = vmatpush.bf16.msra.mxu0 0
        %471 = vmatpush.bf16.msra.mxu0 0
        %472 = vmatpush.bf16.msra.mxu0 0
        %473 = vmatpush.bf16.msra.mxu0 %v461
        %474 = vmatpush.bf16.msra.mxu0 %v460
        %475 = vmatmul.bf16.gmra.mxu0 %v465
        %v476 = vpop.f32.mrf.mxu0
        %v477 = vadd.f32 %v450, %v476
        %v478 = vpop.f32.mrf.mxu0
        %479 = vdwg.mxu0
        %v480 = vlaneseq
        %v481 = vshrl.u32 %v480, 7
        %v482 = vlaneseq
        %v483 = vand.u32 %v482, 127
        %vm484 = vcmp.le.s32.totalorder %v483, %v481
        %v485 = vsel %vm484, 0.0, -1e+09
        %v486 = vpack.c.bf16 %v441, %v441
        %v487 = vpack.c.bf16 %v477, %v477
        %vm488 = vcmask 64512
        %v490 = vsel %vm488, %v486, 0
        %v493 = vsel %vm488, %v487, 0
        %495 = vmatpush.bf16.xpose.msra.mxu0 0
        %496 = vmatpush.bf16.xpose.msra.mxu0 0
        %497 = vmatpush.bf16.xpose.msra.mxu0 0
        %498 = vmatpush.bf16.xpose.msra.mxu0 0
        %499 = vmatpush.bf16.xpose.msra.mxu0 0
        %500 = vmatpush.bf16.xpose.msra.mxu0 0
        %501 = vmatpush.bf16.xpose.msra.mxu0 0
        %502 = vmatpush.bf16.xpose.msra.mxu0 %v493
        %503 = vmatmul.bf16.gmra.mxu0 %v490
        %v504 = vpop.f32.mrf.mxu0
        %v505 = vadd.f32 0.0, %v504
        %v506 = vpop.f32.mrf.mxu0
        %507 = vdwg.mxu0
        %v508 = vmul.f32 %v505, 0.35355338
        %v509 = vadd.f32 %v508, %v485
        %v510 = vsel %vm488, %v509, -inf
        %511 = vmax.xlane.f32.xlu0 %v510
        %v512 = vpop.xlane.xlu0 %511
        %v513 = vsub.f32 %v509, %v512
        %v514 = vmul.f32 %v513, 1.442695
        %v515 = vpow.pop %v514
        %v516 = vsel %vm488, %v515, 0.0
        %517 = vadd.xlane.f32.xlu0 %v516
        %v518 = vpop.xlane.xlu0 %517
        %v519 = vrcp.pop %v518
        %v520 = vmul.f32 %v515, %v519
        %v521 = vpack.c.bf16 %v520, %v520
        %523 = vrot.lane.b32.xlu0 %v487, 96
        %v524 = vpop.permute.xlu0 %523
        %v526 = vsel %vm488, %v521, 0
        %vm528 = vcmask 1043456
        %v530 = vsel %vm528, %v524, 0
        %532 = vmatpush.bf16.msra.mxu0 0
        %533 = vmatpush.bf16.msra.mxu0 0
        %534 = vmatpush.bf16.msra.mxu0 0
        %535 = vmatpush.bf16.msra.mxu0 0
        %536 = vmatpush.bf16.msra.mxu0 0
        %537 = vmatpush.bf16.msra.mxu0 0
        %538 = vmatpush.bf16.msra.mxu0 0
        %539 = vmatpush.bf16.msra.mxu0 %v530
        %540 = vmatmul.bf16.gmra.mxu0 %v526
        %v541 = vpop.f32.mrf.mxu0
        %v542 = vadd.f32 0.0, %v541
        %v543 = vpop.f32.mrf.mxu0
        %544 = vdwg.mxu0
        %v545 = vpack.c.bf16 %v542, %v542
        %v546 = vld [vmem:[%s6] sm:$0xf]
        %548 = vrot.lane.b32.xlu0 %v486, 120
        %v549 = vpop.permute.xlu0 %548
        %550 = vrot.lane.b32.xlu0 %v487, 120
        %v551 = vpop.permute.xlu0 %550
        %v553 = vsel %vm488, %v549, 0
        %v556 = vsel %vm488, %v551, 0
        %558 = vmatpush.bf16.xpose.msra.mxu0 0
        %559 = vmatpush.bf16.xpose.msra.mxu0 0
        %560 = vmatpush.bf16.xpose.msra.mxu0 0
        %561 = vmatpush.bf16.xpose.msra.mxu0 0
        %562 = vmatpush.bf16.xpose.msra.mxu0 0
        %563 = vmatpush.bf16.xpose.msra.mxu0 0
        %564 = vmatpush.bf16.xpose.msra.mxu0 0
        %565 = vmatpush.bf16.xpose.msra.mxu0 %v556
        %566 = vmatmul.bf16.gmra.mxu0 %v553
        %v567 = vpop.f32.mrf.mxu0
        %v568 = vadd.f32 0.0, %v567
        %v569 = vpop.f32.mrf.mxu0
        %570 = vdwg.mxu0
        %v571 = vmul.f32 %v568, 0.35355338
        %v572 = vadd.f32 %v571, %v485
        %v573 = vsel %vm488, %v572, -inf
        %574 = vmax.xlane.f32.xlu0 %v573
        %v575 = vpop.xlane.xlu0 %574
        %v576 = vsub.f32 %v572, %v575
        %v577 = vmul.f32 %v576, 1.442695
        %v578 = vpow.pop %v577
        %v579 = vsel %vm488, %v578, 0.0
        %580 = vadd.xlane.f32.xlu0 %v579
        %v581 = vpop.xlane.xlu0 %580
        %v582 = vrcp.pop %v581
        %v583 = vmul.f32 %v578, %v582
        %v584 = vpack.c.bf16 %v583, %v583
        %585 = vrot.lane.b32.xlu0 %v487, 88
        %v586 = vpop.permute.xlu0 %585
        %v588 = vsel %vm488, %v584, 0
        %v591 = vsel %vm528, %v586, 0
        %593 = vmatpush.bf16.msra.mxu0 0
        %594 = vmatpush.bf16.msra.mxu0 0
        %595 = vmatpush.bf16.msra.mxu0 0
        %596 = vmatpush.bf16.msra.mxu0 0
        %597 = vmatpush.bf16.msra.mxu0 0
        %598 = vmatpush.bf16.msra.mxu0 0
        %599 = vmatpush.bf16.msra.mxu0 0
        %600 = vmatpush.bf16.msra.mxu0 %v591
        %601 = vmatmul.bf16.gmra.mxu0 %v588
        %v602 = vpop.f32.mrf.mxu0
        %v603 = vadd.f32 0.0, %v602
        %v604 = vpop.f32.mrf.mxu0
        %605 = vdwg.mxu0
        %v606 = vpack.c.bf16 %v603, %v603
        %v607 = vld [vmem:[%s6 + $0x4] sm:$0xf]
        %v609 = vsel %vm488, %v606, 0
        %v612 = vsel %vm528, %v607, 0
        %614 = vmatpush.bf16.msra.mxu0 0
        %615 = vmatpush.bf16.msra.mxu0 0
        %616 = vmatpush.bf16.msra.mxu0 0
        %617 = vmatpush.bf16.msra.mxu0 0
        %618 = vmatpush.bf16.msra.mxu0 0
        %619 = vmatpush.bf16.msra.mxu0 0
        %620 = vmatpush.bf16.msra.mxu0 0
        %621 = vmatpush.bf16.msra.mxu0 %v612
        %622 = vmatmul.bf16.gmra.mxu0 %v609
        %v623 = vpop.f32.mrf.mxu0
        %v624 = vadd.f32 0.0, %v623
        %v625 = vpop.f32.mrf.mxu0
        %626 = vdwg.mxu0
        %v628 = vsel %vm488, %v545, 0
        %v631 = vsel %vm528, %v546, 0
        %633 = vmatpush.bf16.msra.mxu0 0
        %634 = vmatpush.bf16.msra.mxu0 0
        %635 = vmatpush.bf16.msra.mxu0 0
        %636 = vmatpush.bf16.msra.mxu0 0
        %637 = vmatpush.bf16.msra.mxu0 0
        %638 = vmatpush.bf16.msra.mxu0 0
        %639 = vmatpush.bf16.msra.mxu0 0
        %640 = vmatpush.bf16.msra.mxu0 %v631
        %641 = vmatmul.bf16.gmra.mxu0 %v628
        %v642 = vpop.f32.mrf.mxu0
        %v643 = vadd.f32 %v624, %v642
        %v644 = vpop.f32.mrf.mxu0
        %645 = vdwg.mxu0
        %646 = vrot.lane.b32.xlu0 %v486, 112
        %v647 = vpop.permute.xlu0 %646
        %648 = vrot.lane.b32.xlu0 %v487, 112
        %v649 = vpop.permute.xlu0 %648
        %v651 = vsel %vm488, %v647, 0
        %v654 = vsel %vm488, %v649, 0
        %656 = vmatpush.bf16.xpose.msra.mxu0 0
        %657 = vmatpush.bf16.xpose.msra.mxu0 0
        %658 = vmatpush.bf16.xpose.msra.mxu0 0
        %659 = vmatpush.bf16.xpose.msra.mxu0 0
        %660 = vmatpush.bf16.xpose.msra.mxu0 0
        %661 = vmatpush.bf16.xpose.msra.mxu0 0
        %662 = vmatpush.bf16.xpose.msra.mxu0 0
        %663 = vmatpush.bf16.xpose.msra.mxu0 %v654
        %664 = vmatmul.bf16.gmra.mxu0 %v651
        %v665 = vpop.f32.mrf.mxu0
        %v666 = vadd.f32 0.0, %v665
        %v667 = vpop.f32.mrf.mxu0
        %668 = vdwg.mxu0
        %v669 = vmul.f32 %v666, 0.35355338
        %v670 = vadd.f32 %v669, %v485
        %v671 = vsel %vm488, %v670, -inf
        %672 = vmax.xlane.f32.xlu0 %v671
        %v673 = vpop.xlane.xlu0 %672
        %v674 = vsub.f32 %v670, %v673
        %v675 = vmul.f32 %v674, 1.442695
        %v676 = vpow.pop %v675
        %v677 = vsel %vm488, %v676, 0.0
        %678 = vadd.xlane.f32.xlu0 %v677
        %v679 = vpop.xlane.xlu0 %678
        %v680 = vrcp.pop %v679
        %v681 = vmul.f32 %v676, %v680
        %v682 = vpack.c.bf16 %v681, %v681
        %683 = vrot.lane.b32.xlu0 %v487, 80
        %v684 = vpop.permute.xlu0 %683
        %v686 = vsel %vm488, %v682, 0
        %v689 = vsel %vm528, %v684, 0
        %691 = vmatpush.bf16.msra.mxu0 0
        %692 = vmatpush.bf16.msra.mxu0 0
        %693 = vmatpush.bf16.msra.mxu0 0
        %694 = vmatpush.bf16.msra.mxu0 0
        %695 = vmatpush.bf16.msra.mxu0 0
        %696 = vmatpush.bf16.msra.mxu0 0
        %697 = vmatpush.bf16.msra.mxu0 0
        %698 = vmatpush.bf16.msra.mxu0 %v689
        %699 = vmatmul.bf16.gmra.mxu0 %v686
        %v700 = vpop.f32.mrf.mxu0
        %v701 = vadd.f32 0.0, %v700
        %v702 = vpop.f32.mrf.mxu0
        %703 = vdwg.mxu0
        %v704 = vpack.c.bf16 %v701, %v701
        %v705 = vld [vmem:[%s6 + $0x8] sm:$0xf]
        %v707 = vsel %vm488, %v704, 0
        %v710 = vsel %vm528, %v705, 0
        %712 = vmatpush.bf16.msra.mxu0 0
        %713 = vmatpush.bf16.msra.mxu0 0
        %714 = vmatpush.bf16.msra.mxu0 0
        %715 = vmatpush.bf16.msra.mxu0 0
        %716 = vmatpush.bf16.msra.mxu0 0
        %717 = vmatpush.bf16.msra.mxu0 0
        %718 = vmatpush.bf16.msra.mxu0 0
        %719 = vmatpush.bf16.msra.mxu0 %v710
        %720 = vmatmul.bf16.gmra.mxu0 %v707
        %v721 = vpop.f32.mrf.mxu0
        %v722 = vadd.f32 0.0, %v721
        %v723 = vpop.f32.mrf.mxu0
        %724 = vdwg.mxu0
        %v725 = vadd.f32 %v643, %v722
        %726 = vrot.lane.b32.xlu0 %v486, 104
        %v727 = vpop.permute.xlu0 %726
        %728 = vrot.lane.b32.xlu0 %v487, 104
        %v729 = vpop.permute.xlu0 %728
        %v731 = vsel %vm488, %v727, 0
        %v734 = vsel %vm488, %v729, 0
        %736 = vmatpush.bf16.xpose.msra.mxu0 0
        %737 = vmatpush.bf16.xpose.msra.mxu0 0
        %738 = vmatpush.bf16.xpose.msra.mxu0 0
        %739 = vmatpush.bf16.xpose.msra.mxu0 0
        %740 = vmatpush.bf16.xpose.msra.mxu0 0
        %741 = vmatpush.bf16.xpose.msra.mxu0 0
        %742 = vmatpush.bf16.xpose.msra.mxu0 0
        %743 = vmatpush.bf16.xpose.msra.mxu0 %v734
        %744 = vmatmul.bf16.gmra.mxu0 %v731
        %v745 = vpop.f32.mrf.mxu0
        %v746 = vadd.f32 0.0, %v745
        %v747 = vpop.f32.mrf.mxu0
        %748 = vdwg.mxu0
        %v749 = vmul.f32 %v746, 0.35355338
        %v750 = vadd.f32 %v749, %v485
        %v751 = vsel %vm488, %v750, -inf
        %752 = vmax.xlane.f32.xlu0 %v751
        %v753 = vpop.xlane.xlu0 %752
        %v754 = vsub.f32 %v750, %v753
        %v755 = vmul.f32 %v754, 1.442695
        %v756 = vpow.pop %v755
        %v757 = vsel %vm488, %v756, 0.0
        %758 = vadd.xlane.f32.xlu0 %v757
        %v759 = vpop.xlane.xlu0 %758
        %v760 = vrcp.pop %v759
        %v761 = vmul.f32 %v756, %v760
        %v762 = vpack.c.bf16 %v761, %v761
        %763 = vrot.lane.b32.xlu0 %v487, 72
        %v764 = vpop.permute.xlu0 %763
        %v766 = vsel %vm488, %v762, 0
        %v769 = vsel %vm528, %v764, 0
        %771 = vmatpush.bf16.msra.mxu0 0
        %772 = vmatpush.bf16.msra.mxu0 0
        %773 = vmatpush.bf16.msra.mxu0 0
        %774 = vmatpush.bf16.msra.mxu0 0
        %775 = vmatpush.bf16.msra.mxu0 0
        %776 = vmatpush.bf16.msra.mxu0 0
        %777 = vmatpush.bf16.msra.mxu0 0
        %778 = vmatpush.bf16.msra.mxu0 %v769
        %779 = vmatmul.bf16.gmra.mxu0 %v766
        %v780 = vpop.f32.mrf.mxu0
        %v781 = vadd.f32 0.0, %v780
        %v782 = vpop.f32.mrf.mxu0
        %783 = vdwg.mxu0
        %v784 = vpack.c.bf16 %v781, %v781
        %v785 = vld [vmem:[%s6 + $0xc] sm:$0xf]
        %v787 = vsel %vm488, %v784, 0
        %v790 = vsel %vm528, %v785, 0
        %792 = vmatpush.bf16.msra.mxu0 0
        %793 = vmatpush.bf16.msra.mxu0 0
        %794 = vmatpush.bf16.msra.mxu0 0
        %795 = vmatpush.bf16.msra.mxu0 0
        %796 = vmatpush.bf16.msra.mxu0 0
        %797 = vmatpush.bf16.msra.mxu0 0
        %798 = vmatpush.bf16.msra.mxu0 0
        %799 = vmatpush.bf16.msra.mxu0 %v790
        %800 = vmatmul.bf16.gmra.mxu0 %v787
        %v801 = vpop.f32.mrf.mxu0
        %v802 = vadd.f32 0.0, %v801
        %v803 = vpop.f32.mrf.mxu0
        %804 = vdwg.mxu0
        %v805 = vadd.f32 %v725, %v802
        %v806 = vld [vmem:[%s7] sm:$0x1]
        %v808 = vperm.slane %v806, 0
        %v810 = vadd.f32 %v805, %v808
        %v811 = vadd.f32 %v810, %v403
        %v812 = vld [vmem:[#allocation2] sm:$0x1]
        %v813 = vld [vmem:[#allocation4] sm:$0x1]
        %v814 = vsel %vm427, %v811, 0.0
        %815 = vadd.xlane.f32.xlu0 %v814
        %v816 = vpop.xlane.xlu0 %815
        %v817 = vrcp.pop 32.0
        %v818 = vmul.f32 32.0, %v817
        %v819 = vsub.f32 1.0, %v818
        %v820 = vmul.f32 %v817, %v819
        %v821 = vadd.f32 %v817, %v820
        %vm822 = vweird.f32 %v817
        %v823 = vsel %vm822, %v817, %v821
        %v824 = vmul.f32 %v816, %v823
        %v825 = vsub.f32 %v811, %v824
        %v826 = vmul.f32 %v825, %v825
        %v827 = vsel %vm427, %v826, 0.0
        %828 = vadd.xlane.f32.xlu0 %v827
        %v829 = vpop.xlane.xlu0 %828
        %v830 = vmul.f32 %v829, %v823
        %v831 = vadd.f32 %v830, 1e-05
        %v832 = vrsqrt.pop %v831
        %v833 = vmul.f32 %v832, %v831
        %v834 = vmul.f32 %v833, %v832
        %v835 = vmul.f32 0.5, %v834
        %v836 = vsub.f32 1.5, %v835
        %v837 = vmul.f32 %v832, %v836
        %vm838 = vweird.f32 %v831
        %vm839 = vweird.f32 %v832
        %vm840 = vmor %vm838, %vm839
        %v841 = vsel %vm840, %v832, %v837
        %v842 = vmul.f32 %v825, %v841
        %v844 = vperm.slane %v812, 0
        %v846 = vmul.f32 %v842, %v844
        %v848 = vperm.slane %v813, 0
        %v850 = vadd.f32 %v846, %v848
        %851 = vst.msk [vmem:[%s401] sm:$0xff] %vm427, %v850
        %p852 = scmp.lt.s32.totalorder %s23, 1
        %s853 = scalar_select %p852, %s23, 1
        %s854 = smul.addr %s853, 8
        %s855 = scalar_lea.vmem %s10, %s854
        // Predicated region
        $region69: #{transformer_forward.27} parent=59 // pred_check
          %p856 = pneg %p261
        $region70: #{transformer_forward.27} parent=59 // pred_check_branch
          %858 = sbr.rel (%p856) target = $region72
        $region71: #{transformer_forward.27} parent=59 // pred_region
          _
        $region72: #{transformer_forward.27} parent=59 // pred_fallthru
          _
      $region60: #{transformer_forward.27} parent=5 // pred_fallthru
        _
      %p859 = scmp.le.s32.totalorder 2, %s18
      // Predicated region
      $region73: #{transformer_forward.27} parent=5 // pred_check
        %p860 = pneg %p859
      $region74: #{transformer_forward.27} parent=5 // pred_check_branch
        %862 = sbr.rel (%p860) target = $region76
      $region75: #{transformer_forward.27} parent=5 // pred_region
        %s863 = ssub.s32 %s18, 2
        // Predicated region
        $region77: #{transformer_forward.27} parent=75 // pred_check
          %p864 = pneg %p267
        $region78: #{transformer_forward.27} parent=75 // pred_check_branch
          %866 = sbr.rel (%p864) target = $region80
        $region79: #{transformer_forward.27} parent=75 // pred_region
          %p867 = scmp.lt.s32.totalorder %s24, 1
          %s868 = scalar_select %p867, %s24, 1
          %s869 = smul.addr %s868, 8
          %s870 = scalar_lea.vmem %s10, %s869
        $region80: #{transformer_forward.27} parent=75 // pred_fallthru
          _
      $region76: #{transformer_forward.27} parent=5 // pred_fallthru
        _
    $region6: #{transformer_forward.27} parent=1 // loop_footer
      %s22 = sadd.s32 1, %s18
    $region7: #{transformer_forward.27} parent=1 // loop_footer_branch
      %17 = sbr.rel target = $region3
    $region8: #{transformer_forward.27} parent=1 // loop_exit
      _
    %871 = vsyncpa [#allocation3], 1
    %s872 = scalar_lea.sflag [#allocation3], 1
    %873 = vsyncpa %s872, 1
    %874 = vsyncpa [#allocation5], 1

// kernel: transformer_forward.28
$region0: #{transformer_forward.28}
  #allocation0 [shape = 'u32[]', space=smem, size = 0x4, offset = 0x4, fixed_abs, tag = 'smem constant byte address 0x4 - core index']
  #allocation1 [shape = 'u32[72,128]{1,0:T(1,128)}', space=vmem, size = 0x9000, scoped, tag = 'internal scratch']
  %s0 = inlined_call_operand.vmem [shape: f32[2,8,32], index: 0, kind: input, shape index: {}]
  %s1 = inlined_call_operand.vmem [shape: f32[2,10,32], index: 1, kind: input, shape index: {}]
  %s2 = inlined_call_operand.vmem [shape: bf16[32,32], index: 2, kind: input, shape index: {}]
  %s3 = inlined_call_operand.vmem [shape: f32[1,32], index: 3, kind: input, shape index: {}]
  %s4 = inlined_call_operand.vmem [shape: bf16[32,64], index: 4, kind: input, shape index: {}]
  %s5 = inlined_call_operand.hbm [shape: f32[1,64], index: 5, kind: input, shape index: {}]
  %s6 = inlined_call_operand.vmem [shape: bf16[32,32], index: 6, kind: input, shape index: {}]
  %s7 = inlined_call_operand.hbm [shape: f32[1,32], index: 7, kind: input, shape index: {}]
  %s8 = inlined_call_operand.hbm [shape: f32[1,32], index: 8, kind: input, shape index: {}]
  %s9 = inlined_call_operand.hbm [shape: f32[1,32], index: 9, kind: input, shape index: {}]
  %s10 = inlined_call_operand.vmem [shape: f32[2,8,32], index: 10, kind: output, shape index: {}]
  %s11 = sld [smem:[#allocation0]]
  $region89: #{transformer_forward.28} parent=0
    _
  %s13 = ssub.s32 1, %s11
  %s14 = scalar_select 0, %s13, %s11
  $region1: #{transformer_forward.28} parent=0
    #allocation2 [shape = 'u8[512]{0}', space=vmem, size = 0x400, scoped, tag = 'input window, operand 5, single buffered']
    #allocation3 [shape = 's32[2]{0}', space=sflag, size = 0x8, scoped, tag = 'scoped memory for transformer_forward.28']
    #allocation4 [shape = 'u8[512]{0}', space=vmem, size = 0x400, scoped, tag = 'input window, operand 7, single buffered']
    #allocation5 [shape = 's32[1]{0}', space=sflag, size = 0x4, scoped, tag = 'scoped memory for transformer_forward.28']
    #allocation6 [shape = 'u8[512]{0}', space=vmem, size = 0x400, scoped, tag = 'input window, operand 8, single buffered']
    #allocation7 [shape = 'u8[512]{0}', space=vmem, size = 0x400, scoped, tag = 'input window, operand 9, single buffered']
    #allocation8 [shape = 's32[1]{0}', space=sflag, size = 0x4, scoped, tag = 'scoped memory for transformer_forward.28']
    %15 = vsyncpa [#allocation3], 0
    %16 = vsyncpa [#allocation5], 0
    %17 = vsyncpa [#allocation8], 0
    loop: start=0, step=1, limit=4
    $region2: #{transformer_forward.28} parent=1 // loop_pre_header
      _
    $region3: #{transformer_forward.28} parent=1 // loop_header
      %s19 = sphi 0, %s23
      %p20 = scmp.ge.s32.totalorder %s19, 4
      %s29 = sphi 0, %s31
      %s32 = sphi 0, %s29
      %s33 = sphi 0, %s32
      %s49 = sphi 0, %s33
      %s55 = sphi 0, %s57
      %s58 = sphi 0, %s55
      %s59 = sphi 0, %s58
      %s75 = sphi 0, %s59
      %s79 = sphi 0, %s79
      %s81 = sphi 0, %s79
      %s82 = sphi 0, %s81
      %s96 = sphi 0, %s82
      %s100 = sphi 0, %s100
      %s102 = sphi 0, %s100
      %s103 = sphi 0, %s102
      %s117 = sphi 0, %s103
      %s121 = sphi 0, %s121
      %s123 = sphi 0, %s121
      %s124 = sphi 0, %s123
      %s138 = sphi 0, %s124
      %s142 = sphi 0, %s142
      %s144 = sphi 0, %s142
      %s145 = sphi 0, %s144
      %s159 = sphi 0, %s145
      %s163 = sphi 0, %s163
      %s165 = sphi 0, %s163
      %s166 = sphi 0, %s165
      %s180 = sphi 0, %s166
      %s184 = sphi 0, %s184
      %s186 = sphi 0, %s184
      %s187 = sphi 0, %s186
      %s201 = sphi 0, %s187
      %s205 = sphi 0, %s205
      %s207 = sphi 0, %s205
      %s208 = sphi 0, %s207
      %s222 = sphi 0, %s208
      %s226 = sphi 0, %s226
      %s228 = sphi 0, %s226
      %s229 = sphi 0, %s228
      %s243 = sphi 0, %s229
      %s249 = sphi 0, %s251
      %s252 = sphi 0, %s249
      %s253 = sphi 0, %s252
      %s269 = sphi 0, %s253
    $region4: #{transformer_forward.28} parent=1 // loop_header_branch
      %22 = sbr.rel (%p20) target = $region8
    $region5: #{transformer_forward.28} parent=1 // loop_body
      %s24 = ssub.s32 %s19, 1
      %s25 = ssub.s32 %s19, 2
      %s26 = sadd.s32 %s19, 1
      %s27 = ssub.s32 %s19, %s26
      %p28 = scmp.eq.s32.totalorder %s27, 0
      %s30 = sadd.s32 %s29, 1
      %s31 = scalar_select %p28, %s29, %s30
      %p34 = pneg %p28
      %p35 = scmp.eq.s32.totalorder %s19, 1
      %p36 = por %p34, %p35
      %p37 = scmp.ne.s32.totalorder %s29, %s32
      %p38 = scmp.eq.s32.totalorder %s19, 0
      %p39 = por %p37, %p38
      %p40 = scmp.ne.s32.totalorder %s29, %s32
      %p41 = scmp.eq.s32.totalorder %s24, 1
      %p42 = por %p40, %p41
      %p43 = scmp.ne.s32.totalorder %s32, %s33
      %p44 = scmp.eq.s32.totalorder %s24, 0
      %p45 = por %p43, %p44
      %p46 = scmp.ne.s32.totalorder %s32, %s33
      %p47 = scmp.eq.s32.totalorder %s25, 1
      %p48 = por %p46, %p47
      %p50 = scmp.ne.s32.totalorder %s33, %s49
      %p51 = scmp.eq.s32.totalorder %s25, 0
      %p52 = por %p50, %p51
      %s53 = ssub.s32 %s19, %s26
      %p54 = scmp.eq.s32.totalorder %s53, 0
      %s56 = sadd.s32 %s55, 1
      %s57 = scalar_select %p54, %s55, %s56
      %p60 = pneg %p54
      %p61 = scmp.eq.s32.totalorder %s19, 1
      %p62 = por %p60, %p61
      %p63 = scmp.ne.s32.totalorder %s55, %s58
      %p64 = scmp.eq.s32.totalorder %s19, 0
      %p65 = por %p63, %p64
      %p66 = scmp.ne.s32.totalorder %s55, %s58
      %p67 = scmp.eq.s32.totalorder %s24, 1
      %p68 = por %p66, %p67
      %p69 = scmp.ne.s32.totalorder %s58, %s59
      %p70 = scmp.eq.s32.totalorder %s24, 0
      %p71 = por %p69, %p70
      %p72 = scmp.ne.s32.totalorder %s58, %s59
      %p73 = scmp.eq.s32.totalorder %s25, 1
      %p74 = por %p72, %p73
      %p76 = scmp.ne.s32.totalorder %s59, %s75
      %p77 = scmp.eq.s32.totalorder %s25, 0
      %p78 = por %p76, %p77
      %s80 = sadd.s32 %s79, 1
      %p83 = scmp.eq.s32.totalorder %s19, 1
      %p84 = scmp.ne.s32.totalorder %s79, %s81
      %p85 = scmp.eq.s32.totalorder %s19, 0
      %p86 = por %p84, %p85
      %p87 = scmp.ne.s32.totalorder %s79, %s81
      %p88 = scmp.eq.s32.totalorder %s24, 1
      %p89 = por %p87, %p88
      %p90 = scmp.ne.s32.totalorder %s81, %s82
      %p91 = scmp.eq.s32.totalorder %s24, 0
      %p92 = por %p90, %p91
      %p93 = scmp.ne.s32.totalorder %s81, %s82
      %p94 = scmp.eq.s32.totalorder %s25, 1
      %p95 = por %p93, %p94
      %p97 = scmp.ne.s32.totalorder %s82, %s96
      %p98 = scmp.eq.s32.totalorder %s25, 0
      %p99 = por %p97, %p98
      %s101 = sadd.s32 %s100, 1
      %p104 = scmp.eq.s32.totalorder %s19, 1
      %p105 = scmp.ne.s32.totalorder %s100, %s102
      %p106 = scmp.eq.s32.totalorder %s19, 0
      %p107 = por %p105, %p106
      %p108 = scmp.ne.s32.totalorder %s100, %s102
      %p109 = scmp.eq.s32.totalorder %s24, 1
      %p110 = por %p108, %p109
      %p111 = scmp.ne.s32.totalorder %s102, %s103
      %p112 = scmp.eq.s32.totalorder %s24, 0
      %p113 = por %p111, %p112
      %p114 = scmp.ne.s32.totalorder %s102, %s103
      %p115 = scmp.eq.s32.totalorder %s25, 1
      %p116 = por %p114, %p115
      %p118 = scmp.ne.s32.totalorder %s103, %s117
      %p119 = scmp.eq.s32.totalorder %s25, 0
      %p120 = por %p118, %p119
      %s122 = sadd.s32 %s121, 1
      %p125 = scmp.eq.s32.totalorder %s19, 1
      %p126 = scmp.ne.s32.totalorder %s121, %s123
      %p127 = scmp.eq.s32.totalorder %s19, 0
      %p128 = por %p126, %p127
      %p129 = scmp.ne.s32.totalorder %s121, %s123
      %p130 = scmp.eq.s32.totalorder %s24, 1
      %p131 = por %p129, %p130
      %p132 = scmp.ne.s32.totalorder %s123, %s124
      %p133 = scmp.eq.s32.totalorder %s24, 0
      %p134 = por %p132, %p133
      %p135 = scmp.ne.s32.totalorder %s123, %s124
      %p136 = scmp.eq.s32.totalorder %s25, 1
      %p137 = por %p135, %p136
      %p139 = scmp.ne.s32.totalorder %s124, %s138
      %p140 = scmp.eq.s32.totalorder %s25, 0
      %p141 = por %p139, %p140
      %s143 = sadd.s32 %s142, 1
      %p146 = scmp.eq.s32.totalorder %s19, 1
      %p147 = scmp.ne.s32.totalorder %s142, %s144
      %p148 = scmp.eq.s32.totalorder %s19, 0
      %p149 = por %p147, %p148
      %p150 = scmp.ne.s32.totalorder %s142, %s144
      %p151 = scmp.eq.s32.totalorder %s24, 1
      %p152 = por %p150, %p151
      %p153 = scmp.ne.s32.totalorder %s144, %s145
      %p154 = scmp.eq.s32.totalorder %s24, 0
      %p155 = por %p153, %p154
      %p156 = scmp.ne.s32.totalorder %s144, %s145
      %p157 = scmp.eq.s32.totalorder %s25, 1
      %p158 = por %p156, %p157
      %p160 = scmp.ne.s32.totalorder %s145, %s159
      %p161 = scmp.eq.s32.totalorder %s25, 0
      %p162 = por %p160, %p161
      %s164 = sadd.s32 %s163, 1
      %p167 = scmp.eq.s32.totalorder %s19, 1
      %p168 = scmp.ne.s32.totalorder %s163, %s165
      %p169 = scmp.eq.s32.totalorder %s19, 0
      %p170 = por %p168, %p169
      %p171 = scmp.ne.s32.totalorder %s163, %s165
      %p172 = scmp.eq.s32.totalorder %s24, 1
      %p173 = por %p171, %p172
      %p174 = scmp.ne.s32.totalorder %s165, %s166
      %p175 = scmp.eq.s32.totalorder %s24, 0
      %p176 = por %p174, %p175
      %p177 = scmp.ne.s32.totalorder %s165, %s166
      %p178 = scmp.eq.s32.totalorder %s25, 1
      %p179 = por %p177, %p178
      %p181 = scmp.ne.s32.totalorder %s166, %s180
      %p182 = scmp.eq.s32.totalorder %s25, 0
      %p183 = por %p181, %p182
      %s185 = sadd.s32 %s184, 1
      %p188 = scmp.eq.s32.totalorder %s19, 1
      %p189 = scmp.ne.s32.totalorder %s184, %s186
      %p190 = scmp.eq.s32.totalorder %s19, 0
      %p191 = por %p189, %p190
      %p192 = scmp.ne.s32.totalorder %s184, %s186
      %p193 = scmp.eq.s32.totalorder %s24, 1
      %p194 = por %p192, %p193
      %p195 = scmp.ne.s32.totalorder %s186, %s187
      %p196 = scmp.eq.s32.totalorder %s24, 0
      %p197 = por %p195, %p196
      %p198 = scmp.ne.s32.totalorder %s186, %s187
      %p199 = scmp.eq.s32.totalorder %s25, 1
      %p200 = por %p198, %p199
      %p202 = scmp.ne.s32.totalorder %s187, %s201
      %p203 = scmp.eq.s32.totalorder %s25, 0
      %p204 = por %p202, %p203
      %s206 = sadd.s32 %s205, 1
      %p209 = scmp.eq.s32.totalorder %s19, 1
      %p210 = scmp.ne.s32.totalorder %s205, %s207
      %p211 = scmp.eq.s32.totalorder %s19, 0
      %p212 = por %p210, %p211
      %p213 = scmp.ne.s32.totalorder %s205, %s207
      %p214 = scmp.eq.s32.totalorder %s24, 1
      %p215 = por %p213, %p214
      %p216 = scmp.ne.s32.totalorder %s207, %s208
      %p217 = scmp.eq.s32.totalorder %s24, 0
      %p218 = por %p216, %p217
      %p219 = scmp.ne.s32.totalorder %s207, %s208
      %p220 = scmp.eq.s32.totalorder %s25, 1
      %p221 = por %p219, %p220
      %p223 = scmp.ne.s32.totalorder %s208, %s222
      %p224 = scmp.eq.s32.totalorder %s25, 0
      %p225 = por %p223, %p224
      %s227 = sadd.s32 %s226, 1
      %p230 = scmp.eq.s32.totalorder %s19, 1
      %p231 = scmp.ne.s32.totalorder %s226, %s228
      %p232 = scmp.eq.s32.totalorder %s19, 0
      %p233 = por %p231, %p232
      %p234 = scmp.ne.s32.totalorder %s226, %s228
      %p235 = scmp.eq.s32.totalorder %s24, 1
      %p236 = por %p234, %p235
      %p237 = scmp.ne.s32.totalorder %s228, %s229
      %p238 = scmp.eq.s32.totalorder %s24, 0
      %p239 = por %p237, %p238
      %p240 = scmp.ne.s32.totalorder %s228, %s229
      %p241 = scmp.eq.s32.totalorder %s25, 1
      %p242 = por %p240, %p241
      %p244 = scmp.ne.s32.totalorder %s229, %s243
      %p245 = scmp.eq.s32.totalorder %s25, 0
      %p246 = por %p244, %p245
      %s247 = ssub.s32 %s19, %s26
      %p248 = scmp.eq.s32.totalorder %s247, 0
      %s250 = sadd.s32 %s249, 1
      %s251 = scalar_select %p248, %s249, %s250
      %p254 = pneg %p248
      %p255 = scmp.eq.s32.totalorder %s19, 1
      %p256 = por %p254, %p255
      %p257 = scmp.ne.s32.totalorder %s249, %s252
      %p258 = scmp.eq.s32.totalorder %s19, 0
      %p259 = por %p257, %p258
      %p260 = scmp.ne.s32.totalorder %s249, %s252
      %p261 = scmp.eq.s32.totalorder %s24, 1
      %p262 = por %p260, %p261
      %p263 = scmp.ne.s32.totalorder %s252, %s253
      %p264 = scmp.eq.s32.totalorder %s24, 0
      %p265 = por %p263, %p264
      %p266 = scmp.ne.s32.totalorder %s252, %s253
      %p267 = scmp.eq.s32.totalorder %s25, 1
      %p268 = por %p266, %p267
      %p270 = scmp.ne.s32.totalorder %s253, %s269
      %p271 = scmp.eq.s32.totalorder %s25, 0
      %p272 = por %p270, %p271
      %p273 = scmp.le.s32.totalorder 1, %s19
      %p274 = scmp.lt.s32.totalorder %s19, 3
      %p275 = pnand %p273, %p274
      %p276 = pneg %p275
      // Predicated region
      $region9: #{transformer_forward.28} parent=5 // pred_check
        _
      $region10: #{transformer_forward.28} parent=5 // pred_check_branch
        %278 = sbr.rel (%p275) target = $region12
      $region11: #{transformer_forward.28} parent=5 // pred_region
        %s279 = ssub.s32 %s19, 1
        // Predicated region
        $region13: #{transformer_forward.28} parent=11 // pred_check
          %p280 = pneg %p92
        $region14: #{transformer_forward.28} parent=11 // pred_check_branch
          %282 = sbr.rel (%p280) target = $region16
        $region15: #{transformer_forward.28} parent=11 // pred_region
          _
        $region16: #{transformer_forward.28} parent=11 // pred_fallthru
          _
        // Predicated region
        $region17: #{transformer_forward.28} parent=11 // pred_check
          %p283 = pneg %p113
        $region18: #{transformer_forward.28} parent=11 // pred_check_branch
          %285 = sbr.rel (%p283) target = $region20
        $region19: #{transformer_forward.28} parent=11 // pred_region
          _
        $region20: #{transformer_forward.28} parent=11 // pred_fallthru
          _
        // Predicated region
        $region21: #{transformer_forward.28} parent=11 // pred_check
          %p286 = pneg %p134
        $region22: #{transformer_forward.28} parent=11 // pred_check_branch
          %288 = sbr.rel (%p286) target = $region24
        $region23: #{transformer_forward.28} parent=11 // pred_region
          _
        $region24: #{transformer_forward.28} parent=11 // pred_fallthru
          _
        // Predicated region
        $region25: #{transformer_forward.28} parent=11 // pred_check
          %p289 = pneg %p155
        $region26: #{transformer_forward.28} parent=11 // pred_check_branch
          %291 = sbr.rel (%p289) target = $region28
        $region27: #{transformer_forward.28} parent=11 // pred_region
          %293 = vsyncadd [#allocation3], 0
          %s295 = sshll.u32 %s5, 4
          %s296 = int_to_ptr.hbm [resolvable:$true] %s295
          %s297 = sshll.u32 [#allocation2], 4
          %s298 = int_to_ptr.vmem [resolvable:$true] %s297
          %300 = dma.hbm_to_vmem [thread:$0]  %s296, 16, %s298, [#allocation3]
        $region28: #{transformer_forward.28} parent=11 // pred_fallthru
          _
        // Predicated region
        $region29: #{transformer_forward.28} parent=11 // pred_check
          %p301 = pneg %p176
        $region30: #{transformer_forward.28} parent=11 // pred_check_branch
          %303 = sbr.rel (%p301) target = $region32
        $region31: #{transformer_forward.28} parent=11 // pred_region
          _
        $region32: #{transformer_forward.28} parent=11 // pred_fallthru
          _
        // Predicated region
        $region33: #{transformer_forward.28} parent=11 // pred_check
          %p304 = pneg %p197
        $region34: #{transformer_forward.28} parent=11 // pred_check_branch
          %306 = sbr.rel (%p304) target = $region36
        $region35: #{transformer_forward.28} parent=11 // pred_region
          %308 = vsyncadd [#allocation5], 0
          %s310 = sshll.u32 %s7, 4
          %s311 = int_to_ptr.hbm [resolvable:$true] %s310
          %s312 = sshll.u32 [#allocation4], 4
          %s313 = int_to_ptr.vmem [resolvable:$true] %s312
          %315 = dma.hbm_to_vmem [thread:$0]  %s311, 16, %s313, [#allocation5]
        $region36: #{transformer_forward.28} parent=11 // pred_fallthru
          _
        // Predicated region
        $region37: #{transformer_forward.28} parent=11 // pred_check
          %p316 = pneg %p218
        $region38: #{transformer_forward.28} parent=11 // pred_check_branch
          %318 = sbr.rel (%p316) target = $region40
        $region39: #{transformer_forward.28} parent=11 // pred_region
          %320 = vsyncadd [#allocation5], 0
          %s322 = sshll.u32 %s8, 4
          %s323 = int_to_ptr.hbm [resolvable:$true] %s322
          %s324 = sshll.u32 [#allocation6], 4
          %s325 = int_to_ptr.vmem [resolvable:$true] %s324
          %327 = dma.hbm_to_vmem [thread:$0]  %s323, 16, %s325, [#allocation5]
        $region40: #{transformer_forward.28} parent=11 // pred_fallthru
          _
        // Predicated region
        $region41: #{transformer_forward.28} parent=11 // pred_check
          %p328 = pneg %p239
        $region42: #{transformer_forward.28} parent=11 // pred_check_branch
          %330 = sbr.rel (%p328) target = $region44
        $region43: #{transformer_forward.28} parent=11 // pred_region
          %332 = vsyncadd [#allocation8], 0
          %s334 = sshll.u32 %s9, 4
          %s335 = int_to_ptr.hbm [resolvable:$true] %s334
          %s336 = sshll.u32 [#allocation7], 4
          %s337 = int_to_ptr.vmem [resolvable:$true] %s336
          %339 = dma.hbm_to_vmem [thread:$0]  %s335, 16, %s337, [#allocation8]
        $region44: #{transformer_forward.28} parent=11 // pred_fallthru
          _
      $region12: #{transformer_forward.28} parent=5 // pred_fallthru
        _
      %p340 = scmp.lt.s32.totalorder %s19, 2
      // Predicated region
      $region45: #{transformer_forward.28} parent=5 // pred_check
        %p341 = pneg %p340
      $region46: #{transformer_forward.28} parent=5 // pred_check_branch
        %343 = sbr.rel (%p341) target = $region48
      $region47: #{transformer_forward.28} parent=5 // pred_region
        // Predicated region
        $region49: #{transformer_forward.28} parent=47 // pred_check
          %p344 = pneg %p39
        $region50: #{transformer_forward.28} parent=47 // pred_check_branch
          %346 = sbr.rel (%p344) target = $region52
        $region51: #{transformer_forward.28} parent=47 // pred_region
          %p347 = scmp.lt.s32.totalorder %s19, 1
          %s348 = scalar_select %p347, %s19, 1
          %s349 = smul.addr %s348, 8
          %s350 = scalar_lea.vmem %s0, %s349
        $region52: #{transformer_forward.28} parent=47 // pred_fallthru
          _
        // Predicated region
        $region53: #{transformer_forward.28} parent=47 // pred_check
          %p351 = pneg %p65
        $region54: #{transformer_forward.28} parent=47 // pred_check_branch
          %353 = sbr.rel (%p351) target = $region56
        $region55: #{transformer_forward.28} parent=47 // pred_region
          %p354 = scmp.lt.s32.totalorder %s19, 1
          %s355 = scalar_select %p354, %s19, 1
          %s356 = smul.addr %s355, 2
          %s357 = smul.addr %s356, 8
          %s358 = scalar_lea.vmem %s1, %s357
        $region56: #{transformer_forward.28} parent=47 // pred_fallthru
          _
      $region48: #{transformer_forward.28} parent=5 // pred_fallthru
        _
      %p359 = scmp.le.s32.totalorder 1, %s19
      %p360 = scmp.lt.s32.totalorder %s19, 3
      %p361 = pnand %p359, %p360
      %p362 = pneg %p361
      // Predicated region
      $region57: #{transformer_forward.28} parent=5 // pred_check
        _
      $region58: #{transformer_forward.28} parent=5 // pred_check_branch
        %364 = sbr.rel (%p361) target = $region60
      $region59: #{transformer_forward.28} parent=5 // pred_region
        %s365 = ssub.s32 %s19, 1
        // Predicated region
        $region61: #{transformer_forward.28} parent=59 // pred_check
          %p366 = pneg %p155
        $region62: #{transformer_forward.28} parent=59 // pred_check_branch
          %368 = sbr.rel (%p366) target = $region64
        $region63: #{transformer_forward.28} parent=59 // pred_region
          %370 = dma.done [#allocation3], 16
        $region64: #{transformer_forward.28} parent=59 // pred_fallthru
          _
        // Predicated region
        $region65: #{transformer_forward.28} parent=59 // pred_check
          %p371 = pneg %p197
        $region66: #{transformer_forward.28} parent=59 // pred_check_branch
          %373 = sbr.rel (%p371) target = $region68
        $region67: #{transformer_forward.28} parent=59 // pred_region
          %375 = dma.done [#allocation5], 16
        $region68: #{transformer_forward.28} parent=59 // pred_fallthru
          _
        // Predicated region
        $region69: #{transformer_forward.28} parent=59 // pred_check
          %p376 = pneg %p218
        $region70: #{transformer_forward.28} parent=59 // pred_check_branch
          %378 = sbr.rel (%p376) target = $region72
        $region71: #{transformer_forward.28} parent=59 // pred_region
          %380 = dma.done [#allocation5], 16
        $region72: #{transformer_forward.28} parent=59 // pred_fallthru
          _
        // Predicated region
        $region73: #{transformer_forward.28} parent=59 // pred_check
          %p381 = pneg %p239
        $region74: #{transformer_forward.28} parent=59 // pred_check_branch
          %383 = sbr.rel (%p381) target = $region76
        $region75: #{transformer_forward.28} parent=59 // pred_region
          %385 = dma.done [#allocation8], 16
        $region76: #{transformer_forward.28} parent=59 // pred_fallthru
          _
        %p386 = scmp.lt.s32.totalorder %s24, 1
        %s387 = scalar_select %p386, %s24, 1
        %s388 = smul.addr %s387, 8
        %s389 = scalar_lea.vmem %s0, %s388
        %p390 = pneg %p45
        %p391 = pneg %p42
        %p392 = scmp.lt.s32.totalorder %s24, 1
        %s393 = scalar_select %p392, %s24, 1
        %s394 = smul.addr %s393, 2
        %s395 = smul.addr %s394, 8
        %s396 = scalar_lea.vmem %s1, %s395
        %p397 = pneg %p71
        %p398 = pneg %p68
        %p399 = pneg %p92
        %p400 = pneg %p89
        %p401 = pneg %p113
        %p402 = pneg %p110
        %p403 = pneg %p134
        %p404 = pneg %p131
        %p405 = pneg %p155
        %p406 = pneg %p152
        %p407 = pneg %p176
        %p408 = pneg %p173
        %p409 = pneg %p197
        %p410 = pneg %p194
        %p411 = pneg %p218
        %p412 = pneg %p215
        %p413 = pneg %p239
        %p414 = pneg %p236
        %p415 = pneg %p265
        %p416 = pneg %p262
        %p417 = scmp.lt.s32.totalorder %s24, 1
        %s418 = scalar_select %p417, %s24, 1
        %s419 = smul.addr %s418, 8
        %s420 = scalar_lea.vmem %s10, %s419
        %p421 = scmp.lt.s32.totalorder %s24, 1
        %s422 = scalar_select %p421, %s24, 1
        %s423 = smul.addr %s422, 8
        %s424 = scalar_lea.vmem %s0, %s423
        %p425 = scmp.lt.s32.totalorder %s24, 1
        %s426 = scalar_select %p425, %s24, 1
        %s427 = smul.addr %s426, 2
        %s428 = smul.addr %s427, 8
        %s429 = scalar_lea.vmem %s1, %s428
        %p430 = scmp.lt.s32.totalorder %s24, 1
        %s431 = scalar_select %p430, %s24, 1
        %s432 = smul.addr %s431, 8
        %s433 = scalar_lea.vmem %s10, %s432
        %v435 = vld [vmem:[%s424] sm:$0xff]
        %v436 = vld [vmem:[%s429] sm:$0xff]
        %v437 = vld [vmem:[%s429 + $0x8] sm:$0x3]
        %v438 = vpack.c.bf16 %v435, %v435
        %v439 = vpack.c.bf16 %v437, %v436
        %v440 = vld [vmem:[%s2] sm:$0xf]
        %v441 = vld [vmem:[%s2 + $0x4] sm:$0xf]
        %v442 = vld [vmem:[%s2 + $0x8] sm:$0xf]
        %v443 = vld [vmem:[%s2 + $0xc] sm:$0xf]
        %v444 = vld [vmem:[%s3] sm:$0x1]
        %v446 = vperm.slane %v444, 0
        %v452 = vunpack.c.l.b16 %v440
        %v453 = vunpack.c.l.b16 %v441
        %v454 = vunpack.c.l.b16 %v442
        %v455 = vunpack.c.l.b16 %v443
        %v456 = vpack.c.b16 %v453, %v452
        %v457 = vpack.c.b16 %v455, %v454
        %vm460 = vcmask 261120
        %v462 = vsel %vm460, %v438, 0
        %464 = vmatpush.bf16.msra.mxu0 0
        %465 = vmatpush.bf16.msra.mxu0 0
        %466 = vmatpush.bf16.msra.mxu0 0
        %467 = vmatpush.bf16.msra.mxu0 0
        %468 = vmatpush.bf16.msra.mxu0 0
        %469 = vmatpush.bf16.msra.mxu0 0
        %470 = vmatpush.bf16.msra.mxu0 %v457
        %471 = vmatpush.bf16.msra.mxu0 %v456
        %472 = vmatmul.bf16.gmra.mxu0 %v462
        %v473 = vpop.f32.mrf.mxu0
        %v474 = vadd.f32 %v446, %v473
        %v475 = vpop.f32.mrf.mxu0
        %476 = vdwg.mxu0
        %v477 = vld [vmem:[%s4] sm:$0xf]
        %v478 = vld [vmem:[%s4 + $0x4] sm:$0xf]
        %v479 = vld [vmem:[%s4 + $0x8] sm:$0xf]
        %v480 = vld [vmem:[%s4 + $0xc] sm:$0xf]
        %v481 = vld [vmem:[#allocation2] sm:$0x1]
        %v483 = vperm.slane %v481, 0
        %v489 = vunpack.c.l.b16 %v477
        %v490 = vunpack.c.l.b16 %v478
        %v491 = vunpack.c.l.b16 %v479
        %v492 = vunpack.c.l.b16 %v480
        %v493 = vpack.c.b16 %v490, %v489
        %v494 = vpack.c.b16 %v492, %v491
        %v498 = vsel %vm460, %v439, 0
        %500 = vmatpush.bf16.msra.mxu0 0
        %501 = vmatpush.bf16.msra.mxu0 0
        %502 = vmatpush.bf16.msra.mxu0 0
        %503 = vmatpush.bf16.msra.mxu0 0
        %504 = vmatpush.bf16.msra.mxu0 0
        %505 = vmatpush.bf16.msra.mxu0 0
        %506 = vmatpush.bf16.msra.mxu0 %v494
        %507 = vmatpush.bf16.msra.mxu0 %v493
        %508 = vmatmul.bf16.gmra.mxu0 %v498
        %v509 = vpop.f32.mrf.mxu0
        %v510 = vadd.f32 %v483, %v509
        %v511 = vpop.f32.mrf.mxu0
        %v512 = vadd.f32 %v483, %v511
        %513 = vdwg.mxu0
        %v514 = vpack.c.bf16 %v474, %v474
        %v515 = vpack.c.bf16 %v512, %v510
        %vm516 = vcmask 64512
        %v518 = vsel %vm516, %v514, 0
        %v521 = vsel %vm516, %v515, 0
        %523 = vmatpush.bf16.xpose.msra.mxu0 0
        %524 = vmatpush.bf16.xpose.msra.mxu0 0
        %525 = vmatpush.bf16.xpose.msra.mxu0 0
        %526 = vmatpush.bf16.xpose.msra.mxu0 0
        %527 = vmatpush.bf16.xpose.msra.mxu0 0
        %528 = vmatpush.bf16.xpose.msra.mxu0 0
        %529 = vmatpush.bf16.xpose.msra.mxu0 0
        %530 = vmatpush.bf16.xpose.msra.mxu0 %v521
        %531 = vmatmul.bf16.gmra.mxu0 %v518
        %v532 = vpop.f32.mrf.mxu0
        %v533 = vadd.f32 0.0, %v532
        %v534 = vpop.f32.mrf.mxu0
        %535 = vdwg.mxu0
        %v536 = vmul.f32 %v533, 0.35355338
        %vm537 = vcmask 80896
        %v538 = vsel %vm537, %v536, -inf
        %539 = vmax.xlane.f32.xlu0 %v538
        %v540 = vpop.xlane.xlu0 %539
        %v541 = vsub.f32 %v536, %v540
        %v542 = vmul.f32 %v541, 1.442695
        %v543 = vpow.pop %v542
        %v544 = vsel %vm537, %v543, 0.0
        %545 = vadd.xlane.f32.xlu0 %v544
        %v546 = vpop.xlane.xlu0 %545
        %v547 = vrcp.pop %v546
        %v548 = vmul.f32 %v543, %v547
        %v549 = vpack.c.bf16 %v548, %v548
        %551 = vrot.lane.b32.xlu0 %v515, 96
        %v552 = vpop.permute.xlu0 %551
        %v554 = vsel %vm537, %v549, 0
        %vm556 = vcmask 1044480
        %v558 = vsel %vm556, %v552, 0
        %560 = vmatpush.bf16.msra.mxu0 0
        %561 = vmatpush.bf16.msra.mxu0 0
        %562 = vmatpush.bf16.msra.mxu0 0
        %563 = vmatpush.bf16.msra.mxu0 0
        %564 = vmatpush.bf16.msra.mxu0 0
        %565 = vmatpush.bf16.msra.mxu0 0
        %566 = vmatpush.bf16.msra.mxu0 0
        %567 = vmatpush.bf16.msra.mxu0 %v558
        %568 = vmatmul.bf16.gmra.mxu0 %v554
        %v569 = vpop.f32.mrf.mxu0
        %v570 = vadd.f32 0.0, %v569
        %v571 = vpop.f32.mrf.mxu0
        %572 = vdwg.mxu0
        %v573 = vpack.c.bf16 %v570, %v570
        %v574 = vld [vmem:[%s6] sm:$0xf]
        %576 = vrot.lane.b32.xlu0 %v514, 120
        %v577 = vpop.permute.xlu0 %576
        %578 = vrot.lane.b32.xlu0 %v515, 120
        %v579 = vpop.permute.xlu0 %578
        %v581 = vsel %vm516, %v577, 0
        %v584 = vsel %vm516, %v579, 0
        %586 = vmatpush.bf16.xpose.msra.mxu0 0
        %587 = vmatpush.bf16.xpose.msra.mxu0 0
        %588 = vmatpush.bf16.xpose.msra.mxu0 0
        %589 = vmatpush.bf16.xpose.msra.mxu0 0
        %590 = vmatpush.bf16.xpose.msra.mxu0 0
        %591 = vmatpush.bf16.xpose.msra.mxu0 0
        %592 = vmatpush.bf16.xpose.msra.mxu0 0
        %593 = vmatpush.bf16.xpose.msra.mxu0 %v584
        %594 = vmatmul.bf16.gmra.mxu0 %v581
        %v595 = vpop.f32.mrf.mxu0
        %v596 = vadd.f32 0.0, %v595
        %v597 = vpop.f32.mrf.mxu0
        %598 = vdwg.mxu0
        %v599 = vmul.f32 %v596, 0.35355338
        %v600 = vsel %vm537, %v599, -inf
        %601 = vmax.xlane.f32.xlu0 %v600
        %v602 = vpop.xlane.xlu0 %601
        %v603 = vsub.f32 %v599, %v602
        %v604 = vmul.f32 %v603, 1.442695
        %v605 = vpow.pop %v604
        %v606 = vsel %vm537, %v605, 0.0
        %607 = vadd.xlane.f32.xlu0 %v606
        %v608 = vpop.xlane.xlu0 %607
        %v609 = vrcp.pop %v608
        %v610 = vmul.f32 %v605, %v609
        %v611 = vpack.c.bf16 %v610, %v610
        %612 = vrot.lane.b32.xlu0 %v515, 88
        %v613 = vpop.permute.xlu0 %612
        %v615 = vsel %vm537, %v611, 0
        %v618 = vsel %vm556, %v613, 0
        %620 = vmatpush.bf16.msra.mxu0 0
        %621 = vmatpush.bf16.msra.mxu0 0
        %622 = vmatpush.bf16.msra.mxu0 0
        %623 = vmatpush.bf16.msra.mxu0 0
        %624 = vmatpush.bf16.msra.mxu0 0
        %625 = vmatpush.bf16.msra.mxu0 0
        %626 = vmatpush.bf16.msra.mxu0 0
        %627 = vmatpush.bf16.msra.mxu0 %v618
        %628 = vmatmul.bf16.gmra.mxu0 %v615
        %v629 = vpop.f32.mrf.mxu0
        %v630 = vadd.f32 0.0, %v629
        %v631 = vpop.f32.mrf.mxu0
        %632 = vdwg.mxu0
        %v633 = vpack.c.bf16 %v630, %v630
        %v634 = vld [vmem:[%s6 + $0x4] sm:$0xf]
        %v636 = vsel %vm516, %v633, 0
        %vm638 = vcmask 1043456
        %v640 = vsel %vm638, %v634, 0
        %642 = vmatpush.bf16.msra.mxu0 0
        %643 = vmatpush.bf16.msra.mxu0 0
        %644 = vmatpush.bf16.msra.mxu0 0
        %645 = vmatpush.bf16.msra.mxu0 0
        %646 = vmatpush.bf16.msra.mxu0 0
        %647 = vmatpush.bf16.msra.mxu0 0
        %648 = vmatpush.bf16.msra.mxu0 0
        %649 = vmatpush.bf16.msra.mxu0 %v640
        %650 = vmatmul.bf16.gmra.mxu0 %v636
        %v651 = vpop.f32.mrf.mxu0
        %v652 = vadd.f32 0.0, %v651
        %v653 = vpop.f32.mrf.mxu0
        %654 = vdwg.mxu0
        %v656 = vsel %vm516, %v573, 0
        %v659 = vsel %vm638, %v574, 0
        %661 = vmatpush.bf16.msra.mxu0 0
        %662 = vmatpush.bf16.msra.mxu0 0
        %663 = vmatpush.bf16.msra.mxu0 0
        %664 = vmatpush.bf16.msra.mxu0 0
        %665 = vmatpush.bf16.msra.mxu0 0
        %666 = vmatpush.bf16.msra.mxu0 0
        %667 = vmatpush.bf16.msra.mxu0 0
        %668 = vmatpush.bf16.msra.mxu0 %v659
        %669 = vmatmul.bf16.gmra.mxu0 %v656
        %v670 = vpop.f32.mrf.mxu0
        %v671 = vadd.f32 %v652, %v670
        %v672 = vpop.f32.mrf.mxu0
        %673 = vdwg.mxu0
        %674 = vrot.lane.b32.xlu0 %v514, 112
        %v675 = vpop.permute.xlu0 %674
        %676 = vrot.lane.b32.xlu0 %v515, 112
        %v677 = vpop.permute.xlu0 %676
        %v679 = vsel %vm516, %v675, 0
        %v682 = vsel %vm516, %v677, 0
        %684 = vmatpush.bf16.xpose.msra.mxu0 0
        %685 = vmatpush.bf16.xpose.msra.mxu0 0
        %686 = vmatpush.bf16.xpose.msra.mxu0 0
        %687 = vmatpush.bf16.xpose.msra.mxu0 0
        %688 = vmatpush.bf16.xpose.msra.mxu0 0
        %689 = vmatpush.bf16.xpose.msra.mxu0 0
        %690 = vmatpush.bf16.xpose.msra.mxu0 0
        %691 = vmatpush.bf16.xpose.msra.mxu0 %v682
        %692 = vmatmul.bf16.gmra.mxu0 %v679
        %v693 = vpop.f32.mrf.mxu0
        %v694 = vadd.f32 0.0, %v693
        %v695 = vpop.f32.mrf.mxu0
        %696 = vdwg.mxu0
        %v697 = vmul.f32 %v694, 0.35355338
        %v698 = vsel %vm537, %v697, -inf
        %699 = vmax.xlane.f32.xlu0 %v698
        %v700 = vpop.xlane.xlu0 %699
        %v701 = vsub.f32 %v697, %v700
        %v702 = vmul.f32 %v701, 1.442695
        %v703 = vpow.pop %v702
        %v704 = vsel %vm537, %v703, 0.0
        %705 = vadd.xlane.f32.xlu0 %v704
        %v706 = vpop.xlane.xlu0 %705
        %v707 = vrcp.pop %v706
        %v708 = vmul.f32 %v703, %v707
        %v709 = vpack.c.bf16 %v708, %v708
        %710 = vrot.lane.b32.xlu0 %v515, 80
        %v711 = vpop.permute.xlu0 %710
        %v713 = vsel %vm537, %v709, 0
        %v716 = vsel %vm556, %v711, 0
        %718 = vmatpush.bf16.msra.mxu0 0
        %719 = vmatpush.bf16.msra.mxu0 0
        %720 = vmatpush.bf16.msra.mxu0 0
        %721 = vmatpush.bf16.msra.mxu0 0
        %722 = vmatpush.bf16.msra.mxu0 0
        %723 = vmatpush.bf16.msra.mxu0 0
        %724 = vmatpush.bf16.msra.mxu0 0
        %725 = vmatpush.bf16.msra.mxu0 %v716
        %726 = vmatmul.bf16.gmra.mxu0 %v713
        %v727 = vpop.f32.mrf.mxu0
        %v728 = vadd.f32 0.0, %v727
        %v729 = vpop.f32.mrf.mxu0
        %730 = vdwg.mxu0
        %v731 = vpack.c.bf16 %v728, %v728
        %v732 = vld [vmem:[%s6 + $0x8] sm:$0xf]
        %v734 = vsel %vm516, %v731, 0
        %v737 = vsel %vm638, %v732, 0
        %739 = vmatpush.bf16.msra.mxu0 0
        %740 = vmatpush.bf16.msra.mxu0 0
        %741 = vmatpush.bf16.msra.mxu0 0
        %742 = vmatpush.bf16.msra.mxu0 0
        %743 = vmatpush.bf16.msra.mxu0 0
        %744 = vmatpush.bf16.msra.mxu0 0
        %745 = vmatpush.bf16.msra.mxu0 0
        %746 = vmatpush.bf16.msra.mxu0 %v737
        %747 = vmatmul.bf16.gmra.mxu0 %v734
        %v748 = vpop.f32.mrf.mxu0
        %v749 = vadd.f32 0.0, %v748
        %v750 = vpop.f32.mrf.mxu0
        %751 = vdwg.mxu0
        %v752 = vadd.f32 %v671, %v749
        %753 = vrot.lane.b32.xlu0 %v514, 104
        %v754 = vpop.permute.xlu0 %753
        %755 = vrot.lane.b32.xlu0 %v515, 104
        %v756 = vpop.permute.xlu0 %755
        %v758 = vsel %vm516, %v754, 0
        %v761 = vsel %vm516, %v756, 0
        %763 = vmatpush.bf16.xpose.msra.mxu0 0
        %764 = vmatpush.bf16.xpose.msra.mxu0 0
        %765 = vmatpush.bf16.xpose.msra.mxu0 0
        %766 = vmatpush.bf16.xpose.msra.mxu0 0
        %767 = vmatpush.bf16.xpose.msra.mxu0 0
        %768 = vmatpush.bf16.xpose.msra.mxu0 0
        %769 = vmatpush.bf16.xpose.msra.mxu0 0
        %770 = vmatpush.bf16.xpose.msra.mxu0 %v761
        %771 = vmatmul.bf16.gmra.mxu0 %v758
        %v772 = vpop.f32.mrf.mxu0
        %v773 = vadd.f32 0.0, %v772
        %v774 = vpop.f32.mrf.mxu0
        %775 = vdwg.mxu0
        %v776 = vmul.f32 %v773, 0.35355338
        %v777 = vsel %vm537, %v776, -inf
        %778 = vmax.xlane.f32.xlu0 %v777
        %v779 = vpop.xlane.xlu0 %778
        %v780 = vsub.f32 %v776, %v779
        %v781 = vmul.f32 %v780, 1.442695
        %v782 = vpow.pop %v781
        %v783 = vsel %vm537, %v782, 0.0
        %784 = vadd.xlane.f32.xlu0 %v783
        %v785 = vpop.xlane.xlu0 %784
        %v786 = vrcp.pop %v785
        %v787 = vmul.f32 %v782, %v786
        %v788 = vpack.c.bf16 %v787, %v787
        %789 = vrot.lane.b32.xlu0 %v515, 72
        %v790 = vpop.permute.xlu0 %789
        %v792 = vsel %vm537, %v788, 0
        %v795 = vsel %vm556, %v790, 0
        %797 = vmatpush.bf16.msra.mxu0 0
        %798 = vmatpush.bf16.msra.mxu0 0
        %799 = vmatpush.bf16.msra.mxu0 0
        %800 = vmatpush.bf16.msra.mxu0 0
        %801 = vmatpush.bf16.msra.mxu0 0
        %802 = vmatpush.bf16.msra.mxu0 0
        %803 = vmatpush.bf16.msra.mxu0 0
        %804 = vmatpush.bf16.msra.mxu0 %v795
        %805 = vmatmul.bf16.gmra.mxu0 %v792
        %v806 = vpop.f32.mrf.mxu0
        %v807 = vadd.f32 0.0, %v806
        %v808 = vpop.f32.mrf.mxu0
        %809 = vdwg.mxu0
        %v810 = vpack.c.bf16 %v807, %v807
        %v811 = vld [vmem:[%s6 + $0xc] sm:$0xf]
        %v813 = vsel %vm516, %v810, 0
        %v816 = vsel %vm638, %v811, 0
        %818 = vmatpush.bf16.msra.mxu0 0
        %819 = vmatpush.bf16.msra.mxu0 0
        %820 = vmatpush.bf16.msra.mxu0 0
        %821 = vmatpush.bf16.msra.mxu0 0
        %822 = vmatpush.bf16.msra.mxu0 0
        %823 = vmatpush.bf16.msra.mxu0 0
        %824 = vmatpush.bf16.msra.mxu0 0
        %825 = vmatpush.bf16.msra.mxu0 %v816
        %826 = vmatmul.bf16.gmra.mxu0 %v813
        %v827 = vpop.f32.mrf.mxu0
        %v828 = vadd.f32 0.0, %v827
        %v829 = vpop.f32.mrf.mxu0
        %830 = vdwg.mxu0
        %v831 = vadd.f32 %v752, %v828
        %v832 = vld [vmem:[#allocation4] sm:$0x1]
        %v834 = vperm.slane %v832, 0
        %v836 = vadd.f32 %v831, %v834
        %v837 = vadd.f32 %v836, %v435
        %v838 = vld [vmem:[#allocation6] sm:$0x1]
        %v839 = vld [vmem:[#allocation7] sm:$0x1]
        %v840 = vsel %vm460, %v837, 0.0
        %841 = vadd.xlane.f32.xlu0 %v840
        %v842 = vpop.xlane.xlu0 %841
        %v843 = vrcp.pop 32.0
        %v844 = vmul.f32 32.0, %v843
        %v845 = vsub.f32 1.0, %v844
        %v846 = vmul.f32 %v843, %v845
        %v847 = vadd.f32 %v843, %v846
        %vm848 = vweird.f32 %v843
        %v849 = vsel %vm848, %v843, %v847
        %v850 = vmul.f32 %v842, %v849
        %v851 = vsub.f32 %v837, %v850
        %v852 = vmul.f32 %v851, %v851
        %v853 = vsel %vm460, %v852, 0.0
        %854 = vadd.xlane.f32.xlu0 %v853
        %v855 = vpop.xlane.xlu0 %854
        %v856 = vmul.f32 %v855, %v849
        %v857 = vadd.f32 %v856, 1e-05
        %v858 = vrsqrt.pop %v857
        %v859 = vmul.f32 %v858, %v857
        %v860 = vmul.f32 %v859, %v858
        %v861 = vmul.f32 0.5, %v860
        %v862 = vsub.f32 1.5, %v861
        %v863 = vmul.f32 %v858, %v862
        %vm864 = vweird.f32 %v857
        %vm865 = vweird.f32 %v858
        %vm866 = vmor %vm864, %vm865
        %v867 = vsel %vm866, %v858, %v863
        %v868 = vmul.f32 %v851, %v867
        %v870 = vperm.slane %v838, 0
        %v872 = vmul.f32 %v868, %v870
        %v874 = vperm.slane %v839, 0
        %v876 = vadd.f32 %v872, %v874
        %877 = vst.msk [vmem:[%s433] sm:$0xff] %vm460, %v876
        %p878 = scmp.lt.s32.totalorder %s24, 1
        %s879 = scalar_select %p878, %s24, 1
        %s880 = smul.addr %s879, 8
        %s881 = scalar_lea.vmem %s10, %s880
        // Predicated region
        $region77: #{transformer_forward.28} parent=59 // pred_check
          %p882 = pneg %p262
        $region78: #{transformer_forward.28} parent=59 // pred_check_branch
          %884 = sbr.rel (%p882) target = $region80
        $region79: #{transformer_forward.28} parent=59 // pred_region
          _
        $region80: #{transformer_forward.28} parent=59 // pred_fallthru
          _
      $region60: #{transformer_forward.28} parent=5 // pred_fallthru
        _
      %p885 = scmp.le.s32.totalorder 2, %s19
      // Predicated region
      $region81: #{transformer_forward.28} parent=5 // pred_check
        %p886 = pneg %p885
      $region82: #{transformer_forward.28} parent=5 // pred_check_branch
        %888 = sbr.rel (%p886) target = $region84
      $region83: #{transformer_forward.28} parent=5 // pred_region
        %s889 = ssub.s32 %s19, 2
        // Predicated region
        $region85: #{transformer_forward.28} parent=83 // pred_check
          %p890 = pneg %p268
        $region86: #{transformer_forward.28} parent=83 // pred_check_branch
          %892 = sbr.rel (%p890) target = $region88
        $region87: #{transformer_forward.28} parent=83 // pred_region
          %p893 = scmp.lt.s32.totalorder %s25, 1
          %s894 = scalar_select %p893, %s25, 1
          %s895 = smul.addr %s894, 8
          %s896 = scalar_lea.vmem %s10, %s895
        $region88: #{transformer_forward.28} parent=83 // pred_fallthru
          _
      $region84: #{transformer_forward.28} parent=5 // pred_fallthru
        _
    $region6: #{transformer_forward.28} parent=1 // loop_footer
      %s23 = sadd.s32 1, %s19
    $region7: #{transformer_forward.28} parent=1 // loop_footer_branch
      %18 = sbr.rel target = $region3
    $region8: #{transformer_forward.28} parent=1 // loop_exit
      _
    %897 = vsyncpa [#allocation3], 1
    %s898 = scalar_lea.sflag [#allocation3], 1
    %899 = vsyncpa %s898, 1
    %900 = vsyncpa [#allocation5], 1
    %901 = vsyncpa [#allocation8], 1

// kernel: transformer_forward.30
$region0: #{transformer_forward.30}
  #allocation0 [shape = 'u32[]', space=smem, size = 0x4, offset = 0x4, fixed_abs, tag = 'smem constant byte address 0x4 - core index']
  #allocation1 [shape = 'u32[72,128]{1,0:T(1,128)}', space=vmem, size = 0x9000, scoped, tag = 'internal scratch']
  %s0 = inlined_call_operand.vmem [shape: f32[2,8,32], index: 0, kind: input, shape index: {}, may-alias: {0,1}]
  %s1 = inlined_call_operand.vmem [shape: f32[2,8,32], index: 1, kind: input, shape index: {}, may-alias: {0,1}]
  %s2 = inlined_call_operand.vmem [shape: bf16[32,32], index: 2, kind: input, shape index: {}]
  %s3 = inlined_call_operand.hbm [shape: f32[1,32], index: 3, kind: input, shape index: {}]
  %s4 = inlined_call_operand.vmem [shape: bf16[32,64], index: 4, kind: input, shape index: {}]
  %s5 = inlined_call_operand.hbm [shape: f32[1,64], index: 5, kind: input, shape index: {}]
  %s6 = inlined_call_operand.vmem [shape: bf16[32,32], index: 6, kind: input, shape index: {}]
  %s7 = inlined_call_operand.hbm [shape: f32[1,32], index: 7, kind: input, shape index: {}]
  %s8 = inlined_call_operand.hbm [shape: f32[1,32], index: 8, kind: input, shape index: {}]
  %s9 = inlined_call_operand.hbm [shape: f32[1,32], index: 9, kind: input, shape index: {}]
  %s10 = inlined_call_operand.vmem [shape: f32[2,8,32], index: 10, kind: output, shape index: {}]
  %s11 = sld [smem:[#allocation0]]
  $region93: #{transformer_forward.30} parent=0
    _
  %s13 = ssub.s32 1, %s11
  %s14 = scalar_select 0, %s13, %s11
  $region1: #{transformer_forward.30} parent=0
    #allocation2 [shape = 'u8[512]{0}', space=vmem, size = 0x400, scoped, tag = 'input window, operand 3, single buffered']
    #allocation3 [shape = 's32[2]{0}', space=sflag, size = 0x8, scoped, tag = 'scoped memory for transformer_forward.30']
    #allocation4 [shape = 'u8[512]{0}', space=vmem, size = 0x400, scoped, tag = 'input window, operand 5, single buffered']
    #allocation5 [shape = 's32[1]{0}', space=sflag, size = 0x4, scoped, tag = 'scoped memory for transformer_forward.30']
    #allocation6 [shape = 'u8[512]{0}', space=vmem, size = 0x400, scoped, tag = 'input window, operand 7, single buffered']
    #allocation7 [shape = 'u8[512]{0}', space=vmem, size = 0x400, scoped, tag = 'input window, operand 8, single buffered']
    #allocation8 [shape = 's32[1]{0}', space=sflag, size = 0x4, scoped, tag = 'scoped memory for transformer_forward.30']
    #allocation9 [shape = 'u8[512]{0}', space=vmem, size = 0x400, scoped, tag = 'input window, operand 9, single buffered']
    %15 = vsyncpa [#allocation3], 0
    %16 = vsyncpa [#allocation5], 0
    %17 = vsyncpa [#allocation8], 0
    loop: start=0, step=1, limit=4
    $region2: #{transformer_forward.30} parent=1 // loop_pre_header
      _
    $region3: #{transformer_forward.30} parent=1 // loop_header
      %s19 = sphi 0, %s23
      %p20 = scmp.ge.s32.totalorder %s19, 4
      %s29 = sphi 0, %s31
      %s32 = sphi 0, %s29
      %s33 = sphi 0, %s32
      %s49 = sphi 0, %s33
      %s55 = sphi 0, %s57
      %s58 = sphi 0, %s55
      %s59 = sphi 0, %s58
      %s75 = sphi 0, %s59
      %s79 = sphi 0, %s79
      %s81 = sphi 0, %s79
      %s82 = sphi 0, %s81
      %s96 = sphi 0, %s82
      %s100 = sphi 0, %s100
      %s102 = sphi 0, %s100
      %s103 = sphi 0, %s102
      %s117 = sphi 0, %s103
      %s121 = sphi 0, %s121
      %s123 = sphi 0, %s121
      %s124 = sphi 0, %s123
      %s138 = sphi 0, %s124
      %s142 = sphi 0, %s142
      %s144 = sphi 0, %s142
      %s145 = sphi 0, %s144
      %s159 = sphi 0, %s145
      %s163 = sphi 0, %s163
      %s165 = sphi 0, %s163
      %s166 = sphi 0, %s165
      %s180 = sphi 0, %s166
      %s184 = sphi 0, %s184
      %s186 = sphi 0, %s184
      %s187 = sphi 0, %s186
      %s201 = sphi 0, %s187
      %s205 = sphi 0, %s205
      %s207 = sphi 0, %s205
      %s208 = sphi 0, %s207
      %s222 = sphi 0, %s208
      %s226 = sphi 0, %s226
      %s228 = sphi 0, %s226
      %s229 = sphi 0, %s228
      %s243 = sphi 0, %s229
      %s249 = sphi 0, %s251
      %s252 = sphi 0, %s249
      %s253 = sphi 0, %s252
      %s269 = sphi 0, %s253
    $region4: #{transformer_forward.30} parent=1 // loop_header_branch
      %22 = sbr.rel (%p20) target = $region8
    $region5: #{transformer_forward.30} parent=1 // loop_body
      %s24 = ssub.s32 %s19, 1
      %s25 = ssub.s32 %s19, 2
      %s26 = sadd.s32 %s19, 1
      %s27 = ssub.s32 %s19, %s26
      %p28 = scmp.eq.s32.totalorder %s27, 0
      %s30 = sadd.s32 %s29, 1
      %s31 = scalar_select %p28, %s29, %s30
      %p34 = pneg %p28
      %p35 = scmp.eq.s32.totalorder %s19, 1
      %p36 = por %p34, %p35
      %p37 = scmp.ne.s32.totalorder %s29, %s32
      %p38 = scmp.eq.s32.totalorder %s19, 0
      %p39 = por %p37, %p38
      %p40 = scmp.ne.s32.totalorder %s29, %s32
      %p41 = scmp.eq.s32.totalorder %s24, 1
      %p42 = por %p40, %p41
      %p43 = scmp.ne.s32.totalorder %s32, %s33
      %p44 = scmp.eq.s32.totalorder %s24, 0
      %p45 = por %p43, %p44
      %p46 = scmp.ne.s32.totalorder %s32, %s33
      %p47 = scmp.eq.s32.totalorder %s25, 1
      %p48 = por %p46, %p47
      %p50 = scmp.ne.s32.totalorder %s33, %s49
      %p51 = scmp.eq.s32.totalorder %s25, 0
      %p52 = por %p50, %p51
      %s53 = ssub.s32 %s19, %s26
      %p54 = scmp.eq.s32.totalorder %s53, 0
      %s56 = sadd.s32 %s55, 1
      %s57 = scalar_select %p54, %s55, %s56
      %p60 = pneg %p54
      %p61 = scmp.eq.s32.totalorder %s19, 1
      %p62 = por %p60, %p61
      %p63 = scmp.ne.s32.totalorder %s55, %s58
      %p64 = scmp.eq.s32.totalorder %s19, 0
      %p65 = por %p63, %p64
      %p66 = scmp.ne.s32.totalorder %s55, %s58
      %p67 = scmp.eq.s32.totalorder %s24, 1
      %p68 = por %p66, %p67
      %p69 = scmp.ne.s32.totalorder %s58, %s59
      %p70 = scmp.eq.s32.totalorder %s24, 0
      %p71 = por %p69, %p70
      %p72 = scmp.ne.s32.totalorder %s58, %s59
      %p73 = scmp.eq.s32.totalorder %s25, 1
      %p74 = por %p72, %p73
      %p76 = scmp.ne.s32.totalorder %s59, %s75
      %p77 = scmp.eq.s32.totalorder %s25, 0
      %p78 = por %p76, %p77
      %s80 = sadd.s32 %s79, 1
      %p83 = scmp.eq.s32.totalorder %s19, 1
      %p84 = scmp.ne.s32.totalorder %s79, %s81
      %p85 = scmp.eq.s32.totalorder %s19, 0
      %p86 = por %p84, %p85
      %p87 = scmp.ne.s32.totalorder %s79, %s81
      %p88 = scmp.eq.s32.totalorder %s24, 1
      %p89 = por %p87, %p88
      %p90 = scmp.ne.s32.totalorder %s81, %s82
      %p91 = scmp.eq.s32.totalorder %s24, 0
      %p92 = por %p90, %p91
      %p93 = scmp.ne.s32.totalorder %s81, %s82
      %p94 = scmp.eq.s32.totalorder %s25, 1
      %p95 = por %p93, %p94
      %p97 = scmp.ne.s32.totalorder %s82, %s96
      %p98 = scmp.eq.s32.totalorder %s25, 0
      %p99 = por %p97, %p98
      %s101 = sadd.s32 %s100, 1
      %p104 = scmp.eq.s32.totalorder %s19, 1
      %p105 = scmp.ne.s32.totalorder %s100, %s102
      %p106 = scmp.eq.s32.totalorder %s19, 0
      %p107 = por %p105, %p106
      %p108 = scmp.ne.s32.totalorder %s100, %s102
      %p109 = scmp.eq.s32.totalorder %s24, 1
      %p110 = por %p108, %p109
      %p111 = scmp.ne.s32.totalorder %s102, %s103
      %p112 = scmp.eq.s32.totalorder %s24, 0
      %p113 = por %p111, %p112
      %p114 = scmp.ne.s32.totalorder %s102, %s103
      %p115 = scmp.eq.s32.totalorder %s25, 1
      %p116 = por %p114, %p115
      %p118 = scmp.ne.s32.totalorder %s103, %s117
      %p119 = scmp.eq.s32.totalorder %s25, 0
      %p120 = por %p118, %p119
      %s122 = sadd.s32 %s121, 1
      %p125 = scmp.eq.s32.totalorder %s19, 1
      %p126 = scmp.ne.s32.totalorder %s121, %s123
      %p127 = scmp.eq.s32.totalorder %s19, 0
      %p128 = por %p126, %p127
      %p129 = scmp.ne.s32.totalorder %s121, %s123
      %p130 = scmp.eq.s32.totalorder %s24, 1
      %p131 = por %p129, %p130
      %p132 = scmp.ne.s32.totalorder %s123, %s124
      %p133 = scmp.eq.s32.totalorder %s24, 0
      %p134 = por %p132, %p133
      %p135 = scmp.ne.s32.totalorder %s123, %s124
      %p136 = scmp.eq.s32.totalorder %s25, 1
      %p137 = por %p135, %p136
      %p139 = scmp.ne.s32.totalorder %s124, %s138
      %p140 = scmp.eq.s32.totalorder %s25, 0
      %p141 = por %p139, %p140
      %s143 = sadd.s32 %s142, 1
      %p146 = scmp.eq.s32.totalorder %s19, 1
      %p147 = scmp.ne.s32.totalorder %s142, %s144
      %p148 = scmp.eq.s32.totalorder %s19, 0
      %p149 = por %p147, %p148
      %p150 = scmp.ne.s32.totalorder %s142, %s144
      %p151 = scmp.eq.s32.totalorder %s24, 1
      %p152 = por %p150, %p151
      %p153 = scmp.ne.s32.totalorder %s144, %s145
      %p154 = scmp.eq.s32.totalorder %s24, 0
      %p155 = por %p153, %p154
      %p156 = scmp.ne.s32.totalorder %s144, %s145
      %p157 = scmp.eq.s32.totalorder %s25, 1
      %p158 = por %p156, %p157
      %p160 = scmp.ne.s32.totalorder %s145, %s159
      %p161 = scmp.eq.s32.totalorder %s25, 0
      %p162 = por %p160, %p161
      %s164 = sadd.s32 %s163, 1
      %p167 = scmp.eq.s32.totalorder %s19, 1
      %p168 = scmp.ne.s32.totalorder %s163, %s165
      %p169 = scmp.eq.s32.totalorder %s19, 0
      %p170 = por %p168, %p169
      %p171 = scmp.ne.s32.totalorder %s163, %s165
      %p172 = scmp.eq.s32.totalorder %s24, 1
      %p173 = por %p171, %p172
      %p174 = scmp.ne.s32.totalorder %s165, %s166
      %p175 = scmp.eq.s32.totalorder %s24, 0
      %p176 = por %p174, %p175
      %p177 = scmp.ne.s32.totalorder %s165, %s166
      %p178 = scmp.eq.s32.totalorder %s25, 1
      %p179 = por %p177, %p178
      %p181 = scmp.ne.s32.totalorder %s166, %s180
      %p182 = scmp.eq.s32.totalorder %s25, 0
      %p183 = por %p181, %p182
      %s185 = sadd.s32 %s184, 1
      %p188 = scmp.eq.s32.totalorder %s19, 1
      %p189 = scmp.ne.s32.totalorder %s184, %s186
      %p190 = scmp.eq.s32.totalorder %s19, 0
      %p191 = por %p189, %p190
      %p192 = scmp.ne.s32.totalorder %s184, %s186
      %p193 = scmp.eq.s32.totalorder %s24, 1
      %p194 = por %p192, %p193
      %p195 = scmp.ne.s32.totalorder %s186, %s187
      %p196 = scmp.eq.s32.totalorder %s24, 0
      %p197 = por %p195, %p196
      %p198 = scmp.ne.s32.totalorder %s186, %s187
      %p199 = scmp.eq.s32.totalorder %s25, 1
      %p200 = por %p198, %p199
      %p202 = scmp.ne.s32.totalorder %s187, %s201
      %p203 = scmp.eq.s32.totalorder %s25, 0
      %p204 = por %p202, %p203
      %s206 = sadd.s32 %s205, 1
      %p209 = scmp.eq.s32.totalorder %s19, 1
      %p210 = scmp.ne.s32.totalorder %s205, %s207
      %p211 = scmp.eq.s32.totalorder %s19, 0
      %p212 = por %p210, %p211
      %p213 = scmp.ne.s32.totalorder %s205, %s207
      %p214 = scmp.eq.s32.totalorder %s24, 1
      %p215 = por %p213, %p214
      %p216 = scmp.ne.s32.totalorder %s207, %s208
      %p217 = scmp.eq.s32.totalorder %s24, 0
      %p218 = por %p216, %p217
      %p219 = scmp.ne.s32.totalorder %s207, %s208
      %p220 = scmp.eq.s32.totalorder %s25, 1
      %p221 = por %p219, %p220
      %p223 = scmp.ne.s32.totalorder %s208, %s222
      %p224 = scmp.eq.s32.totalorder %s25, 0
      %p225 = por %p223, %p224
      %s227 = sadd.s32 %s226, 1
      %p230 = scmp.eq.s32.totalorder %s19, 1
      %p231 = scmp.ne.s32.totalorder %s226, %s228
      %p232 = scmp.eq.s32.totalorder %s19, 0
      %p233 = por %p231, %p232
      %p234 = scmp.ne.s32.totalorder %s226, %s228
      %p235 = scmp.eq.s32.totalorder %s24, 1
      %p236 = por %p234, %p235
      %p237 = scmp.ne.s32.totalorder %s228, %s229
      %p238 = scmp.eq.s32.totalorder %s24, 0
      %p239 = por %p237, %p238
      %p240 = scmp.ne.s32.totalorder %s228, %s229
      %p241 = scmp.eq.s32.totalorder %s25, 1
      %p242 = por %p240, %p241
      %p244 = scmp.ne.s32.totalorder %s229, %s243
      %p245 = scmp.eq.s32.totalorder %s25, 0
      %p246 = por %p244, %p245
      %s247 = ssub.s32 %s19, %s26
      %p248 = scmp.eq.s32.totalorder %s247, 0
      %s250 = sadd.s32 %s249, 1
      %s251 = scalar_select %p248, %s249, %s250
      %p254 = pneg %p248
      %p255 = scmp.eq.s32.totalorder %s19, 1
      %p256 = por %p254, %p255
      %p257 = scmp.ne.s32.totalorder %s249, %s252
      %p258 = scmp.eq.s32.totalorder %s19, 0
      %p259 = por %p257, %p258
      %p260 = scmp.ne.s32.totalorder %s249, %s252
      %p261 = scmp.eq.s32.totalorder %s24, 1
      %p262 = por %p260, %p261
      %p263 = scmp.ne.s32.totalorder %s252, %s253
      %p264 = scmp.eq.s32.totalorder %s24, 0
      %p265 = por %p263, %p264
      %p266 = scmp.ne.s32.totalorder %s252, %s253
      %p267 = scmp.eq.s32.totalorder %s25, 1
      %p268 = por %p266, %p267
      %p270 = scmp.ne.s32.totalorder %s253, %s269
      %p271 = scmp.eq.s32.totalorder %s25, 0
      %p272 = por %p270, %p271
      %p273 = scmp.le.s32.totalorder 1, %s19
      %p274 = scmp.lt.s32.totalorder %s19, 3
      %p275 = pnand %p273, %p274
      %p276 = pneg %p275
      // Predicated region
      $region9: #{transformer_forward.30} parent=5 // pred_check
        _
      $region10: #{transformer_forward.30} parent=5 // pred_check_branch
        %278 = sbr.rel (%p275) target = $region12
      $region11: #{transformer_forward.30} parent=5 // pred_region
        %s279 = ssub.s32 %s19, 1
        // Predicated region
        $region13: #{transformer_forward.30} parent=11 // pred_check
          %p280 = pneg %p92
        $region14: #{transformer_forward.30} parent=11 // pred_check_branch
          %282 = sbr.rel (%p280) target = $region16
        $region15: #{transformer_forward.30} parent=11 // pred_region
          _
        $region16: #{transformer_forward.30} parent=11 // pred_fallthru
          _
        // Predicated region
        $region17: #{transformer_forward.30} parent=11 // pred_check
          %p283 = pneg %p113
        $region18: #{transformer_forward.30} parent=11 // pred_check_branch
          %285 = sbr.rel (%p283) target = $region20
        $region19: #{transformer_forward.30} parent=11 // pred_region
          %287 = vsyncadd [#allocation3], 0
          %s289 = sshll.u32 %s3, 4
          %s290 = int_to_ptr.hbm [resolvable:$true] %s289
          %s291 = sshll.u32 [#allocation2], 4
          %s292 = int_to_ptr.vmem [resolvable:$true] %s291
          %294 = dma.hbm_to_vmem [thread:$0]  %s290, 16, %s292, [#allocation3]
        $region20: #{transformer_forward.30} parent=11 // pred_fallthru
          _
        // Predicated region
        $region21: #{transformer_forward.30} parent=11 // pred_check
          %p295 = pneg %p134
        $region22: #{transformer_forward.30} parent=11 // pred_check_branch
          %297 = sbr.rel (%p295) target = $region24
        $region23: #{transformer_forward.30} parent=11 // pred_region
          _
        $region24: #{transformer_forward.30} parent=11 // pred_fallthru
          _
        // Predicated region
        $region25: #{transformer_forward.30} parent=11 // pred_check
          %p298 = pneg %p155
        $region26: #{transformer_forward.30} parent=11 // pred_check_branch
          %300 = sbr.rel (%p298) target = $region28
        $region27: #{transformer_forward.30} parent=11 // pred_region
          %302 = vsyncadd [#allocation5], 0
          %s304 = sshll.u32 %s5, 4
          %s305 = int_to_ptr.hbm [resolvable:$true] %s304
          %s306 = sshll.u32 [#allocation4], 4
          %s307 = int_to_ptr.vmem [resolvable:$true] %s306
          %309 = dma.hbm_to_vmem [thread:$0]  %s305, 16, %s307, [#allocation5]
        $region28: #{transformer_forward.30} parent=11 // pred_fallthru
          _
        // Predicated region
        $region29: #{transformer_forward.30} parent=11 // pred_check
          %p310 = pneg %p176
        $region30: #{transformer_forward.30} parent=11 // pred_check_branch
          %312 = sbr.rel (%p310) target = $region32
        $region31: #{transformer_forward.30} parent=11 // pred_region
          _
        $region32: #{transformer_forward.30} parent=11 // pred_fallthru
          _
        // Predicated region
        $region33: #{transformer_forward.30} parent=11 // pred_check
          %p313 = pneg %p197
        $region34: #{transformer_forward.30} parent=11 // pred_check_branch
          %315 = sbr.rel (%p313) target = $region36
        $region35: #{transformer_forward.30} parent=11 // pred_region
          %317 = vsyncadd [#allocation5], 0
          %s319 = sshll.u32 %s7, 4
          %s320 = int_to_ptr.hbm [resolvable:$true] %s319
          %s321 = sshll.u32 [#allocation6], 4
          %s322 = int_to_ptr.vmem [resolvable:$true] %s321
          %324 = dma.hbm_to_vmem [thread:$0]  %s320, 16, %s322, [#allocation5]
        $region36: #{transformer_forward.30} parent=11 // pred_fallthru
          _
        // Predicated region
        $region37: #{transformer_forward.30} parent=11 // pred_check
          %p325 = pneg %p218
        $region38: #{transformer_forward.30} parent=11 // pred_check_branch
          %327 = sbr.rel (%p325) target = $region40
        $region39: #{transformer_forward.30} parent=11 // pred_region
          %329 = vsyncadd [#allocation8], 0
          %s331 = sshll.u32 %s8, 4
          %s332 = int_to_ptr.hbm [resolvable:$true] %s331
          %s333 = sshll.u32 [#allocation7], 4
          %s334 = int_to_ptr.vmem [resolvable:$true] %s333
          %336 = dma.hbm_to_vmem [thread:$0]  %s332, 16, %s334, [#allocation8]
        $region40: #{transformer_forward.30} parent=11 // pred_fallthru
          _
        // Predicated region
        $region41: #{transformer_forward.30} parent=11 // pred_check
          %p337 = pneg %p239
        $region42: #{transformer_forward.30} parent=11 // pred_check_branch
          %339 = sbr.rel (%p337) target = $region44
        $region43: #{transformer_forward.30} parent=11 // pred_region
          %341 = vsyncadd [#allocation8], 0
          %s343 = sshll.u32 %s9, 4
          %s344 = int_to_ptr.hbm [resolvable:$true] %s343
          %s345 = sshll.u32 [#allocation9], 4
          %s346 = int_to_ptr.vmem [resolvable:$true] %s345
          %348 = dma.hbm_to_vmem [thread:$0]  %s344, 16, %s346, [#allocation8]
        $region44: #{transformer_forward.30} parent=11 // pred_fallthru
          _
      $region12: #{transformer_forward.30} parent=5 // pred_fallthru
        _
      %p349 = scmp.lt.s32.totalorder %s19, 2
      // Predicated region
      $region45: #{transformer_forward.30} parent=5 // pred_check
        %p350 = pneg %p349
      $region46: #{transformer_forward.30} parent=5 // pred_check_branch
        %352 = sbr.rel (%p350) target = $region48
      $region47: #{transformer_forward.30} parent=5 // pred_region
        // Predicated region
        $region49: #{transformer_forward.30} parent=47 // pred_check
          %p353 = pneg %p39
        $region50: #{transformer_forward.30} parent=47 // pred_check_branch
          %355 = sbr.rel (%p353) target = $region52
        $region51: #{transformer_forward.30} parent=47 // pred_region
          %p356 = scmp.lt.s32.totalorder %s19, 1
          %s357 = scalar_select %p356, %s19, 1
          %s358 = smul.addr %s357, 8
          %s359 = scalar_lea.vmem %s0, %s358
        $region52: #{transformer_forward.30} parent=47 // pred_fallthru
          _
        // Predicated region
        $region53: #{transformer_forward.30} parent=47 // pred_check
          %p360 = pneg %p65
        $region54: #{transformer_forward.30} parent=47 // pred_check_branch
          %362 = sbr.rel (%p360) target = $region56
        $region55: #{transformer_forward.30} parent=47 // pred_region
          %p363 = scmp.lt.s32.totalorder %s19, 1
          %s364 = scalar_select %p363, %s19, 1
          %s365 = smul.addr %s364, 8
          %s366 = scalar_lea.vmem %s1, %s365
        $region56: #{transformer_forward.30} parent=47 // pred_fallthru
          _
      $region48: #{transformer_forward.30} parent=5 // pred_fallthru
        _
      %p367 = scmp.le.s32.totalorder 1, %s19
      %p368 = scmp.lt.s32.totalorder %s19, 3
      %p369 = pnand %p367, %p368
      %p370 = pneg %p369
      // Predicated region
      $region57: #{transformer_forward.30} parent=5 // pred_check
        _
      $region58: #{transformer_forward.30} parent=5 // pred_check_branch
        %372 = sbr.rel (%p369) target = $region60
      $region59: #{transformer_forward.30} parent=5 // pred_region
        %s373 = ssub.s32 %s19, 1
        // Predicated region
        $region61: #{transformer_forward.30} parent=59 // pred_check
          %p374 = pneg %p113
        $region62: #{transformer_forward.30} parent=59 // pred_check_branch
          %376 = sbr.rel (%p374) target = $region64
        $region63: #{transformer_forward.30} parent=59 // pred_region
          %378 = dma.done [#allocation3], 16
        $region64: #{transformer_forward.30} parent=59 // pred_fallthru
          _
        // Predicated region
        $region65: #{transformer_forward.30} parent=59 // pred_check
          %p379 = pneg %p155
        $region66: #{transformer_forward.30} parent=59 // pred_check_branch
          %381 = sbr.rel (%p379) target = $region68
        $region67: #{transformer_forward.30} parent=59 // pred_region
          %383 = dma.done [#allocation5], 16
        $region68: #{transformer_forward.30} parent=59 // pred_fallthru
          _
        // Predicated region
        $region69: #{transformer_forward.30} parent=59 // pred_check
          %p384 = pneg %p197
        $region70: #{transformer_forward.30} parent=59 // pred_check_branch
          %386 = sbr.rel (%p384) target = $region72
        $region71: #{transformer_forward.30} parent=59 // pred_region
          %388 = dma.done [#allocation5], 16
        $region72: #{transformer_forward.30} parent=59 // pred_fallthru
          _
        // Predicated region
        $region73: #{transformer_forward.30} parent=59 // pred_check
          %p389 = pneg %p218
        $region74: #{transformer_forward.30} parent=59 // pred_check_branch
          %391 = sbr.rel (%p389) target = $region76
        $region75: #{transformer_forward.30} parent=59 // pred_region
          %393 = dma.done [#allocation8], 16
        $region76: #{transformer_forward.30} parent=59 // pred_fallthru
          _
        // Predicated region
        $region77: #{transformer_forward.30} parent=59 // pred_check
          %p394 = pneg %p239
        $region78: #{transformer_forward.30} parent=59 // pred_check_branch
          %396 = sbr.rel (%p394) target = $region80
        $region79: #{transformer_forward.30} parent=59 // pred_region
          %398 = dma.done [#allocation8], 16
        $region80: #{transformer_forward.30} parent=59 // pred_fallthru
          _
        %p399 = scmp.lt.s32.totalorder %s24, 1
        %s400 = scalar_select %p399, %s24, 1
        %s401 = smul.addr %s400, 8
        %s402 = scalar_lea.vmem %s0, %s401
        %p403 = pneg %p45
        %p404 = pneg %p42
        %p405 = scmp.lt.s32.totalorder %s24, 1
        %s406 = scalar_select %p405, %s24, 1
        %s407 = smul.addr %s406, 8
        %s408 = scalar_lea.vmem %s1, %s407
        %p409 = pneg %p71
        %p410 = pneg %p68
        %p411 = pneg %p92
        %p412 = pneg %p89
        %p413 = pneg %p113
        %p414 = pneg %p110
        %p415 = pneg %p134
        %p416 = pneg %p131
        %p417 = pneg %p155
        %p418 = pneg %p152
        %p419 = pneg %p176
        %p420 = pneg %p173
        %p421 = pneg %p197
        %p422 = pneg %p194
        %p423 = pneg %p218
        %p424 = pneg %p215
        %p425 = pneg %p239
        %p426 = pneg %p236
        %p427 = pneg %p265
        %p428 = pneg %p262
        %p429 = scmp.lt.s32.totalorder %s24, 1
        %s430 = scalar_select %p429, %s24, 1
        %s431 = smul.addr %s430, 8
        %s432 = scalar_lea.vmem %s10, %s431
        %p433 = scmp.lt.s32.totalorder %s24, 1
        %s434 = scalar_select %p433, %s24, 1
        %s435 = smul.addr %s434, 8
        %s436 = scalar_lea.vmem %s0, %s435
        %p437 = scmp.lt.s32.totalorder %s24, 1
        %s438 = scalar_select %p437, %s24, 1
        %s439 = smul.addr %s438, 8
        %s440 = scalar_lea.vmem %s1, %s439
        %p441 = scmp.lt.s32.totalorder %s24, 1
        %s442 = scalar_select %p441, %s24, 1
        %s443 = smul.addr %s442, 8
        %s444 = scalar_lea.vmem %s10, %s443
        %v446 = vld [vmem:[%s436] sm:$0xff]
        %v447 = vld [vmem:[%s440] sm:$0xff]
        %v448 = vpack.c.bf16 %v446, %v446
        %v449 = vpack.c.bf16 %v447, %v447
        %v450 = vld [vmem:[%s2] sm:$0xf]
        %v451 = vld [vmem:[%s2 + $0x4] sm:$0xf]
        %v452 = vld [vmem:[%s2 + $0x8] sm:$0xf]
        %v453 = vld [vmem:[%s2 + $0xc] sm:$0xf]
        %v454 = vld [vmem:[#allocation2] sm:$0x1]
        %v456 = vperm.slane %v454, 0
        %v462 = vunpack.c.l.b16 %v450
        %v463 = vunpack.c.l.b16 %v451
        %v464 = vunpack.c.l.b16 %v452
        %v465 = vunpack.c.l.b16 %v453
        %v466 = vpack.c.b16 %v463, %v462
        %v467 = vpack.c.b16 %v465, %v464
        %vm470 = vcmask 261120
        %v472 = vsel %vm470, %v448, 0
        %474 = vmatpush.bf16.msra.mxu0 0
        %475 = vmatpush.bf16.msra.mxu0 0
        %476 = vmatpush.bf16.msra.mxu0 0
        %477 = vmatpush.bf16.msra.mxu0 0
        %478 = vmatpush.bf16.msra.mxu0 0
        %479 = vmatpush.bf16.msra.mxu0 0
        %480 = vmatpush.bf16.msra.mxu0 %v467
        %481 = vmatpush.bf16.msra.mxu0 %v466
        %482 = vmatmul.bf16.gmra.mxu0 %v472
        %v483 = vpop.f32.mrf.mxu0
        %v484 = vadd.f32 %v456, %v483
        %v485 = vpop.f32.mrf.mxu0
        %486 = vdwg.mxu0
        %v487 = vld [vmem:[%s4] sm:$0xf]
        %v488 = vld [vmem:[%s4 + $0x4] sm:$0xf]
        %v489 = vld [vmem:[%s4 + $0x8] sm:$0xf]
        %v490 = vld [vmem:[%s4 + $0xc] sm:$0xf]
        %v491 = vld [vmem:[#allocation4] sm:$0x1]
        %v493 = vperm.slane %v491, 0
        %v499 = vunpack.c.l.b16 %v487
        %v500 = vunpack.c.l.b16 %v488
        %v501 = vunpack.c.l.b16 %v489
        %v502 = vunpack.c.l.b16 %v490
        %v503 = vpack.c.b16 %v500, %v499
        %v504 = vpack.c.b16 %v502, %v501
        %v508 = vsel %vm470, %v449, 0
        %510 = vmatpush.bf16.msra.mxu0 0
        %511 = vmatpush.bf16.msra.mxu0 0
        %512 = vmatpush.bf16.msra.mxu0 0
        %513 = vmatpush.bf16.msra.mxu0 0
        %514 = vmatpush.bf16.msra.mxu0 0
        %515 = vmatpush.bf16.msra.mxu0 0
        %516 = vmatpush.bf16.msra.mxu0 %v504
        %517 = vmatpush.bf16.msra.mxu0 %v503
        %518 = vmatmul.bf16.gmra.mxu0 %v508
        %v519 = vpop.f32.mrf.mxu0
        %v520 = vadd.f32 %v493, %v519
        %v521 = vpop.f32.mrf.mxu0
        %522 = vdwg.mxu0
        %v523 = vlaneseq
        %v524 = vshrl.u32 %v523, 7
        %v525 = vlaneseq
        %v526 = vand.u32 %v525, 127
        %vm527 = vcmp.le.s32.totalorder %v526, %v524
        %v528 = vsel %vm527, 0.0, -1e+09
        %v529 = vpack.c.bf16 %v484, %v484
        %v530 = vpack.c.bf16 %v520, %v520
        %vm531 = vcmask 64512
        %v533 = vsel %vm531, %v529, 0
        %v536 = vsel %vm531, %v530, 0
        %538 = vmatpush.bf16.xpose.msra.mxu0 0
        %539 = vmatpush.bf16.xpose.msra.mxu0 0
        %540 = vmatpush.bf16.xpose.msra.mxu0 0
        %541 = vmatpush.bf16.xpose.msra.mxu0 0
        %542 = vmatpush.bf16.xpose.msra.mxu0 0
        %543 = vmatpush.bf16.xpose.msra.mxu0 0
        %544 = vmatpush.bf16.xpose.msra.mxu0 0
        %545 = vmatpush.bf16.xpose.msra.mxu0 %v536
        %546 = vmatmul.bf16.gmra.mxu0 %v533
        %v547 = vpop.f32.mrf.mxu0
        %v548 = vadd.f32 0.0, %v547
        %v549 = vpop.f32.mrf.mxu0
        %550 = vdwg.mxu0
        %v551 = vmul.f32 %v548, 0.35355338
        %v552 = vadd.f32 %v551, %v528
        %v553 = vsel %vm531, %v552, -inf
        %554 = vmax.xlane.f32.xlu0 %v553
        %v555 = vpop.xlane.xlu0 %554
        %v556 = vsub.f32 %v552, %v555
        %v557 = vmul.f32 %v556, 1.442695
        %v558 = vpow.pop %v557
        %v559 = vsel %vm531, %v558, 0.0
        %560 = vadd.xlane.f32.xlu0 %v559
        %v561 = vpop.xlane.xlu0 %560
        %v562 = vrcp.pop %v561
        %v563 = vmul.f32 %v558, %v562
        %v564 = vpack.c.bf16 %v563, %v563
        %566 = vrot.lane.b32.xlu0 %v530, 96
        %v567 = vpop.permute.xlu0 %566
        %v569 = vsel %vm531, %v564, 0
        %vm571 = vcmask 1043456
        %v573 = vsel %vm571, %v567, 0
        %575 = vmatpush.bf16.msra.mxu0 0
        %576 = vmatpush.bf16.msra.mxu0 0
        %577 = vmatpush.bf16.msra.mxu0 0
        %578 = vmatpush.bf16.msra.mxu0 0
        %579 = vmatpush.bf16.msra.mxu0 0
        %580 = vmatpush.bf16.msra.mxu0 0
        %581 = vmatpush.bf16.msra.mxu0 0
        %582 = vmatpush.bf16.msra.mxu0 %v573
        %583 = vmatmul.bf16.gmra.mxu0 %v569
        %v584 = vpop.f32.mrf.mxu0
        %v585 = vadd.f32 0.0, %v584
        %v586 = vpop.f32.mrf.mxu0
        %587 = vdwg.mxu0
        %v588 = vpack.c.bf16 %v585, %v585
        %v589 = vld [vmem:[%s6] sm:$0xf]
        %591 = vrot.lane.b32.xlu0 %v529, 120
        %v592 = vpop.permute.xlu0 %591
        %593 = vrot.lane.b32.xlu0 %v530, 120
        %v594 = vpop.permute.xlu0 %593
        %v596 = vsel %vm531, %v592, 0
        %v599 = vsel %vm531, %v594, 0
        %601 = vmatpush.bf16.xpose.msra.mxu0 0
        %602 = vmatpush.bf16.xpose.msra.mxu0 0
        %603 = vmatpush.bf16.xpose.msra.mxu0 0
        %604 = vmatpush.bf16.xpose.msra.mxu0 0
        %605 = vmatpush.bf16.xpose.msra.mxu0 0
        %606 = vmatpush.bf16.xpose.msra.mxu0 0
        %607 = vmatpush.bf16.xpose.msra.mxu0 0
        %608 = vmatpush.bf16.xpose.msra.mxu0 %v599
        %609 = vmatmul.bf16.gmra.mxu0 %v596
        %v610 = vpop.f32.mrf.mxu0
        %v611 = vadd.f32 0.0, %v610
        %v612 = vpop.f32.mrf.mxu0
        %613 = vdwg.mxu0
        %v614 = vmul.f32 %v611, 0.35355338
        %v615 = vadd.f32 %v614, %v528
        %v616 = vsel %vm531, %v615, -inf
        %617 = vmax.xlane.f32.xlu0 %v616
        %v618 = vpop.xlane.xlu0 %617
        %v619 = vsub.f32 %v615, %v618
        %v620 = vmul.f32 %v619, 1.442695
        %v621 = vpow.pop %v620
        %v622 = vsel %vm531, %v621, 0.0
        %623 = vadd.xlane.f32.xlu0 %v622
        %v624 = vpop.xlane.xlu0 %623
        %v625 = vrcp.pop %v624
        %v626 = vmul.f32 %v621, %v625
        %v627 = vpack.c.bf16 %v626, %v626
        %628 = vrot.lane.b32.xlu0 %v530, 88
        %v629 = vpop.permute.xlu0 %628
        %v631 = vsel %vm531, %v627, 0
        %v634 = vsel %vm571, %v629, 0
        %636 = vmatpush.bf16.msra.mxu0 0
        %637 = vmatpush.bf16.msra.mxu0 0
        %638 = vmatpush.bf16.msra.mxu0 0
        %639 = vmatpush.bf16.msra.mxu0 0
        %640 = vmatpush.bf16.msra.mxu0 0
        %641 = vmatpush.bf16.msra.mxu0 0
        %642 = vmatpush.bf16.msra.mxu0 0
        %643 = vmatpush.bf16.msra.mxu0 %v634
        %644 = vmatmul.bf16.gmra.mxu0 %v631
        %v645 = vpop.f32.mrf.mxu0
        %v646 = vadd.f32 0.0, %v645
        %v647 = vpop.f32.mrf.mxu0
        %648 = vdwg.mxu0
        %v649 = vpack.c.bf16 %v646, %v646
        %v650 = vld [vmem:[%s6 + $0x4] sm:$0xf]
        %v652 = vsel %vm531, %v649, 0
        %v655 = vsel %vm571, %v650, 0
        %657 = vmatpush.bf16.msra.mxu0 0
        %658 = vmatpush.bf16.msra.mxu0 0
        %659 = vmatpush.bf16.msra.mxu0 0
        %660 = vmatpush.bf16.msra.mxu0 0
        %661 = vmatpush.bf16.msra.mxu0 0
        %662 = vmatpush.bf16.msra.mxu0 0
        %663 = vmatpush.bf16.msra.mxu0 0
        %664 = vmatpush.bf16.msra.mxu0 %v655
        %665 = vmatmul.bf16.gmra.mxu0 %v652
        %v666 = vpop.f32.mrf.mxu0
        %v667 = vadd.f32 0.0, %v666
        %v668 = vpop.f32.mrf.mxu0
        %669 = vdwg.mxu0
        %v671 = vsel %vm531, %v588, 0
        %v674 = vsel %vm571, %v589, 0
        %676 = vmatpush.bf16.msra.mxu0 0
        %677 = vmatpush.bf16.msra.mxu0 0
        %678 = vmatpush.bf16.msra.mxu0 0
        %679 = vmatpush.bf16.msra.mxu0 0
        %680 = vmatpush.bf16.msra.mxu0 0
        %681 = vmatpush.bf16.msra.mxu0 0
        %682 = vmatpush.bf16.msra.mxu0 0
        %683 = vmatpush.bf16.msra.mxu0 %v674
        %684 = vmatmul.bf16.gmra.mxu0 %v671
        %v685 = vpop.f32.mrf.mxu0
        %v686 = vadd.f32 %v667, %v685
        %v687 = vpop.f32.mrf.mxu0
        %688 = vdwg.mxu0
        %689 = vrot.lane.b32.xlu0 %v529, 112
        %v690 = vpop.permute.xlu0 %689
        %691 = vrot.lane.b32.xlu0 %v530, 112
        %v692 = vpop.permute.xlu0 %691
        %v694 = vsel %vm531, %v690, 0
        %v697 = vsel %vm531, %v692, 0
        %699 = vmatpush.bf16.xpose.msra.mxu0 0
        %700 = vmatpush.bf16.xpose.msra.mxu0 0
        %701 = vmatpush.bf16.xpose.msra.mxu0 0
        %702 = vmatpush.bf16.xpose.msra.mxu0 0
        %703 = vmatpush.bf16.xpose.msra.mxu0 0
        %704 = vmatpush.bf16.xpose.msra.mxu0 0
        %705 = vmatpush.bf16.xpose.msra.mxu0 0
        %706 = vmatpush.bf16.xpose.msra.mxu0 %v697
        %707 = vmatmul.bf16.gmra.mxu0 %v694
        %v708 = vpop.f32.mrf.mxu0
        %v709 = vadd.f32 0.0, %v708
        %v710 = vpop.f32.mrf.mxu0
        %711 = vdwg.mxu0
        %v712 = vmul.f32 %v709, 0.35355338
        %v713 = vadd.f32 %v712, %v528
        %v714 = vsel %vm531, %v713, -inf
        %715 = vmax.xlane.f32.xlu0 %v714
        %v716 = vpop.xlane.xlu0 %715
        %v717 = vsub.f32 %v713, %v716
        %v718 = vmul.f32 %v717, 1.442695
        %v719 = vpow.pop %v718
        %v720 = vsel %vm531, %v719, 0.0
        %721 = vadd.xlane.f32.xlu0 %v720
        %v722 = vpop.xlane.xlu0 %721
        %v723 = vrcp.pop %v722
        %v724 = vmul.f32 %v719, %v723
        %v725 = vpack.c.bf16 %v724, %v724
        %726 = vrot.lane.b32.xlu0 %v530, 80
        %v727 = vpop.permute.xlu0 %726
        %v729 = vsel %vm531, %v725, 0
        %v732 = vsel %vm571, %v727, 0
        %734 = vmatpush.bf16.msra.mxu0 0
        %735 = vmatpush.bf16.msra.mxu0 0
        %736 = vmatpush.bf16.msra.mxu0 0
        %737 = vmatpush.bf16.msra.mxu0 0
        %738 = vmatpush.bf16.msra.mxu0 0
        %739 = vmatpush.bf16.msra.mxu0 0
        %740 = vmatpush.bf16.msra.mxu0 0
        %741 = vmatpush.bf16.msra.mxu0 %v732
        %742 = vmatmul.bf16.gmra.mxu0 %v729
        %v743 = vpop.f32.mrf.mxu0
        %v744 = vadd.f32 0.0, %v743
        %v745 = vpop.f32.mrf.mxu0
        %746 = vdwg.mxu0
        %v747 = vpack.c.bf16 %v744, %v744
        %v748 = vld [vmem:[%s6 + $0x8] sm:$0xf]
        %v750 = vsel %vm531, %v747, 0
        %v753 = vsel %vm571, %v748, 0
        %755 = vmatpush.bf16.msra.mxu0 0
        %756 = vmatpush.bf16.msra.mxu0 0
        %757 = vmatpush.bf16.msra.mxu0 0
        %758 = vmatpush.bf16.msra.mxu0 0
        %759 = vmatpush.bf16.msra.mxu0 0
        %760 = vmatpush.bf16.msra.mxu0 0
        %761 = vmatpush.bf16.msra.mxu0 0
        %762 = vmatpush.bf16.msra.mxu0 %v753
        %763 = vmatmul.bf16.gmra.mxu0 %v750
        %v764 = vpop.f32.mrf.mxu0
        %v765 = vadd.f32 0.0, %v764
        %v766 = vpop.f32.mrf.mxu0
        %767 = vdwg.mxu0
        %v768 = vadd.f32 %v686, %v765
        %769 = vrot.lane.b32.xlu0 %v529, 104
        %v770 = vpop.permute.xlu0 %769
        %771 = vrot.lane.b32.xlu0 %v530, 104
        %v772 = vpop.permute.xlu0 %771
        %v774 = vsel %vm531, %v770, 0
        %v777 = vsel %vm531, %v772, 0
        %779 = vmatpush.bf16.xpose.msra.mxu0 0
        %780 = vmatpush.bf16.xpose.msra.mxu0 0
        %781 = vmatpush.bf16.xpose.msra.mxu0 0
        %782 = vmatpush.bf16.xpose.msra.mxu0 0
        %783 = vmatpush.bf16.xpose.msra.mxu0 0
        %784 = vmatpush.bf16.xpose.msra.mxu0 0
        %785 = vmatpush.bf16.xpose.msra.mxu0 0
        %786 = vmatpush.bf16.xpose.msra.mxu0 %v777
        %787 = vmatmul.bf16.gmra.mxu0 %v774
        %v788 = vpop.f32.mrf.mxu0
        %v789 = vadd.f32 0.0, %v788
        %v790 = vpop.f32.mrf.mxu0
        %791 = vdwg.mxu0
        %v792 = vmul.f32 %v789, 0.35355338
        %v793 = vadd.f32 %v792, %v528
        %v794 = vsel %vm531, %v793, -inf
        %795 = vmax.xlane.f32.xlu0 %v794
        %v796 = vpop.xlane.xlu0 %795
        %v797 = vsub.f32 %v793, %v796
        %v798 = vmul.f32 %v797, 1.442695
        %v799 = vpow.pop %v798
        %v800 = vsel %vm531, %v799, 0.0
        %801 = vadd.xlane.f32.xlu0 %v800
        %v802 = vpop.xlane.xlu0 %801
        %v803 = vrcp.pop %v802
        %v804 = vmul.f32 %v799, %v803
        %v805 = vpack.c.bf16 %v804, %v804
        %806 = vrot.lane.b32.xlu0 %v530, 72
        %v807 = vpop.permute.xlu0 %806
        %v809 = vsel %vm531, %v805, 0
        %v812 = vsel %vm571, %v807, 0
        %814 = vmatpush.bf16.msra.mxu0 0
        %815 = vmatpush.bf16.msra.mxu0 0
        %816 = vmatpush.bf16.msra.mxu0 0
        %817 = vmatpush.bf16.msra.mxu0 0
        %818 = vmatpush.bf16.msra.mxu0 0
        %819 = vmatpush.bf16.msra.mxu0 0
        %820 = vmatpush.bf16.msra.mxu0 0
        %821 = vmatpush.bf16.msra.mxu0 %v812
        %822 = vmatmul.bf16.gmra.mxu0 %v809
        %v823 = vpop.f32.mrf.mxu0
        %v824 = vadd.f32 0.0, %v823
        %v825 = vpop.f32.mrf.mxu0
        %826 = vdwg.mxu0
        %v827 = vpack.c.bf16 %v824, %v824
        %v828 = vld [vmem:[%s6 + $0xc] sm:$0xf]
        %v830 = vsel %vm531, %v827, 0
        %v833 = vsel %vm571, %v828, 0
        %835 = vmatpush.bf16.msra.mxu0 0
        %836 = vmatpush.bf16.msra.mxu0 0
        %837 = vmatpush.bf16.msra.mxu0 0
        %838 = vmatpush.bf16.msra.mxu0 0
        %839 = vmatpush.bf16.msra.mxu0 0
        %840 = vmatpush.bf16.msra.mxu0 0
        %841 = vmatpush.bf16.msra.mxu0 0
        %842 = vmatpush.bf16.msra.mxu0 %v833
        %843 = vmatmul.bf16.gmra.mxu0 %v830
        %v844 = vpop.f32.mrf.mxu0
        %v845 = vadd.f32 0.0, %v844
        %v846 = vpop.f32.mrf.mxu0
        %847 = vdwg.mxu0
        %v848 = vadd.f32 %v768, %v845
        %v849 = vld [vmem:[#allocation6] sm:$0x1]
        %v851 = vperm.slane %v849, 0
        %v853 = vadd.f32 %v848, %v851
        %v854 = vadd.f32 %v853, %v446
        %v855 = vld [vmem:[#allocation7] sm:$0x1]
        %v856 = vld [vmem:[#allocation9] sm:$0x1]
        %v857 = vsel %vm470, %v854, 0.0
        %858 = vadd.xlane.f32.xlu0 %v857
        %v859 = vpop.xlane.xlu0 %858
        %v860 = vrcp.pop 32.0
        %v861 = vmul.f32 32.0, %v860
        %v862 = vsub.f32 1.0, %v861
        %v863 = vmul.f32 %v860, %v862
        %v864 = vadd.f32 %v860, %v863
        %vm865 = vweird.f32 %v860
        %v866 = vsel %vm865, %v860, %v864
        %v867 = vmul.f32 %v859, %v866
        %v868 = vsub.f32 %v854, %v867
        %v869 = vmul.f32 %v868, %v868
        %v870 = vsel %vm470, %v869, 0.0
        %871 = vadd.xlane.f32.xlu0 %v870
        %v872 = vpop.xlane.xlu0 %871
        %v873 = vmul.f32 %v872, %v866
        %v874 = vadd.f32 %v873, 1e-05
        %v875 = vrsqrt.pop %v874
        %v876 = vmul.f32 %v875, %v874
        %v877 = vmul.f32 %v876, %v875
        %v878 = vmul.f32 0.5, %v877
        %v879 = vsub.f32 1.5, %v878
        %v880 = vmul.f32 %v875, %v879
        %vm881 = vweird.f32 %v874
        %vm882 = vweird.f32 %v875
        %vm883 = vmor %vm881, %vm882
        %v884 = vsel %vm883, %v875, %v880
        %v885 = vmul.f32 %v868, %v884
        %v887 = vperm.slane %v855, 0
        %v889 = vmul.f32 %v885, %v887
        %v891 = vperm.slane %v856, 0
        %v893 = vadd.f32 %v889, %v891
        %894 = vst.msk [vmem:[%s444] sm:$0xff] %vm470, %v893
        %p895 = scmp.lt.s32.totalorder %s24, 1
        %s896 = scalar_select %p895, %s24, 1
        %s897 = smul.addr %s896, 8
        %s898 = scalar_lea.vmem %s10, %s897
        // Predicated region
        $region81: #{transformer_forward.30} parent=59 // pred_check
          %p899 = pneg %p262
        $region82: #{transformer_forward.30} parent=59 // pred_check_branch
          %901 = sbr.rel (%p899) target = $region84
        $region83: #{transformer_forward.30} parent=59 // pred_region
          _
        $region84: #{transformer_forward.30} parent=59 // pred_fallthru
          _
      $region60: #{transformer_forward.30} parent=5 // pred_fallthru
        _
      %p902 = scmp.le.s32.totalorder 2, %s19
      // Predicated region
      $region85: #{transformer_forward.30} parent=5 // pred_check
        %p903 = pneg %p902
      $region86: #{transformer_forward.30} parent=5 // pred_check_branch
        %905 = sbr.rel (%p903) target = $region88
      $region87: #{transformer_forward.30} parent=5 // pred_region
        %s906 = ssub.s32 %s19, 2
        // Predicated region
        $region89: #{transformer_forward.30} parent=87 // pred_check
          %p907 = pneg %p268
        $region90: #{transformer_forward.30} parent=87 // pred_check_branch
          %909 = sbr.rel (%p907) target = $region92
        $region91: #{transformer_forward.30} parent=87 // pred_region
          %p910 = scmp.lt.s32.totalorder %s25, 1
          %s911 = scalar_select %p910, %s25, 1
          %s912 = smul.addr %s911, 8
          %s913 = scalar_lea.vmem %s10, %s912
        $region92: #{transformer_forward.30} parent=87 // pred_fallthru
          _
      $region88: #{transformer_forward.30} parent=5 // pred_fallthru
        _
    $region6: #{transformer_forward.30} parent=1 // loop_footer
      %s23 = sadd.s32 1, %s19
    $region7: #{transformer_forward.30} parent=1 // loop_footer_branch
      %18 = sbr.rel target = $region3
    $region8: #{transformer_forward.30} parent=1 // loop_exit
      _
    %914 = vsyncpa [#allocation3], 1
    %s915 = scalar_lea.sflag [#allocation3], 1
    %916 = vsyncpa %s915, 1
    %917 = vsyncpa [#allocation5], 1
    %918 = vsyncpa [#allocation8], 1

// kernel: transformer_forward.33
$region0: #{transformer_forward.33}
  #allocation0 [shape = 'u32[]', space=smem, size = 0x4, offset = 0x4, fixed_abs, tag = 'smem constant byte address 0x4 - core index']
  #allocation1 [shape = 'u32[72,128]{1,0:T(1,128)}', space=vmem, size = 0x9000, scoped, tag = 'internal scratch']
  %s0 = inlined_call_operand.vmem [shape: f32[16,32], index: 0, kind: input, shape index: {}]
  %s1 = inlined_call_operand.vmem [shape: f32[1,32], index: 1, kind: input, shape index: {}]
  %s2 = inlined_call_operand.vmem [shape: f32[1,32], index: 2, kind: input, shape index: {}]
  %s3 = inlined_call_operand.vmem [shape: bf16[32,48], index: 3, kind: input, shape index: {}]
  %s4 = inlined_call_operand.vmem [shape: f32[1,48], index: 4, kind: input, shape index: {}]
  %s5 = inlined_call_operand.vmem [shape: f32[16,48], index: 5, kind: output, shape index: {}]
  %s6 = sld [smem:[#allocation0]]
  $region30: #{transformer_forward.33} parent=0
    _
  %s8 = ssub.s32 1, %s6
  %s9 = scalar_select 0, %s8, %s6
  // Predicated region
  $region2: #{transformer_forward.33} parent=0 // pred_check
    _
  $region3: #{transformer_forward.33} parent=0 // pred_check_branch
    %11 = sbr.rel (0) target = $region5
  $region4: #{transformer_forward.33} parent=0 // pred_region
    _
  $region5: #{transformer_forward.33} parent=0 // pred_fallthru
    _
  // Predicated region
  $region6: #{transformer_forward.33} parent=0 // pred_check
    _
  $region7: #{transformer_forward.33} parent=0 // pred_check_branch
    %13 = sbr.rel (0) target = $region9
  $region8: #{transformer_forward.33} parent=0 // pred_region
    _
  $region9: #{transformer_forward.33} parent=0 // pred_fallthru
    _
  // Predicated region
  $region10: #{transformer_forward.33} parent=0 // pred_check
    _
  $region11: #{transformer_forward.33} parent=0 // pred_check_branch
    %15 = sbr.rel (0) target = $region13
  $region12: #{transformer_forward.33} parent=0 // pred_region
    _
  $region13: #{transformer_forward.33} parent=0 // pred_fallthru
    _
  // Predicated region
  $region14: #{transformer_forward.33} parent=0 // pred_check
    _
  $region15: #{transformer_forward.33} parent=0 // pred_check_branch
    %17 = sbr.rel (0) target = $region17
  $region16: #{transformer_forward.33} parent=0 // pred_region
    _
  $region17: #{transformer_forward.33} parent=0 // pred_fallthru
    _
  // Predicated region
  $region18: #{transformer_forward.33} parent=0 // pred_check
    _
  $region19: #{transformer_forward.33} parent=0 // pred_check_branch
    %19 = sbr.rel (0) target = $region21
  $region20: #{transformer_forward.33} parent=0 // pred_region
    _
  $region21: #{transformer_forward.33} parent=0 // pred_fallthru
    _
  %v21 = vld [vmem:[%s0] sm:$0xff]
  %v22 = vld [vmem:[%s0 + $0x8] sm:$0xff]
  %v23 = vld [vmem:[%s1] sm:$0x1]
  %v24 = vld [vmem:[%s2] sm:$0x1]
  %vm25 = vcmask 261120
  %v26 = vsel %vm25, %v21, 0.0
  %27 = vadd.xlane.f32.xlu0 %v26
  %v28 = vpop.xlane.xlu0 %27
  %v29 = vsel %vm25, %v22, 0.0
  %30 = vadd.xlane.f32.xlu0 %v29
  %v31 = vpop.xlane.xlu0 %30
  %v32 = vrcp.pop 32.0
  %v33 = vmul.f32 32.0, %v32
  %v34 = vsub.f32 1.0, %v33
  %v35 = vmul.f32 %v32, %v34
  %v36 = vadd.f32 %v32, %v35
  %vm37 = vweird.f32 %v32
  %v38 = vsel %vm37, %v32, %v36
  %v39 = vmul.f32 %v28, %v38
  %v40 = vmul.f32 %v31, %v38
  %v41 = vsub.f32 %v21, %v39
  %v42 = vsub.f32 %v22, %v40
  %v43 = vmul.f32 %v41, %v41
  %v44 = vmul.f32 %v42, %v42
  %v45 = vsel %vm25, %v43, 0.0
  %46 = vadd.xlane.f32.xlu0 %v45
  %v47 = vpop.xlane.xlu0 %46
  %v48 = vsel %vm25, %v44, 0.0
  %49 = vadd.xlane.f32.xlu0 %v48
  %v50 = vpop.xlane.xlu0 %49
  %v51 = vmul.f32 %v47, %v38
  %v52 = vmul.f32 %v50, %v38
  %v53 = vadd.f32 %v51, 1e-05
  %v54 = vadd.f32 %v52, 1e-05
  %v55 = vrsqrt.pop %v53
  %v56 = vmul.f32 %v55, %v53
  %v57 = vmul.f32 %v56, %v55
  %v58 = vmul.f32 0.5, %v57
  %v59 = vsub.f32 1.5, %v58
  %v60 = vmul.f32 %v55, %v59
  %vm61 = vweird.f32 %v53
  %vm62 = vweird.f32 %v55
  %vm63 = vmor %vm61, %vm62
  %v64 = vsel %vm63, %v55, %v60
  %v65 = vrsqrt.pop %v54
  %v66 = vmul.f32 %v65, %v54
  %v67 = vmul.f32 %v66, %v65
  %v68 = vmul.f32 0.5, %v67
  %v69 = vsub.f32 1.5, %v68
  %v70 = vmul.f32 %v65, %v69
  %vm71 = vweird.f32 %v54
  %vm72 = vweird.f32 %v65
  %vm73 = vmor %vm71, %vm72
  %v74 = vsel %vm73, %v65, %v70
  %v75 = vmul.f32 %v41, %v64
  %v76 = vmul.f32 %v42, %v74
  %v78 = vperm.slane %v23, 0
  %v80 = vmul.f32 %v75, %v78
  %v81 = vmul.f32 %v76, %v78
  %v83 = vperm.slane %v24, 0
  %v85 = vadd.f32 %v80, %v83
  %v86 = vadd.f32 %v81, %v83
  %v87 = vpack.c.bf16 %v86, %v85
  %v88 = vld [vmem:[%s3] sm:$0xf]
  %v89 = vld [vmem:[%s3 + $0x4] sm:$0xf]
  %v90 = vld [vmem:[%s3 + $0x8] sm:$0xf]
  %v91 = vld [vmem:[%s3 + $0xc] sm:$0xf]
  %v92 = vld [vmem:[%s4] sm:$0x1]
  %v94 = vperm.slane %v92, 0
  %v100 = vunpack.c.l.b16 %v88
  %v101 = vunpack.c.l.b16 %v89
  %v102 = vunpack.c.l.b16 %v90
  %v103 = vunpack.c.l.b16 %v91
  %v104 = vpack.c.b16 %v101, %v100
  %v105 = vpack.c.b16 %v103, %v102
  %v109 = vsel %vm25, %v87, 0
  %111 = vmatpush.bf16.msra.mxu0 0
  %112 = vmatpush.bf16.msra.mxu0 0
  %113 = vmatpush.bf16.msra.mxu0 0
  %114 = vmatpush.bf16.msra.mxu0 0
  %115 = vmatpush.bf16.msra.mxu0 0
  %116 = vmatpush.bf16.msra.mxu0 0
  %117 = vmatpush.bf16.msra.mxu0 %v105
  %118 = vmatpush.bf16.msra.mxu0 %v104
  %119 = vmatmul.bf16.gmra.mxu0 %v109
  %v120 = vpop.f32.mrf.mxu0
  %v121 = vadd.f32 %v94, %v120
  %v122 = vpop.f32.mrf.mxu0
  %v123 = vadd.f32 %v94, %v122
  %124 = vdwg.mxu0
  %vm125 = vcmask 392192
  %126 = vst.msk [vmem:[%s5] sm:$0xff] %vm125, %v121
  %127 = vst.msk [vmem:[%s5 + $0x8] sm:$0xff] %vm125, %v123
  // Predicated region
  $region22: #{transformer_forward.33} parent=0 // pred_check
    _
  $region23: #{transformer_forward.33} parent=0 // pred_check_branch
    %129 = sbr.rel (0) target = $region25
  $region24: #{transformer_forward.33} parent=0 // pred_region
    _
  $region25: #{transformer_forward.33} parent=0 // pred_fallthru
    _
  // Predicated region
  $region26: #{transformer_forward.33} parent=0 // pred_check
    _
  $region27: #{transformer_forward.33} parent=0 // pred_check_branch
    %131 = sbr.rel (0) target = $region29
  $region28: #{transformer_forward.33} parent=0 // pred_region
    _
  $region29: #{transformer_forward.33} parent=0 // pred_fallthru
    _

</llo_original>
